<compile_context>
chip_gen: v7x
topology: tpu7x:2x2x1
jax: 0.10.0
libtpu: 0.0.40
codegen_flags: <defaults>
</compile_context>

<pallas_src>
import functools

import jax
import jax.numpy as jnp
from jax.experimental import pallas as pl
from jax.experimental.pallas import tpu as pltpu

EPS = 1e-5  # torch LayerNorm / InstanceNorm2d default eps


def _layernorm(x, gamma, beta):
    mu = jnp.mean(x, axis=-1, keepdims=True)
    var = jnp.mean((x - mu) ** 2, axis=-1, keepdims=True)
    return (x - mu) * jax.lax.rsqrt(var + EPS) * gamma + beta


def _gelu_exact(x):
    return 0.5 * x * (1.0 + jax.lax.erf(x * 0.7071067811865476))


def _softmax_rows(s):
    """Row softmax in f32; denominator reciprocal on the EUP (approx)."""
    s = s - jnp.max(s, axis=-1, keepdims=True)
    e = jnp.exp(s)
    return e * pl.reciprocal(jnp.sum(e, axis=-1, keepdims=True), approx=True)


# ------------------------------------------------------------------ fused kernel

def fused_encoder_kernel(
        x_ref, pos_sp_ref, pos_tm_ref,
        in_g_ref, in_b_ref,
        ln1sp_g_ref, ln1sp_b_ref, wqkv_sp_ref, wproj_sp_ref, bproj_sp_ref,
        ln1tm_g_ref, ln1tm_b_ref, wqkv_tm_ref, wproj_tm_ref, bproj_tm_ref,
        ln2_g_ref, ln2_b_ref, w1_ref, b1_ref, w2_ref, b2_ref,
        o_ref,
        attn_sp_scr, attn_tm_scr,
        *, num_frame, num_part, dim_emb, num_heads, last_block, mxu_dtype):
    f, p, c = num_frame, num_part, dim_emb
    N = f * p                       # spatial tokens per batch item (frames stacked)
    D = p * c                       # temporal channel dim
    dh_sp = c // num_heads
    dh_tm = D // num_heads
    scale_sp = float(dh_sp) ** -0.5
    scale_tm = float(dh_tm) ** -0.5

    x = x_ref[0].astype(jnp.float32)                          # (N, c)

    # ----- InstanceNorm2d: per-(batch, channel) stats over the f*p positions -----
    if last_block:
        mu = jnp.mean(x, axis=0, keepdims=True)
        var = jnp.mean((x - mu) ** 2, axis=0, keepdims=True)
        x = (x - mu) * jax.lax.rsqrt(var + EPS) * in_g_ref[...] + in_b_ref[...]

    # ----- positional embedding (spatial layout) -----
    x_sp = x + pos_sp_ref[...]                                # (N, c)

    # ----- spatial attention: all f frames at once via block-diagonal mask -----
    xn = _layernorm(x_sp, ln1sp_g_ref[...], ln1sp_b_ref[...])
    qkv = jnp.dot(xn.astype(mxu_dtype), wqkv_sp_ref[...],
                  preferred_element_type=jnp.float32)         # (N, 3c)
    qkv_m = qkv.astype(mxu_dtype)

    # same_frame[i, j] <=> i // p == j // p   (float-floor, no int division)
    ri = jax.lax.broadcasted_iota(jnp.int32, (N, N), 0).astype(jnp.float32)
    ci = jax.lax.broadcasted_iota(jnp.int32, (N, N), 1).astype(jnp.float32)
    inv_p = 1.0 / p
    same_frame = jnp.floor(ri * inv_p) == jnp.floor(ci * inv_p)

    for h in range(num_heads):                                # static unroll
        qh = qkv_m[:, h * dh_sp:(h + 1) * dh_sp]
        kh = qkv_m[:, c + h * dh_sp:c + (h + 1) * dh_sp]
        vh = qkv_m[:, 2 * c + h * dh_sp:2 * c + (h + 1) * dh_sp]
        s = jax.lax.dot_general(qh, kh, (((1,), (1,)), ((), ())),
                                preferred_element_type=jnp.float32) * scale_sp
        s = jnp.where(same_frame, s, -1e30)
        prob = _softmax_rows(s)
        attn_sp_scr[:, h * dh_sp:(h + 1) * dh_sp] = jnp.dot(
            prob.astype(mxu_dtype), vh, preferred_element_type=jnp.float32)

    attn_sp = jnp.dot(attn_sp_scr[...].astype(mxu_dtype), wproj_sp_ref[...],
                      preferred_element_type=jnp.float32) + bproj_sp_ref[...]
    x_sp = x_sp + attn_sp                                      # (N, c)

    # ----- re-layout (f*p, c) -> (f, p*c) with tiny 0/1 selection matmuls -----
    sr = jax.lax.broadcasted_iota(jnp.int32, (f, N), 0)        # frame index
    sc = jax.lax.broadcasted_iota(jnp.int32, (f, N), 1)        # spatial token index
    parts = []
    for pi in range(p):
        sel = jnp.where(sc == sr * p + pi, 1.0, 0.0)           # (f, N)
        parts.append(jnp.dot(sel, x_sp, preferred_element_type=jnp.float32))
    x_tm = jnp.concatenate(parts, axis=-1)                     # (f, D) lane-dense
    x_tm = x_tm + pos_tm_ref[...]

    # ----- temporal attention -----
    # TODO(synk): optional temporal attention `mask` not implemented (mask=None only).
    xn = _layernorm(x_tm, ln1tm_g_ref[...], ln1tm_b_ref[...])
    qkv = jnp.dot(xn.astype(mxu_dtype), wqkv_tm_ref[...],
                  preferred_element_type=jnp.float32)          # (f, 3D)
    qkv_m = qkv.astype(mxu_dtype)
    for h in range(num_heads):
        qh = qkv_m[:, h * dh_tm:(h + 1) * dh_tm]
        kh = qkv_m[:, D + h * dh_tm:D + (h + 1) * dh_tm]
        vh = qkv_m[:, 2 * D + h * dh_tm:2 * D + (h + 1) * dh_tm]
        s = jax.lax.dot_general(qh, kh, (((1,), (1,)), ((), ())),
                                preferred_element_type=jnp.float32) * scale_tm
        prob = _softmax_rows(s)
        attn_tm_scr[:, h * dh_tm:(h + 1) * dh_tm] = jnp.dot(
            prob.astype(mxu_dtype), vh, preferred_element_type=jnp.float32)

    attn_tm = jnp.dot(attn_tm_scr[...].astype(mxu_dtype), wproj_tm_ref[...],
                      preferred_element_type=jnp.float32) + bproj_tm_ref[...]
    x_tm = x_tm + attn_tm                                      # (f, D)

    # ----- feed-forward -----
    xn = _layernorm(x_tm, ln2_g_ref[...], ln2_b_ref[...])
    h1 = jnp.dot(xn.astype(mxu_dtype), w1_ref[...],
                 preferred_element_type=jnp.float32) + b1_ref[...]
    h1 = _gelu_exact(h1)
    out = jnp.dot(h1.astype(mxu_dtype), w2_ref[...],
                  preferred_element_type=jnp.float32) + b2_ref[...]

    o_ref[0] = (x_tm + out).astype(o_ref.dtype)                # (f, D) lane-dense store


# ----------------------------------------------------------------- param prep

def prepare_params(P, matmul_dtype=jnp.float32):
    """One-time conversion of torch-layout params into kernel-ready layout.

    Linear weights are transposed ONCE to (in, out); matmul weights are
    optionally stored bf16 (recommended on v6e/v7x; MXU is bf16-native, halves
    weight DMA/VMEM).  Norm affines, biases and the positional embedding stay
    float32 so all VPU/EUP math is f32 (required-for-speed on v5e).
    """
    _, f, p, c = P["pos_emb"].shape
    D = p * c
    H = P["fc1_w"].shape[0]
    md = matmul_dtype
    f32 = jnp.float32
    return {
        "pos_sp": P["pos_emb"].reshape(f * p, c).astype(f32),
        "pos_tm": P["pos_emb"].reshape(f, D).astype(f32),
        "in_g": P["in_gamma"].reshape(1, c).astype(f32),
        "in_b": P["in_beta"].reshape(1, c).astype(f32),
        "ln1sp_g": P["ln1sp_g"].reshape(1, c).astype(f32),
        "ln1sp_b": P["ln1sp_b"].reshape(1, c).astype(f32),
        "sp_wqkv": P["sp_wqkv"].T.astype(md),      # (c, 3c)
        "sp_wproj": P["sp_wproj"].T.astype(md),    # (c, c)
        "sp_bproj": P["sp_bproj"].reshape(1, c).astype(f32),
        "ln1tm_g": P["ln1tm_g"].reshape(1, D).astype(f32),
        "ln1tm_b": P["ln1tm_b"].reshape(1, D).astype(f32),
        "tm_wqkv": P["tm_wqkv"].T.astype(md),      # (D, 3D)
        "tm_wproj": P["tm_wproj"].T.astype(md),    # (D, D)
        "tm_bproj": P["tm_bproj"].reshape(1, D).astype(f32),
        "ln2_g": P["ln2_g"].reshape(1, D).astype(f32),
        "ln2_b": P["ln2_b"].reshape(1, D).astype(f32),
        "fc1_w": P["fc1_w"].T.astype(md),          # (D, H)
        "fc1_b": P["fc1_b"].reshape(1, H).astype(f32),
        "fc2_w": P["fc2_w"].T.astype(md),          # (H, D)
        "fc2_b": P["fc2_b"].reshape(1, D).astype(f32),
    }


# -------------------------------------------------------- full forward pass

def transformer_encoder_forward(x, KP, *, num_heads=8, last_block=True):
    b, f, p, c = x.shape
    N, D = f * p, p * c
    H = KP["fc1_w"].shape[1]
    assert c % num_heads == 0 and D % num_heads == 0
    mxu_dtype = KP["sp_wqkv"].dtype

    params = [KP["pos_sp"], KP["pos_tm"], KP["in_g"], KP["in_b"],
              KP["ln1sp_g"], KP["ln1sp_b"], KP["sp_wqkv"], KP["sp_wproj"], KP["sp_bproj"],
              KP["ln1tm_g"], KP["ln1tm_b"], KP["tm_wqkv"], KP["tm_wproj"], KP["tm_bproj"],
              KP["ln2_g"], KP["ln2_b"], KP["fc1_w"], KP["fc1_b"], KP["fc2_w"], KP["fc2_b"]]

    def _const_spec(a):
        nd = a.ndim
        return pl.BlockSpec(a.shape, lambda i, _nd=nd: (0,) * _nd)

    kern = functools.partial(
        fused_encoder_kernel, num_frame=f, num_part=p, dim_emb=c,
        num_heads=num_heads, last_block=last_block, mxu_dtype=mxu_dtype)

    dh_sp, dh_tm = c // num_heads, D // num_heads
    flops = b * (2 * N * c * 3 * c + num_heads * 4 * N * N * dh_sp + 2 * N * c * c
                 + p * 2 * f * N * c
                 + 2 * f * D * 3 * D + num_heads * 4 * f * f * dh_tm + 2 * f * D * D
                 + 2 * f * D * H + 2 * f * H * D)
    transc = b * (num_heads * (N * N + f * f) + f * H)
    param_bytes = sum(int(a.size) * a.dtype.itemsize for a in params)
    bytes_accessed = param_bytes + 2 * b * N * c * x.dtype.itemsize

    out = pl.pallas_call(
        kern,
        out_shape=jax.ShapeDtypeStruct((b, f, D), x.dtype),
        grid=(b,),
        in_specs=[pl.BlockSpec((1, N, c), lambda i: (i, 0, 0))] +
                 [_const_spec(a) for a in params],
        out_specs=pl.BlockSpec((1, f, D), lambda i: (i, 0, 0)),
        scratch_shapes=[pltpu.VMEM((N, c), jnp.float32),   # spatial head outputs
                        pltpu.VMEM((f, D), jnp.float32)],  # temporal head outputs
        compiler_params=pltpu.CompilerParams(
            dimension_semantics=("parallel",)),            # b>=2 keeps both v7x TCs busy
        cost_estimate=pl.CostEstimate(flops=int(flops),
                                      transcendentals=int(transc),
                                      bytes_accessed=int(bytes_accessed)),
    )(x.reshape(b, N, c), *params)
    return out.reshape(b, f, p, c)


# ------------------------------------------------------ pure-JAX reference

def _ref_attention(x, gamma, beta, w_qkv, w_proj, b_proj, num_heads):
    B, N, C = x.shape
    dh = C // num_heads
    scale = dh ** (-0.5)
    xn = _layernorm(x, gamma, beta)
    qkv = xn @ w_qkv.T
    qkv = qkv.reshape(B, N, 3, num_heads, dh).transpose(2, 0, 3, 1, 4)
    q, k, v = qkv[0], qkv[1], qkv[2]
    attn = jnp.einsum('bhnd,bhmd->bhnm', q, k) * scale
    attn = jax.nn.softmax(attn, axis=-1)
    out = jnp.einsum('bhnm,bhmd->bhnd', attn, v)
    out = out.transpose(0, 2, 1, 3).reshape(B, N, C)
    return out @ w_proj.T + b_proj


def ref_forward(x, P, num_heads=8, last_block=True):
    b, f, p, c = x.shape
    if last_block:
        x2 = x.reshape(b, f * p, c)
        mu = jnp.mean(x2, axis=1, keepdims=True)
        var = jnp.mean((x2 - mu) ** 2, axis=1, keepdims=True)
        x2 = (x2 - mu) * jax.lax.rsqrt(var + EPS) * P["in_gamma"] + P["in_beta"]
        x = x2.reshape(b, f, p, c)
    x_sp = x.reshape(b * f, p, c)
    pos = jnp.broadcast_to(P["pos_emb"], (b, f, p, c)).reshape(b * f, p, c)
    x_sp = x_sp + pos
    x_sp = x_sp + _ref_attention(x_sp, P["ln1sp_g"], P["ln1sp_b"],
                                 P["sp_wqkv"], P["sp_wproj"], P["sp_bproj"], num_heads)
    D = p * c
    x_tm = x_sp.reshape(b, f, D) + pos.reshape(b, f, D)
    x_tm = x_tm + _ref_attention(x_tm, P["ln1tm_g"], P["ln1tm_b"],
                                 P["tm_wqkv"], P["tm_wproj"], P["tm_bproj"], num_heads)
    xn = _layernorm(x_tm, P["ln2_g"], P["ln2_b"])
    h = _gelu_exact(xn @ P["fc1_w"].T + P["fc1_b"])
    x_out = x_tm + (h @ P["fc2_w"].T + P["fc2_b"])
    return x_out.reshape(b, f, p, c)


# --------------------------------------------------------------------- main

def make_params(key, num_frame, num_part, dim_emb, ff_expand=1.0):
    D = dim_emb * num_part
    H = int(D * ff_expand)
    ks = jax.random.split(key, 16)
    f32 = jnp.float32

    def w(k, shape, s=0.05):
        return (s * jax.random.normal(k, shape)).astype(f32)

    return {
        "pos_emb": w(ks[0], (1, num_frame, num_part, dim_emb), 0.02),
        "in_gamma": (1.0 + 0.1 * jax.random.normal(ks[1], (dim_emb,))).astype(f32),
        "in_beta": w(ks[2], (dim_emb,), 0.1),
        "ln1sp_g": (1.0 + 0.1 * jax.random.normal(ks[3], (dim_emb,))).astype(f32),
        "ln1sp_b": w(ks[4], (dim_emb,), 0.1),
        "sp_wqkv": w(ks[5], (3 * dim_emb, dim_emb)),
        "sp_wproj": w(ks[6], (dim_emb, dim_emb)),
        "sp_bproj": w(ks[7], (dim_emb,), 0.02),
        "ln1tm_g": (1.0 + 0.1 * jax.random.normal(ks[8], (D,))).astype(f32),
        "ln1tm_b": w(ks[9], (D,), 0.1),
        "tm_wqkv": w(ks[10], (3 * D, D)),
        "tm_wproj": w(ks[11], (D, D)),
        "tm_bproj": w(ks[12], (D,), 0.02),
        "ln2_g": (1.0 + 0.1 * jax.random.normal(ks[13], (D,))).astype(f32),
        "ln2_b": w(ks[14], (D,), 0.1),
        "fc1_w": w(ks[15], (H, D)),
        "fc1_b": jnp.zeros((H,), f32) + 0.01,
        "fc2_w": w(jax.random.fold_in(key, 99), (D, H)),
        "fc2_b": jnp.zeros((D,), f32) + 0.01,
    }


if __name__ == "__main__":
    # small shapes: b=2 batches, f=8 frames, p=4 parts, c=32 embedding dims
    b, f, p, c = 2, 8, 4, 32
    num_heads = 8

    key = jax.random.PRNGKey(0)
    kx, kp = jax.random.split(key)
    x = jax.random.normal(kx, (b, f, p, c), dtype=jnp.float32)
    params = make_params(kp, num_frame=f, num_part=p, dim_emb=c)

    ref = jax.block_until_ready(ref_forward(x, params, num_heads=num_heads, last_block=True))

    # 1) f32 MXU operands (exact path)
    kp32 = prepare_params(params, matmul_dtype=jnp.float32)
    out32 = transformer_encoder_forward(x, kp32, num_heads=num_heads, last_block=True)
    out32 = jax.block_until_ready(out32)
    assert out32.shape == (b, f, p, c), out32.shape
    assert jnp.allclose(out32, ref, rtol=2e-2, atol=2e-2), float(jnp.max(jnp.abs(out32 - ref)))

    # 2) bf16 MXU operands (recommended on v6e/v7x), f32 accumulation & elementwise math
    kp16 = prepare_params(params, matmul_dtype=jnp.bfloat16)
    out16 = transformer_encoder_forward(x, kp16, num_heads=num_heads, last_block=True)
    out16 = jax.block_until_ready(out16)
    assert jnp.allclose(out16, ref, rtol=5e-2, atol=5e-2), float(jnp.max(jnp.abs(out16 - ref)))

    print("KERNEL_OK")
</pallas_src>

<mosaic_0001>
module attributes {stable_mosaic.version = 11 : i64} {
  func.func @fused_encoder_kernel(%arg0: i32, %arg1: memref<1x32x32xf32, #tpu.memory_space<vmem>>, %arg2: memref<32x32xf32, #tpu.memory_space<vmem>>, %arg3: memref<8x128xf32, #tpu.memory_space<vmem>>, %arg4: memref<1x32xf32, #tpu.memory_space<vmem>>, %arg5: memref<1x32xf32, #tpu.memory_space<vmem>>, %arg6: memref<1x32xf32, #tpu.memory_space<vmem>>, %arg7: memref<1x32xf32, #tpu.memory_space<vmem>>, %arg8: memref<32x96xf32, #tpu.memory_space<vmem>>, %arg9: memref<32x32xf32, #tpu.memory_space<vmem>>, %arg10: memref<1x32xf32, #tpu.memory_space<vmem>>, %arg11: memref<1x128xf32, #tpu.memory_space<vmem>>, %arg12: memref<1x128xf32, #tpu.memory_space<vmem>>, %arg13: memref<128x384xf32, #tpu.memory_space<vmem>>, %arg14: memref<128x128xf32, #tpu.memory_space<vmem>>, %arg15: memref<1x128xf32, #tpu.memory_space<vmem>>, %arg16: memref<1x128xf32, #tpu.memory_space<vmem>>, %arg17: memref<1x128xf32, #tpu.memory_space<vmem>>, %arg18: memref<128x128xf32, #tpu.memory_space<vmem>>, %arg19: memref<1x128xf32, #tpu.memory_space<vmem>>, %arg20: memref<128x128xf32, #tpu.memory_space<vmem>>, %arg21: memref<1x128xf32, #tpu.memory_space<vmem>>, %arg22: memref<1x8x128xf32, #tpu.memory_space<vmem>>, %arg23: memref<32x32xf32, #tpu.memory_space<vmem>>, %arg24: memref<8x128xf32, #tpu.memory_space<vmem>>) attributes {dimension_semantics = [#tpu.dimension_semantics<parallel>], iteration_bounds = array<i64: 2>, scalar_prefetch = 0 : i64, scratch_operands = 2 : i64, tpu.core_type = #tpu.core_type<tc>, window_params = [{transform_indices = @transform_0, window_bounds = array<i64: 1, 32, 32>}, {pipeline_mode = #tpu.pipeline_mode<synchronous>, transform_indices = @transform_1, window_bounds = array<i64: 32, 32>}, {pipeline_mode = #tpu.pipeline_mode<synchronous>, transform_indices = @transform_2, window_bounds = array<i64: 8, 128>}, {pipeline_mode = #tpu.pipeline_mode<synchronous>, transform_indices = @transform_3, window_bounds = array<i64: 1, 32>}, {pipeline_mode = #tpu.pipeline_mode<synchronous>, transform_indices = @transform_4, window_bounds = array<i64: 1, 32>}, {pipeline_mode = #tpu.pipeline_mode<synchronous>, transform_indices = @transform_5, window_bounds = array<i64: 1, 32>}, {pipeline_mode = #tpu.pipeline_mode<synchronous>, transform_indices = @transform_6, window_bounds = array<i64: 1, 32>}, {pipeline_mode = #tpu.pipeline_mode<synchronous>, transform_indices = @transform_7, window_bounds = array<i64: 32, 96>}, {pipeline_mode = #tpu.pipeline_mode<synchronous>, transform_indices = @transform_8, window_bounds = array<i64: 32, 32>}, {pipeline_mode = #tpu.pipeline_mode<synchronous>, transform_indices = @transform_9, window_bounds = array<i64: 1, 32>}, {pipeline_mode = #tpu.pipeline_mode<synchronous>, transform_indices = @transform_10, window_bounds = array<i64: 1, 128>}, {pipeline_mode = #tpu.pipeline_mode<synchronous>, transform_indices = @transform_11, window_bounds = array<i64: 1, 128>}, {pipeline_mode = #tpu.pipeline_mode<synchronous>, transform_indices = @transform_12, window_bounds = array<i64: 128, 384>}, {pipeline_mode = #tpu.pipeline_mode<synchronous>, transform_indices = @transform_13, window_bounds = array<i64: 128, 128>}, {pipeline_mode = #tpu.pipeline_mode<synchronous>, transform_indices = @transform_14, window_bounds = array<i64: 1, 128>}, {pipeline_mode = #tpu.pipeline_mode<synchronous>, transform_indices = @transform_15, window_bounds = array<i64: 1, 128>}, {pipeline_mode = #tpu.pipeline_mode<synchronous>, transform_indices = @transform_16, window_bounds = array<i64: 1, 128>}, {pipeline_mode = #tpu.pipeline_mode<synchronous>, transform_indices = @transform_17, window_bounds = array<i64: 128, 128>}, {pipeline_mode = #tpu.pipeline_mode<synchronous>, transform_indices = @transform_18, window_bounds = array<i64: 1, 128>}, {pipeline_mode = #tpu.pipeline_mode<synchronous>, transform_indices = @transform_19, window_bounds = array<i64: 128, 128>}, {pipeline_mode = #tpu.pipeline_mode<synchronous>, transform_indices = @transform_20, window_bounds = array<i64: 1, 128>}, {transform_indices = @transform_21, window_bounds = array<i64: 1, 8, 128>}]} {
    %c0 = arith.constant 0 : index
    %c0_0 = arith.constant 0 : index
    %c0_1 = arith.constant 0 : index
    %0 = vector.load %arg1[%c0, %c0_0, %c0_1] : memref<1x32x32xf32, #tpu.memory_space<vmem>>, vector<1x32x32xf32>
    %1 = vector.shape_cast %0 : vector<1x32x32xf32> to vector<32x32xf32>
    %cst = arith.constant dense<0.000000e+00> : vector<32xf32>
    %2 = vector.multi_reduction <add>, %1, %cst [0] : vector<32x32xf32> to vector<32xf32>
    %3 = vector.shape_cast %2 : vector<32xf32> to vector<1x32xf32>
    %cst_2 = arith.constant 3.200000e+01 : f32
    %4 = vector.broadcast %cst_2 : f32 to vector<1x32xf32>
    %5 = arith.divf %3, %4 : vector<1x32xf32>
    %6 = vector.broadcast %5 : vector<1x32xf32> to vector<32x32xf32>
    %7 = arith.subf %1, %6 : vector<32x32xf32>
    %8 = arith.mulf %7, %7 : vector<32x32xf32>
    %cst_3 = arith.constant dense<0.000000e+00> : vector<32xf32>
    %9 = vector.multi_reduction <add>, %8, %cst_3 [0] : vector<32x32xf32> to vector<32xf32>
    %10 = vector.shape_cast %9 : vector<32xf32> to vector<1x32xf32>
    %cst_4 = arith.constant 3.200000e+01 : f32
    %11 = vector.broadcast %cst_4 : f32 to vector<1x32xf32>
    %12 = arith.divf %10, %11 : vector<1x32xf32>
    %13 = vector.broadcast %5 : vector<1x32xf32> to vector<32x32xf32>
    %14 = arith.subf %1, %13 : vector<32x32xf32>
    %cst_5 = arith.constant 9.99999974E-6 : f32
    %15 = vector.broadcast %cst_5 : f32 to vector<1x32xf32>
    %16 = arith.addf %12, %15 : vector<1x32xf32>
    %17 = math.rsqrt %16 : vector<1x32xf32>
    %18 = vector.broadcast %17 : vector<1x32xf32> to vector<32x32xf32>
    %19 = arith.mulf %14, %18 : vector<32x32xf32>
    %c0_6 = arith.constant 0 : index
    %c0_7 = arith.constant 0 : index
    %20 = vector.load %arg4[%c0_6, %c0_7] : memref<1x32xf32, #tpu.memory_space<vmem>>, vector<1x32xf32>
    %21 = vector.broadcast %20 : vector<1x32xf32> to vector<32x32xf32>
    %22 = arith.mulf %19, %21 : vector<32x32xf32>
    %c0_8 = arith.constant 0 : index
    %c0_9 = arith.constant 0 : index
    %23 = vector.load %arg5[%c0_8, %c0_9] : memref<1x32xf32, #tpu.memory_space<vmem>>, vector<1x32xf32>
    %24 = vector.broadcast %23 : vector<1x32xf32> to vector<32x32xf32>
    %25 = arith.addf %22, %24 : vector<32x32xf32>
    %c0_10 = arith.constant 0 : index
    %c0_11 = arith.constant 0 : index
    %26 = vector.load %arg2[%c0_10, %c0_11] : memref<32x32xf32, #tpu.memory_space<vmem>>, vector<32x32xf32>
    %27 = arith.addf %25, %26 : vector<32x32xf32>
    %c0_12 = arith.constant 0 : index
    %c0_13 = arith.constant 0 : index
    %28 = vector.load %arg6[%c0_12, %c0_13] : memref<1x32xf32, #tpu.memory_space<vmem>>, vector<1x32xf32>
    %c0_14 = arith.constant 0 : index
    %c0_15 = arith.constant 0 : index
    %29 = vector.load %arg7[%c0_14, %c0_15] : memref<1x32xf32, #tpu.memory_space<vmem>>, vector<1x32xf32>
    %cst_16 = arith.constant dense<0.000000e+00> : vector<32xf32>
    %30 = vector.multi_reduction <add>, %27, %cst_16 [1] : vector<32x32xf32> to vector<32xf32>
    %31 = vector.shape_cast %30 : vector<32xf32> to vector<32x1xf32>
    %cst_17 = arith.constant 3.200000e+01 : f32
    %32 = vector.broadcast %cst_17 : f32 to vector<32x1xf32>
    %33 = arith.divf %31, %32 : vector<32x1xf32>
    %34 = vector.broadcast %33 : vector<32x1xf32> to vector<32x32xf32>
    %35 = arith.subf %27, %34 : vector<32x32xf32>
    %36 = arith.mulf %35, %35 : vector<32x32xf32>
    %cst_18 = arith.constant dense<0.000000e+00> : vector<32xf32>
    %37 = vector.multi_reduction <add>, %36, %cst_18 [1] : vector<32x32xf32> to vector<32xf32>
    %38 = vector.shape_cast %37 : vector<32xf32> to vector<32x1xf32>
    %cst_19 = arith.constant 3.200000e+01 : f32
    %39 = vector.broadcast %cst_19 : f32 to vector<32x1xf32>
    %40 = arith.divf %38, %39 : vector<32x1xf32>
    %41 = vector.broadcast %33 : vector<32x1xf32> to vector<32x32xf32>
    %42 = arith.subf %27, %41 : vector<32x32xf32>
    %cst_20 = arith.constant 9.99999974E-6 : f32
    %43 = vector.broadcast %cst_20 : f32 to vector<32x1xf32>
    %44 = arith.addf %40, %43 : vector<32x1xf32>
    %45 = math.rsqrt %44 : vector<32x1xf32>
    %46 = vector.broadcast %45 : vector<32x1xf32> to vector<32x32xf32>
    %47 = arith.mulf %42, %46 : vector<32x32xf32>
    %48 = vector.broadcast %28 : vector<1x32xf32> to vector<32x32xf32>
    %49 = arith.mulf %47, %48 : vector<32x32xf32>
    %50 = vector.broadcast %29 : vector<1x32xf32> to vector<32x32xf32>
    %51 = arith.addf %49, %50 : vector<32x32xf32>
    %c0_21 = arith.constant 0 : index
    %c0_22 = arith.constant 0 : index
    %52 = vector.load %arg8[%c0_21, %c0_22] : memref<32x96xf32, #tpu.memory_space<vmem>>, vector<32x96xf32>
    %cst_23 = arith.constant dense<0.000000e+00> : vector<32x96xf32>
    %53 = tpu.matmul %51, %52, %cst_23 {dimension_numbers = #tpu.dot_dimension_numbers<[1], [0], [0], [1], [0, 0, 1, 1], [], []>} : vector<32x32xf32>, vector<32x96xf32>, vector<32x96xf32> -> vector<32x96xf32>
    %54 = tpu.iota {dimensions = array<i32: 0>} : vector<32x32xi32>
    %55 = arith.sitofp %54 : vector<32x32xi32> to vector<32x32xf32>
    %56 = tpu.iota {dimensions = array<i32: 1>} : vector<32x32xi32>
    %57 = arith.sitofp %56 : vector<32x32xi32> to vector<32x32xf32>
    %cst_24 = arith.constant 2.500000e-01 : f32
    %58 = vector.broadcast %cst_24 : f32 to vector<32x32xf32>
    %59 = arith.mulf %55, %58 : vector<32x32xf32>
    %60 = math.floor %59 : vector<32x32xf32>
    %cst_25 = arith.constant 2.500000e-01 : f32
    %61 = vector.broadcast %cst_25 : f32 to vector<32x32xf32>
    %62 = arith.mulf %57, %61 : vector<32x32xf32>
    %63 = math.floor %62 : vector<32x32xf32>
    %64 = arith.cmpf oeq, %60, %63 : vector<32x32xf32>
    %65 = vector.extract_strided_slice %53 {offsets = [0, 0], sizes = [32, 4], strides = [1, 1]} : vector<32x96xf32> to vector<32x4xf32>
    %66 = vector.extract_strided_slice %53 {offsets = [0, 32], sizes = [32, 4], strides = [1, 1]} : vector<32x96xf32> to vector<32x4xf32>
    %67 = vector.extract_strided_slice %53 {offsets = [0, 64], sizes = [32, 4], strides = [1, 1]} : vector<32x96xf32> to vector<32x4xf32>
    %cst_26 = arith.constant dense<0.000000e+00> : vector<32x32xf32>
    %68 = tpu.matmul %65, %66, %cst_26 {dimension_numbers = #tpu.dot_dimension_numbers<[1], [1], [0], [0], [0, 0, 1, 0], [], []>} : vector<32x4xf32>, vector<32x4xf32>, vector<32x32xf32> -> vector<32x32xf32>
    %cst_27 = arith.constant 5.000000e-01 : f32
    %69 = vector.broadcast %cst_27 : f32 to vector<32x32xf32>
    %70 = arith.mulf %68, %69 : vector<32x32xf32>
    %cst_28 = arith.constant -1.000000e+30 : f32
    %71 = vector.broadcast %cst_28 : f32 to vector<32x32xf32>
    %72 = arith.select %64, %70, %71 : vector<32x32xi1>, vector<32x32xf32>
    %cst_29 = arith.constant dense<0xFF800000> : vector<32xf32>
    %73 = vector.multi_reduction <maximumf>, %72, %cst_29 [1] : vector<32x32xf32> to vector<32xf32>
    %74 = vector.shape_cast %73 : vector<32xf32> to vector<32x1xf32>
    %75 = vector.broadcast %74 : vector<32x1xf32> to vector<32x32xf32>
    %76 = arith.subf %72, %75 : vector<32x32xf32>
    %77 = math.exp %76 : vector<32x32xf32>
    %cst_30 = arith.constant dense<0.000000e+00> : vector<32xf32>
    %78 = vector.multi_reduction <add>, %77, %cst_30 [1] : vector<32x32xf32> to vector<32xf32>
    %79 = vector.shape_cast %78 : vector<32xf32> to vector<32x1xf32>
    %80 = tpu.reciprocal %79 {approx = true} : vector<32x1xf32> -> vector<32x1xf32>
    %81 = vector.broadcast %80 : vector<32x1xf32> to vector<32x32xf32>
    %82 = arith.mulf %77, %81 : vector<32x32xf32>
    %cst_31 = arith.constant dense<0.000000e+00> : vector<32x4xf32>
    %83 = tpu.matmul %82, %67, %cst_31 {dimension_numbers = #tpu.dot_dimension_numbers<[1], [0], [0], [1], [0, 0, 1, 1], [], []>} : vector<32x32xf32>, vector<32x4xf32>, vector<32x4xf32> -> vector<32x4xf32>
    %c0_32 = arith.constant 0 : index
    %c0_33 = arith.constant 0 : index
    %84 = vector.load %arg23[%c0_32, %c0_33] : memref<32x32xf32, #tpu.memory_space<vmem>>, vector<32x4xf32>
    tpu.vector_store %arg23[%c0_32, %c0_33], %83 {strides = array<i32>} : memref<32x32xf32, #tpu.memory_space<vmem>>, vector<32x4xf32>,
    %85 = vector.extract_strided_slice %53 {offsets = [0, 4], sizes = [32, 4], strides = [1, 1]} : vector<32x96xf32> to vector<32x4xf32>
    %86 = vector.extract_strided_slice %53 {offsets = [0, 36], sizes = [32, 4], strides = [1, 1]} : vector<32x96xf32> to vector<32x4xf32>
    %87 = vector.extract_strided_slice %53 {offsets = [0, 68], sizes = [32, 4], strides = [1, 1]} : vector<32x96xf32> to vector<32x4xf32>
    %cst_34 = arith.constant dense<0.000000e+00> : vector<32x32xf32>
    %88 = tpu.matmul %85, %86, %cst_34 {dimension_numbers = #tpu.dot_dimension_numbers<[1], [1], [0], [0], [0, 0, 1, 0], [], []>} : vector<32x4xf32>, vector<32x4xf32>, vector<32x32xf32> -> vector<32x32xf32>
    %cst_35 = arith.constant 5.000000e-01 : f32
    %89 = vector.broadcast %cst_35 : f32 to vector<32x32xf32>
    %90 = arith.mulf %88, %89 : vector<32x32xf32>
    %cst_36 = arith.constant -1.000000e+30 : f32
    %91 = vector.broadcast %cst_36 : f32 to vector<32x32xf32>
    %92 = arith.select %64, %90, %91 : vector<32x32xi1>, vector<32x32xf32>
    %cst_37 = arith.constant dense<0xFF800000> : vector<32xf32>
    %93 = vector.multi_reduction <maximumf>, %92, %cst_37 [1] : vector<32x32xf32> to vector<32xf32>
    %94 = vector.shape_cast %93 : vector<32xf32> to vector<32x1xf32>
    %95 = vector.broadcast %94 : vector<32x1xf32> to vector<32x32xf32>
    %96 = arith.subf %92, %95 : vector<32x32xf32>
    %97 = math.exp %96 : vector<32x32xf32>
    %cst_38 = arith.constant dense<0.000000e+00> : vector<32xf32>
    %98 = vector.multi_reduction <add>, %97, %cst_38 [1] : vector<32x32xf32> to vector<32xf32>
    %99 = vector.shape_cast %98 : vector<32xf32> to vector<32x1xf32>
    %100 = tpu.reciprocal %99 {approx = true} : vector<32x1xf32> -> vector<32x1xf32>
    %101 = vector.broadcast %100 : vector<32x1xf32> to vector<32x32xf32>
    %102 = arith.mulf %97, %101 : vector<32x32xf32>
    %cst_39 = arith.constant dense<0.000000e+00> : vector<32x4xf32>
    %103 = tpu.matmul %102, %87, %cst_39 {dimension_numbers = #tpu.dot_dimension_numbers<[1], [0], [0], [1], [0, 0, 1, 1], [], []>} : vector<32x32xf32>, vector<32x4xf32>, vector<32x4xf32> -> vector<32x4xf32>
    %c0_40 = arith.constant 0 : index
    %c4 = arith.constant 4 : index
    %104 = vector.load %arg23[%c0_40, %c4] : memref<32x32xf32, #tpu.memory_space<vmem>>, vector<32x4xf32>
    tpu.vector_store %arg23[%c0_40, %c4], %103 {strides = array<i32>} : memref<32x32xf32, #tpu.memory_space<vmem>>, vector<32x4xf32>,
    %105 = vector.extract_strided_slice %53 {offsets = [0, 8], sizes = [32, 4], strides = [1, 1]} : vector<32x96xf32> to vector<32x4xf32>
    %106 = vector.extract_strided_slice %53 {offsets = [0, 40], sizes = [32, 4], strides = [1, 1]} : vector<32x96xf32> to vector<32x4xf32>
    %107 = vector.extract_strided_slice %53 {offsets = [0, 72], sizes = [32, 4], strides = [1, 1]} : vector<32x96xf32> to vector<32x4xf32>
    %cst_41 = arith.constant dense<0.000000e+00> : vector<32x32xf32>
    %108 = tpu.matmul %105, %106, %cst_41 {dimension_numbers = #tpu.dot_dimension_numbers<[1], [1], [0], [0], [0, 0, 1, 0], [], []>} : vector<32x4xf32>, vector<32x4xf32>, vector<32x32xf32> -> vector<32x32xf32>
    %cst_42 = arith.constant 5.000000e-01 : f32
    %109 = vector.broadcast %cst_42 : f32 to vector<32x32xf32>
    %110 = arith.mulf %108, %109 : vector<32x32xf32>
    %cst_43 = arith.constant -1.000000e+30 : f32
    %111 = vector.broadcast %cst_43 : f32 to vector<32x32xf32>
    %112 = arith.select %64, %110, %111 : vector<32x32xi1>, vector<32x32xf32>
    %cst_44 = arith.constant dense<0xFF800000> : vector<32xf32>
    %113 = vector.multi_reduction <maximumf>, %112, %cst_44 [1] : vector<32x32xf32> to vector<32xf32>
    %114 = vector.shape_cast %113 : vector<32xf32> to vector<32x1xf32>
    %115 = vector.broadcast %114 : vector<32x1xf32> to vector<32x32xf32>
    %116 = arith.subf %112, %115 : vector<32x32xf32>
    %117 = math.exp %116 : vector<32x32xf32>
    %cst_45 = arith.constant dense<0.000000e+00> : vector<32xf32>
    %118 = vector.multi_reduction <add>, %117, %cst_45 [1] : vector<32x32xf32> to vector<32xf32>
    %119 = vector.shape_cast %118 : vector<32xf32> to vector<32x1xf32>
    %120 = tpu.reciprocal %119 {approx = true} : vector<32x1xf32> -> vector<32x1xf32>
    %121 = vector.broadcast %120 : vector<32x1xf32> to vector<32x32xf32>
    %122 = arith.mulf %117, %121 : vector<32x32xf32>
    %cst_46 = arith.constant dense<0.000000e+00> : vector<32x4xf32>
    %123 = tpu.matmul %122, %107, %cst_46 {dimension_numbers = #tpu.dot_dimension_numbers<[1], [0], [0], [1], [0, 0, 1, 1], [], []>} : vector<32x32xf32>, vector<32x4xf32>, vector<32x4xf32> -> vector<32x4xf32>
    %c0_47 = arith.constant 0 : index
    %c8 = arith.constant 8 : index
    %124 = vector.load %arg23[%c0_47, %c8] : memref<32x32xf32, #tpu.memory_space<vmem>>, vector<32x4xf32>
    tpu.vector_store %arg23[%c0_47, %c8], %123 {strides = array<i32>} : memref<32x32xf32, #tpu.memory_space<vmem>>, vector<32x4xf32>,
    %125 = vector.extract_strided_slice %53 {offsets = [0, 12], sizes = [32, 4], strides = [1, 1]} : vector<32x96xf32> to vector<32x4xf32>
    %126 = vector.extract_strided_slice %53 {offsets = [0, 44], sizes = [32, 4], strides = [1, 1]} : vector<32x96xf32> to vector<32x4xf32>
    %127 = vector.extract_strided_slice %53 {offsets = [0, 76], sizes = [32, 4], strides = [1, 1]} : vector<32x96xf32> to vector<32x4xf32>
    %cst_48 = arith.constant dense<0.000000e+00> : vector<32x32xf32>
    %128 = tpu.matmul %125, %126, %cst_48 {dimension_numbers = #tpu.dot_dimension_numbers<[1], [1], [0], [0], [0, 0, 1, 0], [], []>} : vector<32x4xf32>, vector<32x4xf32>, vector<32x32xf32> -> vector<32x32xf32>
    %cst_49 = arith.constant 5.000000e-01 : f32
    %129 = vector.broadcast %cst_49 : f32 to vector<32x32xf32>
    %130 = arith.mulf %128, %129 : vector<32x32xf32>
    %cst_50 = arith.constant -1.000000e+30 : f32
    %131 = vector.broadcast %cst_50 : f32 to vector<32x32xf32>
    %132 = arith.select %64, %130, %131 : vector<32x32xi1>, vector<32x32xf32>
    %cst_51 = arith.constant dense<0xFF800000> : vector<32xf32>
    %133 = vector.multi_reduction <maximumf>, %132, %cst_51 [1] : vector<32x32xf32> to vector<32xf32>
    %134 = vector.shape_cast %133 : vector<32xf32> to vector<32x1xf32>
    %135 = vector.broadcast %134 : vector<32x1xf32> to vector<32x32xf32>
    %136 = arith.subf %132, %135 : vector<32x32xf32>
    %137 = math.exp %136 : vector<32x32xf32>
    %cst_52 = arith.constant dense<0.000000e+00> : vector<32xf32>
    %138 = vector.multi_reduction <add>, %137, %cst_52 [1] : vector<32x32xf32> to vector<32xf32>
    %139 = vector.shape_cast %138 : vector<32xf32> to vector<32x1xf32>
    %140 = tpu.reciprocal %139 {approx = true} : vector<32x1xf32> -> vector<32x1xf32>
    %141 = vector.broadcast %140 : vector<32x1xf32> to vector<32x32xf32>
    %142 = arith.mulf %137, %141 : vector<32x32xf32>
    %cst_53 = arith.constant dense<0.000000e+00> : vector<32x4xf32>
    %143 = tpu.matmul %142, %127, %cst_53 {dimension_numbers = #tpu.dot_dimension_numbers<[1], [0], [0], [1], [0, 0, 1, 1], [], []>} : vector<32x32xf32>, vector<32x4xf32>, vector<32x4xf32> -> vector<32x4xf32>
    %c0_54 = arith.constant 0 : index
    %c12 = arith.constant 12 : index
    %144 = vector.load %arg23[%c0_54, %c12] : memref<32x32xf32, #tpu.memory_space<vmem>>, vector<32x4xf32>
    tpu.vector_store %arg23[%c0_54, %c12], %143 {strides = array<i32>} : memref<32x32xf32, #tpu.memory_space<vmem>>, vector<32x4xf32>,
    %145 = vector.extract_strided_slice %53 {offsets = [0, 16], sizes = [32, 4], strides = [1, 1]} : vector<32x96xf32> to vector<32x4xf32>
    %146 = vector.extract_strided_slice %53 {offsets = [0, 48], sizes = [32, 4], strides = [1, 1]} : vector<32x96xf32> to vector<32x4xf32>
    %147 = vector.extract_strided_slice %53 {offsets = [0, 80], sizes = [32, 4], strides = [1, 1]} : vector<32x96xf32> to vector<32x4xf32>
    %cst_55 = arith.constant dense<0.000000e+00> : vector<32x32xf32>
    %148 = tpu.matmul %145, %146, %cst_55 {dimension_numbers = #tpu.dot_dimension_numbers<[1], [1], [0], [0], [0, 0, 1, 0], [], []>} : vector<32x4xf32>, vector<32x4xf32>, vector<32x32xf32> -> vector<32x32xf32>
    %cst_56 = arith.constant 5.000000e-01 : f32
    %149 = vector.broadcast %cst_56 : f32 to vector<32x32xf32>
    %150 = arith.mulf %148, %149 : vector<32x32xf32>
    %cst_57 = arith.constant -1.000000e+30 : f32
    %151 = vector.broadcast %cst_57 : f32 to vector<32x32xf32>
    %152 = arith.select %64, %150, %151 : vector<32x32xi1>, vector<32x32xf32>
    %cst_58 = arith.constant dense<0xFF800000> : vector<32xf32>
    %153 = vector.multi_reduction <maximumf>, %152, %cst_58 [1] : vector<32x32xf32> to vector<32xf32>
    %154 = vector.shape_cast %153 : vector<32xf32> to vector<32x1xf32>
    %155 = vector.broadcast %154 : vector<32x1xf32> to vector<32x32xf32>
    %156 = arith.subf %152, %155 : vector<32x32xf32>
    %157 = math.exp %156 : vector<32x32xf32>
    %cst_59 = arith.constant dense<0.000000e+00> : vector<32xf32>
    %158 = vector.multi_reduction <add>, %157, %cst_59 [1] : vector<32x32xf32> to vector<32xf32>
    %159 = vector.shape_cast %158 : vector<32xf32> to vector<32x1xf32>
    %160 = tpu.reciprocal %159 {approx = true} : vector<32x1xf32> -> vector<32x1xf32>
    %161 = vector.broadcast %160 : vector<32x1xf32> to vector<32x32xf32>
    %162 = arith.mulf %157, %161 : vector<32x32xf32>
    %cst_60 = arith.constant dense<0.000000e+00> : vector<32x4xf32>
    %163 = tpu.matmul %162, %147, %cst_60 {dimension_numbers = #tpu.dot_dimension_numbers<[1], [0], [0], [1], [0, 0, 1, 1], [], []>} : vector<32x32xf32>, vector<32x4xf32>, vector<32x4xf32> -> vector<32x4xf32>
    %c0_61 = arith.constant 0 : index
    %c16 = arith.constant 16 : index
    %164 = vector.load %arg23[%c0_61, %c16] : memref<32x32xf32, #tpu.memory_space<vmem>>, vector<32x4xf32>
    tpu.vector_store %arg23[%c0_61, %c16], %163 {strides = array<i32>} : memref<32x32xf32, #tpu.memory_space<vmem>>, vector<32x4xf32>,
    %165 = vector.extract_strided_slice %53 {offsets = [0, 20], sizes = [32, 4], strides = [1, 1]} : vector<32x96xf32> to vector<32x4xf32>
    %166 = vector.extract_strided_slice %53 {offsets = [0, 52], sizes = [32, 4], strides = [1, 1]} : vector<32x96xf32> to vector<32x4xf32>
    %167 = vector.extract_strided_slice %53 {offsets = [0, 84], sizes = [32, 4], strides = [1, 1]} : vector<32x96xf32> to vector<32x4xf32>
    %cst_62 = arith.constant dense<0.000000e+00> : vector<32x32xf32>
    %168 = tpu.matmul %165, %166, %cst_62 {dimension_numbers = #tpu.dot_dimension_numbers<[1], [1], [0], [0], [0, 0, 1, 0], [], []>} : vector<32x4xf32>, vector<32x4xf32>, vector<32x32xf32> -> vector<32x32xf32>
    %cst_63 = arith.constant 5.000000e-01 : f32
    %169 = vector.broadcast %cst_63 : f32 to vector<32x32xf32>
    %170 = arith.mulf %168, %169 : vector<32x32xf32>
    %cst_64 = arith.constant -1.000000e+30 : f32
    %171 = vector.broadcast %cst_64 : f32 to vector<32x32xf32>
    %172 = arith.select %64, %170, %171 : vector<32x32xi1>, vector<32x32xf32>
    %cst_65 = arith.constant dense<0xFF800000> : vector<32xf32>
    %173 = vector.multi_reduction <maximumf>, %172, %cst_65 [1] : vector<32x32xf32> to vector<32xf32>
    %174 = vector.shape_cast %173 : vector<32xf32> to vector<32x1xf32>
    %175 = vector.broadcast %174 : vector<32x1xf32> to vector<32x32xf32>
    %176 = arith.subf %172, %175 : vector<32x32xf32>
    %177 = math.exp %176 : vector<32x32xf32>
    %cst_66 = arith.constant dense<0.000000e+00> : vector<32xf32>
    %178 = vector.multi_reduction <add>, %177, %cst_66 [1] : vector<32x32xf32> to vector<32xf32>
    %179 = vector.shape_cast %178 : vector<32xf32> to vector<32x1xf32>
    %180 = tpu.reciprocal %179 {approx = true} : vector<32x1xf32> -> vector<32x1xf32>
    %181 = vector.broadcast %180 : vector<32x1xf32> to vector<32x32xf32>
    %182 = arith.mulf %177, %181 : vector<32x32xf32>
    %cst_67 = arith.constant dense<0.000000e+00> : vector<32x4xf32>
    %183 = tpu.matmul %182, %167, %cst_67 {dimension_numbers = #tpu.dot_dimension_numbers<[1], [0], [0], [1], [0, 0, 1, 1], [], []>} : vector<32x32xf32>, vector<32x4xf32>, vector<32x4xf32> -> vector<32x4xf32>
    %c0_68 = arith.constant 0 : index
    %c20 = arith.constant 20 : index
    %184 = vector.load %arg23[%c0_68, %c20] : memref<32x32xf32, #tpu.memory_space<vmem>>, vector<32x4xf32>
    tpu.vector_store %arg23[%c0_68, %c20], %183 {strides = array<i32>} : memref<32x32xf32, #tpu.memory_space<vmem>>, vector<32x4xf32>,
    %185 = vector.extract_strided_slice %53 {offsets = [0, 24], sizes = [32, 4], strides = [1, 1]} : vector<32x96xf32> to vector<32x4xf32>
    %186 = vector.extract_strided_slice %53 {offsets = [0, 56], sizes = [32, 4], strides = [1, 1]} : vector<32x96xf32> to vector<32x4xf32>
    %187 = vector.extract_strided_slice %53 {offsets = [0, 88], sizes = [32, 4], strides = [1, 1]} : vector<32x96xf32> to vector<32x4xf32>
    %cst_69 = arith.constant dense<0.000000e+00> : vector<32x32xf32>
    %188 = tpu.matmul %185, %186, %cst_69 {dimension_numbers = #tpu.dot_dimension_numbers<[1], [1], [0], [0], [0, 0, 1, 0], [], []>} : vector<32x4xf32>, vector<32x4xf32>, vector<32x32xf32> -> vector<32x32xf32>
    %cst_70 = arith.constant 5.000000e-01 : f32
    %189 = vector.broadcast %cst_70 : f32 to vector<32x32xf32>
    %190 = arith.mulf %188, %189 : vector<32x32xf32>
    %cst_71 = arith.constant -1.000000e+30 : f32
    %191 = vector.broadcast %cst_71 : f32 to vector<32x32xf32>
    %192 = arith.select %64, %190, %191 : vector<32x32xi1>, vector<32x32xf32>
    %cst_72 = arith.constant dense<0xFF800000> : vector<32xf32>
    %193 = vector.multi_reduction <maximumf>, %192, %cst_72 [1] : vector<32x32xf32> to vector<32xf32>
    %194 = vector.shape_cast %193 : vector<32xf32> to vector<32x1xf32>
    %195 = vector.broadcast %194 : vector<32x1xf32> to vector<32x32xf32>
    %196 = arith.subf %192, %195 : vector<32x32xf32>
    %197 = math.exp %196 : vector<32x32xf32>
    %cst_73 = arith.constant dense<0.000000e+00> : vector<32xf32>
    %198 = vector.multi_reduction <add>, %197, %cst_73 [1] : vector<32x32xf32> to vector<32xf32>
    %199 = vector.shape_cast %198 : vector<32xf32> to vector<32x1xf32>
    %200 = tpu.reciprocal %199 {approx = true} : vector<32x1xf32> -> vector<32x1xf32>
    %201 = vector.broadcast %200 : vector<32x1xf32> to vector<32x32xf32>
    %202 = arith.mulf %197, %201 : vector<32x32xf32>
    %cst_74 = arith.constant dense<0.000000e+00> : vector<32x4xf32>
    %203 = tpu.matmul %202, %187, %cst_74 {dimension_numbers = #tpu.dot_dimension_numbers<[1], [0], [0], [1], [0, 0, 1, 1], [], []>} : vector<32x32xf32>, vector<32x4xf32>, vector<32x4xf32> -> vector<32x4xf32>
    %c0_75 = arith.constant 0 : index
    %c24 = arith.constant 24 : index
    %204 = vector.load %arg23[%c0_75, %c24] : memref<32x32xf32, #tpu.memory_space<vmem>>, vector<32x4xf32>
    tpu.vector_store %arg23[%c0_75, %c24], %203 {strides = array<i32>} : memref<32x32xf32, #tpu.memory_space<vmem>>, vector<32x4xf32>,
    %205 = vector.extract_strided_slice %53 {offsets = [0, 28], sizes = [32, 4], strides = [1, 1]} : vector<32x96xf32> to vector<32x4xf32>
    %206 = vector.extract_strided_slice %53 {offsets = [0, 60], sizes = [32, 4], strides = [1, 1]} : vector<32x96xf32> to vector<32x4xf32>
    %207 = vector.extract_strided_slice %53 {offsets = [0, 92], sizes = [32, 4], strides = [1, 1]} : vector<32x96xf32> to vector<32x4xf32>
    %cst_76 = arith.constant dense<0.000000e+00> : vector<32x32xf32>
    %208 = tpu.matmul %205, %206, %cst_76 {dimension_numbers = #tpu.dot_dimension_numbers<[1], [1], [0], [0], [0, 0, 1, 0], [], []>} : vector<32x4xf32>, vector<32x4xf32>, vector<32x32xf32> -> vector<32x32xf32>
    %cst_77 = arith.constant 5.000000e-01 : f32
    %209 = vector.broadcast %cst_77 : f32 to vector<32x32xf32>
    %210 = arith.mulf %208, %209 : vector<32x32xf32>
    %cst_78 = arith.constant -1.000000e+30 : f32
    %211 = vector.broadcast %cst_78 : f32 to vector<32x32xf32>
    %212 = arith.select %64, %210, %211 : vector<32x32xi1>, vector<32x32xf32>
    %cst_79 = arith.constant dense<0xFF800000> : vector<32xf32>
    %213 = vector.multi_reduction <maximumf>, %212, %cst_79 [1] : vector<32x32xf32> to vector<32xf32>
    %214 = vector.shape_cast %213 : vector<32xf32> to vector<32x1xf32>
    %215 = vector.broadcast %214 : vector<32x1xf32> to vector<32x32xf32>
    %216 = arith.subf %212, %215 : vector<32x32xf32>
    %217 = math.exp %216 : vector<32x32xf32>
    %cst_80 = arith.constant dense<0.000000e+00> : vector<32xf32>
    %218 = vector.multi_reduction <add>, %217, %cst_80 [1] : vector<32x32xf32> to vector<32xf32>
    %219 = vector.shape_cast %218 : vector<32xf32> to vector<32x1xf32>
    %220 = tpu.reciprocal %219 {approx = true} : vector<32x1xf32> -> vector<32x1xf32>
    %221 = vector.broadcast %220 : vector<32x1xf32> to vector<32x32xf32>
    %222 = arith.mulf %217, %221 : vector<32x32xf32>
    %cst_81 = arith.constant dense<0.000000e+00> : vector<32x4xf32>
    %223 = tpu.matmul %222, %207, %cst_81 {dimension_numbers = #tpu.dot_dimension_numbers<[1], [0], [0], [1], [0, 0, 1, 1], [], []>} : vector<32x32xf32>, vector<32x4xf32>, vector<32x4xf32> -> vector<32x4xf32>
    %c0_82 = arith.constant 0 : index
    %c28 = arith.constant 28 : index
    %224 = vector.load %arg23[%c0_82, %c28] : memref<32x32xf32, #tpu.memory_space<vmem>>, vector<32x4xf32>
    tpu.vector_store %arg23[%c0_82, %c28], %223 {strides = array<i32>} : memref<32x32xf32, #tpu.memory_space<vmem>>, vector<32x4xf32>,
    %c0_83 = arith.constant 0 : index
    %c0_84 = arith.constant 0 : index
    %225 = vector.load %arg23[%c0_83, %c0_84] : memref<32x32xf32, #tpu.memory_space<vmem>>, vector<32x32xf32>
    %c0_85 = arith.constant 0 : index
    %c0_86 = arith.constant 0 : index
    %226 = vector.load %arg9[%c0_85, %c0_86] : memref<32x32xf32, #tpu.memory_space<vmem>>, vector<32x32xf32>
    %cst_87 = arith.constant dense<0.000000e+00> : vector<32x32xf32>
    %227 = tpu.matmul %225, %226, %cst_87 {dimension_numbers = #tpu.dot_dimension_numbers<[1], [0], [0], [1], [0, 0, 1, 1], [], []>} : vector<32x32xf32>, vector<32x32xf32>, vector<32x32xf32> -> vector<32x32xf32>
    %c0_88 = arith.constant 0 : index
    %c0_89 = arith.constant 0 : index
    %228 = vector.load %arg10[%c0_88, %c0_89] : memref<1x32xf32, #tpu.memory_space<vmem>>, vector<1x32xf32>
    %229 = vector.broadcast %228 : vector<1x32xf32> to vector<32x32xf32>
    %230 = arith.addf %227, %229 : vector<32x32xf32>
    %231 = arith.addf %27, %230 : vector<32x32xf32>
    %232 = tpu.iota {dimensions = array<i32: 0>} : vector<8x32xi32>
    %233 = tpu.iota {dimensions = array<i32: 1>} : vector<8x32xi32>
    %c4_i32 = arith.constant 4 : i32
    %234 = vector.broadcast %c4_i32 : i32 to vector<8x32xi32>
    %235 = arith.muli %232, %234 : vector<8x32xi32>
    %c0_i32 = arith.constant 0 : i32
    %236 = vector.broadcast %c0_i32 : i32 to vector<8x32xi32>
    %237 = arith.addi %235, %236 : vector<8x32xi32>
    %238 = arith.cmpi eq, %233, %237 : vector<8x32xi32>
    %cst_90 = arith.constant 1.000000e+00 : f32
    %cst_91 = arith.constant 0.000000e+00 : f32
    %239 = vector.broadcast %cst_90 : f32 to vector<8x32xf32>
    %240 = vector.broadcast %cst_91 : f32 to vector<8x32xf32>
    %241 = arith.select %238, %239, %240 : vector<8x32xi1>, vector<8x32xf32>
    %cst_92 = arith.constant dense<0.000000e+00> : vector<8x32xf32>
    %242 = tpu.matmul %241, %231, %cst_92 {dimension_numbers = #tpu.dot_dimension_numbers<[1], [0], [0], [1], [0, 0, 1, 1], [], []>} : vector<8x32xf32>, vector<32x32xf32>, vector<8x32xf32> -> vector<8x32xf32>
    %c4_i32_93 = arith.constant 4 : i32
    %243 = vector.broadcast %c4_i32_93 : i32 to vector<8x32xi32>
    %244 = arith.muli %232, %243 : vector<8x32xi32>
    %c1_i32 = arith.constant 1 : i32
    %245 = vector.broadcast %c1_i32 : i32 to vector<8x32xi32>
    %246 = arith.addi %244, %245 : vector<8x32xi32>
    %247 = arith.cmpi eq, %233, %246 : vector<8x32xi32>
    %cst_94 = arith.constant 1.000000e+00 : f32
    %cst_95 = arith.constant 0.000000e+00 : f32
    %248 = vector.broadcast %cst_94 : f32 to vector<8x32xf32>
    %249 = vector.broadcast %cst_95 : f32 to vector<8x32xf32>
    %250 = arith.select %247, %248, %249 : vector<8x32xi1>, vector<8x32xf32>
    %cst_96 = arith.constant dense<0.000000e+00> : vector<8x32xf32>
    %251 = tpu.matmul %250, %231, %cst_96 {dimension_numbers = #tpu.dot_dimension_numbers<[1], [0], [0], [1], [0, 0, 1, 1], [], []>} : vector<8x32xf32>, vector<32x32xf32>, vector<8x32xf32> -> vector<8x32xf32>
    %c4_i32_97 = arith.constant 4 : i32
    %252 = vector.broadcast %c4_i32_97 : i32 to vector<8x32xi32>
    %253 = arith.muli %232, %252 : vector<8x32xi32>
    %c2_i32 = arith.constant 2 : i32
    %254 = vector.broadcast %c2_i32 : i32 to vector<8x32xi32>
    %255 = arith.addi %253, %254 : vector<8x32xi32>
    %256 = arith.cmpi eq, %233, %255 : vector<8x32xi32>
    %cst_98 = arith.constant 1.000000e+00 : f32
    %cst_99 = arith.constant 0.000000e+00 : f32
    %257 = vector.broadcast %cst_98 : f32 to vector<8x32xf32>
    %258 = vector.broadcast %cst_99 : f32 to vector<8x32xf32>
    %259 = arith.select %256, %257, %258 : vector<8x32xi1>, vector<8x32xf32>
    %cst_100 = arith.constant dense<0.000000e+00> : vector<8x32xf32>
    %260 = tpu.matmul %259, %231, %cst_100 {dimension_numbers = #tpu.dot_dimension_numbers<[1], [0], [0], [1], [0, 0, 1, 1], [], []>} : vector<8x32xf32>, vector<32x32xf32>, vector<8x32xf32> -> vector<8x32xf32>
    %c4_i32_101 = arith.constant 4 : i32
    %261 = vector.broadcast %c4_i32_101 : i32 to vector<8x32xi32>
    %262 = arith.muli %232, %261 : vector<8x32xi32>
    %c3_i32 = arith.constant 3 : i32
    %263 = vector.broadcast %c3_i32 : i32 to vector<8x32xi32>
    %264 = arith.addi %262, %263 : vector<8x32xi32>
    %265 = arith.cmpi eq, %233, %264 : vector<8x32xi32>
    %cst_102 = arith.constant 1.000000e+00 : f32
    %cst_103 = arith.constant 0.000000e+00 : f32
    %266 = vector.broadcast %cst_102 : f32 to vector<8x32xf32>
    %267 = vector.broadcast %cst_103 : f32 to vector<8x32xf32>
    %268 = arith.select %265, %266, %267 : vector<8x32xi1>, vector<8x32xf32>
    %cst_104 = arith.constant dense<0.000000e+00> : vector<8x32xf32>
    %269 = tpu.matmul %268, %231, %cst_104 {dimension_numbers = #tpu.dot_dimension_numbers<[1], [0], [0], [1], [0, 0, 1, 1], [], []>} : vector<8x32xf32>, vector<32x32xf32>, vector<8x32xf32> -> vector<8x32xf32>
    %270 = tpu.concatenate %242, %251, %260, %269 in 1 : vector<8x32xf32>, vector<8x32xf32>, vector<8x32xf32>, vector<8x32xf32> -> vector<8x128xf32>
    %c0_105 = arith.constant 0 : index
    %c0_106 = arith.constant 0 : index
    %271 = vector.load %arg3[%c0_105, %c0_106] : memref<8x128xf32, #tpu.memory_space<vmem>>, vector<8x128xf32>
    %272 = arith.addf %270, %271 : vector<8x128xf32>
    %c0_107 = arith.constant 0 : index
    %c0_108 = arith.constant 0 : index
    %273 = vector.load %arg11[%c0_107, %c0_108] : memref<1x128xf32, #tpu.memory_space<vmem>>, vector<1x128xf32>
    %c0_109 = arith.constant 0 : index
    %c0_110 = arith.constant 0 : index
    %274 = vector.load %arg12[%c0_109, %c0_110] : memref<1x128xf32, #tpu.memory_space<vmem>>, vector<1x128xf32>
    %cst_111 = arith.constant dense<0.000000e+00> : vector<8xf32>
    %275 = vector.multi_reduction <add>, %272, %cst_111 [1] : vector<8x128xf32> to vector<8xf32>
    %276 = vector.shape_cast %275 : vector<8xf32> to vector<8x1xf32>
    %cst_112 = arith.constant 1.280000e+02 : f32
    %277 = vector.broadcast %cst_112 : f32 to vector<8x1xf32>
    %278 = arith.divf %276, %277 : vector<8x1xf32>
    %279 = vector.broadcast %278 : vector<8x1xf32> to vector<8x128xf32>
    %280 = arith.subf %272, %279 : vector<8x128xf32>
    %281 = arith.mulf %280, %280 : vector<8x128xf32>
    %cst_113 = arith.constant dense<0.000000e+00> : vector<8xf32>
    %282 = vector.multi_reduction <add>, %281, %cst_113 [1] : vector<8x128xf32> to vector<8xf32>
    %283 = vector.shape_cast %282 : vector<8xf32> to vector<8x1xf32>
    %cst_114 = arith.constant 1.280000e+02 : f32
    %284 = vector.broadcast %cst_114 : f32 to vector<8x1xf32>
    %285 = arith.divf %283, %284 : vector<8x1xf32>
    %286 = vector.broadcast %278 : vector<8x1xf32> to vector<8x128xf32>
    %287 = arith.subf %272, %286 : vector<8x128xf32>
    %cst_115 = arith.constant 9.99999974E-6 : f32
    %288 = vector.broadcast %cst_115 : f32 to vector<8x1xf32>
    %289 = arith.addf %285, %288 : vector<8x1xf32>
    %290 = math.rsqrt %289 : vector<8x1xf32>
    %291 = vector.broadcast %290 : vector<8x1xf32> to vector<8x128xf32>
    %292 = arith.mulf %287, %291 : vector<8x128xf32>
    %293 = vector.broadcast %273 : vector<1x128xf32> to vector<8x128xf32>
    %294 = arith.mulf %292, %293 : vector<8x128xf32>
    %295 = vector.broadcast %274 : vector<1x128xf32> to vector<8x128xf32>
    %296 = arith.addf %294, %295 : vector<8x128xf32>
    %c0_116 = arith.constant 0 : index
    %c0_117 = arith.constant 0 : index
    %297 = vector.load %arg13[%c0_116, %c0_117] : memref<128x384xf32, #tpu.memory_space<vmem>>, vector<128x384xf32>
    %cst_118 = arith.constant dense<0.000000e+00> : vector<8x384xf32>
    %298 = tpu.matmul %296, %297, %cst_118 {dimension_numbers = #tpu.dot_dimension_numbers<[1], [0], [0], [1], [0, 0, 1, 1], [], []>} : vector<8x128xf32>, vector<128x384xf32>, vector<8x384xf32> -> vector<8x384xf32>
    %299 = vector.extract_strided_slice %298 {offsets = [0, 0], sizes = [8, 16], strides = [1, 1]} : vector<8x384xf32> to vector<8x16xf32>
    %300 = vector.extract_strided_slice %298 {offsets = [0, 128], sizes = [8, 16], strides = [1, 1]} : vector<8x384xf32> to vector<8x16xf32>
    %301 = vector.extract_strided_slice %298 {offsets = [0, 256], sizes = [8, 16], strides = [1, 1]} : vector<8x384xf32> to vector<8x16xf32>
    %cst_119 = arith.constant dense<0.000000e+00> : vector<8x8xf32>
    %302 = tpu.matmul %299, %300, %cst_119 {dimension_numbers = #tpu.dot_dimension_numbers<[1], [1], [0], [0], [0, 0, 1, 0], [], []>} : vector<8x16xf32>, vector<8x16xf32>, vector<8x8xf32> -> vector<8x8xf32>
    %cst_120 = arith.constant 2.500000e-01 : f32
    %303 = vector.broadcast %cst_120 : f32 to vector<8x8xf32>
    %304 = arith.mulf %302, %303 : vector<8x8xf32>
    %cst_121 = arith.constant dense<0xFF800000> : vector<8xf32>
    %305 = vector.multi_reduction <maximumf>, %304, %cst_121 [1] : vector<8x8xf32> to vector<8xf32>
    %306 = vector.shape_cast %305 : vector<8xf32> to vector<8x1xf32>
    %307 = vector.broadcast %306 : vector<8x1xf32> to vector<8x8xf32>
    %308 = arith.subf %304, %307 : vector<8x8xf32>
    %309 = math.exp %308 : vector<8x8xf32>
    %cst_122 = arith.constant dense<0.000000e+00> : vector<8xf32>
    %310 = vector.multi_reduction <add>, %309, %cst_122 [1] : vector<8x8xf32> to vector<8xf32>
    %311 = vector.shape_cast %310 : vector<8xf32> to vector<8x1xf32>
    %312 = tpu.reciprocal %311 {approx = true} : vector<8x1xf32> -> vector<8x1xf32>
    %313 = vector.broadcast %312 : vector<8x1xf32> to vector<8x8xf32>
    %314 = arith.mulf %309, %313 : vector<8x8xf32>
    %cst_123 = arith.constant dense<0.000000e+00> : vector<8x16xf32>
    %315 = tpu.matmul %314, %301, %cst_123 {dimension_numbers = #tpu.dot_dimension_numbers<[1], [0], [0], [1], [0, 0, 1, 1], [], []>} : vector<8x8xf32>, vector<8x16xf32>, vector<8x16xf32> -> vector<8x16xf32>
    %c0_124 = arith.constant 0 : index
    %c0_125 = arith.constant 0 : index
    %316 = vector.load %arg24[%c0_124, %c0_125] : memref<8x128xf32, #tpu.memory_space<vmem>>, vector<8x16xf32>
    tpu.vector_store %arg24[%c0_124, %c0_125], %315 {strides = array<i32>} : memref<8x128xf32, #tpu.memory_space<vmem>>, vector<8x16xf32>,
    %317 = vector.extract_strided_slice %298 {offsets = [0, 16], sizes = [8, 16], strides = [1, 1]} : vector<8x384xf32> to vector<8x16xf32>
    %318 = vector.extract_strided_slice %298 {offsets = [0, 144], sizes = [8, 16], strides = [1, 1]} : vector<8x384xf32> to vector<8x16xf32>
    %319 = vector.extract_strided_slice %298 {offsets = [0, 272], sizes = [8, 16], strides = [1, 1]} : vector<8x384xf32> to vector<8x16xf32>
    %cst_126 = arith.constant dense<0.000000e+00> : vector<8x8xf32>
    %320 = tpu.matmul %317, %318, %cst_126 {dimension_numbers = #tpu.dot_dimension_numbers<[1], [1], [0], [0], [0, 0, 1, 0], [], []>} : vector<8x16xf32>, vector<8x16xf32>, vector<8x8xf32> -> vector<8x8xf32>
    %cst_127 = arith.constant 2.500000e-01 : f32
    %321 = vector.broadcast %cst_127 : f32 to vector<8x8xf32>
    %322 = arith.mulf %320, %321 : vector<8x8xf32>
    %cst_128 = arith.constant dense<0xFF800000> : vector<8xf32>
    %323 = vector.multi_reduction <maximumf>, %322, %cst_128 [1] : vector<8x8xf32> to vector<8xf32>
    %324 = vector.shape_cast %323 : vector<8xf32> to vector<8x1xf32>
    %325 = vector.broadcast %324 : vector<8x1xf32> to vector<8x8xf32>
    %326 = arith.subf %322, %325 : vector<8x8xf32>
    %327 = math.exp %326 : vector<8x8xf32>
    %cst_129 = arith.constant dense<0.000000e+00> : vector<8xf32>
    %328 = vector.multi_reduction <add>, %327, %cst_129 [1] : vector<8x8xf32> to vector<8xf32>
    %329 = vector.shape_cast %328 : vector<8xf32> to vector<8x1xf32>
    %330 = tpu.reciprocal %329 {approx = true} : vector<8x1xf32> -> vector<8x1xf32>
    %331 = vector.broadcast %330 : vector<8x1xf32> to vector<8x8xf32>
    %332 = arith.mulf %327, %331 : vector<8x8xf32>
    %cst_130 = arith.constant dense<0.000000e+00> : vector<8x16xf32>
    %333 = tpu.matmul %332, %319, %cst_130 {dimension_numbers = #tpu.dot_dimension_numbers<[1], [0], [0], [1], [0, 0, 1, 1], [], []>} : vector<8x8xf32>, vector<8x16xf32>, vector<8x16xf32> -> vector<8x16xf32>
    %c0_131 = arith.constant 0 : index
    %c16_132 = arith.constant 16 : index
    %334 = vector.load %arg24[%c0_131, %c16_132] : memref<8x128xf32, #tpu.memory_space<vmem>>, vector<8x16xf32>
    tpu.vector_store %arg24[%c0_131, %c16_132], %333 {strides = array<i32>} : memref<8x128xf32, #tpu.memory_space<vmem>>, vector<8x16xf32>,
    %335 = vector.extract_strided_slice %298 {offsets = [0, 32], sizes = [8, 16], strides = [1, 1]} : vector<8x384xf32> to vector<8x16xf32>
    %336 = vector.extract_strided_slice %298 {offsets = [0, 160], sizes = [8, 16], strides = [1, 1]} : vector<8x384xf32> to vector<8x16xf32>
    %337 = vector.extract_strided_slice %298 {offsets = [0, 288], sizes = [8, 16], strides = [1, 1]} : vector<8x384xf32> to vector<8x16xf32>
    %cst_133 = arith.constant dense<0.000000e+00> : vector<8x8xf32>
    %338 = tpu.matmul %335, %336, %cst_133 {dimension_numbers = #tpu.dot_dimension_numbers<[1], [1], [0], [0], [0, 0, 1, 0], [], []>} : vector<8x16xf32>, vector<8x16xf32>, vector<8x8xf32> -> vector<8x8xf32>
    %cst_134 = arith.constant 2.500000e-01 : f32
    %339 = vector.broadcast %cst_134 : f32 to vector<8x8xf32>
    %340 = arith.mulf %338, %339 : vector<8x8xf32>
    %cst_135 = arith.constant dense<0xFF800000> : vector<8xf32>
    %341 = vector.multi_reduction <maximumf>, %340, %cst_135 [1] : vector<8x8xf32> to vector<8xf32>
    %342 = vector.shape_cast %341 : vector<8xf32> to vector<8x1xf32>
    %343 = vector.broadcast %342 : vector<8x1xf32> to vector<8x8xf32>
    %344 = arith.subf %340, %343 : vector<8x8xf32>
    %345 = math.exp %344 : vector<8x8xf32>
    %cst_136 = arith.constant dense<0.000000e+00> : vector<8xf32>
    %346 = vector.multi_reduction <add>, %345, %cst_136 [1] : vector<8x8xf32> to vector<8xf32>
    %347 = vector.shape_cast %346 : vector<8xf32> to vector<8x1xf32>
    %348 = tpu.reciprocal %347 {approx = true} : vector<8x1xf32> -> vector<8x1xf32>
    %349 = vector.broadcast %348 : vector<8x1xf32> to vector<8x8xf32>
    %350 = arith.mulf %345, %349 : vector<8x8xf32>
    %cst_137 = arith.constant dense<0.000000e+00> : vector<8x16xf32>
    %351 = tpu.matmul %350, %337, %cst_137 {dimension_numbers = #tpu.dot_dimension_numbers<[1], [0], [0], [1], [0, 0, 1, 1], [], []>} : vector<8x8xf32>, vector<8x16xf32>, vector<8x16xf32> -> vector<8x16xf32>
    %c0_138 = arith.constant 0 : index
    %c32 = arith.constant 32 : index
    %352 = vector.load %arg24[%c0_138, %c32] : memref<8x128xf32, #tpu.memory_space<vmem>>, vector<8x16xf32>
    tpu.vector_store %arg24[%c0_138, %c32], %351 {strides = array<i32>} : memref<8x128xf32, #tpu.memory_space<vmem>>, vector<8x16xf32>,
    %353 = vector.extract_strided_slice %298 {offsets = [0, 48], sizes = [8, 16], strides = [1, 1]} : vector<8x384xf32> to vector<8x16xf32>
    %354 = vector.extract_strided_slice %298 {offsets = [0, 176], sizes = [8, 16], strides = [1, 1]} : vector<8x384xf32> to vector<8x16xf32>
    %355 = vector.extract_strided_slice %298 {offsets = [0, 304], sizes = [8, 16], strides = [1, 1]} : vector<8x384xf32> to vector<8x16xf32>
    %cst_139 = arith.constant dense<0.000000e+00> : vector<8x8xf32>
    %356 = tpu.matmul %353, %354, %cst_139 {dimension_numbers = #tpu.dot_dimension_numbers<[1], [1], [0], [0], [0, 0, 1, 0], [], []>} : vector<8x16xf32>, vector<8x16xf32>, vector<8x8xf32> -> vector<8x8xf32>
    %cst_140 = arith.constant 2.500000e-01 : f32
    %357 = vector.broadcast %cst_140 : f32 to vector<8x8xf32>
    %358 = arith.mulf %356, %357 : vector<8x8xf32>
    %cst_141 = arith.constant dense<0xFF800000> : vector<8xf32>
    %359 = vector.multi_reduction <maximumf>, %358, %cst_141 [1] : vector<8x8xf32> to vector<8xf32>
    %360 = vector.shape_cast %359 : vector<8xf32> to vector<8x1xf32>
    %361 = vector.broadcast %360 : vector<8x1xf32> to vector<8x8xf32>
    %362 = arith.subf %358, %361 : vector<8x8xf32>
    %363 = math.exp %362 : vector<8x8xf32>
    %cst_142 = arith.constant dense<0.000000e+00> : vector<8xf32>
    %364 = vector.multi_reduction <add>, %363, %cst_142 [1] : vector<8x8xf32> to vector<8xf32>
    %365 = vector.shape_cast %364 : vector<8xf32> to vector<8x1xf32>
    %366 = tpu.reciprocal %365 {approx = true} : vector<8x1xf32> -> vector<8x1xf32>
    %367 = vector.broadcast %366 : vector<8x1xf32> to vector<8x8xf32>
    %368 = arith.mulf %363, %367 : vector<8x8xf32>
    %cst_143 = arith.constant dense<0.000000e+00> : vector<8x16xf32>
    %369 = tpu.matmul %368, %355, %cst_143 {dimension_numbers = #tpu.dot_dimension_numbers<[1], [0], [0], [1], [0, 0, 1, 1], [], []>} : vector<8x8xf32>, vector<8x16xf32>, vector<8x16xf32> -> vector<8x16xf32>
    %c0_144 = arith.constant 0 : index
    %c48 = arith.constant 48 : index
    %370 = vector.load %arg24[%c0_144, %c48] : memref<8x128xf32, #tpu.memory_space<vmem>>, vector<8x16xf32>
    tpu.vector_store %arg24[%c0_144, %c48], %369 {strides = array<i32>} : memref<8x128xf32, #tpu.memory_space<vmem>>, vector<8x16xf32>,
    %371 = vector.extract_strided_slice %298 {offsets = [0, 64], sizes = [8, 16], strides = [1, 1]} : vector<8x384xf32> to vector<8x16xf32>
    %372 = vector.extract_strided_slice %298 {offsets = [0, 192], sizes = [8, 16], strides = [1, 1]} : vector<8x384xf32> to vector<8x16xf32>
    %373 = vector.extract_strided_slice %298 {offsets = [0, 320], sizes = [8, 16], strides = [1, 1]} : vector<8x384xf32> to vector<8x16xf32>
    %cst_145 = arith.constant dense<0.000000e+00> : vector<8x8xf32>
    %374 = tpu.matmul %371, %372, %cst_145 {dimension_numbers = #tpu.dot_dimension_numbers<[1], [1], [0], [0], [0, 0, 1, 0], [], []>} : vector<8x16xf32>, vector<8x16xf32>, vector<8x8xf32> -> vector<8x8xf32>
    %cst_146 = arith.constant 2.500000e-01 : f32
    %375 = vector.broadcast %cst_146 : f32 to vector<8x8xf32>
    %376 = arith.mulf %374, %375 : vector<8x8xf32>
    %cst_147 = arith.constant dense<0xFF800000> : vector<8xf32>
    %377 = vector.multi_reduction <maximumf>, %376, %cst_147 [1] : vector<8x8xf32> to vector<8xf32>
    %378 = vector.shape_cast %377 : vector<8xf32> to vector<8x1xf32>
    %379 = vector.broadcast %378 : vector<8x1xf32> to vector<8x8xf32>
    %380 = arith.subf %376, %379 : vector<8x8xf32>
    %381 = math.exp %380 : vector<8x8xf32>
    %cst_148 = arith.constant dense<0.000000e+00> : vector<8xf32>
    %382 = vector.multi_reduction <add>, %381, %cst_148 [1] : vector<8x8xf32> to vector<8xf32>
    %383 = vector.shape_cast %382 : vector<8xf32> to vector<8x1xf32>
    %384 = tpu.reciprocal %383 {approx = true} : vector<8x1xf32> -> vector<8x1xf32>
    %385 = vector.broadcast %384 : vector<8x1xf32> to vector<8x8xf32>
    %386 = arith.mulf %381, %385 : vector<8x8xf32>
    %cst_149 = arith.constant dense<0.000000e+00> : vector<8x16xf32>
    %387 = tpu.matmul %386, %373, %cst_149 {dimension_numbers = #tpu.dot_dimension_numbers<[1], [0], [0], [1], [0, 0, 1, 1], [], []>} : vector<8x8xf32>, vector<8x16xf32>, vector<8x16xf32> -> vector<8x16xf32>
    %c0_150 = arith.constant 0 : index
    %c64 = arith.constant 64 : index
    %388 = vector.load %arg24[%c0_150, %c64] : memref<8x128xf32, #tpu.memory_space<vmem>>, vector<8x16xf32>
    tpu.vector_store %arg24[%c0_150, %c64], %387 {strides = array<i32>} : memref<8x128xf32, #tpu.memory_space<vmem>>, vector<8x16xf32>,
    %389 = vector.extract_strided_slice %298 {offsets = [0, 80], sizes = [8, 16], strides = [1, 1]} : vector<8x384xf32> to vector<8x16xf32>
    %390 = vector.extract_strided_slice %298 {offsets = [0, 208], sizes = [8, 16], strides = [1, 1]} : vector<8x384xf32> to vector<8x16xf32>
    %391 = vector.extract_strided_slice %298 {offsets = [0, 336], sizes = [8, 16], strides = [1, 1]} : vector<8x384xf32> to vector<8x16xf32>
    %cst_151 = arith.constant dense<0.000000e+00> : vector<8x8xf32>
    %392 = tpu.matmul %389, %390, %cst_151 {dimension_numbers = #tpu.dot_dimension_numbers<[1], [1], [0], [0], [0, 0, 1, 0], [], []>} : vector<8x16xf32>, vector<8x16xf32>, vector<8x8xf32> -> vector<8x8xf32>
    %cst_152 = arith.constant 2.500000e-01 : f32
    %393 = vector.broadcast %cst_152 : f32 to vector<8x8xf32>
    %394 = arith.mulf %392, %393 : vector<8x8xf32>
    %cst_153 = arith.constant dense<0xFF800000> : vector<8xf32>
    %395 = vector.multi_reduction <maximumf>, %394, %cst_153 [1] : vector<8x8xf32> to vector<8xf32>
    %396 = vector.shape_cast %395 : vector<8xf32> to vector<8x1xf32>
    %397 = vector.broadcast %396 : vector<8x1xf32> to vector<8x8xf32>
    %398 = arith.subf %394, %397 : vector<8x8xf32>
    %399 = math.exp %398 : vector<8x8xf32>
    %cst_154 = arith.constant dense<0.000000e+00> : vector<8xf32>
    %400 = vector.multi_reduction <add>, %399, %cst_154 [1] : vector<8x8xf32> to vector<8xf32>
    %401 = vector.shape_cast %400 : vector<8xf32> to vector<8x1xf32>
    %402 = tpu.reciprocal %401 {approx = true} : vector<8x1xf32> -> vector<8x1xf32>
    %403 = vector.broadcast %402 : vector<8x1xf32> to vector<8x8xf32>
    %404 = arith.mulf %399, %403 : vector<8x8xf32>
    %cst_155 = arith.constant dense<0.000000e+00> : vector<8x16xf32>
    %405 = tpu.matmul %404, %391, %cst_155 {dimension_numbers = #tpu.dot_dimension_numbers<[1], [0], [0], [1], [0, 0, 1, 1], [], []>} : vector<8x8xf32>, vector<8x16xf32>, vector<8x16xf32> -> vector<8x16xf32>
    %c0_156 = arith.constant 0 : index
    %c80 = arith.constant 80 : index
    %406 = vector.load %arg24[%c0_156, %c80] : memref<8x128xf32, #tpu.memory_space<vmem>>, vector<8x16xf32>
    tpu.vector_store %arg24[%c0_156, %c80], %405 {strides = array<i32>} : memref<8x128xf32, #tpu.memory_space<vmem>>, vector<8x16xf32>,
    %407 = vector.extract_strided_slice %298 {offsets = [0, 96], sizes = [8, 16], strides = [1, 1]} : vector<8x384xf32> to vector<8x16xf32>
    %408 = vector.extract_strided_slice %298 {offsets = [0, 224], sizes = [8, 16], strides = [1, 1]} : vector<8x384xf32> to vector<8x16xf32>
    %409 = vector.extract_strided_slice %298 {offsets = [0, 352], sizes = [8, 16], strides = [1, 1]} : vector<8x384xf32> to vector<8x16xf32>
    %cst_157 = arith.constant dense<0.000000e+00> : vector<8x8xf32>
    %410 = tpu.matmul %407, %408, %cst_157 {dimension_numbers = #tpu.dot_dimension_numbers<[1], [1], [0], [0], [0, 0, 1, 0], [], []>} : vector<8x16xf32>, vector<8x16xf32>, vector<8x8xf32> -> vector<8x8xf32>
    %cst_158 = arith.constant 2.500000e-01 : f32
    %411 = vector.broadcast %cst_158 : f32 to vector<8x8xf32>
    %412 = arith.mulf %410, %411 : vector<8x8xf32>
    %cst_159 = arith.constant dense<0xFF800000> : vector<8xf32>
    %413 = vector.multi_reduction <maximumf>, %412, %cst_159 [1] : vector<8x8xf32> to vector<8xf32>
    %414 = vector.shape_cast %413 : vector<8xf32> to vector<8x1xf32>
    %415 = vector.broadcast %414 : vector<8x1xf32> to vector<8x8xf32>
    %416 = arith.subf %412, %415 : vector<8x8xf32>
    %417 = math.exp %416 : vector<8x8xf32>
    %cst_160 = arith.constant dense<0.000000e+00> : vector<8xf32>
    %418 = vector.multi_reduction <add>, %417, %cst_160 [1] : vector<8x8xf32> to vector<8xf32>
    %419 = vector.shape_cast %418 : vector<8xf32> to vector<8x1xf32>
    %420 = tpu.reciprocal %419 {approx = true} : vector<8x1xf32> -> vector<8x1xf32>
    %421 = vector.broadcast %420 : vector<8x1xf32> to vector<8x8xf32>
    %422 = arith.mulf %417, %421 : vector<8x8xf32>
    %cst_161 = arith.constant dense<0.000000e+00> : vector<8x16xf32>
    %423 = tpu.matmul %422, %409, %cst_161 {dimension_numbers = #tpu.dot_dimension_numbers<[1], [0], [0], [1], [0, 0, 1, 1], [], []>} : vector<8x8xf32>, vector<8x16xf32>, vector<8x16xf32> -> vector<8x16xf32>
    %c0_162 = arith.constant 0 : index
    %c96 = arith.constant 96 : index
    %424 = vector.load %arg24[%c0_162, %c96] : memref<8x128xf32, #tpu.memory_space<vmem>>, vector<8x16xf32>
    tpu.vector_store %arg24[%c0_162, %c96], %423 {strides = array<i32>} : memref<8x128xf32, #tpu.memory_space<vmem>>, vector<8x16xf32>,
    %425 = vector.extract_strided_slice %298 {offsets = [0, 112], sizes = [8, 16], strides = [1, 1]} : vector<8x384xf32> to vector<8x16xf32>
    %426 = vector.extract_strided_slice %298 {offsets = [0, 240], sizes = [8, 16], strides = [1, 1]} : vector<8x384xf32> to vector<8x16xf32>
    %427 = vector.extract_strided_slice %298 {offsets = [0, 368], sizes = [8, 16], strides = [1, 1]} : vector<8x384xf32> to vector<8x16xf32>
    %cst_163 = arith.constant dense<0.000000e+00> : vector<8x8xf32>
    %428 = tpu.matmul %425, %426, %cst_163 {dimension_numbers = #tpu.dot_dimension_numbers<[1], [1], [0], [0], [0, 0, 1, 0], [], []>} : vector<8x16xf32>, vector<8x16xf32>, vector<8x8xf32> -> vector<8x8xf32>
    %cst_164 = arith.constant 2.500000e-01 : f32
    %429 = vector.broadcast %cst_164 : f32 to vector<8x8xf32>
    %430 = arith.mulf %428, %429 : vector<8x8xf32>
    %cst_165 = arith.constant dense<0xFF800000> : vector<8xf32>
    %431 = vector.multi_reduction <maximumf>, %430, %cst_165 [1] : vector<8x8xf32> to vector<8xf32>
    %432 = vector.shape_cast %431 : vector<8xf32> to vector<8x1xf32>
    %433 = vector.broadcast %432 : vector<8x1xf32> to vector<8x8xf32>
    %434 = arith.subf %430, %433 : vector<8x8xf32>
    %435 = math.exp %434 : vector<8x8xf32>
    %cst_166 = arith.constant dense<0.000000e+00> : vector<8xf32>
    %436 = vector.multi_reduction <add>, %435, %cst_166 [1] : vector<8x8xf32> to vector<8xf32>
    %437 = vector.shape_cast %436 : vector<8xf32> to vector<8x1xf32>
    %438 = tpu.reciprocal %437 {approx = true} : vector<8x1xf32> -> vector<8x1xf32>
    %439 = vector.broadcast %438 : vector<8x1xf32> to vector<8x8xf32>
    %440 = arith.mulf %435, %439 : vector<8x8xf32>
    %cst_167 = arith.constant dense<0.000000e+00> : vector<8x16xf32>
    %441 = tpu.matmul %440, %427, %cst_167 {dimension_numbers = #tpu.dot_dimension_numbers<[1], [0], [0], [1], [0, 0, 1, 1], [], []>} : vector<8x8xf32>, vector<8x16xf32>, vector<8x16xf32> -> vector<8x16xf32>
    %c0_168 = arith.constant 0 : index
    %c112 = arith.constant 112 : index
    %442 = vector.load %arg24[%c0_168, %c112] : memref<8x128xf32, #tpu.memory_space<vmem>>, vector<8x16xf32>
    tpu.vector_store %arg24[%c0_168, %c112], %441 {strides = array<i32>} : memref<8x128xf32, #tpu.memory_space<vmem>>, vector<8x16xf32>,
    %c0_169 = arith.constant 0 : index
    %c0_170 = arith.constant 0 : index
    %443 = vector.load %arg24[%c0_169, %c0_170] : memref<8x128xf32, #tpu.memory_space<vmem>>, vector<8x128xf32>
    %c0_171 = arith.constant 0 : index
    %c0_172 = arith.constant 0 : index
    %444 = vector.load %arg14[%c0_171, %c0_172] : memref<128x128xf32, #tpu.memory_space<vmem>>, vector<128x128xf32>
    %cst_173 = arith.constant dense<0.000000e+00> : vector<8x128xf32>
    %445 = tpu.matmul %443, %444, %cst_173 {dimension_numbers = #tpu.dot_dimension_numbers<[1], [0], [0], [1], [0, 0, 1, 1], [], []>} : vector<8x128xf32>, vector<128x128xf32>, vector<8x128xf32> -> vector<8x128xf32>
    %c0_174 = arith.constant 0 : index
    %c0_175 = arith.constant 0 : index
    %446 = vector.load %arg15[%c0_174, %c0_175] : memref<1x128xf32, #tpu.memory_space<vmem>>, vector<1x128xf32>
    %447 = vector.broadcast %446 : vector<1x128xf32> to vector<8x128xf32>
    %448 = arith.addf %445, %447 : vector<8x128xf32>
    %449 = arith.addf %272, %448 : vector<8x128xf32>
    %c0_176 = arith.constant 0 : index
    %c0_177 = arith.constant 0 : index
    %450 = vector.load %arg16[%c0_176, %c0_177] : memref<1x128xf32, #tpu.memory_space<vmem>>, vector<1x128xf32>
    %c0_178 = arith.constant 0 : index
    %c0_179 = arith.constant 0 : index
    %451 = vector.load %arg17[%c0_178, %c0_179] : memref<1x128xf32, #tpu.memory_space<vmem>>, vector<1x128xf32>
    %cst_180 = arith.constant dense<0.000000e+00> : vector<8xf32>
    %452 = vector.multi_reduction <add>, %449, %cst_180 [1] : vector<8x128xf32> to vector<8xf32>
    %453 = vector.shape_cast %452 : vector<8xf32> to vector<8x1xf32>
    %cst_181 = arith.constant 1.280000e+02 : f32
    %454 = vector.broadcast %cst_181 : f32 to vector<8x1xf32>
    %455 = arith.divf %453, %454 : vector<8x1xf32>
    %456 = vector.broadcast %455 : vector<8x1xf32> to vector<8x128xf32>
    %457 = arith.subf %449, %456 : vector<8x128xf32>
    %458 = arith.mulf %457, %457 : vector<8x128xf32>
    %cst_182 = arith.constant dense<0.000000e+00> : vector<8xf32>
    %459 = vector.multi_reduction <add>, %458, %cst_182 [1] : vector<8x128xf32> to vector<8xf32>
    %460 = vector.shape_cast %459 : vector<8xf32> to vector<8x1xf32>
    %cst_183 = arith.constant 1.280000e+02 : f32
    %461 = vector.broadcast %cst_183 : f32 to vector<8x1xf32>
    %462 = arith.divf %460, %461 : vector<8x1xf32>
    %463 = vector.broadcast %455 : vector<8x1xf32> to vector<8x128xf32>
    %464 = arith.subf %449, %463 : vector<8x128xf32>
    %cst_184 = arith.constant 9.99999974E-6 : f32
    %465 = vector.broadcast %cst_184 : f32 to vector<8x1xf32>
    %466 = arith.addf %462, %465 : vector<8x1xf32>
    %467 = math.rsqrt %466 : vector<8x1xf32>
    %468 = vector.broadcast %467 : vector<8x1xf32> to vector<8x128xf32>
    %469 = arith.mulf %464, %468 : vector<8x128xf32>
    %470 = vector.broadcast %450 : vector<1x128xf32> to vector<8x128xf32>
    %471 = arith.mulf %469, %470 : vector<8x128xf32>
    %472 = vector.broadcast %451 : vector<1x128xf32> to vector<8x128xf32>
    %473 = arith.addf %471, %472 : vector<8x128xf32>
    %c0_185 = arith.constant 0 : index
    %c0_186 = arith.constant 0 : index
    %474 = vector.load %arg18[%c0_185, %c0_186] : memref<128x128xf32, #tpu.memory_space<vmem>>, vector<128x128xf32>
    %cst_187 = arith.constant dense<0.000000e+00> : vector<8x128xf32>
    %475 = tpu.matmul %473, %474, %cst_187 {dimension_numbers = #tpu.dot_dimension_numbers<[1], [0], [0], [1], [0, 0, 1, 1], [], []>} : vector<8x128xf32>, vector<128x128xf32>, vector<8x128xf32> -> vector<8x128xf32>
    %c0_188 = arith.constant 0 : index
    %c0_189 = arith.constant 0 : index
    %476 = vector.load %arg19[%c0_188, %c0_189] : memref<1x128xf32, #tpu.memory_space<vmem>>, vector<1x128xf32>
    %477 = vector.broadcast %476 : vector<1x128xf32> to vector<8x128xf32>
    %478 = arith.addf %475, %477 : vector<8x128xf32>
    %cst_190 = arith.constant 5.000000e-01 : f32
    %479 = vector.broadcast %cst_190 : f32 to vector<8x128xf32>
    %480 = arith.mulf %479, %478 : vector<8x128xf32>
    %cst_191 = arith.constant 0.707106769 : f32
    %481 = vector.broadcast %cst_191 : f32 to vector<8x128xf32>
    %482 = arith.mulf %478, %481 : vector<8x128xf32>
    %483 = math.erf %482 : vector<8x128xf32>
    %cst_192 = arith.constant 1.000000e+00 : f32
    %484 = vector.broadcast %cst_192 : f32 to vector<8x128xf32>
    %485 = arith.addf %484, %483 : vector<8x128xf32>
    %486 = arith.mulf %480, %485 : vector<8x128xf32>
    %c0_193 = arith.constant 0 : index
    %c0_194 = arith.constant 0 : index
    %487 = vector.load %arg20[%c0_193, %c0_194] : memref<128x128xf32, #tpu.memory_space<vmem>>, vector<128x128xf32>
    %cst_195 = arith.constant dense<0.000000e+00> : vector<8x128xf32>
    %488 = tpu.matmul %486, %487, %cst_195 {dimension_numbers = #tpu.dot_dimension_numbers<[1], [0], [0], [1], [0, 0, 1, 1], [], []>} : vector<8x128xf32>, vector<128x128xf32>, vector<8x128xf32> -> vector<8x128xf32>
    %c0_196 = arith.constant 0 : index
    %c0_197 = arith.constant 0 : index
    %489 = vector.load %arg21[%c0_196, %c0_197] : memref<1x128xf32, #tpu.memory_space<vmem>>, vector<1x128xf32>
    %490 = vector.broadcast %489 : vector<1x128xf32> to vector<8x128xf32>
    %491 = arith.addf %488, %490 : vector<8x128xf32>
    %492 = arith.addf %449, %491 : vector<8x128xf32>
    %c0_198 = arith.constant 0 : index
    %c0_199 = arith.constant 0 : index
    %c0_200 = arith.constant 0 : index
    %493 = vector.load %arg22[%c0_198, %c0_199, %c0_200] : memref<1x8x128xf32, #tpu.memory_space<vmem>>, vector<1x8x128xf32>
    %494 = vector.shape_cast %493 : vector<1x8x128xf32> to vector<8x128xf32>
    %495 = vector.shape_cast %492 : vector<8x128xf32> to vector<1x8x128xf32>
    tpu.vector_store %arg22[%c0_198, %c0_199, %c0_200], %495 {strides = array<i32>} : memref<1x8x128xf32, #tpu.memory_space<vmem>>, vector<1x8x128xf32>,
    return
  }
  func.func @transform_0(%arg0: i32) -> (i32, i32, i32) {
    %c0_i32 = arith.constant 0 : i32
    %c0_i32_0 = arith.constant 0 : i32
    %c0_i32_1 = arith.constant 0 : i32
    return %arg0, %c0_i32, %c0_i32_0 : i32, i32, i32
  }
  func.func @transform_1(%arg0: i32) -> (i32, i32) {
    %c0_i32 = arith.constant 0 : i32
    %c0_i32_0 = arith.constant 0 : i32
    %c0_i32_1 = arith.constant 0 : i32
    return %c0_i32, %c0_i32_0 : i32, i32
  }
  func.func @transform_2(%arg0: i32) -> (i32, i32) {
    %c0_i32 = arith.constant 0 : i32
    %c0_i32_0 = arith.constant 0 : i32
    %c0_i32_1 = arith.constant 0 : i32
    return %c0_i32, %c0_i32_0 : i32, i32
  }
  func.func @transform_3(%arg0: i32) -> (i32, i32) {
    %c0_i32 = arith.constant 0 : i32
    %c0_i32_0 = arith.constant 0 : i32
    %c0_i32_1 = arith.constant 0 : i32
    return %c0_i32, %c0_i32_0 : i32, i32
  }
  func.func @transform_4(%arg0: i32) -> (i32, i32) {
    %c0_i32 = arith.constant 0 : i32
    %c0_i32_0 = arith.constant 0 : i32
    %c0_i32_1 = arith.constant 0 : i32
    return %c0_i32, %c0_i32_0 : i32, i32
  }
  func.func @transform_5(%arg0: i32) -> (i32, i32) {
    %c0_i32 = arith.constant 0 : i32
    %c0_i32_0 = arith.constant 0 : i32
    %c0_i32_1 = arith.constant 0 : i32
    return %c0_i32, %c0_i32_0 : i32, i32
  }
  func.func @transform_6(%arg0: i32) -> (i32, i32) {
    %c0_i32 = arith.constant 0 : i32
    %c0_i32_0 = arith.constant 0 : i32
    %c0_i32_1 = arith.constant 0 : i32
    return %c0_i32, %c0_i32_0 : i32, i32
  }
  func.func @transform_7(%arg0: i32) -> (i32, i32) {
    %c0_i32 = arith.constant 0 : i32
    %c0_i32_0 = arith.constant 0 : i32
    %c0_i32_1 = arith.constant 0 : i32
    return %c0_i32, %c0_i32_0 : i32, i32
  }
  func.func @transform_8(%arg0: i32) -> (i32, i32) {
    %c0_i32 = arith.constant 0 : i32
    %c0_i32_0 = arith.constant 0 : i32
    %c0_i32_1 = arith.constant 0 : i32
    return %c0_i32, %c0_i32_0 : i32, i32
  }
  func.func @transform_9(%arg0: i32) -> (i32, i32) {
    %c0_i32 = arith.constant 0 : i32
    %c0_i32_0 = arith.constant 0 : i32
    %c0_i32_1 = arith.constant 0 : i32
    return %c0_i32, %c0_i32_0 : i32, i32
  }
  func.func @transform_10(%arg0: i32) -> (i32, i32) {
    %c0_i32 = arith.constant 0 : i32
    %c0_i32_0 = arith.constant 0 : i32
    %c0_i32_1 = arith.constant 0 : i32
    return %c0_i32, %c0_i32_0 : i32, i32
  }
  func.func @transform_11(%arg0: i32) -> (i32, i32) {
    %c0_i32 = arith.constant 0 : i32
    %c0_i32_0 = arith.constant 0 : i32
    %c0_i32_1 = arith.constant 0 : i32
    return %c0_i32, %c0_i32_0 : i32, i32
  }
  func.func @transform_12(%arg0: i32) -> (i32, i32) {
    %c0_i32 = arith.constant 0 : i32
    %c0_i32_0 = arith.constant 0 : i32
    %c0_i32_1 = arith.constant 0 : i32
    return %c0_i32, %c0_i32_0 : i32, i32
  }
  func.func @transform_13(%arg0: i32) -> (i32, i32) {
    %c0_i32 = arith.constant 0 : i32
    %c0_i32_0 = arith.constant 0 : i32
    %c0_i32_1 = arith.constant 0 : i32
    return %c0_i32, %c0_i32_0 : i32, i32
  }
  func.func @transform_14(%arg0: i32) -> (i32, i32) {
    %c0_i32 = arith.constant 0 : i32
    %c0_i32_0 = arith.constant 0 : i32
    %c0_i32_1 = arith.constant 0 : i32
    return %c0_i32, %c0_i32_0 : i32, i32
  }
  func.func @transform_15(%arg0: i32) -> (i32, i32) {
    %c0_i32 = arith.constant 0 : i32
    %c0_i32_0 = arith.constant 0 : i32
    %c0_i32_1 = arith.constant 0 : i32
    return %c0_i32, %c0_i32_0 : i32, i32
  }
  func.func @transform_16(%arg0: i32) -> (i32, i32) {
    %c0_i32 = arith.constant 0 : i32
    %c0_i32_0 = arith.constant 0 : i32
    %c0_i32_1 = arith.constant 0 : i32
    return %c0_i32, %c0_i32_0 : i32, i32
  }
  func.func @transform_17(%arg0: i32) -> (i32, i32) {
    %c0_i32 = arith.constant 0 : i32
    %c0_i32_0 = arith.constant 0 : i32
    %c0_i32_1 = arith.constant 0 : i32
    return %c0_i32, %c0_i32_0 : i32, i32
  }
  func.func @transform_18(%arg0: i32) -> (i32, i32) {
    %c0_i32 = arith.constant 0 : i32
    %c0_i32_0 = arith.constant 0 : i32
    %c0_i32_1 = arith.constant 0 : i32
    return %c0_i32, %c0_i32_0 : i32, i32
  }
  func.func @transform_19(%arg0: i32) -> (i32, i32) {
    %c0_i32 = arith.constant 0 : i32
    %c0_i32_0 = arith.constant 0 : i32
    %c0_i32_1 = arith.constant 0 : i32
    return %c0_i32, %c0_i32_0 : i32, i32
  }
  func.func @transform_20(%arg0: i32) -> (i32, i32) {
    %c0_i32 = arith.constant 0 : i32
    %c0_i32_0 = arith.constant 0 : i32
    %c0_i32_1 = arith.constant 0 : i32
    return %c0_i32, %c0_i32_0 : i32, i32
  }
  func.func @transform_21(%arg0: i32) -> (i32, i32, i32) {
    %c0_i32 = arith.constant 0 : i32
    %c0_i32_0 = arith.constant 0 : i32
    %c0_i32_1 = arith.constant 0 : i32
    return %arg0, %c0_i32, %c0_i32_0 : i32, i32, i32
  }
}

</mosaic_0001>

<llo_original>
// kernel: tpu_custom_call.1
$region0: #{tpu_custom_call.1}
  #allocation0 [shape = 'u32[]', space=smem, size = 0x4, offset = 0x4, fixed_abs, tag = 'smem constant byte address 0x4 - core index']
  #allocation1 [shape = 'u32[144,128]{1,0:T(1,128)}', space=vmem, size = 0x12000, scoped, tag = 'internal scratch']
  #allocation2 [shape = 'f32[32,32]{1,0:T(8,128)}', space=vmem, size = 0x4000, scoped, tag = 'scratch operand']
  #allocation3 [shape = 'f32[8,128]{1,0:T(8,128)}', space=vmem, size = 0x1000, scoped, tag = 'scratch operand']
  %s0 = inlined_call_operand.hbm [shape: f32[2,32,32], index: 0, kind: input, shape index: {}]
  %s1 = inlined_call_operand.hbm [shape: f32[32,32], index: 1, kind: input, shape index: {}]
  %s2 = inlined_call_operand.hbm [shape: f32[8,128], index: 2, kind: input, shape index: {}]
  %s3 = inlined_call_operand.vmem [shape: f32[1,32], index: 3, kind: input, shape index: {}]
  %s4 = inlined_call_operand.vmem [shape: f32[1,32], index: 4, kind: input, shape index: {}]
  %s5 = inlined_call_operand.vmem [shape: f32[1,32], index: 5, kind: input, shape index: {}]
  %s6 = inlined_call_operand.vmem [shape: f32[1,32], index: 6, kind: input, shape index: {}]
  %s7 = inlined_call_operand.hbm [shape: f32[32,96], index: 7, kind: input, shape index: {}]
  %s8 = inlined_call_operand.hbm [shape: f32[32,32], index: 8, kind: input, shape index: {}]
  %s9 = inlined_call_operand.vmem [shape: f32[1,32], index: 9, kind: input, shape index: {}]
  %s10 = inlined_call_operand.vmem [shape: f32[1,128], index: 10, kind: input, shape index: {}]
  %s11 = inlined_call_operand.vmem [shape: f32[1,128], index: 11, kind: input, shape index: {}]
  %s12 = inlined_call_operand.hbm [shape: f32[128,384], index: 12, kind: input, shape index: {}]
  %s13 = inlined_call_operand.hbm [shape: f32[128,128], index: 13, kind: input, shape index: {}]
  %s14 = inlined_call_operand.vmem [shape: f32[1,128], index: 14, kind: input, shape index: {}]
  %s15 = inlined_call_operand.vmem [shape: f32[1,128], index: 15, kind: input, shape index: {}]
  %s16 = inlined_call_operand.vmem [shape: f32[1,128], index: 16, kind: input, shape index: {}]
  %s17 = inlined_call_operand.hbm [shape: f32[128,128], index: 17, kind: input, shape index: {}]
  %s18 = inlined_call_operand.vmem [shape: f32[1,128], index: 18, kind: input, shape index: {}]
  %s19 = inlined_call_operand.hbm [shape: f32[128,128], index: 19, kind: input, shape index: {}]
  %s20 = inlined_call_operand.vmem [shape: f32[1,128], index: 20, kind: input, shape index: {}]
  %s21 = inlined_call_operand.hbm [shape: f32[2,8,128], index: 21, kind: output, shape index: {}]
  %s22 = sld [smem:[#allocation0]]
  $region153: #{tpu_custom_call.1} parent=0
    _
  %s24 = ssub.s32 1, %s22
  %s25 = scalar_select 0, %s24, %s22
  $region1: #{tpu_custom_call.1} parent=0
    #allocation4 [shape = 'u8[32768]{0}', space=vmem, size = 0x8000, scoped, tag = 'input window, operand 0']
    #allocation5 [shape = 's32[2]{0}', space=sflag, size = 0x8, scoped, tag = 'scoped memory for tpu_custom_call.1']
    #allocation6 [shape = 's32[2]{0}', space=sflag, size = 0x8, scoped, tag = 'scoped memory for tpu_custom_call.1']
    #allocation7 [shape = 'u8[16384]{0}', space=vmem, size = 0x4000, scoped, tag = 'input window, operand 1, single buffered']
    #allocation8 [shape = 's32[1]{0}', space=sflag, size = 0x4, scoped, tag = 'scoped memory for tpu_custom_call.1']
    #allocation9 [shape = 'u8[4096]{0}', space=vmem, size = 0x1000, scoped, tag = 'input window, operand 2, single buffered']
    #allocation10 [shape = 'u8[16384]{0}', space=vmem, size = 0x4000, scoped, tag = 'input window, operand 7, single buffered']
    #allocation11 [shape = 's32[1]{0}', space=sflag, size = 0x4, scoped, tag = 'scoped memory for tpu_custom_call.1']
    #allocation12 [shape = 'u8[16384]{0}', space=vmem, size = 0x4000, scoped, tag = 'input window, operand 8, single buffered']
    #allocation13 [shape = 'u8[196608]{0}', space=vmem, size = 0x30000, scoped, tag = 'input window, operand 12, single buffered']
    #allocation14 [shape = 's32[1]{0}', space=sflag, size = 0x4, scoped, tag = 'scoped memory for tpu_custom_call.1']
    #allocation15 [shape = 'u8[65536]{0}', space=vmem, size = 0x10000, scoped, tag = 'input window, operand 13, single buffered']
    #allocation16 [shape = 'u8[65536]{0}', space=vmem, size = 0x10000, scoped, tag = 'input window, operand 17, single buffered']
    #allocation17 [shape = 's32[1]{0}', space=sflag, size = 0x4, scoped, tag = 'scoped memory for tpu_custom_call.1']
    #allocation18 [shape = 'u8[65536]{0}', space=vmem, size = 0x10000, scoped, tag = 'input window, operand 19, single buffered']
    #allocation19 [shape = 'u8[8192]{0}', space=vmem, size = 0x2000, scoped, tag = 'output window, operand 0']
    %26 = vsyncpa [#allocation5], 0
    %s27 = scalar_lea.sflag [#allocation5], 1
    %28 = vsyncpa %s27, 0
    %29 = vsyncpa [#allocation8], 0
    %30 = vsyncpa [#allocation11], 0
    %31 = vsyncpa [#allocation14], 0
    %32 = vsyncpa [#allocation17], 0
    %33 = vsyncpa [#allocation6], 0
    %s34 = scalar_lea.sflag [#allocation6], 1
    %35 = vsyncpa %s34, 0
    loop: start=0, step=1, limit=4
    $region2: #{tpu_custom_call.1} parent=1 // loop_pre_header
      _
    $region3: #{tpu_custom_call.1} parent=1 // loop_header
      %s37 = sphi 0, %s41
      %p38 = scmp.ge.s32.totalorder %s37, 4
      %s47 = sphi 0, %s49
      %s50 = sphi 0, %s47
      %s51 = sphi 0, %s50
      %s67 = sphi 0, %s51
      %s71 = sphi 0, %s71
      %s73 = sphi 0, %s71
      %s74 = sphi 0, %s73
      %s88 = sphi 0, %s74
      %s92 = sphi 0, %s92
      %s94 = sphi 0, %s92
      %s95 = sphi 0, %s94
      %s109 = sphi 0, %s95
      %s113 = sphi 0, %s113
      %s115 = sphi 0, %s113
      %s116 = sphi 0, %s115
      %s130 = sphi 0, %s116
      %s134 = sphi 0, %s134
      %s136 = sphi 0, %s134
      %s137 = sphi 0, %s136
      %s151 = sphi 0, %s137
      %s155 = sphi 0, %s155
      %s157 = sphi 0, %s155
      %s158 = sphi 0, %s157
      %s172 = sphi 0, %s158
      %s176 = sphi 0, %s176
      %s178 = sphi 0, %s176
      %s179 = sphi 0, %s178
      %s193 = sphi 0, %s179
      %s197 = sphi 0, %s197
      %s199 = sphi 0, %s197
      %s200 = sphi 0, %s199
      %s214 = sphi 0, %s200
      %s218 = sphi 0, %s218
      %s220 = sphi 0, %s218
      %s221 = sphi 0, %s220
      %s235 = sphi 0, %s221
      %s239 = sphi 0, %s239
      %s241 = sphi 0, %s239
      %s242 = sphi 0, %s241
      %s256 = sphi 0, %s242
      %s260 = sphi 0, %s260
      %s262 = sphi 0, %s260
      %s263 = sphi 0, %s262
      %s277 = sphi 0, %s263
      %s281 = sphi 0, %s281
      %s283 = sphi 0, %s281
      %s284 = sphi 0, %s283
      %s298 = sphi 0, %s284
      %s302 = sphi 0, %s302
      %s304 = sphi 0, %s302
      %s305 = sphi 0, %s304
      %s319 = sphi 0, %s305
      %s323 = sphi 0, %s323
      %s325 = sphi 0, %s323
      %s326 = sphi 0, %s325
      %s340 = sphi 0, %s326
      %s344 = sphi 0, %s344
      %s346 = sphi 0, %s344
      %s347 = sphi 0, %s346
      %s361 = sphi 0, %s347
      %s365 = sphi 0, %s365
      %s367 = sphi 0, %s365
      %s368 = sphi 0, %s367
      %s382 = sphi 0, %s368
      %s386 = sphi 0, %s386
      %s388 = sphi 0, %s386
      %s389 = sphi 0, %s388
      %s403 = sphi 0, %s389
      %s407 = sphi 0, %s407
      %s409 = sphi 0, %s407
      %s410 = sphi 0, %s409
      %s424 = sphi 0, %s410
      %s428 = sphi 0, %s428
      %s430 = sphi 0, %s428
      %s431 = sphi 0, %s430
      %s445 = sphi 0, %s431
      %s449 = sphi 0, %s449
      %s451 = sphi 0, %s449
      %s452 = sphi 0, %s451
      %s466 = sphi 0, %s452
      %s470 = sphi 0, %s470
      %s472 = sphi 0, %s470
      %s473 = sphi 0, %s472
      %s487 = sphi 0, %s473
      %s493 = sphi 0, %s495
      %s496 = sphi 0, %s493
      %s497 = sphi 0, %s496
      %s513 = sphi 0, %s497
    $region4: #{tpu_custom_call.1} parent=1 // loop_header_branch
      %40 = sbr.rel (%p38) target = $region8
    $region5: #{tpu_custom_call.1} parent=1 // loop_body
      %s42 = ssub.s32 %s37, 1
      %s43 = ssub.s32 %s37, 2
      %s44 = sadd.s32 %s37, 1
      %s45 = ssub.s32 %s37, %s44
      %p46 = scmp.eq.s32.totalorder %s45, 0
      %s48 = sadd.s32 %s47, 1
      %s49 = scalar_select %p46, %s47, %s48
      %p52 = pneg %p46
      %p53 = scmp.eq.s32.totalorder %s37, 1
      %p54 = por %p52, %p53
      %p55 = scmp.ne.s32.totalorder %s47, %s50
      %p56 = scmp.eq.s32.totalorder %s37, 0
      %p57 = por %p55, %p56
      %p58 = scmp.ne.s32.totalorder %s47, %s50
      %p59 = scmp.eq.s32.totalorder %s42, 1
      %p60 = por %p58, %p59
      %p61 = scmp.ne.s32.totalorder %s50, %s51
      %p62 = scmp.eq.s32.totalorder %s42, 0
      %p63 = por %p61, %p62
      %p64 = scmp.ne.s32.totalorder %s50, %s51
      %p65 = scmp.eq.s32.totalorder %s43, 1
      %p66 = por %p64, %p65
      %p68 = scmp.ne.s32.totalorder %s51, %s67
      %p69 = scmp.eq.s32.totalorder %s43, 0
      %p70 = por %p68, %p69
      %s72 = sadd.s32 %s71, 1
      %p75 = scmp.eq.s32.totalorder %s37, 1
      %p76 = scmp.ne.s32.totalorder %s71, %s73
      %p77 = scmp.eq.s32.totalorder %s37, 0
      %p78 = por %p76, %p77
      %p79 = scmp.ne.s32.totalorder %s71, %s73
      %p80 = scmp.eq.s32.totalorder %s42, 1
      %p81 = por %p79, %p80
      %p82 = scmp.ne.s32.totalorder %s73, %s74
      %p83 = scmp.eq.s32.totalorder %s42, 0
      %p84 = por %p82, %p83
      %p85 = scmp.ne.s32.totalorder %s73, %s74
      %p86 = scmp.eq.s32.totalorder %s43, 1
      %p87 = por %p85, %p86
      %p89 = scmp.ne.s32.totalorder %s74, %s88
      %p90 = scmp.eq.s32.totalorder %s43, 0
      %p91 = por %p89, %p90
      %s93 = sadd.s32 %s92, 1
      %p96 = scmp.eq.s32.totalorder %s37, 1
      %p97 = scmp.ne.s32.totalorder %s92, %s94
      %p98 = scmp.eq.s32.totalorder %s37, 0
      %p99 = por %p97, %p98
      %p100 = scmp.ne.s32.totalorder %s92, %s94
      %p101 = scmp.eq.s32.totalorder %s42, 1
      %p102 = por %p100, %p101
      %p103 = scmp.ne.s32.totalorder %s94, %s95
      %p104 = scmp.eq.s32.totalorder %s42, 0
      %p105 = por %p103, %p104
      %p106 = scmp.ne.s32.totalorder %s94, %s95
      %p107 = scmp.eq.s32.totalorder %s43, 1
      %p108 = por %p106, %p107
      %p110 = scmp.ne.s32.totalorder %s95, %s109
      %p111 = scmp.eq.s32.totalorder %s43, 0
      %p112 = por %p110, %p111
      %s114 = sadd.s32 %s113, 1
      %p117 = scmp.eq.s32.totalorder %s37, 1
      %p118 = scmp.ne.s32.totalorder %s113, %s115
      %p119 = scmp.eq.s32.totalorder %s37, 0
      %p120 = por %p118, %p119
      %p121 = scmp.ne.s32.totalorder %s113, %s115
      %p122 = scmp.eq.s32.totalorder %s42, 1
      %p123 = por %p121, %p122
      %p124 = scmp.ne.s32.totalorder %s115, %s116
      %p125 = scmp.eq.s32.totalorder %s42, 0
      %p126 = por %p124, %p125
      %p127 = scmp.ne.s32.totalorder %s115, %s116
      %p128 = scmp.eq.s32.totalorder %s43, 1
      %p129 = por %p127, %p128
      %p131 = scmp.ne.s32.totalorder %s116, %s130
      %p132 = scmp.eq.s32.totalorder %s43, 0
      %p133 = por %p131, %p132
      %s135 = sadd.s32 %s134, 1
      %p138 = scmp.eq.s32.totalorder %s37, 1
      %p139 = scmp.ne.s32.totalorder %s134, %s136
      %p140 = scmp.eq.s32.totalorder %s37, 0
      %p141 = por %p139, %p140
      %p142 = scmp.ne.s32.totalorder %s134, %s136
      %p143 = scmp.eq.s32.totalorder %s42, 1
      %p144 = por %p142, %p143
      %p145 = scmp.ne.s32.totalorder %s136, %s137
      %p146 = scmp.eq.s32.totalorder %s42, 0
      %p147 = por %p145, %p146
      %p148 = scmp.ne.s32.totalorder %s136, %s137
      %p149 = scmp.eq.s32.totalorder %s43, 1
      %p150 = por %p148, %p149
      %p152 = scmp.ne.s32.totalorder %s137, %s151
      %p153 = scmp.eq.s32.totalorder %s43, 0
      %p154 = por %p152, %p153
      %s156 = sadd.s32 %s155, 1
      %p159 = scmp.eq.s32.totalorder %s37, 1
      %p160 = scmp.ne.s32.totalorder %s155, %s157
      %p161 = scmp.eq.s32.totalorder %s37, 0
      %p162 = por %p160, %p161
      %p163 = scmp.ne.s32.totalorder %s155, %s157
      %p164 = scmp.eq.s32.totalorder %s42, 1
      %p165 = por %p163, %p164
      %p166 = scmp.ne.s32.totalorder %s157, %s158
      %p167 = scmp.eq.s32.totalorder %s42, 0
      %p168 = por %p166, %p167
      %p169 = scmp.ne.s32.totalorder %s157, %s158
      %p170 = scmp.eq.s32.totalorder %s43, 1
      %p171 = por %p169, %p170
      %p173 = scmp.ne.s32.totalorder %s158, %s172
      %p174 = scmp.eq.s32.totalorder %s43, 0
      %p175 = por %p173, %p174
      %s177 = sadd.s32 %s176, 1
      %p180 = scmp.eq.s32.totalorder %s37, 1
      %p181 = scmp.ne.s32.totalorder %s176, %s178
      %p182 = scmp.eq.s32.totalorder %s37, 0
      %p183 = por %p181, %p182
      %p184 = scmp.ne.s32.totalorder %s176, %s178
      %p185 = scmp.eq.s32.totalorder %s42, 1
      %p186 = por %p184, %p185
      %p187 = scmp.ne.s32.totalorder %s178, %s179
      %p188 = scmp.eq.s32.totalorder %s42, 0
      %p189 = por %p187, %p188
      %p190 = scmp.ne.s32.totalorder %s178, %s179
      %p191 = scmp.eq.s32.totalorder %s43, 1
      %p192 = por %p190, %p191
      %p194 = scmp.ne.s32.totalorder %s179, %s193
      %p195 = scmp.eq.s32.totalorder %s43, 0
      %p196 = por %p194, %p195
      %s198 = sadd.s32 %s197, 1
      %p201 = scmp.eq.s32.totalorder %s37, 1
      %p202 = scmp.ne.s32.totalorder %s197, %s199
      %p203 = scmp.eq.s32.totalorder %s37, 0
      %p204 = por %p202, %p203
      %p205 = scmp.ne.s32.totalorder %s197, %s199
      %p206 = scmp.eq.s32.totalorder %s42, 1
      %p207 = por %p205, %p206
      %p208 = scmp.ne.s32.totalorder %s199, %s200
      %p209 = scmp.eq.s32.totalorder %s42, 0
      %p210 = por %p208, %p209
      %p211 = scmp.ne.s32.totalorder %s199, %s200
      %p212 = scmp.eq.s32.totalorder %s43, 1
      %p213 = por %p211, %p212
      %p215 = scmp.ne.s32.totalorder %s200, %s214
      %p216 = scmp.eq.s32.totalorder %s43, 0
      %p217 = por %p215, %p216
      %s219 = sadd.s32 %s218, 1
      %p222 = scmp.eq.s32.totalorder %s37, 1
      %p223 = scmp.ne.s32.totalorder %s218, %s220
      %p224 = scmp.eq.s32.totalorder %s37, 0
      %p225 = por %p223, %p224
      %p226 = scmp.ne.s32.totalorder %s218, %s220
      %p227 = scmp.eq.s32.totalorder %s42, 1
      %p228 = por %p226, %p227
      %p229 = scmp.ne.s32.totalorder %s220, %s221
      %p230 = scmp.eq.s32.totalorder %s42, 0
      %p231 = por %p229, %p230
      %p232 = scmp.ne.s32.totalorder %s220, %s221
      %p233 = scmp.eq.s32.totalorder %s43, 1
      %p234 = por %p232, %p233
      %p236 = scmp.ne.s32.totalorder %s221, %s235
      %p237 = scmp.eq.s32.totalorder %s43, 0
      %p238 = por %p236, %p237
      %s240 = sadd.s32 %s239, 1
      %p243 = scmp.eq.s32.totalorder %s37, 1
      %p244 = scmp.ne.s32.totalorder %s239, %s241
      %p245 = scmp.eq.s32.totalorder %s37, 0
      %p246 = por %p244, %p245
      %p247 = scmp.ne.s32.totalorder %s239, %s241
      %p248 = scmp.eq.s32.totalorder %s42, 1
      %p249 = por %p247, %p248
      %p250 = scmp.ne.s32.totalorder %s241, %s242
      %p251 = scmp.eq.s32.totalorder %s42, 0
      %p252 = por %p250, %p251
      %p253 = scmp.ne.s32.totalorder %s241, %s242
      %p254 = scmp.eq.s32.totalorder %s43, 1
      %p255 = por %p253, %p254
      %p257 = scmp.ne.s32.totalorder %s242, %s256
      %p258 = scmp.eq.s32.totalorder %s43, 0
      %p259 = por %p257, %p258
      %s261 = sadd.s32 %s260, 1
      %p264 = scmp.eq.s32.totalorder %s37, 1
      %p265 = scmp.ne.s32.totalorder %s260, %s262
      %p266 = scmp.eq.s32.totalorder %s37, 0
      %p267 = por %p265, %p266
      %p268 = scmp.ne.s32.totalorder %s260, %s262
      %p269 = scmp.eq.s32.totalorder %s42, 1
      %p270 = por %p268, %p269
      %p271 = scmp.ne.s32.totalorder %s262, %s263
      %p272 = scmp.eq.s32.totalorder %s42, 0
      %p273 = por %p271, %p272
      %p274 = scmp.ne.s32.totalorder %s262, %s263
      %p275 = scmp.eq.s32.totalorder %s43, 1
      %p276 = por %p274, %p275
      %p278 = scmp.ne.s32.totalorder %s263, %s277
      %p279 = scmp.eq.s32.totalorder %s43, 0
      %p280 = por %p278, %p279
      %s282 = sadd.s32 %s281, 1
      %p285 = scmp.eq.s32.totalorder %s37, 1
      %p286 = scmp.ne.s32.totalorder %s281, %s283
      %p287 = scmp.eq.s32.totalorder %s37, 0
      %p288 = por %p286, %p287
      %p289 = scmp.ne.s32.totalorder %s281, %s283
      %p290 = scmp.eq.s32.totalorder %s42, 1
      %p291 = por %p289, %p290
      %p292 = scmp.ne.s32.totalorder %s283, %s284
      %p293 = scmp.eq.s32.totalorder %s42, 0
      %p294 = por %p292, %p293
      %p295 = scmp.ne.s32.totalorder %s283, %s284
      %p296 = scmp.eq.s32.totalorder %s43, 1
      %p297 = por %p295, %p296
      %p299 = scmp.ne.s32.totalorder %s284, %s298
      %p300 = scmp.eq.s32.totalorder %s43, 0
      %p301 = por %p299, %p300
      %s303 = sadd.s32 %s302, 1
      %p306 = scmp.eq.s32.totalorder %s37, 1
      %p307 = scmp.ne.s32.totalorder %s302, %s304
      %p308 = scmp.eq.s32.totalorder %s37, 0
      %p309 = por %p307, %p308
      %p310 = scmp.ne.s32.totalorder %s302, %s304
      %p311 = scmp.eq.s32.totalorder %s42, 1
      %p312 = por %p310, %p311
      %p313 = scmp.ne.s32.totalorder %s304, %s305
      %p314 = scmp.eq.s32.totalorder %s42, 0
      %p315 = por %p313, %p314
      %p316 = scmp.ne.s32.totalorder %s304, %s305
      %p317 = scmp.eq.s32.totalorder %s43, 1
      %p318 = por %p316, %p317
      %p320 = scmp.ne.s32.totalorder %s305, %s319
      %p321 = scmp.eq.s32.totalorder %s43, 0
      %p322 = por %p320, %p321
      %s324 = sadd.s32 %s323, 1
      %p327 = scmp.eq.s32.totalorder %s37, 1
      %p328 = scmp.ne.s32.totalorder %s323, %s325
      %p329 = scmp.eq.s32.totalorder %s37, 0
      %p330 = por %p328, %p329
      %p331 = scmp.ne.s32.totalorder %s323, %s325
      %p332 = scmp.eq.s32.totalorder %s42, 1
      %p333 = por %p331, %p332
      %p334 = scmp.ne.s32.totalorder %s325, %s326
      %p335 = scmp.eq.s32.totalorder %s42, 0
      %p336 = por %p334, %p335
      %p337 = scmp.ne.s32.totalorder %s325, %s326
      %p338 = scmp.eq.s32.totalorder %s43, 1
      %p339 = por %p337, %p338
      %p341 = scmp.ne.s32.totalorder %s326, %s340
      %p342 = scmp.eq.s32.totalorder %s43, 0
      %p343 = por %p341, %p342
      %s345 = sadd.s32 %s344, 1
      %p348 = scmp.eq.s32.totalorder %s37, 1
      %p349 = scmp.ne.s32.totalorder %s344, %s346
      %p350 = scmp.eq.s32.totalorder %s37, 0
      %p351 = por %p349, %p350
      %p352 = scmp.ne.s32.totalorder %s344, %s346
      %p353 = scmp.eq.s32.totalorder %s42, 1
      %p354 = por %p352, %p353
      %p355 = scmp.ne.s32.totalorder %s346, %s347
      %p356 = scmp.eq.s32.totalorder %s42, 0
      %p357 = por %p355, %p356
      %p358 = scmp.ne.s32.totalorder %s346, %s347
      %p359 = scmp.eq.s32.totalorder %s43, 1
      %p360 = por %p358, %p359
      %p362 = scmp.ne.s32.totalorder %s347, %s361
      %p363 = scmp.eq.s32.totalorder %s43, 0
      %p364 = por %p362, %p363
      %s366 = sadd.s32 %s365, 1
      %p369 = scmp.eq.s32.totalorder %s37, 1
      %p370 = scmp.ne.s32.totalorder %s365, %s367
      %p371 = scmp.eq.s32.totalorder %s37, 0
      %p372 = por %p370, %p371
      %p373 = scmp.ne.s32.totalorder %s365, %s367
      %p374 = scmp.eq.s32.totalorder %s42, 1
      %p375 = por %p373, %p374
      %p376 = scmp.ne.s32.totalorder %s367, %s368
      %p377 = scmp.eq.s32.totalorder %s42, 0
      %p378 = por %p376, %p377
      %p379 = scmp.ne.s32.totalorder %s367, %s368
      %p380 = scmp.eq.s32.totalorder %s43, 1
      %p381 = por %p379, %p380
      %p383 = scmp.ne.s32.totalorder %s368, %s382
      %p384 = scmp.eq.s32.totalorder %s43, 0
      %p385 = por %p383, %p384
      %s387 = sadd.s32 %s386, 1
      %p390 = scmp.eq.s32.totalorder %s37, 1
      %p391 = scmp.ne.s32.totalorder %s386, %s388
      %p392 = scmp.eq.s32.totalorder %s37, 0
      %p393 = por %p391, %p392
      %p394 = scmp.ne.s32.totalorder %s386, %s388
      %p395 = scmp.eq.s32.totalorder %s42, 1
      %p396 = por %p394, %p395
      %p397 = scmp.ne.s32.totalorder %s388, %s389
      %p398 = scmp.eq.s32.totalorder %s42, 0
      %p399 = por %p397, %p398
      %p400 = scmp.ne.s32.totalorder %s388, %s389
      %p401 = scmp.eq.s32.totalorder %s43, 1
      %p402 = por %p400, %p401
      %p404 = scmp.ne.s32.totalorder %s389, %s403
      %p405 = scmp.eq.s32.totalorder %s43, 0
      %p406 = por %p404, %p405
      %s408 = sadd.s32 %s407, 1
      %p411 = scmp.eq.s32.totalorder %s37, 1
      %p412 = scmp.ne.s32.totalorder %s407, %s409
      %p413 = scmp.eq.s32.totalorder %s37, 0
      %p414 = por %p412, %p413
      %p415 = scmp.ne.s32.totalorder %s407, %s409
      %p416 = scmp.eq.s32.totalorder %s42, 1
      %p417 = por %p415, %p416
      %p418 = scmp.ne.s32.totalorder %s409, %s410
      %p419 = scmp.eq.s32.totalorder %s42, 0
      %p420 = por %p418, %p419
      %p421 = scmp.ne.s32.totalorder %s409, %s410
      %p422 = scmp.eq.s32.totalorder %s43, 1
      %p423 = por %p421, %p422
      %p425 = scmp.ne.s32.totalorder %s410, %s424
      %p426 = scmp.eq.s32.totalorder %s43, 0
      %p427 = por %p425, %p426
      %s429 = sadd.s32 %s428, 1
      %p432 = scmp.eq.s32.totalorder %s37, 1
      %p433 = scmp.ne.s32.totalorder %s428, %s430
      %p434 = scmp.eq.s32.totalorder %s37, 0
      %p435 = por %p433, %p434
      %p436 = scmp.ne.s32.totalorder %s428, %s430
      %p437 = scmp.eq.s32.totalorder %s42, 1
      %p438 = por %p436, %p437
      %p439 = scmp.ne.s32.totalorder %s430, %s431
      %p440 = scmp.eq.s32.totalorder %s42, 0
      %p441 = por %p439, %p440
      %p442 = scmp.ne.s32.totalorder %s430, %s431
      %p443 = scmp.eq.s32.totalorder %s43, 1
      %p444 = por %p442, %p443
      %p446 = scmp.ne.s32.totalorder %s431, %s445
      %p447 = scmp.eq.s32.totalorder %s43, 0
      %p448 = por %p446, %p447
      %s450 = sadd.s32 %s449, 1
      %p453 = scmp.eq.s32.totalorder %s37, 1
      %p454 = scmp.ne.s32.totalorder %s449, %s451
      %p455 = scmp.eq.s32.totalorder %s37, 0
      %p456 = por %p454, %p455
      %p457 = scmp.ne.s32.totalorder %s449, %s451
      %p458 = scmp.eq.s32.totalorder %s42, 1
      %p459 = por %p457, %p458
      %p460 = scmp.ne.s32.totalorder %s451, %s452
      %p461 = scmp.eq.s32.totalorder %s42, 0
      %p462 = por %p460, %p461
      %p463 = scmp.ne.s32.totalorder %s451, %s452
      %p464 = scmp.eq.s32.totalorder %s43, 1
      %p465 = por %p463, %p464
      %p467 = scmp.ne.s32.totalorder %s452, %s466
      %p468 = scmp.eq.s32.totalorder %s43, 0
      %p469 = por %p467, %p468
      %s471 = sadd.s32 %s470, 1
      %p474 = scmp.eq.s32.totalorder %s37, 1
      %p475 = scmp.ne.s32.totalorder %s470, %s472
      %p476 = scmp.eq.s32.totalorder %s37, 0
      %p477 = por %p475, %p476
      %p478 = scmp.ne.s32.totalorder %s470, %s472
      %p479 = scmp.eq.s32.totalorder %s42, 1
      %p480 = por %p478, %p479
      %p481 = scmp.ne.s32.totalorder %s472, %s473
      %p482 = scmp.eq.s32.totalorder %s42, 0
      %p483 = por %p481, %p482
      %p484 = scmp.ne.s32.totalorder %s472, %s473
      %p485 = scmp.eq.s32.totalorder %s43, 1
      %p486 = por %p484, %p485
      %p488 = scmp.ne.s32.totalorder %s473, %s487
      %p489 = scmp.eq.s32.totalorder %s43, 0
      %p490 = por %p488, %p489
      %s491 = ssub.s32 %s37, %s44
      %p492 = scmp.eq.s32.totalorder %s491, 0
      %s494 = sadd.s32 %s493, 1
      %s495 = scalar_select %p492, %s493, %s494
      %p498 = pneg %p492
      %p499 = scmp.eq.s32.totalorder %s37, 1
      %p500 = por %p498, %p499
      %p501 = scmp.ne.s32.totalorder %s493, %s496
      %p502 = scmp.eq.s32.totalorder %s37, 0
      %p503 = por %p501, %p502
      %p504 = scmp.ne.s32.totalorder %s493, %s496
      %p505 = scmp.eq.s32.totalorder %s42, 1
      %p506 = por %p504, %p505
      %p507 = scmp.ne.s32.totalorder %s496, %s497
      %p508 = scmp.eq.s32.totalorder %s42, 0
      %p509 = por %p507, %p508
      %p510 = scmp.ne.s32.totalorder %s496, %s497
      %p511 = scmp.eq.s32.totalorder %s43, 1
      %p512 = por %p510, %p511
      %p514 = scmp.ne.s32.totalorder %s497, %s513
      %p515 = scmp.eq.s32.totalorder %s43, 0
      %p516 = por %p514, %p515
      %p517 = scmp.le.s32.totalorder 1, %s37
      %p518 = scmp.lt.s32.totalorder %s37, 3
      %p519 = pnand %p517, %p518
      %p520 = pneg %p519
      // Predicated region
      $region9: #{tpu_custom_call.1} parent=5 // pred_check
        _
      $region10: #{tpu_custom_call.1} parent=5 // pred_check_branch
        %522 = sbr.rel (%p519) target = $region12
      $region11: #{tpu_custom_call.1} parent=5 // pred_region
        %s523 = ssub.s32 %s37, 1
        // Predicated region
        $region13: #{tpu_custom_call.1} parent=11 // pred_check
          %p524 = pneg %p84
        $region14: #{tpu_custom_call.1} parent=11 // pred_check_branch
          %526 = sbr.rel (%p524) target = $region16
        $region15: #{tpu_custom_call.1} parent=11 // pred_region
          %s528 = ssub.s32 512, 512
          %529 = vsyncadd [#allocation8], %s528
          %s530 = sshll.u32 [#allocation7], 4
          %s531 = int_to_ptr.vmem [resolvable:$true] %s530
          %536 = dma.hbm_to_vmem [thread:$0]  %s1, 512, %s531, [#allocation8], 128, 128, 8
        $region16: #{tpu_custom_call.1} parent=11 // pred_fallthru
          _
        // Predicated region
        $region17: #{tpu_custom_call.1} parent=11 // pred_check
          %p537 = pneg %p105
        $region18: #{tpu_custom_call.1} parent=11 // pred_check_branch
          %539 = sbr.rel (%p537) target = $region20
        $region19: #{tpu_custom_call.1} parent=11 // pred_region
          %s541 = ssub.s32 128, 128
          %542 = vsyncadd [#allocation8], %s541
          %s544 = sshll.u32 [#allocation9], 4
          %s545 = int_to_ptr.vmem [resolvable:$true] %s544
          %547 = dma.hbm_to_vmem [thread:$0]  %s2, 128, %s545, [#allocation8]
        $region20: #{tpu_custom_call.1} parent=11 // pred_fallthru
          _
        // Predicated region
        $region21: #{tpu_custom_call.1} parent=11 // pred_check
          %p548 = pneg %p126
        $region22: #{tpu_custom_call.1} parent=11 // pred_check_branch
          %550 = sbr.rel (%p548) target = $region24
        $region23: #{tpu_custom_call.1} parent=11 // pred_region
          _
        $region24: #{tpu_custom_call.1} parent=11 // pred_fallthru
          _
        // Predicated region
        $region25: #{tpu_custom_call.1} parent=11 // pred_check
          %p551 = pneg %p147
        $region26: #{tpu_custom_call.1} parent=11 // pred_check_branch
          %553 = sbr.rel (%p551) target = $region28
        $region27: #{tpu_custom_call.1} parent=11 // pred_region
          _
        $region28: #{tpu_custom_call.1} parent=11 // pred_fallthru
          _
        // Predicated region
        $region29: #{tpu_custom_call.1} parent=11 // pred_check
          %p554 = pneg %p168
        $region30: #{tpu_custom_call.1} parent=11 // pred_check_branch
          %556 = sbr.rel (%p554) target = $region32
        $region31: #{tpu_custom_call.1} parent=11 // pred_region
          _
        $region32: #{tpu_custom_call.1} parent=11 // pred_fallthru
          _
        // Predicated region
        $region33: #{tpu_custom_call.1} parent=11 // pred_check
          %p557 = pneg %p189
        $region34: #{tpu_custom_call.1} parent=11 // pred_check_branch
          %559 = sbr.rel (%p557) target = $region36
        $region35: #{tpu_custom_call.1} parent=11 // pred_region
          _
        $region36: #{tpu_custom_call.1} parent=11 // pred_fallthru
          _
        // Predicated region
        $region37: #{tpu_custom_call.1} parent=11 // pred_check
          %p560 = pneg %p210
        $region38: #{tpu_custom_call.1} parent=11 // pred_check_branch
          %562 = sbr.rel (%p560) target = $region40
        $region39: #{tpu_custom_call.1} parent=11 // pred_region
          %s564 = ssub.s32 512, 512
          %565 = vsyncadd [#allocation11], %s564
          %s566 = sshll.u32 [#allocation10], 4
          %s567 = int_to_ptr.vmem [resolvable:$true] %s566
          %572 = dma.hbm_to_vmem [thread:$0]  %s7, 512, %s567, [#allocation11], 128, 128, 8
        $region40: #{tpu_custom_call.1} parent=11 // pred_fallthru
          _
        // Predicated region
        $region41: #{tpu_custom_call.1} parent=11 // pred_check
          %p573 = pneg %p231
        $region42: #{tpu_custom_call.1} parent=11 // pred_check_branch
          %575 = sbr.rel (%p573) target = $region44
        $region43: #{tpu_custom_call.1} parent=11 // pred_region
          %s577 = ssub.s32 512, 512
          %578 = vsyncadd [#allocation11], %s577
          %s579 = sshll.u32 [#allocation12], 4
          %s580 = int_to_ptr.vmem [resolvable:$true] %s579
          %585 = dma.hbm_to_vmem [thread:$0]  %s8, 512, %s580, [#allocation11], 128, 128, 8
        $region44: #{tpu_custom_call.1} parent=11 // pred_fallthru
          _
        // Predicated region
        $region45: #{tpu_custom_call.1} parent=11 // pred_check
          %p586 = pneg %p252
        $region46: #{tpu_custom_call.1} parent=11 // pred_check_branch
          %588 = sbr.rel (%p586) target = $region48
        $region47: #{tpu_custom_call.1} parent=11 // pred_region
          _
        $region48: #{tpu_custom_call.1} parent=11 // pred_fallthru
          _
        // Predicated region
        $region49: #{tpu_custom_call.1} parent=11 // pred_check
          %p589 = pneg %p273
        $region50: #{tpu_custom_call.1} parent=11 // pred_check_branch
          %591 = sbr.rel (%p589) target = $region52
        $region51: #{tpu_custom_call.1} parent=11 // pred_region
          _
        $region52: #{tpu_custom_call.1} parent=11 // pred_fallthru
          _
        // Predicated region
        $region53: #{tpu_custom_call.1} parent=11 // pred_check
          %p592 = pneg %p294
        $region54: #{tpu_custom_call.1} parent=11 // pred_check_branch
          %594 = sbr.rel (%p592) target = $region56
        $region55: #{tpu_custom_call.1} parent=11 // pred_region
          _
        $region56: #{tpu_custom_call.1} parent=11 // pred_fallthru
          _
        // Predicated region
        $region57: #{tpu_custom_call.1} parent=11 // pred_check
          %p595 = pneg %p315
        $region58: #{tpu_custom_call.1} parent=11 // pred_check_branch
          %597 = sbr.rel (%p595) target = $region60
        $region59: #{tpu_custom_call.1} parent=11 // pred_region
          %s599 = ssub.s32 6144, 6144
          %600 = vsyncadd [#allocation14], %s599
          %s601 = sshll.u32 [#allocation13], 4
          %s602 = int_to_ptr.vmem [resolvable:$true] %s601
          %607 = dma.hbm_to_vmem [thread:$0]  %s12, 6144, %s602, [#allocation14], 384, 384, 24
        $region60: #{tpu_custom_call.1} parent=11 // pred_fallthru
          _
        // Predicated region
        $region61: #{tpu_custom_call.1} parent=11 // pred_check
          %p608 = pneg %p336
        $region62: #{tpu_custom_call.1} parent=11 // pred_check_branch
          %610 = sbr.rel (%p608) target = $region64
        $region63: #{tpu_custom_call.1} parent=11 // pred_region
          %s612 = ssub.s32 2048, 2048
          %613 = vsyncadd [#allocation14], %s612
          %s614 = sshll.u32 [#allocation15], 4
          %s615 = int_to_ptr.vmem [resolvable:$true] %s614
          %620 = dma.hbm_to_vmem [thread:$0]  %s13, 2048, %s615, [#allocation14], 128, 128, 8
        $region64: #{tpu_custom_call.1} parent=11 // pred_fallthru
          _
        // Predicated region
        $region65: #{tpu_custom_call.1} parent=11 // pred_check
          %p621 = pneg %p357
        $region66: #{tpu_custom_call.1} parent=11 // pred_check_branch
          %623 = sbr.rel (%p621) target = $region68
        $region67: #{tpu_custom_call.1} parent=11 // pred_region
          _
        $region68: #{tpu_custom_call.1} parent=11 // pred_fallthru
          _
        // Predicated region
        $region69: #{tpu_custom_call.1} parent=11 // pred_check
          %p624 = pneg %p378
        $region70: #{tpu_custom_call.1} parent=11 // pred_check_branch
          %626 = sbr.rel (%p624) target = $region72
        $region71: #{tpu_custom_call.1} parent=11 // pred_region
          _
        $region72: #{tpu_custom_call.1} parent=11 // pred_fallthru
          _
        // Predicated region
        $region73: #{tpu_custom_call.1} parent=11 // pred_check
          %p627 = pneg %p399
        $region74: #{tpu_custom_call.1} parent=11 // pred_check_branch
          %629 = sbr.rel (%p627) target = $region76
        $region75: #{tpu_custom_call.1} parent=11 // pred_region
          _
        $region76: #{tpu_custom_call.1} parent=11 // pred_fallthru
          _
        // Predicated region
        $region77: #{tpu_custom_call.1} parent=11 // pred_check
          %p630 = pneg %p420
        $region78: #{tpu_custom_call.1} parent=11 // pred_check_branch
          %632 = sbr.rel (%p630) target = $region80
        $region79: #{tpu_custom_call.1} parent=11 // pred_region
          %s634 = ssub.s32 2048, 2048
          %635 = vsyncadd [#allocation17], %s634
          %s636 = sshll.u32 [#allocation16], 4
          %s637 = int_to_ptr.vmem [resolvable:$true] %s636
          %642 = dma.hbm_to_vmem [thread:$0]  %s17, 2048, %s637, [#allocation17], 128, 128, 8
        $region80: #{tpu_custom_call.1} parent=11 // pred_fallthru
          _
        // Predicated region
        $region81: #{tpu_custom_call.1} parent=11 // pred_check
          %p643 = pneg %p441
        $region82: #{tpu_custom_call.1} parent=11 // pred_check_branch
          %645 = sbr.rel (%p643) target = $region84
        $region83: #{tpu_custom_call.1} parent=11 // pred_region
          _
        $region84: #{tpu_custom_call.1} parent=11 // pred_fallthru
          _
        // Predicated region
        $region85: #{tpu_custom_call.1} parent=11 // pred_check
          %p646 = pneg %p462
        $region86: #{tpu_custom_call.1} parent=11 // pred_check_branch
          %648 = sbr.rel (%p646) target = $region88
        $region87: #{tpu_custom_call.1} parent=11 // pred_region
          %s650 = ssub.s32 2048, 2048
          %651 = vsyncadd [#allocation17], %s650
          %s652 = sshll.u32 [#allocation18], 4
          %s653 = int_to_ptr.vmem [resolvable:$true] %s652
          %658 = dma.hbm_to_vmem [thread:$0]  %s19, 2048, %s653, [#allocation17], 128, 128, 8
        $region88: #{tpu_custom_call.1} parent=11 // pred_fallthru
          _
        // Predicated region
        $region89: #{tpu_custom_call.1} parent=11 // pred_check
          %p659 = pneg %p483
        $region90: #{tpu_custom_call.1} parent=11 // pred_check_branch
          %661 = sbr.rel (%p659) target = $region92
        $region91: #{tpu_custom_call.1} parent=11 // pred_region
          _
        $region92: #{tpu_custom_call.1} parent=11 // pred_fallthru
          _
      $region12: #{tpu_custom_call.1} parent=5 // pred_fallthru
        _
      %p662 = scmp.lt.s32.totalorder %s37, 2
      // Predicated region
      $region93: #{tpu_custom_call.1} parent=5 // pred_check
        %p663 = pneg %p662
      $region94: #{tpu_custom_call.1} parent=5 // pred_check_branch
        %665 = sbr.rel (%p663) target = $region96
      $region95: #{tpu_custom_call.1} parent=5 // pred_region
        // Predicated region
        $region97: #{tpu_custom_call.1} parent=95 // pred_check
          %p666 = pneg %p57
        $region98: #{tpu_custom_call.1} parent=95 // pred_check_branch
          %668 = sbr.rel (%p666) target = $region100
        $region99: #{tpu_custom_call.1} parent=95 // pred_region
          %s669 = sand.u32 %s47, 1
          %s670 = scalar_lea.sflag [#allocation5], %s669
          %s671 = sand.u32 %s47, 1
          %s672 = smul.addr %s671, 32
          %s673 = scalar_lea.vmem [#allocation4], %s672
          %s675 = ssub.s32 512, 512
          %676 = vsyncadd %s670, %s675
          %s677 = smul.addr %s37, 4
          %s678 = smul.addr %s677, 128
          %s679 = scalar_lea.hbm %s0, %s678
          %s680 = sshll.u32 %s673, 4
          %s681 = int_to_ptr.vmem [resolvable:$true] %s680
          %686 = dma.hbm_to_vmem [thread:$0]  %s679, 512, %s681, %s670, 128, 128, 8
        $region100: #{tpu_custom_call.1} parent=95 // pred_fallthru
          _
      $region96: #{tpu_custom_call.1} parent=5 // pred_fallthru
        _
      %p687 = scmp.le.s32.totalorder 1, %s37
      %p688 = scmp.lt.s32.totalorder %s37, 3
      %p689 = pnand %p687, %p688
      %p690 = pneg %p689
      // Predicated region
      $region101: #{tpu_custom_call.1} parent=5 // pred_check
        _
      $region102: #{tpu_custom_call.1} parent=5 // pred_check_branch
        %692 = sbr.rel (%p689) target = $region104
      $region103: #{tpu_custom_call.1} parent=5 // pred_region
        %s693 = ssub.s32 %s37, 1
        %s694 = sand.u32 %s50, 1
        %s695 = scalar_lea.sflag [#allocation5], %s694
        %s696 = sand.u32 %s50, 1
        %s697 = smul.addr %s696, 32
        %s698 = scalar_lea.vmem [#allocation4], %s697
        // Predicated region
        $region105: #{tpu_custom_call.1} parent=103 // pred_check
          %p699 = pneg %p63
        $region106: #{tpu_custom_call.1} parent=103 // pred_check_branch
          %701 = sbr.rel (%p699) target = $region108
        $region107: #{tpu_custom_call.1} parent=103 // pred_region
          %702 = dma.done %s695, 512
        $region108: #{tpu_custom_call.1} parent=103 // pred_fallthru
          _
        // Predicated region
        $region109: #{tpu_custom_call.1} parent=103 // pred_check
          %p703 = pneg %p84
        $region110: #{tpu_custom_call.1} parent=103 // pred_check_branch
          %705 = sbr.rel (%p703) target = $region112
        $region111: #{tpu_custom_call.1} parent=103 // pred_region
          %706 = dma.done [#allocation8], 512
        $region112: #{tpu_custom_call.1} parent=103 // pred_fallthru
          _
        // Predicated region
        $region113: #{tpu_custom_call.1} parent=103 // pred_check
          %p707 = pneg %p105
        $region114: #{tpu_custom_call.1} parent=103 // pred_check_branch
          %709 = sbr.rel (%p707) target = $region116
        $region115: #{tpu_custom_call.1} parent=103 // pred_region
          %710 = dma.done [#allocation8], 128
        $region116: #{tpu_custom_call.1} parent=103 // pred_fallthru
          _
        // Predicated region
        $region117: #{tpu_custom_call.1} parent=103 // pred_check
          %p711 = pneg %p210
        $region118: #{tpu_custom_call.1} parent=103 // pred_check_branch
          %713 = sbr.rel (%p711) target = $region120
        $region119: #{tpu_custom_call.1} parent=103 // pred_region
          %714 = dma.done [#allocation11], 512
        $region120: #{tpu_custom_call.1} parent=103 // pred_fallthru
          _
        // Predicated region
        $region121: #{tpu_custom_call.1} parent=103 // pred_check
          %p715 = pneg %p231
        $region122: #{tpu_custom_call.1} parent=103 // pred_check_branch
          %717 = sbr.rel (%p715) target = $region124
        $region123: #{tpu_custom_call.1} parent=103 // pred_region
          %718 = dma.done [#allocation11], 512
        $region124: #{tpu_custom_call.1} parent=103 // pred_fallthru
          _
        // Predicated region
        $region125: #{tpu_custom_call.1} parent=103 // pred_check
          %p719 = pneg %p315
        $region126: #{tpu_custom_call.1} parent=103 // pred_check_branch
          %721 = sbr.rel (%p719) target = $region128
        $region127: #{tpu_custom_call.1} parent=103 // pred_region
          %722 = dma.done [#allocation14], 6144
        $region128: #{tpu_custom_call.1} parent=103 // pred_fallthru
          _
        // Predicated region
        $region129: #{tpu_custom_call.1} parent=103 // pred_check
          %p723 = pneg %p336
        $region130: #{tpu_custom_call.1} parent=103 // pred_check_branch
          %725 = sbr.rel (%p723) target = $region132
        $region131: #{tpu_custom_call.1} parent=103 // pred_region
          %726 = dma.done [#allocation14], 2048
        $region132: #{tpu_custom_call.1} parent=103 // pred_fallthru
          _
        // Predicated region
        $region133: #{tpu_custom_call.1} parent=103 // pred_check
          %p727 = pneg %p420
        $region134: #{tpu_custom_call.1} parent=103 // pred_check_branch
          %729 = sbr.rel (%p727) target = $region136
        $region135: #{tpu_custom_call.1} parent=103 // pred_region
          %730 = dma.done [#allocation17], 2048
        $region136: #{tpu_custom_call.1} parent=103 // pred_fallthru
          _
        // Predicated region
        $region137: #{tpu_custom_call.1} parent=103 // pred_check
          %p731 = pneg %p462
        $region138: #{tpu_custom_call.1} parent=103 // pred_check_branch
          %733 = sbr.rel (%p731) target = $region140
        $region139: #{tpu_custom_call.1} parent=103 // pred_region
          %734 = dma.done [#allocation17], 2048
        $region140: #{tpu_custom_call.1} parent=103 // pred_fallthru
          _
        %s735 = sand.u32 %s50, 1
        %s736 = scalar_lea.sflag [#allocation5], %s735
        %s737 = sand.u32 %s50, 1
        %s738 = smul.addr %s737, 32
        %s739 = scalar_lea.vmem [#allocation4], %s738
        %p740 = pneg %p63
        %p741 = pneg %p60
        %p742 = pneg %p84
        %p743 = pneg %p81
        %p744 = pneg %p105
        %p745 = pneg %p102
        %p746 = pneg %p126
        %p747 = pneg %p123
        %p748 = pneg %p147
        %p749 = pneg %p144
        %p750 = pneg %p168
        %p751 = pneg %p165
        %p752 = pneg %p189
        %p753 = pneg %p186
        %p754 = pneg %p210
        %p755 = pneg %p207
        %p756 = pneg %p231
        %p757 = pneg %p228
        %p758 = pneg %p252
        %p759 = pneg %p249
        %p760 = pneg %p273
        %p761 = pneg %p270
        %p762 = pneg %p294
        %p763 = pneg %p291
        %p764 = pneg %p315
        %p765 = pneg %p312
        %p766 = pneg %p336
        %p767 = pneg %p333
        %p768 = pneg %p357
        %p769 = pneg %p354
        %p770 = pneg %p378
        %p771 = pneg %p375
        %p772 = pneg %p399
        %p773 = pneg %p396
        %p774 = pneg %p420
        %p775 = pneg %p417
        %p776 = pneg %p441
        %p777 = pneg %p438
        %p778 = pneg %p462
        %p779 = pneg %p459
        %p780 = pneg %p483
        %p781 = pneg %p480
        %p782 = pneg %p509
        %p783 = pneg %p506
        %s784 = sand.u32 %s496, 1
        %s785 = scalar_lea.sflag [#allocation6], %s784
        %s786 = sand.u32 %s496, 1
        %s787 = smul.addr %s786, 8
        %s788 = scalar_lea.vmem [#allocation19], %s787
        %v789 = vld [vmem:[%s698] sm:$0xff]
        %v790 = vld [vmem:[%s698 + $0x8] sm:$0xff]
        %v791 = vld [vmem:[%s698 + $0x10] sm:$0xff]
        %v792 = vld [vmem:[%s698 + $0x18] sm:$0xff]
        %vm793 = vcmask 261120
        %v794 = vsel %vm793, %v789, 0.0
        %v795 = vsel %vm793, %v790, 0.0
        %v796 = vadd.f32 %v794, %v795
        %v797 = vsel %vm793, %v791, 0.0
        %v798 = vadd.f32 %v796, %v797
        %v799 = vsel %vm793, %v792, 0.0
        %v800 = vadd.f32 %v798, %v799
        %v801 = vrot.slane %v800, 4
        %v802 = vadd.f32 %v800, %v801
        %v803 = vrot.slane %v802, 2
        %v804 = vadd.f32 %v802, %v803
        %v805 = vrot.slane %v804, 1
        %v806 = vadd.f32 %v804, %v805
        %v807 = vrcp.pop 32.0
        %v808 = vmul.f32 %v806, %v807
        %v809 = vsub.f32 %v789, %v808
        %v810 = vsub.f32 %v790, %v808
        %v811 = vsub.f32 %v791, %v808
        %v812 = vsub.f32 %v792, %v808
        %v813 = vmul.f32 %v809, %v809
        %v814 = vmul.f32 %v810, %v810
        %v815 = vmul.f32 %v811, %v811
        %v816 = vmul.f32 %v812, %v812
        %v817 = vsel %vm793, %v813, 0.0
        %v818 = vsel %vm793, %v814, 0.0
        %v819 = vadd.f32 %v817, %v818
        %v820 = vsel %vm793, %v815, 0.0
        %v821 = vadd.f32 %v819, %v820
        %v822 = vsel %vm793, %v816, 0.0
        %v823 = vadd.f32 %v821, %v822
        %v824 = vrot.slane %v823, 4
        %v825 = vadd.f32 %v823, %v824
        %v826 = vrot.slane %v825, 2
        %v827 = vadd.f32 %v825, %v826
        %v828 = vrot.slane %v827, 1
        %v829 = vadd.f32 %v827, %v828
        %v830 = vmul.f32 %v829, %v807
        %v831 = vadd.f32 %v830, 1e-05
        %v832 = vrsqrt.pop %v831
        %v833 = vmul.f32 %v809, %v832
        %v834 = vmul.f32 %v810, %v832
        %v835 = vmul.f32 %v811, %v832
        %v836 = vmul.f32 %v812, %v832
        %v837 = vld [vmem:[%s3] sm:$0x1]
        %v839 = vlaneseq
        %v840 = vshrl.u32 %v839, 7
        %v841 = vsub.s32 0, %v840
        %v842 = vrot.slane %v837, %v841
        %v844 = vmul.f32 %v833, %v842
        %v845 = vmul.f32 %v834, %v842
        %v846 = vmul.f32 %v835, %v842
        %v847 = vmul.f32 %v836, %v842
        %v848 = vld [vmem:[%s4] sm:$0x1]
        %v850 = vlaneseq
        %v851 = vshrl.u32 %v850, 7
        %v852 = vsub.s32 0, %v851
        %v853 = vrot.slane %v848, %v852
        %v855 = vadd.f32 %v844, %v853
        %v856 = vadd.f32 %v845, %v853
        %v857 = vadd.f32 %v846, %v853
        %v858 = vadd.f32 %v847, %v853
        %v859 = vld [vmem:[#allocation7] sm:$0xff]
        %v860 = vld [vmem:[#allocation7 + $0x8] sm:$0xff]
        %v861 = vld [vmem:[#allocation7 + $0x10] sm:$0xff]
        %v862 = vld [vmem:[#allocation7 + $0x18] sm:$0xff]
        %v863 = vadd.f32 %v855, %v859
        %v864 = vadd.f32 %v856, %v860
        %v865 = vadd.f32 %v857, %v861
        %v866 = vadd.f32 %v858, %v862
        %v867 = vld [vmem:[%s5] sm:$0x1]
        %v868 = vld [vmem:[%s6] sm:$0x1]
        %v869 = vsel %vm793, %v863, 0.0
        %870 = vadd.xlane.f32.xlu0 %v869
        %v871 = vpop.xlane.xlu0 %870
        %v872 = vsel %vm793, %v864, 0.0
        %873 = vadd.xlane.f32.xlu0 %v872
        %v874 = vpop.xlane.xlu0 %873
        %v875 = vsel %vm793, %v865, 0.0
        %876 = vadd.xlane.f32.xlu0 %v875
        %v877 = vpop.xlane.xlu0 %876
        %v878 = vsel %vm793, %v866, 0.0
        %879 = vadd.xlane.f32.xlu0 %v878
        %v880 = vpop.xlane.xlu0 %879
        %v881 = vmul.f32 %v871, %v807
        %v882 = vmul.f32 %v874, %v807
        %v883 = vmul.f32 %v877, %v807
        %v884 = vmul.f32 %v880, %v807
        %v885 = vsub.f32 %v863, %v881
        %v886 = vsub.f32 %v864, %v882
        %v887 = vsub.f32 %v865, %v883
        %v888 = vsub.f32 %v866, %v884
        %v889 = vmul.f32 %v885, %v885
        %v890 = vmul.f32 %v886, %v886
        %v891 = vmul.f32 %v887, %v887
        %v892 = vmul.f32 %v888, %v888
        %v893 = vsel %vm793, %v889, 0.0
        %894 = vadd.xlane.f32.xlu0 %v893
        %v895 = vpop.xlane.xlu0 %894
        %v896 = vsel %vm793, %v890, 0.0
        %897 = vadd.xlane.f32.xlu0 %v896
        %v898 = vpop.xlane.xlu0 %897
        %v899 = vsel %vm793, %v891, 0.0
        %900 = vadd.xlane.f32.xlu0 %v899
        %v901 = vpop.xlane.xlu0 %900
        %v902 = vsel %vm793, %v892, 0.0
        %903 = vadd.xlane.f32.xlu0 %v902
        %v904 = vpop.xlane.xlu0 %903
        %v905 = vmul.f32 %v895, %v807
        %v906 = vmul.f32 %v898, %v807
        %v907 = vmul.f32 %v901, %v807
        %v908 = vmul.f32 %v904, %v807
        %v909 = vadd.f32 %v905, 1e-05
        %v910 = vadd.f32 %v906, 1e-05
        %v911 = vadd.f32 %v907, 1e-05
        %v912 = vadd.f32 %v908, 1e-05
        %v913 = vrsqrt.pop %v909
        %v914 = vrsqrt.pop %v910
        %v915 = vrsqrt.pop %v911
        %v916 = vrsqrt.pop %v912
        %v917 = vmul.f32 %v885, %v913
        %v918 = vmul.f32 %v886, %v914
        %v919 = vmul.f32 %v887, %v915
        %v920 = vmul.f32 %v888, %v916
        %v922 = vlaneseq
        %v923 = vshrl.u32 %v922, 7
        %v924 = vsub.s32 0, %v923
        %v925 = vrot.slane %v867, %v924
        %v927 = vmul.f32 %v917, %v925
        %v928 = vmul.f32 %v918, %v925
        %v929 = vmul.f32 %v919, %v925
        %v930 = vmul.f32 %v920, %v925
        %v932 = vlaneseq
        %v933 = vshrl.u32 %v932, 7
        %v934 = vsub.s32 0, %v933
        %v935 = vrot.slane %v868, %v934
        %v937 = vadd.f32 %v927, %v935
        %v938 = vadd.f32 %v928, %v935
        %v939 = vadd.f32 %v929, %v935
        %v940 = vadd.f32 %v930, %v935
        %v941 = vld [vmem:[#allocation10] sm:$0xff]
        %v942 = vld [vmem:[#allocation10 + $0x8] sm:$0xff]
        %v943 = vld [vmem:[#allocation10 + $0x10] sm:$0xff]
        %v944 = vld [vmem:[#allocation10 + $0x18] sm:$0xff]
        %v946 = vsel %vm793, %v937, 0
        %v949 = vsel %vm793, %v938, 0
        %v952 = vsel %vm793, %v939, 0
        %v955 = vsel %vm793, %v940, 0
        %957 = vmatprep.subr.mxu0 0.0
        %958 = vmatpush1.msra.mxu0 %v941
        %959 = vmatprep.subr.mxu0 0.0
        %960 = vmatpush1.msra.mxu0 %v942
        %961 = vmatprep.subr.mxu0 0.0
        %962 = vmatpush1.msra.mxu0 %v943
        %963 = vmatprep.subr.mxu0 0.0
        %964 = vmatpush1.msra.mxu0 %v944
        %965 = vmatprep.subr.mxu0 0.0
        %966 = vmatpush1.msra.mxu0 0.0
        %967 = vmatprep.subr.mxu0 0.0
        %968 = vmatpush1.msra.mxu0 0.0
        %969 = vmatprep.subr.mxu0 0.0
        %970 = vmatpush1.msra.mxu0 0.0
        %971 = vmatprep.subr.mxu0 0.0
        %972 = vmatpush1.msra.mxu0 0.0
        %973 = vmatprep.subr.mxu0 0.0
        %974 = vmatpush1.msra.mxu0 0.0
        %975 = vmatprep.subr.mxu0 0.0
        %976 = vmatpush1.msra.mxu0 0.0
        %977 = vmatprep.subr.mxu0 0.0
        %978 = vmatpush1.msra.mxu0 0.0
        %979 = vmatprep.subr.mxu0 0.0
        %980 = vmatpush1.msra.mxu0 0.0
        %981 = vmatprep.subr.mxu0 0.0
        %982 = vmatpush1.msra.mxu0 0.0
        %983 = vmatprep.subr.mxu0 0.0
        %984 = vmatpush1.msra.mxu0 0.0
        %985 = vmatprep.subr.mxu0 0.0
        %986 = vmatpush1.msra.mxu0 0.0
        %987 = vmatprep.subr.mxu0 0.0
        %988 = vmatpush1.msra.mxu0 0.0
        %989 = vmatprep.subr.mxu0 0.0
        %990 = vmatpush1.msra.mxu0 0.0
        %991 = vmatprep.subr.mxu0 0.0
        %992 = vmatpush1.msra.mxu0 0.0
        %993 = vmatprep.subr.mxu0 0.0
        %994 = vmatpush1.msra.mxu0 0.0
        %995 = vmatprep.subr.mxu0 0.0
        %996 = vmatpush1.msra.mxu0 0.0
        %997 = vmatprep.subr.mxu0 0.0
        %998 = vmatpush1.msra.mxu0 0.0
        %999 = vmatprep.subr.mxu0 0.0
        %1000 = vmatpush1.msra.mxu0 0.0
        %1001 = vmatprep.subr.mxu0 0.0
        %1002 = vmatpush1.msra.mxu0 0.0
        %1003 = vmatprep.subr.mxu0 0.0
        %1004 = vmatpush1.msra.mxu0 0.0
        %1005 = vmatprep.subr.mxu0 0.0
        %1006 = vmatpush1.msra.mxu0 0.0
        %1007 = vmatprep.subr.mxu0 0.0
        %1008 = vmatpush1.msra.mxu0 0.0
        %1009 = vmatprep.subr.mxu0 0.0
        %1010 = vmatpush1.msra.mxu0 0.0
        %1011 = vmatprep.subr.mxu0 0.0
        %1012 = vmatpush1.msra.mxu0 0.0
        %1013 = vmatprep.subr.mxu0 0.0
        %1014 = vmatpush1.msra.mxu0 0.0
        %1015 = vmatprep.subr.mxu0 0.0
        %1016 = vmatpush1.msra.mxu0 0.0
        %1017 = vmatprep.subr.mxu0 0.0
        %1018 = vmatpush1.msra.mxu0 0.0
        %1019 = vmatprep.subr.mxu0 0.0
        %1020 = vmatpush1.msra.mxu0 0.0
        %1021 = vmatprep.mubr.f32.mxu0 0.0
        %1022 = vmatmul.mubr.f32.gmra.mrb[0].mxu0 %v946
        %v1023 = vpop.f32.mrb[0].mxu0
        %v1024 = vadd.f32 0.0, %v1023
        %v1025 = vpop.f32.mrb[0].mxu0
        %1026 = vmatprep.mubr.f32.mxu0 0.0
        %1027 = vmatmul.mubr.f32.gmra.mrb[0].mxu0 %v949
        %v1028 = vpop.f32.mrb[0].mxu0
        %v1029 = vadd.f32 0.0, %v1028
        %v1030 = vpop.f32.mrb[0].mxu0
        %1031 = vmatprep.mubr.f32.mxu0 0.0
        %1032 = vmatmul.mubr.f32.gmra.mrb[0].mxu0 %v952
        %v1033 = vpop.f32.mrb[0].mxu0
        %v1034 = vadd.f32 0.0, %v1033
        %v1035 = vpop.f32.mrb[0].mxu0
        %1036 = vmatprep.mubr.f32.mxu0 0.0
        %1037 = vmatmul.mubr.f32.gmra.mrb[0].mxu0 %v955
        %v1038 = vpop.f32.mrb[0].mxu0
        %v1039 = vadd.f32 0.0, %v1038
        %v1040 = vpop.f32.mrb[0].mxu0
        %1041 = vdwg.mxu0
        %v1042 = vlaneseq
        %v1043 = vshrl.u32 %v1042, 7
        %v1044 = vadd.s32 %v1043, 8
        %v1045 = vadd.s32 %v1043, 16
        %v1046 = vadd.s32 %v1043, 24
        %v1047 = vcvt.s32.f32 %v1043
        %v1048 = vcvt.s32.f32 %v1044
        %v1049 = vcvt.s32.f32 %v1045
        %v1050 = vcvt.s32.f32 %v1046
        %v1051 = vlaneseq
        %v1052 = vand.u32 %v1051, 127
        %v1053 = vcvt.s32.f32 %v1052
        %v1054 = vmul.f32 %v1047, 0.25
        %v1055 = vmul.f32 %v1048, 0.25
        %v1056 = vmul.f32 %v1049, 0.25
        %v1057 = vmul.f32 %v1050, 0.25
        %v1058 = vfloor.f32 %v1054
        %v1059 = vfloor.f32 %v1055
        %v1060 = vfloor.f32 %v1056
        %v1061 = vfloor.f32 %v1057
        %v1062 = vmul.f32 %v1053, 0.25
        %v1063 = vfloor.f32 %v1062
        %vm1064 = vcmp.eq.f32.partialorder %v1058, %v1063
        %vm1065 = vcmp.eq.f32.partialorder %v1059, %v1063
        %vm1066 = vcmp.eq.f32.partialorder %v1060, %v1063
        %vm1067 = vcmp.eq.f32.partialorder %v1061, %v1063
        %1072 = vrot.lane.b32.xlu0 %v1024, 96
        %v1073 = vpop.permute.xlu0 %1072
        %1074 = vrot.lane.b32.xlu0 %v1029, 96
        %v1075 = vpop.permute.xlu0 %1074
        %1076 = vrot.lane.b32.xlu0 %v1034, 96
        %v1077 = vpop.permute.xlu0 %1076
        %1078 = vrot.lane.b32.xlu0 %v1039, 96
        %v1079 = vpop.permute.xlu0 %1078
        %vm1080 = vcmask 31744
        %v1081 = vsel %vm1080, %v1024, 0
        %v1083 = vsel %vm1080, %v1029, 0
        %v1085 = vsel %vm1080, %v1034, 0
        %v1087 = vsel %vm1080, %v1039, 0
        %v1089 = vsel %vm1080, %v1073, 0
        %v1091 = vsel %vm1080, %v1075, 0
        %v1093 = vsel %vm1080, %v1077, 0
        %v1095 = vsel %vm1080, %v1079, 0
        %1097 = vmatprep.subr.mxu0 0.0
        %1098 = vmatpush1.xpose.msra.mxu0 %v1089
        %1099 = vmatprep.subr.mxu0 0.0
        %1100 = vmatpush1.xpose.msra.mxu0 %v1091
        %1101 = vmatprep.subr.mxu0 0.0
        %1102 = vmatpush1.xpose.msra.mxu0 %v1093
        %1103 = vmatprep.subr.mxu0 0.0
        %1104 = vmatpush1.xpose.msra.mxu0 %v1095
        %1105 = vmatprep.subr.mxu0 0.0
        %1106 = vmatpush1.xpose.msra.mxu0 0.0
        %1107 = vmatprep.subr.mxu0 0.0
        %1108 = vmatpush1.xpose.msra.mxu0 0.0
        %1109 = vmatprep.subr.mxu0 0.0
        %1110 = vmatpush1.xpose.msra.mxu0 0.0
        %1111 = vmatprep.subr.mxu0 0.0
        %1112 = vmatpush1.xpose.msra.mxu0 0.0
        %1113 = vmatprep.subr.mxu0 0.0
        %1114 = vmatpush1.xpose.msra.mxu0 0.0
        %1115 = vmatprep.subr.mxu0 0.0
        %1116 = vmatpush1.xpose.msra.mxu0 0.0
        %1117 = vmatprep.subr.mxu0 0.0
        %1118 = vmatpush1.xpose.msra.mxu0 0.0
        %1119 = vmatprep.subr.mxu0 0.0
        %1120 = vmatpush1.xpose.msra.mxu0 0.0
        %1121 = vmatprep.subr.mxu0 0.0
        %1122 = vmatpush1.xpose.msra.mxu0 0.0
        %1123 = vmatprep.subr.mxu0 0.0
        %1124 = vmatpush1.xpose.msra.mxu0 0.0
        %1125 = vmatprep.subr.mxu0 0.0
        %1126 = vmatpush1.xpose.msra.mxu0 0.0
        %1127 = vmatprep.subr.mxu0 0.0
        %1128 = vmatpush1.xpose.msra.mxu0 0.0
        %1129 = vmatprep.subr.mxu0 0.0
        %1130 = vmatpush1.xpose.msra.mxu0 0.0
        %1131 = vmatprep.subr.mxu0 0.0
        %1132 = vmatpush1.xpose.msra.mxu0 0.0
        %1133 = vmatprep.subr.mxu0 0.0
        %1134 = vmatpush1.xpose.msra.mxu0 0.0
        %1135 = vmatprep.subr.mxu0 0.0
        %1136 = vmatpush1.xpose.msra.mxu0 0.0
        %1137 = vmatprep.subr.mxu0 0.0
        %1138 = vmatpush1.xpose.msra.mxu0 0.0
        %1139 = vmatprep.subr.mxu0 0.0
        %1140 = vmatpush1.xpose.msra.mxu0 0.0
        %1141 = vmatprep.subr.mxu0 0.0
        %1142 = vmatpush1.xpose.msra.mxu0 0.0
        %1143 = vmatprep.subr.mxu0 0.0
        %1144 = vmatpush1.xpose.msra.mxu0 0.0
        %1145 = vmatprep.subr.mxu0 0.0
        %1146 = vmatpush1.xpose.msra.mxu0 0.0
        %1147 = vmatprep.subr.mxu0 0.0
        %1148 = vmatpush1.xpose.msra.mxu0 0.0
        %1149 = vmatprep.subr.mxu0 0.0
        %1150 = vmatpush1.xpose.msra.mxu0 0.0
        %1151 = vmatprep.subr.mxu0 0.0
        %1152 = vmatpush1.xpose.msra.mxu0 0.0
        %1153 = vmatprep.subr.mxu0 0.0
        %1154 = vmatpush1.xpose.msra.mxu0 0.0
        %1155 = vmatprep.subr.mxu0 0.0
        %1156 = vmatpush1.xpose.msra.mxu0 0.0
        %1157 = vmatprep.subr.mxu0 0.0
        %1158 = vmatpush1.xpose.msra.mxu0 0.0
        %1159 = vmatprep.subr.mxu0 0.0
        %1160 = vmatpush1.xpose.msra.mxu0 0.0
        %1161 = vmatprep.mubr.f32.mxu0 0.0
        %1162 = vmatmul.mubr.f32.gmra.mrb[0].mxu0 %v1081
        %v1163 = vpop.f32.mrb[0].mxu0
        %v1164 = vadd.f32 0.0, %v1163
        %v1165 = vpop.f32.mrb[0].mxu0
        %1166 = vmatprep.mubr.f32.mxu0 0.0
        %1167 = vmatmul.mubr.f32.gmra.mrb[0].mxu0 %v1083
        %v1168 = vpop.f32.mrb[0].mxu0
        %v1169 = vadd.f32 0.0, %v1168
        %v1170 = vpop.f32.mrb[0].mxu0
        %1171 = vmatprep.mubr.f32.mxu0 0.0
        %1172 = vmatmul.mubr.f32.gmra.mrb[0].mxu0 %v1085
        %v1173 = vpop.f32.mrb[0].mxu0
        %v1174 = vadd.f32 0.0, %v1173
        %v1175 = vpop.f32.mrb[0].mxu0
        %1176 = vmatprep.mubr.f32.mxu0 0.0
        %1177 = vmatmul.mubr.f32.gmra.mrb[0].mxu0 %v1087
        %v1178 = vpop.f32.mrb[0].mxu0
        %v1179 = vadd.f32 0.0, %v1178
        %v1180 = vpop.f32.mrb[0].mxu0
        %1181 = vdwg.mxu0
        %v1182 = vmul.f32 %v1164, 0.5
        %v1183 = vmul.f32 %v1169, 0.5
        %v1184 = vmul.f32 %v1174, 0.5
        %v1185 = vmul.f32 %v1179, 0.5
        %v1186 = vsel %vm1064, %v1182, -1e+30
        %v1187 = vsel %vm1065, %v1183, -1e+30
        %v1188 = vsel %vm1066, %v1184, -1e+30
        %v1189 = vsel %vm1067, %v1185, -1e+30
        %v1190 = vsel %vm793, %v1186, -inf
        %1191 = vmax.xlane.f32.xlu0 %v1190
        %v1192 = vpop.xlane.xlu0 %1191
        %v1193 = vsel %vm793, %v1187, -inf
        %1194 = vmax.xlane.f32.xlu0 %v1193
        %v1195 = vpop.xlane.xlu0 %1194
        %v1196 = vsel %vm793, %v1188, -inf
        %1197 = vmax.xlane.f32.xlu0 %v1196
        %v1198 = vpop.xlane.xlu0 %1197
        %v1199 = vsel %vm793, %v1189, -inf
        %1200 = vmax.xlane.f32.xlu0 %v1199
        %v1201 = vpop.xlane.xlu0 %1200
        %v1202 = vsub.f32 %v1186, %v1192
        %v1203 = vsub.f32 %v1187, %v1195
        %v1204 = vsub.f32 %v1188, %v1198
        %v1205 = vsub.f32 %v1189, %v1201
        %v1206 = vmul.f32 %v1202, 1.442695
        %v1207 = vpow.pop %v1206
        %v1208 = vmul.f32 %v1203, 1.442695
        %v1209 = vpow.pop %v1208
        %v1210 = vmul.f32 %v1204, 1.442695
        %v1211 = vpow.pop %v1210
        %v1212 = vmul.f32 %v1205, 1.442695
        %v1213 = vpow.pop %v1212
        %v1214 = vsel %vm793, %v1207, 0.0
        %1215 = vadd.xlane.f32.xlu0 %v1214
        %v1216 = vpop.xlane.xlu0 %1215
        %v1217 = vsel %vm793, %v1209, 0.0
        %1218 = vadd.xlane.f32.xlu0 %v1217
        %v1219 = vpop.xlane.xlu0 %1218
        %v1220 = vsel %vm793, %v1211, 0.0
        %1221 = vadd.xlane.f32.xlu0 %v1220
        %v1222 = vpop.xlane.xlu0 %1221
        %v1223 = vsel %vm793, %v1213, 0.0
        %1224 = vadd.xlane.f32.xlu0 %v1223
        %v1225 = vpop.xlane.xlu0 %1224
        %v1226 = vrcp.pop %v1216
        %v1227 = vrcp.pop %v1219
        %v1228 = vrcp.pop %v1222
        %v1229 = vrcp.pop %v1225
        %v1230 = vmul.f32 %v1207, %v1226
        %v1231 = vmul.f32 %v1209, %v1227
        %v1232 = vmul.f32 %v1211, %v1228
        %v1233 = vmul.f32 %v1213, %v1229
        %1234 = vrot.lane.b32.xlu0 %v1024, 64
        %v1235 = vpop.permute.xlu0 %1234
        %1236 = vrot.lane.b32.xlu0 %v1029, 64
        %v1237 = vpop.permute.xlu0 %1236
        %1238 = vrot.lane.b32.xlu0 %v1034, 64
        %v1239 = vpop.permute.xlu0 %1238
        %1240 = vrot.lane.b32.xlu0 %v1039, 64
        %v1241 = vpop.permute.xlu0 %1240
        %v1247 = vsel %vm793, %v1230, 0
        %v1250 = vsel %vm793, %v1231, 0
        %v1253 = vsel %vm793, %v1232, 0
        %v1256 = vsel %vm793, %v1233, 0
        %1258 = vmatprep.subr.mxu0 0.0
        %1259 = vmatpush1.msra.mxu0 %v1235
        %1260 = vmatprep.subr.mxu0 0.0
        %1261 = vmatpush1.msra.mxu0 %v1237
        %1262 = vmatprep.subr.mxu0 0.0
        %1263 = vmatpush1.msra.mxu0 %v1239
        %1264 = vmatprep.subr.mxu0 0.0
        %1265 = vmatpush1.msra.mxu0 %v1241
        %1266 = vmatprep.subr.mxu0 0.0
        %1267 = vmatpush1.msra.mxu0 0.0
        %1268 = vmatprep.subr.mxu0 0.0
        %1269 = vmatpush1.msra.mxu0 0.0
        %1270 = vmatprep.subr.mxu0 0.0
        %1271 = vmatpush1.msra.mxu0 0.0
        %1272 = vmatprep.subr.mxu0 0.0
        %1273 = vmatpush1.msra.mxu0 0.0
        %1274 = vmatprep.subr.mxu0 0.0
        %1275 = vmatpush1.msra.mxu0 0.0
        %1276 = vmatprep.subr.mxu0 0.0
        %1277 = vmatpush1.msra.mxu0 0.0
        %1278 = vmatprep.subr.mxu0 0.0
        %1279 = vmatpush1.msra.mxu0 0.0
        %1280 = vmatprep.subr.mxu0 0.0
        %1281 = vmatpush1.msra.mxu0 0.0
        %1282 = vmatprep.subr.mxu0 0.0
        %1283 = vmatpush1.msra.mxu0 0.0
        %1284 = vmatprep.subr.mxu0 0.0
        %1285 = vmatpush1.msra.mxu0 0.0
        %1286 = vmatprep.subr.mxu0 0.0
        %1287 = vmatpush1.msra.mxu0 0.0
        %1288 = vmatprep.subr.mxu0 0.0
        %1289 = vmatpush1.msra.mxu0 0.0
        %1290 = vmatprep.subr.mxu0 0.0
        %1291 = vmatpush1.msra.mxu0 0.0
        %1292 = vmatprep.subr.mxu0 0.0
        %1293 = vmatpush1.msra.mxu0 0.0
        %1294 = vmatprep.subr.mxu0 0.0
        %1295 = vmatpush1.msra.mxu0 0.0
        %1296 = vmatprep.subr.mxu0 0.0
        %1297 = vmatpush1.msra.mxu0 0.0
        %1298 = vmatprep.subr.mxu0 0.0
        %1299 = vmatpush1.msra.mxu0 0.0
        %1300 = vmatprep.subr.mxu0 0.0
        %1301 = vmatpush1.msra.mxu0 0.0
        %1302 = vmatprep.subr.mxu0 0.0
        %1303 = vmatpush1.msra.mxu0 0.0
        %1304 = vmatprep.subr.mxu0 0.0
        %1305 = vmatpush1.msra.mxu0 0.0
        %1306 = vmatprep.subr.mxu0 0.0
        %1307 = vmatpush1.msra.mxu0 0.0
        %1308 = vmatprep.subr.mxu0 0.0
        %1309 = vmatpush1.msra.mxu0 0.0
        %1310 = vmatprep.subr.mxu0 0.0
        %1311 = vmatpush1.msra.mxu0 0.0
        %1312 = vmatprep.subr.mxu0 0.0
        %1313 = vmatpush1.msra.mxu0 0.0
        %1314 = vmatprep.subr.mxu0 0.0
        %1315 = vmatpush1.msra.mxu0 0.0
        %1316 = vmatprep.subr.mxu0 0.0
        %1317 = vmatpush1.msra.mxu0 0.0
        %1318 = vmatprep.subr.mxu0 0.0
        %1319 = vmatpush1.msra.mxu0 0.0
        %1320 = vmatprep.subr.mxu0 0.0
        %1321 = vmatpush1.msra.mxu0 0.0
        %1322 = vmatprep.mubr.f32.mxu0 0.0
        %1323 = vmatmul.mubr.f32.gmra.mrb[0].mxu0 %v1247
        %v1324 = vpop.f32.mrb[0].mxu0
        %v1325 = vadd.f32 0.0, %v1324
        %v1326 = vpop.f32.mrb[0].mxu0
        %1327 = vmatprep.mubr.f32.mxu0 0.0
        %1328 = vmatmul.mubr.f32.gmra.mrb[0].mxu0 %v1250
        %v1329 = vpop.f32.mrb[0].mxu0
        %v1330 = vadd.f32 0.0, %v1329
        %v1331 = vpop.f32.mrb[0].mxu0
        %1332 = vmatprep.mubr.f32.mxu0 0.0
        %1333 = vmatmul.mubr.f32.gmra.mrb[0].mxu0 %v1253
        %v1334 = vpop.f32.mrb[0].mxu0
        %v1335 = vadd.f32 0.0, %v1334
        %v1336 = vpop.f32.mrb[0].mxu0
        %1337 = vmatprep.mubr.f32.mxu0 0.0
        %1338 = vmatmul.mubr.f32.gmra.mrb[0].mxu0 %v1256
        %v1339 = vpop.f32.mrb[0].mxu0
        %v1340 = vadd.f32 0.0, %v1339
        %v1341 = vpop.f32.mrb[0].mxu0
        %1342 = vdwg.mxu0
        %1343 = vst.msk [vmem:[#allocation2] sm:$0xff] %vm1080, %v1325
        %1344 = vst.msk [vmem:[#allocation2 + $0x8] sm:$0xff] %vm1080, %v1330
        %1345 = vst.msk [vmem:[#allocation2 + $0x10] sm:$0xff] %vm1080, %v1335
        %1346 = vst.msk [vmem:[#allocation2 + $0x18] sm:$0xff] %vm1080, %v1340
        %1347 = vrot.lane.b32.xlu0 %v1024, 124
        %v1348 = vpop.permute.xlu0 %1347
        %1349 = vrot.lane.b32.xlu0 %v1029, 124
        %v1350 = vpop.permute.xlu0 %1349
        %1351 = vrot.lane.b32.xlu0 %v1034, 124
        %v1352 = vpop.permute.xlu0 %1351
        %1353 = vrot.lane.b32.xlu0 %v1039, 124
        %v1354 = vpop.permute.xlu0 %1353
        %1355 = vrot.lane.b32.xlu0 %v1024, 92
        %v1356 = vpop.permute.xlu0 %1355
        %1357 = vrot.lane.b32.xlu0 %v1029, 92
        %v1358 = vpop.permute.xlu0 %1357
        %1359 = vrot.lane.b32.xlu0 %v1034, 92
        %v1360 = vpop.permute.xlu0 %1359
        %1361 = vrot.lane.b32.xlu0 %v1039, 92
        %v1362 = vpop.permute.xlu0 %1361
        %v1363 = vsel %vm1080, %v1348, 0
        %v1365 = vsel %vm1080, %v1350, 0
        %v1367 = vsel %vm1080, %v1352, 0
        %v1369 = vsel %vm1080, %v1354, 0
        %v1371 = vsel %vm1080, %v1356, 0
        %v1373 = vsel %vm1080, %v1358, 0
        %v1375 = vsel %vm1080, %v1360, 0
        %v1377 = vsel %vm1080, %v1362, 0
        %1379 = vmatprep.subr.mxu0 0.0
        %1380 = vmatpush1.xpose.msra.mxu0 %v1371
        %1381 = vmatprep.subr.mxu0 0.0
        %1382 = vmatpush1.xpose.msra.mxu0 %v1373
        %1383 = vmatprep.subr.mxu0 0.0
        %1384 = vmatpush1.xpose.msra.mxu0 %v1375
        %1385 = vmatprep.subr.mxu0 0.0
        %1386 = vmatpush1.xpose.msra.mxu0 %v1377
        %1387 = vmatprep.subr.mxu0 0.0
        %1388 = vmatpush1.xpose.msra.mxu0 0.0
        %1389 = vmatprep.subr.mxu0 0.0
        %1390 = vmatpush1.xpose.msra.mxu0 0.0
        %1391 = vmatprep.subr.mxu0 0.0
        %1392 = vmatpush1.xpose.msra.mxu0 0.0
        %1393 = vmatprep.subr.mxu0 0.0
        %1394 = vmatpush1.xpose.msra.mxu0 0.0
        %1395 = vmatprep.subr.mxu0 0.0
        %1396 = vmatpush1.xpose.msra.mxu0 0.0
        %1397 = vmatprep.subr.mxu0 0.0
        %1398 = vmatpush1.xpose.msra.mxu0 0.0
        %1399 = vmatprep.subr.mxu0 0.0
        %1400 = vmatpush1.xpose.msra.mxu0 0.0
        %1401 = vmatprep.subr.mxu0 0.0
        %1402 = vmatpush1.xpose.msra.mxu0 0.0
        %1403 = vmatprep.subr.mxu0 0.0
        %1404 = vmatpush1.xpose.msra.mxu0 0.0
        %1405 = vmatprep.subr.mxu0 0.0
        %1406 = vmatpush1.xpose.msra.mxu0 0.0
        %1407 = vmatprep.subr.mxu0 0.0
        %1408 = vmatpush1.xpose.msra.mxu0 0.0
        %1409 = vmatprep.subr.mxu0 0.0
        %1410 = vmatpush1.xpose.msra.mxu0 0.0
        %1411 = vmatprep.subr.mxu0 0.0
        %1412 = vmatpush1.xpose.msra.mxu0 0.0
        %1413 = vmatprep.subr.mxu0 0.0
        %1414 = vmatpush1.xpose.msra.mxu0 0.0
        %1415 = vmatprep.subr.mxu0 0.0
        %1416 = vmatpush1.xpose.msra.mxu0 0.0
        %1417 = vmatprep.subr.mxu0 0.0
        %1418 = vmatpush1.xpose.msra.mxu0 0.0
        %1419 = vmatprep.subr.mxu0 0.0
        %1420 = vmatpush1.xpose.msra.mxu0 0.0
        %1421 = vmatprep.subr.mxu0 0.0
        %1422 = vmatpush1.xpose.msra.mxu0 0.0
        %1423 = vmatprep.subr.mxu0 0.0
        %1424 = vmatpush1.xpose.msra.mxu0 0.0
        %1425 = vmatprep.subr.mxu0 0.0
        %1426 = vmatpush1.xpose.msra.mxu0 0.0
        %1427 = vmatprep.subr.mxu0 0.0
        %1428 = vmatpush1.xpose.msra.mxu0 0.0
        %1429 = vmatprep.subr.mxu0 0.0
        %1430 = vmatpush1.xpose.msra.mxu0 0.0
        %1431 = vmatprep.subr.mxu0 0.0
        %1432 = vmatpush1.xpose.msra.mxu0 0.0
        %1433 = vmatprep.subr.mxu0 0.0
        %1434 = vmatpush1.xpose.msra.mxu0 0.0
        %1435 = vmatprep.subr.mxu0 0.0
        %1436 = vmatpush1.xpose.msra.mxu0 0.0
        %1437 = vmatprep.subr.mxu0 0.0
        %1438 = vmatpush1.xpose.msra.mxu0 0.0
        %1439 = vmatprep.subr.mxu0 0.0
        %1440 = vmatpush1.xpose.msra.mxu0 0.0
        %1441 = vmatprep.subr.mxu0 0.0
        %1442 = vmatpush1.xpose.msra.mxu0 0.0
        %1443 = vmatprep.mubr.f32.mxu0 0.0
        %1444 = vmatmul.mubr.f32.gmra.mrb[0].mxu0 %v1363
        %v1445 = vpop.f32.mrb[0].mxu0
        %v1446 = vadd.f32 0.0, %v1445
        %v1447 = vpop.f32.mrb[0].mxu0
        %1448 = vmatprep.mubr.f32.mxu0 0.0
        %1449 = vmatmul.mubr.f32.gmra.mrb[0].mxu0 %v1365
        %v1450 = vpop.f32.mrb[0].mxu0
        %v1451 = vadd.f32 0.0, %v1450
        %v1452 = vpop.f32.mrb[0].mxu0
        %1453 = vmatprep.mubr.f32.mxu0 0.0
        %1454 = vmatmul.mubr.f32.gmra.mrb[0].mxu0 %v1367
        %v1455 = vpop.f32.mrb[0].mxu0
        %v1456 = vadd.f32 0.0, %v1455
        %v1457 = vpop.f32.mrb[0].mxu0
        %1458 = vmatprep.mubr.f32.mxu0 0.0
        %1459 = vmatmul.mubr.f32.gmra.mrb[0].mxu0 %v1369
        %v1460 = vpop.f32.mrb[0].mxu0
        %v1461 = vadd.f32 0.0, %v1460
        %v1462 = vpop.f32.mrb[0].mxu0
        %1463 = vdwg.mxu0
        %v1464 = vmul.f32 %v1446, 0.5
        %v1465 = vmul.f32 %v1451, 0.5
        %v1466 = vmul.f32 %v1456, 0.5
        %v1467 = vmul.f32 %v1461, 0.5
        %v1468 = vsel %vm1064, %v1464, -1e+30
        %v1469 = vsel %vm1065, %v1465, -1e+30
        %v1470 = vsel %vm1066, %v1466, -1e+30
        %v1471 = vsel %vm1067, %v1467, -1e+30
        %v1472 = vsel %vm793, %v1468, -inf
        %1473 = vmax.xlane.f32.xlu0 %v1472
        %v1474 = vpop.xlane.xlu0 %1473
        %v1475 = vsel %vm793, %v1469, -inf
        %1476 = vmax.xlane.f32.xlu0 %v1475
        %v1477 = vpop.xlane.xlu0 %1476
        %v1478 = vsel %vm793, %v1470, -inf
        %1479 = vmax.xlane.f32.xlu0 %v1478
        %v1480 = vpop.xlane.xlu0 %1479
        %v1481 = vsel %vm793, %v1471, -inf
        %1482 = vmax.xlane.f32.xlu0 %v1481
        %v1483 = vpop.xlane.xlu0 %1482
        %v1484 = vsub.f32 %v1468, %v1474
        %v1485 = vsub.f32 %v1469, %v1477
        %v1486 = vsub.f32 %v1470, %v1480
        %v1487 = vsub.f32 %v1471, %v1483
        %v1488 = vmul.f32 %v1484, 1.442695
        %v1489 = vpow.pop %v1488
        %v1490 = vmul.f32 %v1485, 1.442695
        %v1491 = vpow.pop %v1490
        %v1492 = vmul.f32 %v1486, 1.442695
        %v1493 = vpow.pop %v1492
        %v1494 = vmul.f32 %v1487, 1.442695
        %v1495 = vpow.pop %v1494
        %v1496 = vsel %vm793, %v1489, 0.0
        %1497 = vadd.xlane.f32.xlu0 %v1496
        %v1498 = vpop.xlane.xlu0 %1497
        %v1499 = vsel %vm793, %v1491, 0.0
        %1500 = vadd.xlane.f32.xlu0 %v1499
        %v1501 = vpop.xlane.xlu0 %1500
        %v1502 = vsel %vm793, %v1493, 0.0
        %1503 = vadd.xlane.f32.xlu0 %v1502
        %v1504 = vpop.xlane.xlu0 %1503
        %v1505 = vsel %vm793, %v1495, 0.0
        %1506 = vadd.xlane.f32.xlu0 %v1505
        %v1507 = vpop.xlane.xlu0 %1506
        %v1508 = vrcp.pop %v1498
        %v1509 = vrcp.pop %v1501
        %v1510 = vrcp.pop %v1504
        %v1511 = vrcp.pop %v1507
        %v1512 = vmul.f32 %v1489, %v1508
        %v1513 = vmul.f32 %v1491, %v1509
        %v1514 = vmul.f32 %v1493, %v1510
        %v1515 = vmul.f32 %v1495, %v1511
        %1516 = vrot.lane.b32.xlu0 %v1024, 60
        %v1517 = vpop.permute.xlu0 %1516
        %1518 = vrot.lane.b32.xlu0 %v1029, 60
        %v1519 = vpop.permute.xlu0 %1518
        %1520 = vrot.lane.b32.xlu0 %v1034, 60
        %v1521 = vpop.permute.xlu0 %1520
        %1522 = vrot.lane.b32.xlu0 %v1039, 60
        %v1523 = vpop.permute.xlu0 %1522
        %v1529 = vsel %vm793, %v1512, 0
        %v1532 = vsel %vm793, %v1513, 0
        %v1535 = vsel %vm793, %v1514, 0
        %v1538 = vsel %vm793, %v1515, 0
        %1540 = vmatprep.subr.mxu0 0.0
        %1541 = vmatpush1.msra.mxu0 %v1517
        %1542 = vmatprep.subr.mxu0 0.0
        %1543 = vmatpush1.msra.mxu0 %v1519
        %1544 = vmatprep.subr.mxu0 0.0
        %1545 = vmatpush1.msra.mxu0 %v1521
        %1546 = vmatprep.subr.mxu0 0.0
        %1547 = vmatpush1.msra.mxu0 %v1523
        %1548 = vmatprep.subr.mxu0 0.0
        %1549 = vmatpush1.msra.mxu0 0.0
        %1550 = vmatprep.subr.mxu0 0.0
        %1551 = vmatpush1.msra.mxu0 0.0
        %1552 = vmatprep.subr.mxu0 0.0
        %1553 = vmatpush1.msra.mxu0 0.0
        %1554 = vmatprep.subr.mxu0 0.0
        %1555 = vmatpush1.msra.mxu0 0.0
        %1556 = vmatprep.subr.mxu0 0.0
        %1557 = vmatpush1.msra.mxu0 0.0
        %1558 = vmatprep.subr.mxu0 0.0
        %1559 = vmatpush1.msra.mxu0 0.0
        %1560 = vmatprep.subr.mxu0 0.0
        %1561 = vmatpush1.msra.mxu0 0.0
        %1562 = vmatprep.subr.mxu0 0.0
        %1563 = vmatpush1.msra.mxu0 0.0
        %1564 = vmatprep.subr.mxu0 0.0
        %1565 = vmatpush1.msra.mxu0 0.0
        %1566 = vmatprep.subr.mxu0 0.0
        %1567 = vmatpush1.msra.mxu0 0.0
        %1568 = vmatprep.subr.mxu0 0.0
        %1569 = vmatpush1.msra.mxu0 0.0
        %1570 = vmatprep.subr.mxu0 0.0
        %1571 = vmatpush1.msra.mxu0 0.0
        %1572 = vmatprep.subr.mxu0 0.0
        %1573 = vmatpush1.msra.mxu0 0.0
        %1574 = vmatprep.subr.mxu0 0.0
        %1575 = vmatpush1.msra.mxu0 0.0
        %1576 = vmatprep.subr.mxu0 0.0
        %1577 = vmatpush1.msra.mxu0 0.0
        %1578 = vmatprep.subr.mxu0 0.0
        %1579 = vmatpush1.msra.mxu0 0.0
        %1580 = vmatprep.subr.mxu0 0.0
        %1581 = vmatpush1.msra.mxu0 0.0
        %1582 = vmatprep.subr.mxu0 0.0
        %1583 = vmatpush1.msra.mxu0 0.0
        %1584 = vmatprep.subr.mxu0 0.0
        %1585 = vmatpush1.msra.mxu0 0.0
        %1586 = vmatprep.subr.mxu0 0.0
        %1587 = vmatpush1.msra.mxu0 0.0
        %1588 = vmatprep.subr.mxu0 0.0
        %1589 = vmatpush1.msra.mxu0 0.0
        %1590 = vmatprep.subr.mxu0 0.0
        %1591 = vmatpush1.msra.mxu0 0.0
        %1592 = vmatprep.subr.mxu0 0.0
        %1593 = vmatpush1.msra.mxu0 0.0
        %1594 = vmatprep.subr.mxu0 0.0
        %1595 = vmatpush1.msra.mxu0 0.0
        %1596 = vmatprep.subr.mxu0 0.0
        %1597 = vmatpush1.msra.mxu0 0.0
        %1598 = vmatprep.subr.mxu0 0.0
        %1599 = vmatpush1.msra.mxu0 0.0
        %1600 = vmatprep.subr.mxu0 0.0
        %1601 = vmatpush1.msra.mxu0 0.0
        %1602 = vmatprep.subr.mxu0 0.0
        %1603 = vmatpush1.msra.mxu0 0.0
        %1604 = vmatprep.mubr.f32.mxu0 0.0
        %1605 = vmatmul.mubr.f32.gmra.mrb[0].mxu0 %v1529
        %v1606 = vpop.f32.mrb[0].mxu0
        %v1607 = vadd.f32 0.0, %v1606
        %v1608 = vpop.f32.mrb[0].mxu0
        %1609 = vmatprep.mubr.f32.mxu0 0.0
        %1610 = vmatmul.mubr.f32.gmra.mrb[0].mxu0 %v1532
        %v1611 = vpop.f32.mrb[0].mxu0
        %v1612 = vadd.f32 0.0, %v1611
        %v1613 = vpop.f32.mrb[0].mxu0
        %1614 = vmatprep.mubr.f32.mxu0 0.0
        %1615 = vmatmul.mubr.f32.gmra.mrb[0].mxu0 %v1535
        %v1616 = vpop.f32.mrb[0].mxu0
        %v1617 = vadd.f32 0.0, %v1616
        %v1618 = vpop.f32.mrb[0].mxu0
        %1619 = vmatprep.mubr.f32.mxu0 0.0
        %1620 = vmatmul.mubr.f32.gmra.mrb[0].mxu0 %v1538
        %v1621 = vpop.f32.mrb[0].mxu0
        %v1622 = vadd.f32 0.0, %v1621
        %v1623 = vpop.f32.mrb[0].mxu0
        %1624 = vdwg.mxu0
        %1629 = vrot.lane.b32.xlu0 %v1607, 4
        %v1630 = vpop.permute.xlu0 %1629
        %1631 = vrot.lane.b32.xlu0 %v1612, 4
        %v1632 = vpop.permute.xlu0 %1631
        %1633 = vrot.lane.b32.xlu0 %v1617, 4
        %v1634 = vpop.permute.xlu0 %1633
        %1635 = vrot.lane.b32.xlu0 %v1622, 4
        %v1636 = vpop.permute.xlu0 %1635
        %vm1641 = vcmask 64544
        %1642 = vst.msk [vmem:[#allocation2] sm:$0xff] %vm1641, %v1630
        %1643 = vst.msk [vmem:[#allocation2 + $0x8] sm:$0xff] %vm1641, %v1632
        %1644 = vst.msk [vmem:[#allocation2 + $0x10] sm:$0xff] %vm1641, %v1634
        %1645 = vst.msk [vmem:[#allocation2 + $0x18] sm:$0xff] %vm1641, %v1636
        %1646 = vrot.lane.b32.xlu0 %v1024, 120
        %v1647 = vpop.permute.xlu0 %1646
        %1648 = vrot.lane.b32.xlu0 %v1029, 120
        %v1649 = vpop.permute.xlu0 %1648
        %1650 = vrot.lane.b32.xlu0 %v1034, 120
        %v1651 = vpop.permute.xlu0 %1650
        %1652 = vrot.lane.b32.xlu0 %v1039, 120
        %v1653 = vpop.permute.xlu0 %1652
        %1654 = vrot.lane.b32.xlu0 %v1024, 88
        %v1655 = vpop.permute.xlu0 %1654
        %1656 = vrot.lane.b32.xlu0 %v1029, 88
        %v1657 = vpop.permute.xlu0 %1656
        %1658 = vrot.lane.b32.xlu0 %v1034, 88
        %v1659 = vpop.permute.xlu0 %1658
        %1660 = vrot.lane.b32.xlu0 %v1039, 88
        %v1661 = vpop.permute.xlu0 %1660
        %v1662 = vsel %vm1080, %v1647, 0
        %v1664 = vsel %vm1080, %v1649, 0
        %v1666 = vsel %vm1080, %v1651, 0
        %v1668 = vsel %vm1080, %v1653, 0
        %v1670 = vsel %vm1080, %v1655, 0
        %v1672 = vsel %vm1080, %v1657, 0
        %v1674 = vsel %vm1080, %v1659, 0
        %v1676 = vsel %vm1080, %v1661, 0
        %1678 = vmatprep.subr.mxu0 0.0
        %1679 = vmatpush1.xpose.msra.mxu0 %v1670
        %1680 = vmatprep.subr.mxu0 0.0
        %1681 = vmatpush1.xpose.msra.mxu0 %v1672
        %1682 = vmatprep.subr.mxu0 0.0
        %1683 = vmatpush1.xpose.msra.mxu0 %v1674
        %1684 = vmatprep.subr.mxu0 0.0
        %1685 = vmatpush1.xpose.msra.mxu0 %v1676
        %1686 = vmatprep.subr.mxu0 0.0
        %1687 = vmatpush1.xpose.msra.mxu0 0.0
        %1688 = vmatprep.subr.mxu0 0.0
        %1689 = vmatpush1.xpose.msra.mxu0 0.0
        %1690 = vmatprep.subr.mxu0 0.0
        %1691 = vmatpush1.xpose.msra.mxu0 0.0
        %1692 = vmatprep.subr.mxu0 0.0
        %1693 = vmatpush1.xpose.msra.mxu0 0.0
        %1694 = vmatprep.subr.mxu0 0.0
        %1695 = vmatpush1.xpose.msra.mxu0 0.0
        %1696 = vmatprep.subr.mxu0 0.0
        %1697 = vmatpush1.xpose.msra.mxu0 0.0
        %1698 = vmatprep.subr.mxu0 0.0
        %1699 = vmatpush1.xpose.msra.mxu0 0.0
        %1700 = vmatprep.subr.mxu0 0.0
        %1701 = vmatpush1.xpose.msra.mxu0 0.0
        %1702 = vmatprep.subr.mxu0 0.0
        %1703 = vmatpush1.xpose.msra.mxu0 0.0
        %1704 = vmatprep.subr.mxu0 0.0
        %1705 = vmatpush1.xpose.msra.mxu0 0.0
        %1706 = vmatprep.subr.mxu0 0.0
        %1707 = vmatpush1.xpose.msra.mxu0 0.0
        %1708 = vmatprep.subr.mxu0 0.0
        %1709 = vmatpush1.xpose.msra.mxu0 0.0
        %1710 = vmatprep.subr.mxu0 0.0
        %1711 = vmatpush1.xpose.msra.mxu0 0.0
        %1712 = vmatprep.subr.mxu0 0.0
        %1713 = vmatpush1.xpose.msra.mxu0 0.0
        %1714 = vmatprep.subr.mxu0 0.0
        %1715 = vmatpush1.xpose.msra.mxu0 0.0
        %1716 = vmatprep.subr.mxu0 0.0
        %1717 = vmatpush1.xpose.msra.mxu0 0.0
        %1718 = vmatprep.subr.mxu0 0.0
        %1719 = vmatpush1.xpose.msra.mxu0 0.0
        %1720 = vmatprep.subr.mxu0 0.0
        %1721 = vmatpush1.xpose.msra.mxu0 0.0
        %1722 = vmatprep.subr.mxu0 0.0
        %1723 = vmatpush1.xpose.msra.mxu0 0.0
        %1724 = vmatprep.subr.mxu0 0.0
        %1725 = vmatpush1.xpose.msra.mxu0 0.0
        %1726 = vmatprep.subr.mxu0 0.0
        %1727 = vmatpush1.xpose.msra.mxu0 0.0
        %1728 = vmatprep.subr.mxu0 0.0
        %1729 = vmatpush1.xpose.msra.mxu0 0.0
        %1730 = vmatprep.subr.mxu0 0.0
        %1731 = vmatpush1.xpose.msra.mxu0 0.0
        %1732 = vmatprep.subr.mxu0 0.0
        %1733 = vmatpush1.xpose.msra.mxu0 0.0
        %1734 = vmatprep.subr.mxu0 0.0
        %1735 = vmatpush1.xpose.msra.mxu0 0.0
        %1736 = vmatprep.subr.mxu0 0.0
        %1737 = vmatpush1.xpose.msra.mxu0 0.0
        %1738 = vmatprep.subr.mxu0 0.0
        %1739 = vmatpush1.xpose.msra.mxu0 0.0
        %1740 = vmatprep.subr.mxu0 0.0
        %1741 = vmatpush1.xpose.msra.mxu0 0.0
        %1742 = vmatprep.mubr.f32.mxu0 0.0
        %1743 = vmatmul.mubr.f32.gmra.mrb[0].mxu0 %v1662
        %v1744 = vpop.f32.mrb[0].mxu0
        %v1745 = vadd.f32 0.0, %v1744
        %v1746 = vpop.f32.mrb[0].mxu0
        %1747 = vmatprep.mubr.f32.mxu0 0.0
        %1748 = vmatmul.mubr.f32.gmra.mrb[0].mxu0 %v1664
        %v1749 = vpop.f32.mrb[0].mxu0
        %v1750 = vadd.f32 0.0, %v1749
        %v1751 = vpop.f32.mrb[0].mxu0
        %1752 = vmatprep.mubr.f32.mxu0 0.0
        %1753 = vmatmul.mubr.f32.gmra.mrb[0].mxu0 %v1666
        %v1754 = vpop.f32.mrb[0].mxu0
        %v1755 = vadd.f32 0.0, %v1754
        %v1756 = vpop.f32.mrb[0].mxu0
        %1757 = vmatprep.mubr.f32.mxu0 0.0
        %1758 = vmatmul.mubr.f32.gmra.mrb[0].mxu0 %v1668
        %v1759 = vpop.f32.mrb[0].mxu0
        %v1760 = vadd.f32 0.0, %v1759
        %v1761 = vpop.f32.mrb[0].mxu0
        %1762 = vdwg.mxu0
        %v1763 = vmul.f32 %v1745, 0.5
        %v1764 = vmul.f32 %v1750, 0.5
        %v1765 = vmul.f32 %v1755, 0.5
        %v1766 = vmul.f32 %v1760, 0.5
        %v1767 = vsel %vm1064, %v1763, -1e+30
        %v1768 = vsel %vm1065, %v1764, -1e+30
        %v1769 = vsel %vm1066, %v1765, -1e+30
        %v1770 = vsel %vm1067, %v1766, -1e+30
        %v1771 = vsel %vm793, %v1767, -inf
        %1772 = vmax.xlane.f32.xlu0 %v1771
        %v1773 = vpop.xlane.xlu0 %1772
        %v1774 = vsel %vm793, %v1768, -inf
        %1775 = vmax.xlane.f32.xlu0 %v1774
        %v1776 = vpop.xlane.xlu0 %1775
        %v1777 = vsel %vm793, %v1769, -inf
        %1778 = vmax.xlane.f32.xlu0 %v1777
        %v1779 = vpop.xlane.xlu0 %1778
        %v1780 = vsel %vm793, %v1770, -inf
        %1781 = vmax.xlane.f32.xlu0 %v1780
        %v1782 = vpop.xlane.xlu0 %1781
        %v1783 = vsub.f32 %v1767, %v1773
        %v1784 = vsub.f32 %v1768, %v1776
        %v1785 = vsub.f32 %v1769, %v1779
        %v1786 = vsub.f32 %v1770, %v1782
        %v1787 = vmul.f32 %v1783, 1.442695
        %v1788 = vpow.pop %v1787
        %v1789 = vmul.f32 %v1784, 1.442695
        %v1790 = vpow.pop %v1789
        %v1791 = vmul.f32 %v1785, 1.442695
        %v1792 = vpow.pop %v1791
        %v1793 = vmul.f32 %v1786, 1.442695
        %v1794 = vpow.pop %v1793
        %v1795 = vsel %vm793, %v1788, 0.0
        %1796 = vadd.xlane.f32.xlu0 %v1795
        %v1797 = vpop.xlane.xlu0 %1796
        %v1798 = vsel %vm793, %v1790, 0.0
        %1799 = vadd.xlane.f32.xlu0 %v1798
        %v1800 = vpop.xlane.xlu0 %1799
        %v1801 = vsel %vm793, %v1792, 0.0
        %1802 = vadd.xlane.f32.xlu0 %v1801
        %v1803 = vpop.xlane.xlu0 %1802
        %v1804 = vsel %vm793, %v1794, 0.0
        %1805 = vadd.xlane.f32.xlu0 %v1804
        %v1806 = vpop.xlane.xlu0 %1805
        %v1807 = vrcp.pop %v1797
        %v1808 = vrcp.pop %v1800
        %v1809 = vrcp.pop %v1803
        %v1810 = vrcp.pop %v1806
        %v1811 = vmul.f32 %v1788, %v1807
        %v1812 = vmul.f32 %v1790, %v1808
        %v1813 = vmul.f32 %v1792, %v1809
        %v1814 = vmul.f32 %v1794, %v1810
        %1815 = vrot.lane.b32.xlu0 %v1024, 56
        %v1816 = vpop.permute.xlu0 %1815
        %1817 = vrot.lane.b32.xlu0 %v1029, 56
        %v1818 = vpop.permute.xlu0 %1817
        %1819 = vrot.lane.b32.xlu0 %v1034, 56
        %v1820 = vpop.permute.xlu0 %1819
        %1821 = vrot.lane.b32.xlu0 %v1039, 56
        %v1822 = vpop.permute.xlu0 %1821
        %v1828 = vsel %vm793, %v1811, 0
        %v1831 = vsel %vm793, %v1812, 0
        %v1834 = vsel %vm793, %v1813, 0
        %v1837 = vsel %vm793, %v1814, 0
        %1839 = vmatprep.subr.mxu0 0.0
        %1840 = vmatpush1.msra.mxu0 %v1816
        %1841 = vmatprep.subr.mxu0 0.0
        %1842 = vmatpush1.msra.mxu0 %v1818
        %1843 = vmatprep.subr.mxu0 0.0
        %1844 = vmatpush1.msra.mxu0 %v1820
        %1845 = vmatprep.subr.mxu0 0.0
        %1846 = vmatpush1.msra.mxu0 %v1822
        %1847 = vmatprep.subr.mxu0 0.0
        %1848 = vmatpush1.msra.mxu0 0.0
        %1849 = vmatprep.subr.mxu0 0.0
        %1850 = vmatpush1.msra.mxu0 0.0
        %1851 = vmatprep.subr.mxu0 0.0
        %1852 = vmatpush1.msra.mxu0 0.0
        %1853 = vmatprep.subr.mxu0 0.0
        %1854 = vmatpush1.msra.mxu0 0.0
        %1855 = vmatprep.subr.mxu0 0.0
        %1856 = vmatpush1.msra.mxu0 0.0
        %1857 = vmatprep.subr.mxu0 0.0
        %1858 = vmatpush1.msra.mxu0 0.0
        %1859 = vmatprep.subr.mxu0 0.0
        %1860 = vmatpush1.msra.mxu0 0.0
        %1861 = vmatprep.subr.mxu0 0.0
        %1862 = vmatpush1.msra.mxu0 0.0
        %1863 = vmatprep.subr.mxu0 0.0
        %1864 = vmatpush1.msra.mxu0 0.0
        %1865 = vmatprep.subr.mxu0 0.0
        %1866 = vmatpush1.msra.mxu0 0.0
        %1867 = vmatprep.subr.mxu0 0.0
        %1868 = vmatpush1.msra.mxu0 0.0
        %1869 = vmatprep.subr.mxu0 0.0
        %1870 = vmatpush1.msra.mxu0 0.0
        %1871 = vmatprep.subr.mxu0 0.0
        %1872 = vmatpush1.msra.mxu0 0.0
        %1873 = vmatprep.subr.mxu0 0.0
        %1874 = vmatpush1.msra.mxu0 0.0
        %1875 = vmatprep.subr.mxu0 0.0
        %1876 = vmatpush1.msra.mxu0 0.0
        %1877 = vmatprep.subr.mxu0 0.0
        %1878 = vmatpush1.msra.mxu0 0.0
        %1879 = vmatprep.subr.mxu0 0.0
        %1880 = vmatpush1.msra.mxu0 0.0
        %1881 = vmatprep.subr.mxu0 0.0
        %1882 = vmatpush1.msra.mxu0 0.0
        %1883 = vmatprep.subr.mxu0 0.0
        %1884 = vmatpush1.msra.mxu0 0.0
        %1885 = vmatprep.subr.mxu0 0.0
        %1886 = vmatpush1.msra.mxu0 0.0
        %1887 = vmatprep.subr.mxu0 0.0
        %1888 = vmatpush1.msra.mxu0 0.0
        %1889 = vmatprep.subr.mxu0 0.0
        %1890 = vmatpush1.msra.mxu0 0.0
        %1891 = vmatprep.subr.mxu0 0.0
        %1892 = vmatpush1.msra.mxu0 0.0
        %1893 = vmatprep.subr.mxu0 0.0
        %1894 = vmatpush1.msra.mxu0 0.0
        %1895 = vmatprep.subr.mxu0 0.0
        %1896 = vmatpush1.msra.mxu0 0.0
        %1897 = vmatprep.subr.mxu0 0.0
        %1898 = vmatpush1.msra.mxu0 0.0
        %1899 = vmatprep.subr.mxu0 0.0
        %1900 = vmatpush1.msra.mxu0 0.0
        %1901 = vmatprep.subr.mxu0 0.0
        %1902 = vmatpush1.msra.mxu0 0.0
        %1903 = vmatprep.mubr.f32.mxu0 0.0
        %1904 = vmatmul.mubr.f32.gmra.mrb[0].mxu0 %v1828
        %v1905 = vpop.f32.mrb[0].mxu0
        %v1906 = vadd.f32 0.0, %v1905
        %v1907 = vpop.f32.mrb[0].mxu0
        %1908 = vmatprep.mubr.f32.mxu0 0.0
        %1909 = vmatmul.mubr.f32.gmra.mrb[0].mxu0 %v1831
        %v1910 = vpop.f32.mrb[0].mxu0
        %v1911 = vadd.f32 0.0, %v1910
        %v1912 = vpop.f32.mrb[0].mxu0
        %1913 = vmatprep.mubr.f32.mxu0 0.0
        %1914 = vmatmul.mubr.f32.gmra.mrb[0].mxu0 %v1834
        %v1915 = vpop.f32.mrb[0].mxu0
        %v1916 = vadd.f32 0.0, %v1915
        %v1917 = vpop.f32.mrb[0].mxu0
        %1918 = vmatprep.mubr.f32.mxu0 0.0
        %1919 = vmatmul.mubr.f32.gmra.mrb[0].mxu0 %v1837
        %v1920 = vpop.f32.mrb[0].mxu0
        %v1921 = vadd.f32 0.0, %v1920
        %v1922 = vpop.f32.mrb[0].mxu0
        %1923 = vdwg.mxu0
        %1928 = vrot.lane.b32.xlu0 %v1906, 8
        %v1929 = vpop.permute.xlu0 %1928
        %1930 = vrot.lane.b32.xlu0 %v1911, 8
        %v1931 = vpop.permute.xlu0 %1930
        %1932 = vrot.lane.b32.xlu0 %v1916, 8
        %v1933 = vpop.permute.xlu0 %1932
        %1934 = vrot.lane.b32.xlu0 %v1921, 8
        %v1935 = vpop.permute.xlu0 %1934
        %vm1940 = vcmask 97344
        %1941 = vst.msk [vmem:[#allocation2] sm:$0xff] %vm1940, %v1929
        %1942 = vst.msk [vmem:[#allocation2 + $0x8] sm:$0xff] %vm1940, %v1931
        %1943 = vst.msk [vmem:[#allocation2 + $0x10] sm:$0xff] %vm1940, %v1933
        %1944 = vst.msk [vmem:[#allocation2 + $0x18] sm:$0xff] %vm1940, %v1935
        %1945 = vrot.lane.b32.xlu0 %v1024, 116
        %v1946 = vpop.permute.xlu0 %1945
        %1947 = vrot.lane.b32.xlu0 %v1029, 116
        %v1948 = vpop.permute.xlu0 %1947
        %1949 = vrot.lane.b32.xlu0 %v1034, 116
        %v1950 = vpop.permute.xlu0 %1949
        %1951 = vrot.lane.b32.xlu0 %v1039, 116
        %v1952 = vpop.permute.xlu0 %1951
        %1953 = vrot.lane.b32.xlu0 %v1024, 84
        %v1954 = vpop.permute.xlu0 %1953
        %1955 = vrot.lane.b32.xlu0 %v1029, 84
        %v1956 = vpop.permute.xlu0 %1955
        %1957 = vrot.lane.b32.xlu0 %v1034, 84
        %v1958 = vpop.permute.xlu0 %1957
        %1959 = vrot.lane.b32.xlu0 %v1039, 84
        %v1960 = vpop.permute.xlu0 %1959
        %v1961 = vsel %vm1080, %v1946, 0
        %v1963 = vsel %vm1080, %v1948, 0
        %v1965 = vsel %vm1080, %v1950, 0
        %v1967 = vsel %vm1080, %v1952, 0
        %v1969 = vsel %vm1080, %v1954, 0
        %v1971 = vsel %vm1080, %v1956, 0
        %v1973 = vsel %vm1080, %v1958, 0
        %v1975 = vsel %vm1080, %v1960, 0
        %1977 = vmatprep.subr.mxu0 0.0
        %1978 = vmatpush1.xpose.msra.mxu0 %v1969
        %1979 = vmatprep.subr.mxu0 0.0
        %1980 = vmatpush1.xpose.msra.mxu0 %v1971
        %1981 = vmatprep.subr.mxu0 0.0
        %1982 = vmatpush1.xpose.msra.mxu0 %v1973
        %1983 = vmatprep.subr.mxu0 0.0
        %1984 = vmatpush1.xpose.msra.mxu0 %v1975
        %1985 = vmatprep.subr.mxu0 0.0
        %1986 = vmatpush1.xpose.msra.mxu0 0.0
        %1987 = vmatprep.subr.mxu0 0.0
        %1988 = vmatpush1.xpose.msra.mxu0 0.0
        %1989 = vmatprep.subr.mxu0 0.0
        %1990 = vmatpush1.xpose.msra.mxu0 0.0
        %1991 = vmatprep.subr.mxu0 0.0
        %1992 = vmatpush1.xpose.msra.mxu0 0.0
        %1993 = vmatprep.subr.mxu0 0.0
        %1994 = vmatpush1.xpose.msra.mxu0 0.0
        %1995 = vmatprep.subr.mxu0 0.0
        %1996 = vmatpush1.xpose.msra.mxu0 0.0
        %1997 = vmatprep.subr.mxu0 0.0
        %1998 = vmatpush1.xpose.msra.mxu0 0.0
        %1999 = vmatprep.subr.mxu0 0.0
        %2000 = vmatpush1.xpose.msra.mxu0 0.0
        %2001 = vmatprep.subr.mxu0 0.0
        %2002 = vmatpush1.xpose.msra.mxu0 0.0
        %2003 = vmatprep.subr.mxu0 0.0
        %2004 = vmatpush1.xpose.msra.mxu0 0.0
        %2005 = vmatprep.subr.mxu0 0.0
        %2006 = vmatpush1.xpose.msra.mxu0 0.0
        %2007 = vmatprep.subr.mxu0 0.0
        %2008 = vmatpush1.xpose.msra.mxu0 0.0
        %2009 = vmatprep.subr.mxu0 0.0
        %2010 = vmatpush1.xpose.msra.mxu0 0.0
        %2011 = vmatprep.subr.mxu0 0.0
        %2012 = vmatpush1.xpose.msra.mxu0 0.0
        %2013 = vmatprep.subr.mxu0 0.0
        %2014 = vmatpush1.xpose.msra.mxu0 0.0
        %2015 = vmatprep.subr.mxu0 0.0
        %2016 = vmatpush1.xpose.msra.mxu0 0.0
        %2017 = vmatprep.subr.mxu0 0.0
        %2018 = vmatpush1.xpose.msra.mxu0 0.0
        %2019 = vmatprep.subr.mxu0 0.0
        %2020 = vmatpush1.xpose.msra.mxu0 0.0
        %2021 = vmatprep.subr.mxu0 0.0
        %2022 = vmatpush1.xpose.msra.mxu0 0.0
        %2023 = vmatprep.subr.mxu0 0.0
        %2024 = vmatpush1.xpose.msra.mxu0 0.0
        %2025 = vmatprep.subr.mxu0 0.0
        %2026 = vmatpush1.xpose.msra.mxu0 0.0
        %2027 = vmatprep.subr.mxu0 0.0
        %2028 = vmatpush1.xpose.msra.mxu0 0.0
        %2029 = vmatprep.subr.mxu0 0.0
        %2030 = vmatpush1.xpose.msra.mxu0 0.0
        %2031 = vmatprep.subr.mxu0 0.0
        %2032 = vmatpush1.xpose.msra.mxu0 0.0
        %2033 = vmatprep.subr.mxu0 0.0
        %2034 = vmatpush1.xpose.msra.mxu0 0.0
        %2035 = vmatprep.subr.mxu0 0.0
        %2036 = vmatpush1.xpose.msra.mxu0 0.0
        %2037 = vmatprep.subr.mxu0 0.0
        %2038 = vmatpush1.xpose.msra.mxu0 0.0
        %2039 = vmatprep.subr.mxu0 0.0
        %2040 = vmatpush1.xpose.msra.mxu0 0.0
        %2041 = vmatprep.mubr.f32.mxu0 0.0
        %2042 = vmatmul.mubr.f32.gmra.mrb[0].mxu0 %v1961
        %v2043 = vpop.f32.mrb[0].mxu0
        %v2044 = vadd.f32 0.0, %v2043
        %v2045 = vpop.f32.mrb[0].mxu0
        %2046 = vmatprep.mubr.f32.mxu0 0.0
        %2047 = vmatmul.mubr.f32.gmra.mrb[0].mxu0 %v1963
        %v2048 = vpop.f32.mrb[0].mxu0
        %v2049 = vadd.f32 0.0, %v2048
        %v2050 = vpop.f32.mrb[0].mxu0
        %2051 = vmatprep.mubr.f32.mxu0 0.0
        %2052 = vmatmul.mubr.f32.gmra.mrb[0].mxu0 %v1965
        %v2053 = vpop.f32.mrb[0].mxu0
        %v2054 = vadd.f32 0.0, %v2053
        %v2055 = vpop.f32.mrb[0].mxu0
        %2056 = vmatprep.mubr.f32.mxu0 0.0
        %2057 = vmatmul.mubr.f32.gmra.mrb[0].mxu0 %v1967
        %v2058 = vpop.f32.mrb[0].mxu0
        %v2059 = vadd.f32 0.0, %v2058
        %v2060 = vpop.f32.mrb[0].mxu0
        %2061 = vdwg.mxu0
        %v2062 = vmul.f32 %v2044, 0.5
        %v2063 = vmul.f32 %v2049, 0.5
        %v2064 = vmul.f32 %v2054, 0.5
        %v2065 = vmul.f32 %v2059, 0.5
        %v2066 = vsel %vm1064, %v2062, -1e+30
        %v2067 = vsel %vm1065, %v2063, -1e+30
        %v2068 = vsel %vm1066, %v2064, -1e+30
        %v2069 = vsel %vm1067, %v2065, -1e+30
        %v2070 = vsel %vm793, %v2066, -inf
        %2071 = vmax.xlane.f32.xlu0 %v2070
        %v2072 = vpop.xlane.xlu0 %2071
        %v2073 = vsel %vm793, %v2067, -inf
        %2074 = vmax.xlane.f32.xlu0 %v2073
        %v2075 = vpop.xlane.xlu0 %2074
        %v2076 = vsel %vm793, %v2068, -inf
        %2077 = vmax.xlane.f32.xlu0 %v2076
        %v2078 = vpop.xlane.xlu0 %2077
        %v2079 = vsel %vm793, %v2069, -inf
        %2080 = vmax.xlane.f32.xlu0 %v2079
        %v2081 = vpop.xlane.xlu0 %2080
        %v2082 = vsub.f32 %v2066, %v2072
        %v2083 = vsub.f32 %v2067, %v2075
        %v2084 = vsub.f32 %v2068, %v2078
        %v2085 = vsub.f32 %v2069, %v2081
        %v2086 = vmul.f32 %v2082, 1.442695
        %v2087 = vpow.pop %v2086
        %v2088 = vmul.f32 %v2083, 1.442695
        %v2089 = vpow.pop %v2088
        %v2090 = vmul.f32 %v2084, 1.442695
        %v2091 = vpow.pop %v2090
        %v2092 = vmul.f32 %v2085, 1.442695
        %v2093 = vpow.pop %v2092
        %v2094 = vsel %vm793, %v2087, 0.0
        %2095 = vadd.xlane.f32.xlu0 %v2094
        %v2096 = vpop.xlane.xlu0 %2095
        %v2097 = vsel %vm793, %v2089, 0.0
        %2098 = vadd.xlane.f32.xlu0 %v2097
        %v2099 = vpop.xlane.xlu0 %2098
        %v2100 = vsel %vm793, %v2091, 0.0
        %2101 = vadd.xlane.f32.xlu0 %v2100
        %v2102 = vpop.xlane.xlu0 %2101
        %v2103 = vsel %vm793, %v2093, 0.0
        %2104 = vadd.xlane.f32.xlu0 %v2103
        %v2105 = vpop.xlane.xlu0 %2104
        %v2106 = vrcp.pop %v2096
        %v2107 = vrcp.pop %v2099
        %v2108 = vrcp.pop %v2102
        %v2109 = vrcp.pop %v2105
        %v2110 = vmul.f32 %v2087, %v2106
        %v2111 = vmul.f32 %v2089, %v2107
        %v2112 = vmul.f32 %v2091, %v2108
        %v2113 = vmul.f32 %v2093, %v2109
        %2114 = vrot.lane.b32.xlu0 %v1024, 52
        %v2115 = vpop.permute.xlu0 %2114
        %2116 = vrot.lane.b32.xlu0 %v1029, 52
        %v2117 = vpop.permute.xlu0 %2116
        %2118 = vrot.lane.b32.xlu0 %v1034, 52
        %v2119 = vpop.permute.xlu0 %2118
        %2120 = vrot.lane.b32.xlu0 %v1039, 52
        %v2121 = vpop.permute.xlu0 %2120
        %v2127 = vsel %vm793, %v2110, 0
        %v2130 = vsel %vm793, %v2111, 0
        %v2133 = vsel %vm793, %v2112, 0
        %v2136 = vsel %vm793, %v2113, 0
        %2138 = vmatprep.subr.mxu0 0.0
        %2139 = vmatpush1.msra.mxu0 %v2115
        %2140 = vmatprep.subr.mxu0 0.0
        %2141 = vmatpush1.msra.mxu0 %v2117
        %2142 = vmatprep.subr.mxu0 0.0
        %2143 = vmatpush1.msra.mxu0 %v2119
        %2144 = vmatprep.subr.mxu0 0.0
        %2145 = vmatpush1.msra.mxu0 %v2121
        %2146 = vmatprep.subr.mxu0 0.0
        %2147 = vmatpush1.msra.mxu0 0.0
        %2148 = vmatprep.subr.mxu0 0.0
        %2149 = vmatpush1.msra.mxu0 0.0
        %2150 = vmatprep.subr.mxu0 0.0
        %2151 = vmatpush1.msra.mxu0 0.0
        %2152 = vmatprep.subr.mxu0 0.0
        %2153 = vmatpush1.msra.mxu0 0.0
        %2154 = vmatprep.subr.mxu0 0.0
        %2155 = vmatpush1.msra.mxu0 0.0
        %2156 = vmatprep.subr.mxu0 0.0
        %2157 = vmatpush1.msra.mxu0 0.0
        %2158 = vmatprep.subr.mxu0 0.0
        %2159 = vmatpush1.msra.mxu0 0.0
        %2160 = vmatprep.subr.mxu0 0.0
        %2161 = vmatpush1.msra.mxu0 0.0
        %2162 = vmatprep.subr.mxu0 0.0
        %2163 = vmatpush1.msra.mxu0 0.0
        %2164 = vmatprep.subr.mxu0 0.0
        %2165 = vmatpush1.msra.mxu0 0.0
        %2166 = vmatprep.subr.mxu0 0.0
        %2167 = vmatpush1.msra.mxu0 0.0
        %2168 = vmatprep.subr.mxu0 0.0
        %2169 = vmatpush1.msra.mxu0 0.0
        %2170 = vmatprep.subr.mxu0 0.0
        %2171 = vmatpush1.msra.mxu0 0.0
        %2172 = vmatprep.subr.mxu0 0.0
        %2173 = vmatpush1.msra.mxu0 0.0
        %2174 = vmatprep.subr.mxu0 0.0
        %2175 = vmatpush1.msra.mxu0 0.0
        %2176 = vmatprep.subr.mxu0 0.0
        %2177 = vmatpush1.msra.mxu0 0.0
        %2178 = vmatprep.subr.mxu0 0.0
        %2179 = vmatpush1.msra.mxu0 0.0
        %2180 = vmatprep.subr.mxu0 0.0
        %2181 = vmatpush1.msra.mxu0 0.0
        %2182 = vmatprep.subr.mxu0 0.0
        %2183 = vmatpush1.msra.mxu0 0.0
        %2184 = vmatprep.subr.mxu0 0.0
        %2185 = vmatpush1.msra.mxu0 0.0
        %2186 = vmatprep.subr.mxu0 0.0
        %2187 = vmatpush1.msra.mxu0 0.0
        %2188 = vmatprep.subr.mxu0 0.0
        %2189 = vmatpush1.msra.mxu0 0.0
        %2190 = vmatprep.subr.mxu0 0.0
        %2191 = vmatpush1.msra.mxu0 0.0
        %2192 = vmatprep.subr.mxu0 0.0
        %2193 = vmatpush1.msra.mxu0 0.0
        %2194 = vmatprep.subr.mxu0 0.0
        %2195 = vmatpush1.msra.mxu0 0.0
        %2196 = vmatprep.subr.mxu0 0.0
        %2197 = vmatpush1.msra.mxu0 0.0
        %2198 = vmatprep.subr.mxu0 0.0
        %2199 = vmatpush1.msra.mxu0 0.0
        %2200 = vmatprep.subr.mxu0 0.0
        %2201 = vmatpush1.msra.mxu0 0.0
        %2202 = vmatprep.mubr.f32.mxu0 0.0
        %2203 = vmatmul.mubr.f32.gmra.mrb[0].mxu0 %v2127
        %v2204 = vpop.f32.mrb[0].mxu0
        %v2205 = vadd.f32 0.0, %v2204
        %v2206 = vpop.f32.mrb[0].mxu0
        %2207 = vmatprep.mubr.f32.mxu0 0.0
        %2208 = vmatmul.mubr.f32.gmra.mrb[0].mxu0 %v2130
        %v2209 = vpop.f32.mrb[0].mxu0
        %v2210 = vadd.f32 0.0, %v2209
        %v2211 = vpop.f32.mrb[0].mxu0
        %2212 = vmatprep.mubr.f32.mxu0 0.0
        %2213 = vmatmul.mubr.f32.gmra.mrb[0].mxu0 %v2133
        %v2214 = vpop.f32.mrb[0].mxu0
        %v2215 = vadd.f32 0.0, %v2214
        %v2216 = vpop.f32.mrb[0].mxu0
        %2217 = vmatprep.mubr.f32.mxu0 0.0
        %2218 = vmatmul.mubr.f32.gmra.mrb[0].mxu0 %v2136
        %v2219 = vpop.f32.mrb[0].mxu0
        %v2220 = vadd.f32 0.0, %v2219
        %v2221 = vpop.f32.mrb[0].mxu0
        %2222 = vdwg.mxu0
        %2227 = vrot.lane.b32.xlu0 %v2205, 12
        %v2228 = vpop.permute.xlu0 %2227
        %2229 = vrot.lane.b32.xlu0 %v2210, 12
        %v2230 = vpop.permute.xlu0 %2229
        %2231 = vrot.lane.b32.xlu0 %v2215, 12
        %v2232 = vpop.permute.xlu0 %2231
        %2233 = vrot.lane.b32.xlu0 %v2220, 12
        %v2234 = vpop.permute.xlu0 %2233
        %vm2239 = vcmask 130144
        %2240 = vst.msk [vmem:[#allocation2] sm:$0xff] %vm2239, %v2228
        %2241 = vst.msk [vmem:[#allocation2 + $0x8] sm:$0xff] %vm2239, %v2230
        %2242 = vst.msk [vmem:[#allocation2 + $0x10] sm:$0xff] %vm2239, %v2232
        %2243 = vst.msk [vmem:[#allocation2 + $0x18] sm:$0xff] %vm2239, %v2234
        %2244 = vrot.lane.b32.xlu0 %v1024, 112
        %v2245 = vpop.permute.xlu0 %2244
        %2246 = vrot.lane.b32.xlu0 %v1029, 112
        %v2247 = vpop.permute.xlu0 %2246
        %2248 = vrot.lane.b32.xlu0 %v1034, 112
        %v2249 = vpop.permute.xlu0 %2248
        %2250 = vrot.lane.b32.xlu0 %v1039, 112
        %v2251 = vpop.permute.xlu0 %2250
        %2252 = vrot.lane.b32.xlu0 %v1024, 80
        %v2253 = vpop.permute.xlu0 %2252
        %2254 = vrot.lane.b32.xlu0 %v1029, 80
        %v2255 = vpop.permute.xlu0 %2254
        %2256 = vrot.lane.b32.xlu0 %v1034, 80
        %v2257 = vpop.permute.xlu0 %2256
        %2258 = vrot.lane.b32.xlu0 %v1039, 80
        %v2259 = vpop.permute.xlu0 %2258
        %v2260 = vsel %vm1080, %v2245, 0
        %v2262 = vsel %vm1080, %v2247, 0
        %v2264 = vsel %vm1080, %v2249, 0
        %v2266 = vsel %vm1080, %v2251, 0
        %v2268 = vsel %vm1080, %v2253, 0
        %v2270 = vsel %vm1080, %v2255, 0
        %v2272 = vsel %vm1080, %v2257, 0
        %v2274 = vsel %vm1080, %v2259, 0
        %2276 = vmatprep.subr.mxu0 0.0
        %2277 = vmatpush1.xpose.msra.mxu0 %v2268
        %2278 = vmatprep.subr.mxu0 0.0
        %2279 = vmatpush1.xpose.msra.mxu0 %v2270
        %2280 = vmatprep.subr.mxu0 0.0
        %2281 = vmatpush1.xpose.msra.mxu0 %v2272
        %2282 = vmatprep.subr.mxu0 0.0
        %2283 = vmatpush1.xpose.msra.mxu0 %v2274
        %2284 = vmatprep.subr.mxu0 0.0
        %2285 = vmatpush1.xpose.msra.mxu0 0.0
        %2286 = vmatprep.subr.mxu0 0.0
        %2287 = vmatpush1.xpose.msra.mxu0 0.0
        %2288 = vmatprep.subr.mxu0 0.0
        %2289 = vmatpush1.xpose.msra.mxu0 0.0
        %2290 = vmatprep.subr.mxu0 0.0
        %2291 = vmatpush1.xpose.msra.mxu0 0.0
        %2292 = vmatprep.subr.mxu0 0.0
        %2293 = vmatpush1.xpose.msra.mxu0 0.0
        %2294 = vmatprep.subr.mxu0 0.0
        %2295 = vmatpush1.xpose.msra.mxu0 0.0
        %2296 = vmatprep.subr.mxu0 0.0
        %2297 = vmatpush1.xpose.msra.mxu0 0.0
        %2298 = vmatprep.subr.mxu0 0.0
        %2299 = vmatpush1.xpose.msra.mxu0 0.0
        %2300 = vmatprep.subr.mxu0 0.0
        %2301 = vmatpush1.xpose.msra.mxu0 0.0
        %2302 = vmatprep.subr.mxu0 0.0
        %2303 = vmatpush1.xpose.msra.mxu0 0.0
        %2304 = vmatprep.subr.mxu0 0.0
        %2305 = vmatpush1.xpose.msra.mxu0 0.0
        %2306 = vmatprep.subr.mxu0 0.0
        %2307 = vmatpush1.xpose.msra.mxu0 0.0
        %2308 = vmatprep.subr.mxu0 0.0
        %2309 = vmatpush1.xpose.msra.mxu0 0.0
        %2310 = vmatprep.subr.mxu0 0.0
        %2311 = vmatpush1.xpose.msra.mxu0 0.0
        %2312 = vmatprep.subr.mxu0 0.0
        %2313 = vmatpush1.xpose.msra.mxu0 0.0
        %2314 = vmatprep.subr.mxu0 0.0
        %2315 = vmatpush1.xpose.msra.mxu0 0.0
        %2316 = vmatprep.subr.mxu0 0.0
        %2317 = vmatpush1.xpose.msra.mxu0 0.0
        %2318 = vmatprep.subr.mxu0 0.0
        %2319 = vmatpush1.xpose.msra.mxu0 0.0
        %2320 = vmatprep.subr.mxu0 0.0
        %2321 = vmatpush1.xpose.msra.mxu0 0.0
        %2322 = vmatprep.subr.mxu0 0.0
        %2323 = vmatpush1.xpose.msra.mxu0 0.0
        %2324 = vmatprep.subr.mxu0 0.0
        %2325 = vmatpush1.xpose.msra.mxu0 0.0
        %2326 = vmatprep.subr.mxu0 0.0
        %2327 = vmatpush1.xpose.msra.mxu0 0.0
        %2328 = vmatprep.subr.mxu0 0.0
        %2329 = vmatpush1.xpose.msra.mxu0 0.0
        %2330 = vmatprep.subr.mxu0 0.0
        %2331 = vmatpush1.xpose.msra.mxu0 0.0
        %2332 = vmatprep.subr.mxu0 0.0
        %2333 = vmatpush1.xpose.msra.mxu0 0.0
        %2334 = vmatprep.subr.mxu0 0.0
        %2335 = vmatpush1.xpose.msra.mxu0 0.0
        %2336 = vmatprep.subr.mxu0 0.0
        %2337 = vmatpush1.xpose.msra.mxu0 0.0
        %2338 = vmatprep.subr.mxu0 0.0
        %2339 = vmatpush1.xpose.msra.mxu0 0.0
        %2340 = vmatprep.mubr.f32.mxu0 0.0
        %2341 = vmatmul.mubr.f32.gmra.mrb[0].mxu0 %v2260
        %v2342 = vpop.f32.mrb[0].mxu0
        %v2343 = vadd.f32 0.0, %v2342
        %v2344 = vpop.f32.mrb[0].mxu0
        %2345 = vmatprep.mubr.f32.mxu0 0.0
        %2346 = vmatmul.mubr.f32.gmra.mrb[0].mxu0 %v2262
        %v2347 = vpop.f32.mrb[0].mxu0
        %v2348 = vadd.f32 0.0, %v2347
        %v2349 = vpop.f32.mrb[0].mxu0
        %2350 = vmatprep.mubr.f32.mxu0 0.0
        %2351 = vmatmul.mubr.f32.gmra.mrb[0].mxu0 %v2264
        %v2352 = vpop.f32.mrb[0].mxu0
        %v2353 = vadd.f32 0.0, %v2352
        %v2354 = vpop.f32.mrb[0].mxu0
        %2355 = vmatprep.mubr.f32.mxu0 0.0
        %2356 = vmatmul.mubr.f32.gmra.mrb[0].mxu0 %v2266
        %v2357 = vpop.f32.mrb[0].mxu0
        %v2358 = vadd.f32 0.0, %v2357
        %v2359 = vpop.f32.mrb[0].mxu0
        %2360 = vdwg.mxu0
        %v2361 = vmul.f32 %v2343, 0.5
        %v2362 = vmul.f32 %v2348, 0.5
        %v2363 = vmul.f32 %v2353, 0.5
        %v2364 = vmul.f32 %v2358, 0.5
        %v2365 = vsel %vm1064, %v2361, -1e+30
        %v2366 = vsel %vm1065, %v2362, -1e+30
        %v2367 = vsel %vm1066, %v2363, -1e+30
        %v2368 = vsel %vm1067, %v2364, -1e+30
        %v2369 = vsel %vm793, %v2365, -inf
        %2370 = vmax.xlane.f32.xlu0 %v2369
        %v2371 = vpop.xlane.xlu0 %2370
        %v2372 = vsel %vm793, %v2366, -inf
        %2373 = vmax.xlane.f32.xlu0 %v2372
        %v2374 = vpop.xlane.xlu0 %2373
        %v2375 = vsel %vm793, %v2367, -inf
        %2376 = vmax.xlane.f32.xlu0 %v2375
        %v2377 = vpop.xlane.xlu0 %2376
        %v2378 = vsel %vm793, %v2368, -inf
        %2379 = vmax.xlane.f32.xlu0 %v2378
        %v2380 = vpop.xlane.xlu0 %2379
        %v2381 = vsub.f32 %v2365, %v2371
        %v2382 = vsub.f32 %v2366, %v2374
        %v2383 = vsub.f32 %v2367, %v2377
        %v2384 = vsub.f32 %v2368, %v2380
        %v2385 = vmul.f32 %v2381, 1.442695
        %v2386 = vpow.pop %v2385
        %v2387 = vmul.f32 %v2382, 1.442695
        %v2388 = vpow.pop %v2387
        %v2389 = vmul.f32 %v2383, 1.442695
        %v2390 = vpow.pop %v2389
        %v2391 = vmul.f32 %v2384, 1.442695
        %v2392 = vpow.pop %v2391
        %v2393 = vsel %vm793, %v2386, 0.0
        %2394 = vadd.xlane.f32.xlu0 %v2393
        %v2395 = vpop.xlane.xlu0 %2394
        %v2396 = vsel %vm793, %v2388, 0.0
        %2397 = vadd.xlane.f32.xlu0 %v2396
        %v2398 = vpop.xlane.xlu0 %2397
        %v2399 = vsel %vm793, %v2390, 0.0
        %2400 = vadd.xlane.f32.xlu0 %v2399
        %v2401 = vpop.xlane.xlu0 %2400
        %v2402 = vsel %vm793, %v2392, 0.0
        %2403 = vadd.xlane.f32.xlu0 %v2402
        %v2404 = vpop.xlane.xlu0 %2403
        %v2405 = vrcp.pop %v2395
        %v2406 = vrcp.pop %v2398
        %v2407 = vrcp.pop %v2401
        %v2408 = vrcp.pop %v2404
        %v2409 = vmul.f32 %v2386, %v2405
        %v2410 = vmul.f32 %v2388, %v2406
        %v2411 = vmul.f32 %v2390, %v2407
        %v2412 = vmul.f32 %v2392, %v2408
        %2413 = vrot.lane.b32.xlu0 %v1024, 48
        %v2414 = vpop.permute.xlu0 %2413
        %2415 = vrot.lane.b32.xlu0 %v1029, 48
        %v2416 = vpop.permute.xlu0 %2415
        %2417 = vrot.lane.b32.xlu0 %v1034, 48
        %v2418 = vpop.permute.xlu0 %2417
        %2419 = vrot.lane.b32.xlu0 %v1039, 48
        %v2420 = vpop.permute.xlu0 %2419
        %v2426 = vsel %vm793, %v2409, 0
        %v2429 = vsel %vm793, %v2410, 0
        %v2432 = vsel %vm793, %v2411, 0
        %v2435 = vsel %vm793, %v2412, 0
        %2437 = vmatprep.subr.mxu0 0.0
        %2438 = vmatpush1.msra.mxu0 %v2414
        %2439 = vmatprep.subr.mxu0 0.0
        %2440 = vmatpush1.msra.mxu0 %v2416
        %2441 = vmatprep.subr.mxu0 0.0
        %2442 = vmatpush1.msra.mxu0 %v2418
        %2443 = vmatprep.subr.mxu0 0.0
        %2444 = vmatpush1.msra.mxu0 %v2420
        %2445 = vmatprep.subr.mxu0 0.0
        %2446 = vmatpush1.msra.mxu0 0.0
        %2447 = vmatprep.subr.mxu0 0.0
        %2448 = vmatpush1.msra.mxu0 0.0
        %2449 = vmatprep.subr.mxu0 0.0
        %2450 = vmatpush1.msra.mxu0 0.0
        %2451 = vmatprep.subr.mxu0 0.0
        %2452 = vmatpush1.msra.mxu0 0.0
        %2453 = vmatprep.subr.mxu0 0.0
        %2454 = vmatpush1.msra.mxu0 0.0
        %2455 = vmatprep.subr.mxu0 0.0
        %2456 = vmatpush1.msra.mxu0 0.0
        %2457 = vmatprep.subr.mxu0 0.0
        %2458 = vmatpush1.msra.mxu0 0.0
        %2459 = vmatprep.subr.mxu0 0.0
        %2460 = vmatpush1.msra.mxu0 0.0
        %2461 = vmatprep.subr.mxu0 0.0
        %2462 = vmatpush1.msra.mxu0 0.0
        %2463 = vmatprep.subr.mxu0 0.0
        %2464 = vmatpush1.msra.mxu0 0.0
        %2465 = vmatprep.subr.mxu0 0.0
        %2466 = vmatpush1.msra.mxu0 0.0
        %2467 = vmatprep.subr.mxu0 0.0
        %2468 = vmatpush1.msra.mxu0 0.0
        %2469 = vmatprep.subr.mxu0 0.0
        %2470 = vmatpush1.msra.mxu0 0.0
        %2471 = vmatprep.subr.mxu0 0.0
        %2472 = vmatpush1.msra.mxu0 0.0
        %2473 = vmatprep.subr.mxu0 0.0
        %2474 = vmatpush1.msra.mxu0 0.0
        %2475 = vmatprep.subr.mxu0 0.0
        %2476 = vmatpush1.msra.mxu0 0.0
        %2477 = vmatprep.subr.mxu0 0.0
        %2478 = vmatpush1.msra.mxu0 0.0
        %2479 = vmatprep.subr.mxu0 0.0
        %2480 = vmatpush1.msra.mxu0 0.0
        %2481 = vmatprep.subr.mxu0 0.0
        %2482 = vmatpush1.msra.mxu0 0.0
        %2483 = vmatprep.subr.mxu0 0.0
        %2484 = vmatpush1.msra.mxu0 0.0
        %2485 = vmatprep.subr.mxu0 0.0
        %2486 = vmatpush1.msra.mxu0 0.0
        %2487 = vmatprep.subr.mxu0 0.0
        %2488 = vmatpush1.msra.mxu0 0.0
        %2489 = vmatprep.subr.mxu0 0.0
        %2490 = vmatpush1.msra.mxu0 0.0
        %2491 = vmatprep.subr.mxu0 0.0
        %2492 = vmatpush1.msra.mxu0 0.0
        %2493 = vmatprep.subr.mxu0 0.0
        %2494 = vmatpush1.msra.mxu0 0.0
        %2495 = vmatprep.subr.mxu0 0.0
        %2496 = vmatpush1.msra.mxu0 0.0
        %2497 = vmatprep.subr.mxu0 0.0
        %2498 = vmatpush1.msra.mxu0 0.0
        %2499 = vmatprep.subr.mxu0 0.0
        %2500 = vmatpush1.msra.mxu0 0.0
        %2501 = vmatprep.mubr.f32.mxu0 0.0
        %2502 = vmatmul.mubr.f32.gmra.mrb[0].mxu0 %v2426
        %v2503 = vpop.f32.mrb[0].mxu0
        %v2504 = vadd.f32 0.0, %v2503
        %v2505 = vpop.f32.mrb[0].mxu0
        %2506 = vmatprep.mubr.f32.mxu0 0.0
        %2507 = vmatmul.mubr.f32.gmra.mrb[0].mxu0 %v2429
        %v2508 = vpop.f32.mrb[0].mxu0
        %v2509 = vadd.f32 0.0, %v2508
        %v2510 = vpop.f32.mrb[0].mxu0
        %2511 = vmatprep.mubr.f32.mxu0 0.0
        %2512 = vmatmul.mubr.f32.gmra.mrb[0].mxu0 %v2432
        %v2513 = vpop.f32.mrb[0].mxu0
        %v2514 = vadd.f32 0.0, %v2513
        %v2515 = vpop.f32.mrb[0].mxu0
        %2516 = vmatprep.mubr.f32.mxu0 0.0
        %2517 = vmatmul.mubr.f32.gmra.mrb[0].mxu0 %v2435
        %v2518 = vpop.f32.mrb[0].mxu0
        %v2519 = vadd.f32 0.0, %v2518
        %v2520 = vpop.f32.mrb[0].mxu0
        %2521 = vdwg.mxu0
        %2526 = vrot.lane.b32.xlu0 %v2504, 16
        %v2527 = vpop.permute.xlu0 %2526
        %2528 = vrot.lane.b32.xlu0 %v2509, 16
        %v2529 = vpop.permute.xlu0 %2528
        %2530 = vrot.lane.b32.xlu0 %v2514, 16
        %v2531 = vpop.permute.xlu0 %2530
        %2532 = vrot.lane.b32.xlu0 %v2519, 16
        %v2533 = vpop.permute.xlu0 %2532
        %vm2538 = vcmask 162944
        %2539 = vst.msk [vmem:[#allocation2] sm:$0xff] %vm2538, %v2527
        %2540 = vst.msk [vmem:[#allocation2 + $0x8] sm:$0xff] %vm2538, %v2529
        %2541 = vst.msk [vmem:[#allocation2 + $0x10] sm:$0xff] %vm2538, %v2531
        %2542 = vst.msk [vmem:[#allocation2 + $0x18] sm:$0xff] %vm2538, %v2533
        %2543 = vrot.lane.b32.xlu0 %v1024, 108
        %v2544 = vpop.permute.xlu0 %2543
        %2545 = vrot.lane.b32.xlu0 %v1029, 108
        %v2546 = vpop.permute.xlu0 %2545
        %2547 = vrot.lane.b32.xlu0 %v1034, 108
        %v2548 = vpop.permute.xlu0 %2547
        %2549 = vrot.lane.b32.xlu0 %v1039, 108
        %v2550 = vpop.permute.xlu0 %2549
        %2551 = vrot.lane.b32.xlu0 %v1024, 76
        %v2552 = vpop.permute.xlu0 %2551
        %2553 = vrot.lane.b32.xlu0 %v1029, 76
        %v2554 = vpop.permute.xlu0 %2553
        %2555 = vrot.lane.b32.xlu0 %v1034, 76
        %v2556 = vpop.permute.xlu0 %2555
        %2557 = vrot.lane.b32.xlu0 %v1039, 76
        %v2558 = vpop.permute.xlu0 %2557
        %v2559 = vsel %vm1080, %v2544, 0
        %v2561 = vsel %vm1080, %v2546, 0
        %v2563 = vsel %vm1080, %v2548, 0
        %v2565 = vsel %vm1080, %v2550, 0
        %v2567 = vsel %vm1080, %v2552, 0
        %v2569 = vsel %vm1080, %v2554, 0
        %v2571 = vsel %vm1080, %v2556, 0
        %v2573 = vsel %vm1080, %v2558, 0
        %2575 = vmatprep.subr.mxu0 0.0
        %2576 = vmatpush1.xpose.msra.mxu0 %v2567
        %2577 = vmatprep.subr.mxu0 0.0
        %2578 = vmatpush1.xpose.msra.mxu0 %v2569
        %2579 = vmatprep.subr.mxu0 0.0
        %2580 = vmatpush1.xpose.msra.mxu0 %v2571
        %2581 = vmatprep.subr.mxu0 0.0
        %2582 = vmatpush1.xpose.msra.mxu0 %v2573
        %2583 = vmatprep.subr.mxu0 0.0
        %2584 = vmatpush1.xpose.msra.mxu0 0.0
        %2585 = vmatprep.subr.mxu0 0.0
        %2586 = vmatpush1.xpose.msra.mxu0 0.0
        %2587 = vmatprep.subr.mxu0 0.0
        %2588 = vmatpush1.xpose.msra.mxu0 0.0
        %2589 = vmatprep.subr.mxu0 0.0
        %2590 = vmatpush1.xpose.msra.mxu0 0.0
        %2591 = vmatprep.subr.mxu0 0.0
        %2592 = vmatpush1.xpose.msra.mxu0 0.0
        %2593 = vmatprep.subr.mxu0 0.0
        %2594 = vmatpush1.xpose.msra.mxu0 0.0
        %2595 = vmatprep.subr.mxu0 0.0
        %2596 = vmatpush1.xpose.msra.mxu0 0.0
        %2597 = vmatprep.subr.mxu0 0.0
        %2598 = vmatpush1.xpose.msra.mxu0 0.0
        %2599 = vmatprep.subr.mxu0 0.0
        %2600 = vmatpush1.xpose.msra.mxu0 0.0
        %2601 = vmatprep.subr.mxu0 0.0
        %2602 = vmatpush1.xpose.msra.mxu0 0.0
        %2603 = vmatprep.subr.mxu0 0.0
        %2604 = vmatpush1.xpose.msra.mxu0 0.0
        %2605 = vmatprep.subr.mxu0 0.0
        %2606 = vmatpush1.xpose.msra.mxu0 0.0
        %2607 = vmatprep.subr.mxu0 0.0
        %2608 = vmatpush1.xpose.msra.mxu0 0.0
        %2609 = vmatprep.subr.mxu0 0.0
        %2610 = vmatpush1.xpose.msra.mxu0 0.0
        %2611 = vmatprep.subr.mxu0 0.0
        %2612 = vmatpush1.xpose.msra.mxu0 0.0
        %2613 = vmatprep.subr.mxu0 0.0
        %2614 = vmatpush1.xpose.msra.mxu0 0.0
        %2615 = vmatprep.subr.mxu0 0.0
        %2616 = vmatpush1.xpose.msra.mxu0 0.0
        %2617 = vmatprep.subr.mxu0 0.0
        %2618 = vmatpush1.xpose.msra.mxu0 0.0
        %2619 = vmatprep.subr.mxu0 0.0
        %2620 = vmatpush1.xpose.msra.mxu0 0.0
        %2621 = vmatprep.subr.mxu0 0.0
        %2622 = vmatpush1.xpose.msra.mxu0 0.0
        %2623 = vmatprep.subr.mxu0 0.0
        %2624 = vmatpush1.xpose.msra.mxu0 0.0
        %2625 = vmatprep.subr.mxu0 0.0
        %2626 = vmatpush1.xpose.msra.mxu0 0.0
        %2627 = vmatprep.subr.mxu0 0.0
        %2628 = vmatpush1.xpose.msra.mxu0 0.0
        %2629 = vmatprep.subr.mxu0 0.0
        %2630 = vmatpush1.xpose.msra.mxu0 0.0
        %2631 = vmatprep.subr.mxu0 0.0
        %2632 = vmatpush1.xpose.msra.mxu0 0.0
        %2633 = vmatprep.subr.mxu0 0.0
        %2634 = vmatpush1.xpose.msra.mxu0 0.0
        %2635 = vmatprep.subr.mxu0 0.0
        %2636 = vmatpush1.xpose.msra.mxu0 0.0
        %2637 = vmatprep.subr.mxu0 0.0
        %2638 = vmatpush1.xpose.msra.mxu0 0.0
        %2639 = vmatprep.mubr.f32.mxu0 0.0
        %2640 = vmatmul.mubr.f32.gmra.mrb[0].mxu0 %v2559
        %v2641 = vpop.f32.mrb[0].mxu0
        %v2642 = vadd.f32 0.0, %v2641
        %v2643 = vpop.f32.mrb[0].mxu0
        %2644 = vmatprep.mubr.f32.mxu0 0.0
        %2645 = vmatmul.mubr.f32.gmra.mrb[0].mxu0 %v2561
        %v2646 = vpop.f32.mrb[0].mxu0
        %v2647 = vadd.f32 0.0, %v2646
        %v2648 = vpop.f32.mrb[0].mxu0
        %2649 = vmatprep.mubr.f32.mxu0 0.0
        %2650 = vmatmul.mubr.f32.gmra.mrb[0].mxu0 %v2563
        %v2651 = vpop.f32.mrb[0].mxu0
        %v2652 = vadd.f32 0.0, %v2651
        %v2653 = vpop.f32.mrb[0].mxu0
        %2654 = vmatprep.mubr.f32.mxu0 0.0
        %2655 = vmatmul.mubr.f32.gmra.mrb[0].mxu0 %v2565
        %v2656 = vpop.f32.mrb[0].mxu0
        %v2657 = vadd.f32 0.0, %v2656
        %v2658 = vpop.f32.mrb[0].mxu0
        %2659 = vdwg.mxu0
        %v2660 = vmul.f32 %v2642, 0.5
        %v2661 = vmul.f32 %v2647, 0.5
        %v2662 = vmul.f32 %v2652, 0.5
        %v2663 = vmul.f32 %v2657, 0.5
        %v2664 = vsel %vm1064, %v2660, -1e+30
        %v2665 = vsel %vm1065, %v2661, -1e+30
        %v2666 = vsel %vm1066, %v2662, -1e+30
        %v2667 = vsel %vm1067, %v2663, -1e+30
        %v2668 = vsel %vm793, %v2664, -inf
        %2669 = vmax.xlane.f32.xlu0 %v2668
        %v2670 = vpop.xlane.xlu0 %2669
        %v2671 = vsel %vm793, %v2665, -inf
        %2672 = vmax.xlane.f32.xlu0 %v2671
        %v2673 = vpop.xlane.xlu0 %2672
        %v2674 = vsel %vm793, %v2666, -inf
        %2675 = vmax.xlane.f32.xlu0 %v2674
        %v2676 = vpop.xlane.xlu0 %2675
        %v2677 = vsel %vm793, %v2667, -inf
        %2678 = vmax.xlane.f32.xlu0 %v2677
        %v2679 = vpop.xlane.xlu0 %2678
        %v2680 = vsub.f32 %v2664, %v2670
        %v2681 = vsub.f32 %v2665, %v2673
        %v2682 = vsub.f32 %v2666, %v2676
        %v2683 = vsub.f32 %v2667, %v2679
        %v2684 = vmul.f32 %v2680, 1.442695
        %v2685 = vpow.pop %v2684
        %v2686 = vmul.f32 %v2681, 1.442695
        %v2687 = vpow.pop %v2686
        %v2688 = vmul.f32 %v2682, 1.442695
        %v2689 = vpow.pop %v2688
        %v2690 = vmul.f32 %v2683, 1.442695
        %v2691 = vpow.pop %v2690
        %v2692 = vsel %vm793, %v2685, 0.0
        %2693 = vadd.xlane.f32.xlu0 %v2692
        %v2694 = vpop.xlane.xlu0 %2693
        %v2695 = vsel %vm793, %v2687, 0.0
        %2696 = vadd.xlane.f32.xlu0 %v2695
        %v2697 = vpop.xlane.xlu0 %2696
        %v2698 = vsel %vm793, %v2689, 0.0
        %2699 = vadd.xlane.f32.xlu0 %v2698
        %v2700 = vpop.xlane.xlu0 %2699
        %v2701 = vsel %vm793, %v2691, 0.0
        %2702 = vadd.xlane.f32.xlu0 %v2701
        %v2703 = vpop.xlane.xlu0 %2702
        %v2704 = vrcp.pop %v2694
        %v2705 = vrcp.pop %v2697
        %v2706 = vrcp.pop %v2700
        %v2707 = vrcp.pop %v2703
        %v2708 = vmul.f32 %v2685, %v2704
        %v2709 = vmul.f32 %v2687, %v2705
        %v2710 = vmul.f32 %v2689, %v2706
        %v2711 = vmul.f32 %v2691, %v2707
        %2712 = vrot.lane.b32.xlu0 %v1024, 44
        %v2713 = vpop.permute.xlu0 %2712
        %2714 = vrot.lane.b32.xlu0 %v1029, 44
        %v2715 = vpop.permute.xlu0 %2714
        %2716 = vrot.lane.b32.xlu0 %v1034, 44
        %v2717 = vpop.permute.xlu0 %2716
        %2718 = vrot.lane.b32.xlu0 %v1039, 44
        %v2719 = vpop.permute.xlu0 %2718
        %v2725 = vsel %vm793, %v2708, 0
        %v2728 = vsel %vm793, %v2709, 0
        %v2731 = vsel %vm793, %v2710, 0
        %v2734 = vsel %vm793, %v2711, 0
        %2736 = vmatprep.subr.mxu0 0.0
        %2737 = vmatpush1.msra.mxu0 %v2713
        %2738 = vmatprep.subr.mxu0 0.0
        %2739 = vmatpush1.msra.mxu0 %v2715
        %2740 = vmatprep.subr.mxu0 0.0
        %2741 = vmatpush1.msra.mxu0 %v2717
        %2742 = vmatprep.subr.mxu0 0.0
        %2743 = vmatpush1.msra.mxu0 %v2719
        %2744 = vmatprep.subr.mxu0 0.0
        %2745 = vmatpush1.msra.mxu0 0.0
        %2746 = vmatprep.subr.mxu0 0.0
        %2747 = vmatpush1.msra.mxu0 0.0
        %2748 = vmatprep.subr.mxu0 0.0
        %2749 = vmatpush1.msra.mxu0 0.0
        %2750 = vmatprep.subr.mxu0 0.0
        %2751 = vmatpush1.msra.mxu0 0.0
        %2752 = vmatprep.subr.mxu0 0.0
        %2753 = vmatpush1.msra.mxu0 0.0
        %2754 = vmatprep.subr.mxu0 0.0
        %2755 = vmatpush1.msra.mxu0 0.0
        %2756 = vmatprep.subr.mxu0 0.0
        %2757 = vmatpush1.msra.mxu0 0.0
        %2758 = vmatprep.subr.mxu0 0.0
        %2759 = vmatpush1.msra.mxu0 0.0
        %2760 = vmatprep.subr.mxu0 0.0
        %2761 = vmatpush1.msra.mxu0 0.0
        %2762 = vmatprep.subr.mxu0 0.0
        %2763 = vmatpush1.msra.mxu0 0.0
        %2764 = vmatprep.subr.mxu0 0.0
        %2765 = vmatpush1.msra.mxu0 0.0
        %2766 = vmatprep.subr.mxu0 0.0
        %2767 = vmatpush1.msra.mxu0 0.0
        %2768 = vmatprep.subr.mxu0 0.0
        %2769 = vmatpush1.msra.mxu0 0.0
        %2770 = vmatprep.subr.mxu0 0.0
        %2771 = vmatpush1.msra.mxu0 0.0
        %2772 = vmatprep.subr.mxu0 0.0
        %2773 = vmatpush1.msra.mxu0 0.0
        %2774 = vmatprep.subr.mxu0 0.0
        %2775 = vmatpush1.msra.mxu0 0.0
        %2776 = vmatprep.subr.mxu0 0.0
        %2777 = vmatpush1.msra.mxu0 0.0
        %2778 = vmatprep.subr.mxu0 0.0
        %2779 = vmatpush1.msra.mxu0 0.0
        %2780 = vmatprep.subr.mxu0 0.0
        %2781 = vmatpush1.msra.mxu0 0.0
        %2782 = vmatprep.subr.mxu0 0.0
        %2783 = vmatpush1.msra.mxu0 0.0
        %2784 = vmatprep.subr.mxu0 0.0
        %2785 = vmatpush1.msra.mxu0 0.0
        %2786 = vmatprep.subr.mxu0 0.0
        %2787 = vmatpush1.msra.mxu0 0.0
        %2788 = vmatprep.subr.mxu0 0.0
        %2789 = vmatpush1.msra.mxu0 0.0
        %2790 = vmatprep.subr.mxu0 0.0
        %2791 = vmatpush1.msra.mxu0 0.0
        %2792 = vmatprep.subr.mxu0 0.0
        %2793 = vmatpush1.msra.mxu0 0.0
        %2794 = vmatprep.subr.mxu0 0.0
        %2795 = vmatpush1.msra.mxu0 0.0
        %2796 = vmatprep.subr.mxu0 0.0
        %2797 = vmatpush1.msra.mxu0 0.0
        %2798 = vmatprep.subr.mxu0 0.0
        %2799 = vmatpush1.msra.mxu0 0.0
        %2800 = vmatprep.mubr.f32.mxu0 0.0
        %2801 = vmatmul.mubr.f32.gmra.mrb[0].mxu0 %v2725
        %v2802 = vpop.f32.mrb[0].mxu0
        %v2803 = vadd.f32 0.0, %v2802
        %v2804 = vpop.f32.mrb[0].mxu0
        %2805 = vmatprep.mubr.f32.mxu0 0.0
        %2806 = vmatmul.mubr.f32.gmra.mrb[0].mxu0 %v2728
        %v2807 = vpop.f32.mrb[0].mxu0
        %v2808 = vadd.f32 0.0, %v2807
        %v2809 = vpop.f32.mrb[0].mxu0
        %2810 = vmatprep.mubr.f32.mxu0 0.0
        %2811 = vmatmul.mubr.f32.gmra.mrb[0].mxu0 %v2731
        %v2812 = vpop.f32.mrb[0].mxu0
        %v2813 = vadd.f32 0.0, %v2812
        %v2814 = vpop.f32.mrb[0].mxu0
        %2815 = vmatprep.mubr.f32.mxu0 0.0
        %2816 = vmatmul.mubr.f32.gmra.mrb[0].mxu0 %v2734
        %v2817 = vpop.f32.mrb[0].mxu0
        %v2818 = vadd.f32 0.0, %v2817
        %v2819 = vpop.f32.mrb[0].mxu0
        %2820 = vdwg.mxu0
        %2825 = vrot.lane.b32.xlu0 %v2803, 20
        %v2826 = vpop.permute.xlu0 %2825
        %2827 = vrot.lane.b32.xlu0 %v2808, 20
        %v2828 = vpop.permute.xlu0 %2827
        %2829 = vrot.lane.b32.xlu0 %v2813, 20
        %v2830 = vpop.permute.xlu0 %2829
        %2831 = vrot.lane.b32.xlu0 %v2818, 20
        %v2832 = vpop.permute.xlu0 %2831
        %vm2837 = vcmask 195744
        %2838 = vst.msk [vmem:[#allocation2] sm:$0xff] %vm2837, %v2826
        %2839 = vst.msk [vmem:[#allocation2 + $0x8] sm:$0xff] %vm2837, %v2828
        %2840 = vst.msk [vmem:[#allocation2 + $0x10] sm:$0xff] %vm2837, %v2830
        %2841 = vst.msk [vmem:[#allocation2 + $0x18] sm:$0xff] %vm2837, %v2832
        %2842 = vrot.lane.b32.xlu0 %v1024, 104
        %v2843 = vpop.permute.xlu0 %2842
        %2844 = vrot.lane.b32.xlu0 %v1029, 104
        %v2845 = vpop.permute.xlu0 %2844
        %2846 = vrot.lane.b32.xlu0 %v1034, 104
        %v2847 = vpop.permute.xlu0 %2846
        %2848 = vrot.lane.b32.xlu0 %v1039, 104
        %v2849 = vpop.permute.xlu0 %2848
        %2850 = vrot.lane.b32.xlu0 %v1024, 72
        %v2851 = vpop.permute.xlu0 %2850
        %2852 = vrot.lane.b32.xlu0 %v1029, 72
        %v2853 = vpop.permute.xlu0 %2852
        %2854 = vrot.lane.b32.xlu0 %v1034, 72
        %v2855 = vpop.permute.xlu0 %2854
        %2856 = vrot.lane.b32.xlu0 %v1039, 72
        %v2857 = vpop.permute.xlu0 %2856
        %v2858 = vsel %vm1080, %v2843, 0
        %v2860 = vsel %vm1080, %v2845, 0
        %v2862 = vsel %vm1080, %v2847, 0
        %v2864 = vsel %vm1080, %v2849, 0
        %v2866 = vsel %vm1080, %v2851, 0
        %v2868 = vsel %vm1080, %v2853, 0
        %v2870 = vsel %vm1080, %v2855, 0
        %v2872 = vsel %vm1080, %v2857, 0
        %2874 = vmatprep.subr.mxu0 0.0
        %2875 = vmatpush1.xpose.msra.mxu0 %v2866
        %2876 = vmatprep.subr.mxu0 0.0
        %2877 = vmatpush1.xpose.msra.mxu0 %v2868
        %2878 = vmatprep.subr.mxu0 0.0
        %2879 = vmatpush1.xpose.msra.mxu0 %v2870
        %2880 = vmatprep.subr.mxu0 0.0
        %2881 = vmatpush1.xpose.msra.mxu0 %v2872
        %2882 = vmatprep.subr.mxu0 0.0
        %2883 = vmatpush1.xpose.msra.mxu0 0.0
        %2884 = vmatprep.subr.mxu0 0.0
        %2885 = vmatpush1.xpose.msra.mxu0 0.0
        %2886 = vmatprep.subr.mxu0 0.0
        %2887 = vmatpush1.xpose.msra.mxu0 0.0
        %2888 = vmatprep.subr.mxu0 0.0
        %2889 = vmatpush1.xpose.msra.mxu0 0.0
        %2890 = vmatprep.subr.mxu0 0.0
        %2891 = vmatpush1.xpose.msra.mxu0 0.0
        %2892 = vmatprep.subr.mxu0 0.0
        %2893 = vmatpush1.xpose.msra.mxu0 0.0
        %2894 = vmatprep.subr.mxu0 0.0
        %2895 = vmatpush1.xpose.msra.mxu0 0.0
        %2896 = vmatprep.subr.mxu0 0.0
        %2897 = vmatpush1.xpose.msra.mxu0 0.0
        %2898 = vmatprep.subr.mxu0 0.0
        %2899 = vmatpush1.xpose.msra.mxu0 0.0
        %2900 = vmatprep.subr.mxu0 0.0
        %2901 = vmatpush1.xpose.msra.mxu0 0.0
        %2902 = vmatprep.subr.mxu0 0.0
        %2903 = vmatpush1.xpose.msra.mxu0 0.0
        %2904 = vmatprep.subr.mxu0 0.0
        %2905 = vmatpush1.xpose.msra.mxu0 0.0
        %2906 = vmatprep.subr.mxu0 0.0
        %2907 = vmatpush1.xpose.msra.mxu0 0.0
        %2908 = vmatprep.subr.mxu0 0.0
        %2909 = vmatpush1.xpose.msra.mxu0 0.0
        %2910 = vmatprep.subr.mxu0 0.0
        %2911 = vmatpush1.xpose.msra.mxu0 0.0
        %2912 = vmatprep.subr.mxu0 0.0
        %2913 = vmatpush1.xpose.msra.mxu0 0.0
        %2914 = vmatprep.subr.mxu0 0.0
        %2915 = vmatpush1.xpose.msra.mxu0 0.0
        %2916 = vmatprep.subr.mxu0 0.0
        %2917 = vmatpush1.xpose.msra.mxu0 0.0
        %2918 = vmatprep.subr.mxu0 0.0
        %2919 = vmatpush1.xpose.msra.mxu0 0.0
        %2920 = vmatprep.subr.mxu0 0.0
        %2921 = vmatpush1.xpose.msra.mxu0 0.0
        %2922 = vmatprep.subr.mxu0 0.0
        %2923 = vmatpush1.xpose.msra.mxu0 0.0
        %2924 = vmatprep.subr.mxu0 0.0
        %2925 = vmatpush1.xpose.msra.mxu0 0.0
        %2926 = vmatprep.subr.mxu0 0.0
        %2927 = vmatpush1.xpose.msra.mxu0 0.0
        %2928 = vmatprep.subr.mxu0 0.0
        %2929 = vmatpush1.xpose.msra.mxu0 0.0
        %2930 = vmatprep.subr.mxu0 0.0
        %2931 = vmatpush1.xpose.msra.mxu0 0.0
        %2932 = vmatprep.subr.mxu0 0.0
        %2933 = vmatpush1.xpose.msra.mxu0 0.0
        %2934 = vmatprep.subr.mxu0 0.0
        %2935 = vmatpush1.xpose.msra.mxu0 0.0
        %2936 = vmatprep.subr.mxu0 0.0
        %2937 = vmatpush1.xpose.msra.mxu0 0.0
        %2938 = vmatprep.mubr.f32.mxu0 0.0
        %2939 = vmatmul.mubr.f32.gmra.mrb[0].mxu0 %v2858
        %v2940 = vpop.f32.mrb[0].mxu0
        %v2941 = vadd.f32 0.0, %v2940
        %v2942 = vpop.f32.mrb[0].mxu0
        %2943 = vmatprep.mubr.f32.mxu0 0.0
        %2944 = vmatmul.mubr.f32.gmra.mrb[0].mxu0 %v2860
        %v2945 = vpop.f32.mrb[0].mxu0
        %v2946 = vadd.f32 0.0, %v2945
        %v2947 = vpop.f32.mrb[0].mxu0
        %2948 = vmatprep.mubr.f32.mxu0 0.0
        %2949 = vmatmul.mubr.f32.gmra.mrb[0].mxu0 %v2862
        %v2950 = vpop.f32.mrb[0].mxu0
        %v2951 = vadd.f32 0.0, %v2950
        %v2952 = vpop.f32.mrb[0].mxu0
        %2953 = vmatprep.mubr.f32.mxu0 0.0
        %2954 = vmatmul.mubr.f32.gmra.mrb[0].mxu0 %v2864
        %v2955 = vpop.f32.mrb[0].mxu0
        %v2956 = vadd.f32 0.0, %v2955
        %v2957 = vpop.f32.mrb[0].mxu0
        %2958 = vdwg.mxu0
        %v2959 = vmul.f32 %v2941, 0.5
        %v2960 = vmul.f32 %v2946, 0.5
        %v2961 = vmul.f32 %v2951, 0.5
        %v2962 = vmul.f32 %v2956, 0.5
        %v2963 = vsel %vm1064, %v2959, -1e+30
        %v2964 = vsel %vm1065, %v2960, -1e+30
        %v2965 = vsel %vm1066, %v2961, -1e+30
        %v2966 = vsel %vm1067, %v2962, -1e+30
        %v2967 = vsel %vm793, %v2963, -inf
        %2968 = vmax.xlane.f32.xlu0 %v2967
        %v2969 = vpop.xlane.xlu0 %2968
        %v2970 = vsel %vm793, %v2964, -inf
        %2971 = vmax.xlane.f32.xlu0 %v2970
        %v2972 = vpop.xlane.xlu0 %2971
        %v2973 = vsel %vm793, %v2965, -inf
        %2974 = vmax.xlane.f32.xlu0 %v2973
        %v2975 = vpop.xlane.xlu0 %2974
        %v2976 = vsel %vm793, %v2966, -inf
        %2977 = vmax.xlane.f32.xlu0 %v2976
        %v2978 = vpop.xlane.xlu0 %2977
        %v2979 = vsub.f32 %v2963, %v2969
        %v2980 = vsub.f32 %v2964, %v2972
        %v2981 = vsub.f32 %v2965, %v2975
        %v2982 = vsub.f32 %v2966, %v2978
        %v2983 = vmul.f32 %v2979, 1.442695
        %v2984 = vpow.pop %v2983
        %v2985 = vmul.f32 %v2980, 1.442695
        %v2986 = vpow.pop %v2985
        %v2987 = vmul.f32 %v2981, 1.442695
        %v2988 = vpow.pop %v2987
        %v2989 = vmul.f32 %v2982, 1.442695
        %v2990 = vpow.pop %v2989
        %v2991 = vsel %vm793, %v2984, 0.0
        %2992 = vadd.xlane.f32.xlu0 %v2991
        %v2993 = vpop.xlane.xlu0 %2992
        %v2994 = vsel %vm793, %v2986, 0.0
        %2995 = vadd.xlane.f32.xlu0 %v2994
        %v2996 = vpop.xlane.xlu0 %2995
        %v2997 = vsel %vm793, %v2988, 0.0
        %2998 = vadd.xlane.f32.xlu0 %v2997
        %v2999 = vpop.xlane.xlu0 %2998
        %v3000 = vsel %vm793, %v2990, 0.0
        %3001 = vadd.xlane.f32.xlu0 %v3000
        %v3002 = vpop.xlane.xlu0 %3001
        %v3003 = vrcp.pop %v2993
        %v3004 = vrcp.pop %v2996
        %v3005 = vrcp.pop %v2999
        %v3006 = vrcp.pop %v3002
        %v3007 = vmul.f32 %v2984, %v3003
        %v3008 = vmul.f32 %v2986, %v3004
        %v3009 = vmul.f32 %v2988, %v3005
        %v3010 = vmul.f32 %v2990, %v3006
        %3011 = vrot.lane.b32.xlu0 %v1024, 40
        %v3012 = vpop.permute.xlu0 %3011
        %3013 = vrot.lane.b32.xlu0 %v1029, 40
        %v3014 = vpop.permute.xlu0 %3013
        %3015 = vrot.lane.b32.xlu0 %v1034, 40
        %v3016 = vpop.permute.xlu0 %3015
        %3017 = vrot.lane.b32.xlu0 %v1039, 40
        %v3018 = vpop.permute.xlu0 %3017
        %v3024 = vsel %vm793, %v3007, 0
        %v3027 = vsel %vm793, %v3008, 0
        %v3030 = vsel %vm793, %v3009, 0
        %v3033 = vsel %vm793, %v3010, 0
        %3035 = vmatprep.subr.mxu0 0.0
        %3036 = vmatpush1.msra.mxu0 %v3012
        %3037 = vmatprep.subr.mxu0 0.0
        %3038 = vmatpush1.msra.mxu0 %v3014
        %3039 = vmatprep.subr.mxu0 0.0
        %3040 = vmatpush1.msra.mxu0 %v3016
        %3041 = vmatprep.subr.mxu0 0.0
        %3042 = vmatpush1.msra.mxu0 %v3018
        %3043 = vmatprep.subr.mxu0 0.0
        %3044 = vmatpush1.msra.mxu0 0.0
        %3045 = vmatprep.subr.mxu0 0.0
        %3046 = vmatpush1.msra.mxu0 0.0
        %3047 = vmatprep.subr.mxu0 0.0
        %3048 = vmatpush1.msra.mxu0 0.0
        %3049 = vmatprep.subr.mxu0 0.0
        %3050 = vmatpush1.msra.mxu0 0.0
        %3051 = vmatprep.subr.mxu0 0.0
        %3052 = vmatpush1.msra.mxu0 0.0
        %3053 = vmatprep.subr.mxu0 0.0
        %3054 = vmatpush1.msra.mxu0 0.0
        %3055 = vmatprep.subr.mxu0 0.0
        %3056 = vmatpush1.msra.mxu0 0.0
        %3057 = vmatprep.subr.mxu0 0.0
        %3058 = vmatpush1.msra.mxu0 0.0
        %3059 = vmatprep.subr.mxu0 0.0
        %3060 = vmatpush1.msra.mxu0 0.0
        %3061 = vmatprep.subr.mxu0 0.0
        %3062 = vmatpush1.msra.mxu0 0.0
        %3063 = vmatprep.subr.mxu0 0.0
        %3064 = vmatpush1.msra.mxu0 0.0
        %3065 = vmatprep.subr.mxu0 0.0
        %3066 = vmatpush1.msra.mxu0 0.0
        %3067 = vmatprep.subr.mxu0 0.0
        %3068 = vmatpush1.msra.mxu0 0.0
        %3069 = vmatprep.subr.mxu0 0.0
        %3070 = vmatpush1.msra.mxu0 0.0
        %3071 = vmatprep.subr.mxu0 0.0
        %3072 = vmatpush1.msra.mxu0 0.0
        %3073 = vmatprep.subr.mxu0 0.0
        %3074 = vmatpush1.msra.mxu0 0.0
        %3075 = vmatprep.subr.mxu0 0.0
        %3076 = vmatpush1.msra.mxu0 0.0
        %3077 = vmatprep.subr.mxu0 0.0
        %3078 = vmatpush1.msra.mxu0 0.0
        %3079 = vmatprep.subr.mxu0 0.0
        %3080 = vmatpush1.msra.mxu0 0.0
        %3081 = vmatprep.subr.mxu0 0.0
        %3082 = vmatpush1.msra.mxu0 0.0
        %3083 = vmatprep.subr.mxu0 0.0
        %3084 = vmatpush1.msra.mxu0 0.0
        %3085 = vmatprep.subr.mxu0 0.0
        %3086 = vmatpush1.msra.mxu0 0.0
        %3087 = vmatprep.subr.mxu0 0.0
        %3088 = vmatpush1.msra.mxu0 0.0
        %3089 = vmatprep.subr.mxu0 0.0
        %3090 = vmatpush1.msra.mxu0 0.0
        %3091 = vmatprep.subr.mxu0 0.0
        %3092 = vmatpush1.msra.mxu0 0.0
        %3093 = vmatprep.subr.mxu0 0.0
        %3094 = vmatpush1.msra.mxu0 0.0
        %3095 = vmatprep.subr.mxu0 0.0
        %3096 = vmatpush1.msra.mxu0 0.0
        %3097 = vmatprep.subr.mxu0 0.0
        %3098 = vmatpush1.msra.mxu0 0.0
        %3099 = vmatprep.mubr.f32.mxu0 0.0
        %3100 = vmatmul.mubr.f32.gmra.mrb[0].mxu0 %v3024
        %v3101 = vpop.f32.mrb[0].mxu0
        %v3102 = vadd.f32 0.0, %v3101
        %v3103 = vpop.f32.mrb[0].mxu0
        %3104 = vmatprep.mubr.f32.mxu0 0.0
        %3105 = vmatmul.mubr.f32.gmra.mrb[0].mxu0 %v3027
        %v3106 = vpop.f32.mrb[0].mxu0
        %v3107 = vadd.f32 0.0, %v3106
        %v3108 = vpop.f32.mrb[0].mxu0
        %3109 = vmatprep.mubr.f32.mxu0 0.0
        %3110 = vmatmul.mubr.f32.gmra.mrb[0].mxu0 %v3030
        %v3111 = vpop.f32.mrb[0].mxu0
        %v3112 = vadd.f32 0.0, %v3111
        %v3113 = vpop.f32.mrb[0].mxu0
        %3114 = vmatprep.mubr.f32.mxu0 0.0
        %3115 = vmatmul.mubr.f32.gmra.mrb[0].mxu0 %v3033
        %v3116 = vpop.f32.mrb[0].mxu0
        %v3117 = vadd.f32 0.0, %v3116
        %v3118 = vpop.f32.mrb[0].mxu0
        %3119 = vdwg.mxu0
        %3124 = vrot.lane.b32.xlu0 %v3102, 24
        %v3125 = vpop.permute.xlu0 %3124
        %3126 = vrot.lane.b32.xlu0 %v3107, 24
        %v3127 = vpop.permute.xlu0 %3126
        %3128 = vrot.lane.b32.xlu0 %v3112, 24
        %v3129 = vpop.permute.xlu0 %3128
        %3130 = vrot.lane.b32.xlu0 %v3117, 24
        %v3131 = vpop.permute.xlu0 %3130
        %vm3136 = vcmask 228544
        %3137 = vst.msk [vmem:[#allocation2] sm:$0xff] %vm3136, %v3125
        %3138 = vst.msk [vmem:[#allocation2 + $0x8] sm:$0xff] %vm3136, %v3127
        %3139 = vst.msk [vmem:[#allocation2 + $0x10] sm:$0xff] %vm3136, %v3129
        %3140 = vst.msk [vmem:[#allocation2 + $0x18] sm:$0xff] %vm3136, %v3131
        %3141 = vrot.lane.b32.xlu0 %v1024, 100
        %v3142 = vpop.permute.xlu0 %3141
        %3143 = vrot.lane.b32.xlu0 %v1029, 100
        %v3144 = vpop.permute.xlu0 %3143
        %3145 = vrot.lane.b32.xlu0 %v1034, 100
        %v3146 = vpop.permute.xlu0 %3145
        %3147 = vrot.lane.b32.xlu0 %v1039, 100
        %v3148 = vpop.permute.xlu0 %3147
        %3149 = vrot.lane.b32.xlu0 %v1024, 68
        %v3150 = vpop.permute.xlu0 %3149
        %3151 = vrot.lane.b32.xlu0 %v1029, 68
        %v3152 = vpop.permute.xlu0 %3151
        %3153 = vrot.lane.b32.xlu0 %v1034, 68
        %v3154 = vpop.permute.xlu0 %3153
        %3155 = vrot.lane.b32.xlu0 %v1039, 68
        %v3156 = vpop.permute.xlu0 %3155
        %v3157 = vsel %vm1080, %v3142, 0
        %v3159 = vsel %vm1080, %v3144, 0
        %v3161 = vsel %vm1080, %v3146, 0
        %v3163 = vsel %vm1080, %v3148, 0
        %v3165 = vsel %vm1080, %v3150, 0
        %v3167 = vsel %vm1080, %v3152, 0
        %v3169 = vsel %vm1080, %v3154, 0
        %v3171 = vsel %vm1080, %v3156, 0
        %3173 = vmatprep.subr.mxu0 0.0
        %3174 = vmatpush1.xpose.msra.mxu0 %v3165
        %3175 = vmatprep.subr.mxu0 0.0
        %3176 = vmatpush1.xpose.msra.mxu0 %v3167
        %3177 = vmatprep.subr.mxu0 0.0
        %3178 = vmatpush1.xpose.msra.mxu0 %v3169
        %3179 = vmatprep.subr.mxu0 0.0
        %3180 = vmatpush1.xpose.msra.mxu0 %v3171
        %3181 = vmatprep.subr.mxu0 0.0
        %3182 = vmatpush1.xpose.msra.mxu0 0.0
        %3183 = vmatprep.subr.mxu0 0.0
        %3184 = vmatpush1.xpose.msra.mxu0 0.0
        %3185 = vmatprep.subr.mxu0 0.0
        %3186 = vmatpush1.xpose.msra.mxu0 0.0
        %3187 = vmatprep.subr.mxu0 0.0
        %3188 = vmatpush1.xpose.msra.mxu0 0.0
        %3189 = vmatprep.subr.mxu0 0.0
        %3190 = vmatpush1.xpose.msra.mxu0 0.0
        %3191 = vmatprep.subr.mxu0 0.0
        %3192 = vmatpush1.xpose.msra.mxu0 0.0
        %3193 = vmatprep.subr.mxu0 0.0
        %3194 = vmatpush1.xpose.msra.mxu0 0.0
        %3195 = vmatprep.subr.mxu0 0.0
        %3196 = vmatpush1.xpose.msra.mxu0 0.0
        %3197 = vmatprep.subr.mxu0 0.0
        %3198 = vmatpush1.xpose.msra.mxu0 0.0
        %3199 = vmatprep.subr.mxu0 0.0
        %3200 = vmatpush1.xpose.msra.mxu0 0.0
        %3201 = vmatprep.subr.mxu0 0.0
        %3202 = vmatpush1.xpose.msra.mxu0 0.0
        %3203 = vmatprep.subr.mxu0 0.0
        %3204 = vmatpush1.xpose.msra.mxu0 0.0
        %3205 = vmatprep.subr.mxu0 0.0
        %3206 = vmatpush1.xpose.msra.mxu0 0.0
        %3207 = vmatprep.subr.mxu0 0.0
        %3208 = vmatpush1.xpose.msra.mxu0 0.0
        %3209 = vmatprep.subr.mxu0 0.0
        %3210 = vmatpush1.xpose.msra.mxu0 0.0
        %3211 = vmatprep.subr.mxu0 0.0
        %3212 = vmatpush1.xpose.msra.mxu0 0.0
        %3213 = vmatprep.subr.mxu0 0.0
        %3214 = vmatpush1.xpose.msra.mxu0 0.0
        %3215 = vmatprep.subr.mxu0 0.0
        %3216 = vmatpush1.xpose.msra.mxu0 0.0
        %3217 = vmatprep.subr.mxu0 0.0
        %3218 = vmatpush1.xpose.msra.mxu0 0.0
        %3219 = vmatprep.subr.mxu0 0.0
        %3220 = vmatpush1.xpose.msra.mxu0 0.0
        %3221 = vmatprep.subr.mxu0 0.0
        %3222 = vmatpush1.xpose.msra.mxu0 0.0
        %3223 = vmatprep.subr.mxu0 0.0
        %3224 = vmatpush1.xpose.msra.mxu0 0.0
        %3225 = vmatprep.subr.mxu0 0.0
        %3226 = vmatpush1.xpose.msra.mxu0 0.0
        %3227 = vmatprep.subr.mxu0 0.0
        %3228 = vmatpush1.xpose.msra.mxu0 0.0
        %3229 = vmatprep.subr.mxu0 0.0
        %3230 = vmatpush1.xpose.msra.mxu0 0.0
        %3231 = vmatprep.subr.mxu0 0.0
        %3232 = vmatpush1.xpose.msra.mxu0 0.0
        %3233 = vmatprep.subr.mxu0 0.0
        %3234 = vmatpush1.xpose.msra.mxu0 0.0
        %3235 = vmatprep.subr.mxu0 0.0
        %3236 = vmatpush1.xpose.msra.mxu0 0.0
        %3237 = vmatprep.mubr.f32.mxu0 0.0
        %3238 = vmatmul.mubr.f32.gmra.mrb[0].mxu0 %v3157
        %v3239 = vpop.f32.mrb[0].mxu0
        %v3240 = vadd.f32 0.0, %v3239
        %v3241 = vpop.f32.mrb[0].mxu0
        %3242 = vmatprep.mubr.f32.mxu0 0.0
        %3243 = vmatmul.mubr.f32.gmra.mrb[0].mxu0 %v3159
        %v3244 = vpop.f32.mrb[0].mxu0
        %v3245 = vadd.f32 0.0, %v3244
        %v3246 = vpop.f32.mrb[0].mxu0
        %3247 = vmatprep.mubr.f32.mxu0 0.0
        %3248 = vmatmul.mubr.f32.gmra.mrb[0].mxu0 %v3161
        %v3249 = vpop.f32.mrb[0].mxu0
        %v3250 = vadd.f32 0.0, %v3249
        %v3251 = vpop.f32.mrb[0].mxu0
        %3252 = vmatprep.mubr.f32.mxu0 0.0
        %3253 = vmatmul.mubr.f32.gmra.mrb[0].mxu0 %v3163
        %v3254 = vpop.f32.mrb[0].mxu0
        %v3255 = vadd.f32 0.0, %v3254
        %v3256 = vpop.f32.mrb[0].mxu0
        %3257 = vdwg.mxu0
        %v3258 = vmul.f32 %v3240, 0.5
        %v3259 = vmul.f32 %v3245, 0.5
        %v3260 = vmul.f32 %v3250, 0.5
        %v3261 = vmul.f32 %v3255, 0.5
        %v3262 = vsel %vm1064, %v3258, -1e+30
        %v3263 = vsel %vm1065, %v3259, -1e+30
        %v3264 = vsel %vm1066, %v3260, -1e+30
        %v3265 = vsel %vm1067, %v3261, -1e+30
        %v3266 = vsel %vm793, %v3262, -inf
        %3267 = vmax.xlane.f32.xlu0 %v3266
        %v3268 = vpop.xlane.xlu0 %3267
        %v3269 = vsel %vm793, %v3263, -inf
        %3270 = vmax.xlane.f32.xlu0 %v3269
        %v3271 = vpop.xlane.xlu0 %3270
        %v3272 = vsel %vm793, %v3264, -inf
        %3273 = vmax.xlane.f32.xlu0 %v3272
        %v3274 = vpop.xlane.xlu0 %3273
        %v3275 = vsel %vm793, %v3265, -inf
        %3276 = vmax.xlane.f32.xlu0 %v3275
        %v3277 = vpop.xlane.xlu0 %3276
        %v3278 = vsub.f32 %v3262, %v3268
        %v3279 = vsub.f32 %v3263, %v3271
        %v3280 = vsub.f32 %v3264, %v3274
        %v3281 = vsub.f32 %v3265, %v3277
        %v3282 = vmul.f32 %v3278, 1.442695
        %v3283 = vpow.pop %v3282
        %v3284 = vmul.f32 %v3279, 1.442695
        %v3285 = vpow.pop %v3284
        %v3286 = vmul.f32 %v3280, 1.442695
        %v3287 = vpow.pop %v3286
        %v3288 = vmul.f32 %v3281, 1.442695
        %v3289 = vpow.pop %v3288
        %v3290 = vsel %vm793, %v3283, 0.0
        %3291 = vadd.xlane.f32.xlu0 %v3290
        %v3292 = vpop.xlane.xlu0 %3291
        %v3293 = vsel %vm793, %v3285, 0.0
        %3294 = vadd.xlane.f32.xlu0 %v3293
        %v3295 = vpop.xlane.xlu0 %3294
        %v3296 = vsel %vm793, %v3287, 0.0
        %3297 = vadd.xlane.f32.xlu0 %v3296
        %v3298 = vpop.xlane.xlu0 %3297
        %v3299 = vsel %vm793, %v3289, 0.0
        %3300 = vadd.xlane.f32.xlu0 %v3299
        %v3301 = vpop.xlane.xlu0 %3300
        %v3302 = vrcp.pop %v3292
        %v3303 = vrcp.pop %v3295
        %v3304 = vrcp.pop %v3298
        %v3305 = vrcp.pop %v3301
        %v3306 = vmul.f32 %v3283, %v3302
        %v3307 = vmul.f32 %v3285, %v3303
        %v3308 = vmul.f32 %v3287, %v3304
        %v3309 = vmul.f32 %v3289, %v3305
        %3310 = vrot.lane.b32.xlu0 %v1024, 36
        %v3311 = vpop.permute.xlu0 %3310
        %3312 = vrot.lane.b32.xlu0 %v1029, 36
        %v3313 = vpop.permute.xlu0 %3312
        %3314 = vrot.lane.b32.xlu0 %v1034, 36
        %v3315 = vpop.permute.xlu0 %3314
        %3316 = vrot.lane.b32.xlu0 %v1039, 36
        %v3317 = vpop.permute.xlu0 %3316
        %v3323 = vsel %vm793, %v3306, 0
        %v3326 = vsel %vm793, %v3307, 0
        %v3329 = vsel %vm793, %v3308, 0
        %v3332 = vsel %vm793, %v3309, 0
        %3334 = vmatprep.subr.mxu0 0.0
        %3335 = vmatpush1.msra.mxu0 %v3311
        %3336 = vmatprep.subr.mxu0 0.0
        %3337 = vmatpush1.msra.mxu0 %v3313
        %3338 = vmatprep.subr.mxu0 0.0
        %3339 = vmatpush1.msra.mxu0 %v3315
        %3340 = vmatprep.subr.mxu0 0.0
        %3341 = vmatpush1.msra.mxu0 %v3317
        %3342 = vmatprep.subr.mxu0 0.0
        %3343 = vmatpush1.msra.mxu0 0.0
        %3344 = vmatprep.subr.mxu0 0.0
        %3345 = vmatpush1.msra.mxu0 0.0
        %3346 = vmatprep.subr.mxu0 0.0
        %3347 = vmatpush1.msra.mxu0 0.0
        %3348 = vmatprep.subr.mxu0 0.0
        %3349 = vmatpush1.msra.mxu0 0.0
        %3350 = vmatprep.subr.mxu0 0.0
        %3351 = vmatpush1.msra.mxu0 0.0
        %3352 = vmatprep.subr.mxu0 0.0
        %3353 = vmatpush1.msra.mxu0 0.0
        %3354 = vmatprep.subr.mxu0 0.0
        %3355 = vmatpush1.msra.mxu0 0.0
        %3356 = vmatprep.subr.mxu0 0.0
        %3357 = vmatpush1.msra.mxu0 0.0
        %3358 = vmatprep.subr.mxu0 0.0
        %3359 = vmatpush1.msra.mxu0 0.0
        %3360 = vmatprep.subr.mxu0 0.0
        %3361 = vmatpush1.msra.mxu0 0.0
        %3362 = vmatprep.subr.mxu0 0.0
        %3363 = vmatpush1.msra.mxu0 0.0
        %3364 = vmatprep.subr.mxu0 0.0
        %3365 = vmatpush1.msra.mxu0 0.0
        %3366 = vmatprep.subr.mxu0 0.0
        %3367 = vmatpush1.msra.mxu0 0.0
        %3368 = vmatprep.subr.mxu0 0.0
        %3369 = vmatpush1.msra.mxu0 0.0
        %3370 = vmatprep.subr.mxu0 0.0
        %3371 = vmatpush1.msra.mxu0 0.0
        %3372 = vmatprep.subr.mxu0 0.0
        %3373 = vmatpush1.msra.mxu0 0.0
        %3374 = vmatprep.subr.mxu0 0.0
        %3375 = vmatpush1.msra.mxu0 0.0
        %3376 = vmatprep.subr.mxu0 0.0
        %3377 = vmatpush1.msra.mxu0 0.0
        %3378 = vmatprep.subr.mxu0 0.0
        %3379 = vmatpush1.msra.mxu0 0.0
        %3380 = vmatprep.subr.mxu0 0.0
        %3381 = vmatpush1.msra.mxu0 0.0
        %3382 = vmatprep.subr.mxu0 0.0
        %3383 = vmatpush1.msra.mxu0 0.0
        %3384 = vmatprep.subr.mxu0 0.0
        %3385 = vmatpush1.msra.mxu0 0.0
        %3386 = vmatprep.subr.mxu0 0.0
        %3387 = vmatpush1.msra.mxu0 0.0
        %3388 = vmatprep.subr.mxu0 0.0
        %3389 = vmatpush1.msra.mxu0 0.0
        %3390 = vmatprep.subr.mxu0 0.0
        %3391 = vmatpush1.msra.mxu0 0.0
        %3392 = vmatprep.subr.mxu0 0.0
        %3393 = vmatpush1.msra.mxu0 0.0
        %3394 = vmatprep.subr.mxu0 0.0
        %3395 = vmatpush1.msra.mxu0 0.0
        %3396 = vmatprep.subr.mxu0 0.0
        %3397 = vmatpush1.msra.mxu0 0.0
        %3398 = vmatprep.mubr.f32.mxu0 0.0
        %3399 = vmatmul.mubr.f32.gmra.mrb[0].mxu0 %v3323
        %v3400 = vpop.f32.mrb[0].mxu0
        %v3401 = vadd.f32 0.0, %v3400
        %v3402 = vpop.f32.mrb[0].mxu0
        %3403 = vmatprep.mubr.f32.mxu0 0.0
        %3404 = vmatmul.mubr.f32.gmra.mrb[0].mxu0 %v3326
        %v3405 = vpop.f32.mrb[0].mxu0
        %v3406 = vadd.f32 0.0, %v3405
        %v3407 = vpop.f32.mrb[0].mxu0
        %3408 = vmatprep.mubr.f32.mxu0 0.0
        %3409 = vmatmul.mubr.f32.gmra.mrb[0].mxu0 %v3329
        %v3410 = vpop.f32.mrb[0].mxu0
        %v3411 = vadd.f32 0.0, %v3410
        %v3412 = vpop.f32.mrb[0].mxu0
        %3413 = vmatprep.mubr.f32.mxu0 0.0
        %3414 = vmatmul.mubr.f32.gmra.mrb[0].mxu0 %v3332
        %v3415 = vpop.f32.mrb[0].mxu0
        %v3416 = vadd.f32 0.0, %v3415
        %v3417 = vpop.f32.mrb[0].mxu0
        %3418 = vdwg.mxu0
        %3423 = vrot.lane.b32.xlu0 %v3401, 28
        %v3424 = vpop.permute.xlu0 %3423
        %3425 = vrot.lane.b32.xlu0 %v3406, 28
        %v3426 = vpop.permute.xlu0 %3425
        %3427 = vrot.lane.b32.xlu0 %v3411, 28
        %v3428 = vpop.permute.xlu0 %3427
        %3429 = vrot.lane.b32.xlu0 %v3416, 28
        %v3430 = vpop.permute.xlu0 %3429
        %vm3435 = vcmask 261344
        %3436 = vst.msk [vmem:[#allocation2] sm:$0xff] %vm3435, %v3424
        %3437 = vst.msk [vmem:[#allocation2 + $0x8] sm:$0xff] %vm3435, %v3426
        %3438 = vst.msk [vmem:[#allocation2 + $0x10] sm:$0xff] %vm3435, %v3428
        %3439 = vst.msk [vmem:[#allocation2 + $0x18] sm:$0xff] %vm3435, %v3430
        %v3440 = vld [vmem:[#allocation2] sm:$0xff]
        %v3441 = vld [vmem:[#allocation2 + $0x8] sm:$0xff]
        %v3442 = vld [vmem:[#allocation2 + $0x10] sm:$0xff]
        %v3443 = vld [vmem:[#allocation2 + $0x18] sm:$0xff]
        %v3444 = vld [vmem:[#allocation12] sm:$0xff]
        %v3445 = vld [vmem:[#allocation12 + $0x8] sm:$0xff]
        %v3446 = vld [vmem:[#allocation12 + $0x10] sm:$0xff]
        %v3447 = vld [vmem:[#allocation12 + $0x18] sm:$0xff]
        %v3448 = vld [vmem:[%s9] sm:$0x1]
        %v3450 = vlaneseq
        %v3451 = vshrl.u32 %v3450, 7
        %v3452 = vsub.s32 0, %v3451
        %v3453 = vrot.slane %v3448, %v3452
        %v3456 = vsel %vm793, %v3440, 0
        %v3459 = vsel %vm793, %v3441, 0
        %v3462 = vsel %vm793, %v3442, 0
        %v3465 = vsel %vm793, %v3443, 0
        %3467 = vmatprep.subr.mxu0 0.0
        %3468 = vmatpush1.msra.mxu0 %v3444
        %3469 = vmatprep.subr.mxu0 0.0
        %3470 = vmatpush1.msra.mxu0 %v3445
        %3471 = vmatprep.subr.mxu0 0.0
        %3472 = vmatpush1.msra.mxu0 %v3446
        %3473 = vmatprep.subr.mxu0 0.0
        %3474 = vmatpush1.msra.mxu0 %v3447
        %3475 = vmatprep.subr.mxu0 0.0
        %3476 = vmatpush1.msra.mxu0 0.0
        %3477 = vmatprep.subr.mxu0 0.0
        %3478 = vmatpush1.msra.mxu0 0.0
        %3479 = vmatprep.subr.mxu0 0.0
        %3480 = vmatpush1.msra.mxu0 0.0
        %3481 = vmatprep.subr.mxu0 0.0
        %3482 = vmatpush1.msra.mxu0 0.0
        %3483 = vmatprep.subr.mxu0 0.0
        %3484 = vmatpush1.msra.mxu0 0.0
        %3485 = vmatprep.subr.mxu0 0.0
        %3486 = vmatpush1.msra.mxu0 0.0
        %3487 = vmatprep.subr.mxu0 0.0
        %3488 = vmatpush1.msra.mxu0 0.0
        %3489 = vmatprep.subr.mxu0 0.0
        %3490 = vmatpush1.msra.mxu0 0.0
        %3491 = vmatprep.subr.mxu0 0.0
        %3492 = vmatpush1.msra.mxu0 0.0
        %3493 = vmatprep.subr.mxu0 0.0
        %3494 = vmatpush1.msra.mxu0 0.0
        %3495 = vmatprep.subr.mxu0 0.0
        %3496 = vmatpush1.msra.mxu0 0.0
        %3497 = vmatprep.subr.mxu0 0.0
        %3498 = vmatpush1.msra.mxu0 0.0
        %3499 = vmatprep.subr.mxu0 0.0
        %3500 = vmatpush1.msra.mxu0 0.0
        %3501 = vmatprep.subr.mxu0 0.0
        %3502 = vmatpush1.msra.mxu0 0.0
        %3503 = vmatprep.subr.mxu0 0.0
        %3504 = vmatpush1.msra.mxu0 0.0
        %3505 = vmatprep.subr.mxu0 0.0
        %3506 = vmatpush1.msra.mxu0 0.0
        %3507 = vmatprep.subr.mxu0 0.0
        %3508 = vmatpush1.msra.mxu0 0.0
        %3509 = vmatprep.subr.mxu0 0.0
        %3510 = vmatpush1.msra.mxu0 0.0
        %3511 = vmatprep.subr.mxu0 0.0
        %3512 = vmatpush1.msra.mxu0 0.0
        %3513 = vmatprep.subr.mxu0 0.0
        %3514 = vmatpush1.msra.mxu0 0.0
        %3515 = vmatprep.subr.mxu0 0.0
        %3516 = vmatpush1.msra.mxu0 0.0
        %3517 = vmatprep.subr.mxu0 0.0
        %3518 = vmatpush1.msra.mxu0 0.0
        %3519 = vmatprep.subr.mxu0 0.0
        %3520 = vmatpush1.msra.mxu0 0.0
        %3521 = vmatprep.subr.mxu0 0.0
        %3522 = vmatpush1.msra.mxu0 0.0
        %3523 = vmatprep.subr.mxu0 0.0
        %3524 = vmatpush1.msra.mxu0 0.0
        %3525 = vmatprep.subr.mxu0 0.0
        %3526 = vmatpush1.msra.mxu0 0.0
        %3527 = vmatprep.subr.mxu0 0.0
        %3528 = vmatpush1.msra.mxu0 0.0
        %3529 = vmatprep.subr.mxu0 0.0
        %3530 = vmatpush1.msra.mxu0 0.0
        %3531 = vmatprep.mubr.f32.mxu0 0.0
        %3532 = vmatmul.mubr.f32.gmra.mrb[0].mxu0 %v3456
        %v3533 = vpop.f32.mrb[0].mxu0
        %v3534 = vadd.f32 %v3453, %v3533
        %v3535 = vpop.f32.mrb[0].mxu0
        %3536 = vmatprep.mubr.f32.mxu0 0.0
        %3537 = vmatmul.mubr.f32.gmra.mrb[0].mxu0 %v3459
        %v3538 = vpop.f32.mrb[0].mxu0
        %v3539 = vadd.f32 %v3453, %v3538
        %v3540 = vpop.f32.mrb[0].mxu0
        %3541 = vmatprep.mubr.f32.mxu0 0.0
        %3542 = vmatmul.mubr.f32.gmra.mrb[0].mxu0 %v3462
        %v3543 = vpop.f32.mrb[0].mxu0
        %v3544 = vadd.f32 %v3453, %v3543
        %v3545 = vpop.f32.mrb[0].mxu0
        %3546 = vmatprep.mubr.f32.mxu0 0.0
        %3547 = vmatmul.mubr.f32.gmra.mrb[0].mxu0 %v3465
        %v3548 = vpop.f32.mrb[0].mxu0
        %v3549 = vadd.f32 %v3453, %v3548
        %v3550 = vpop.f32.mrb[0].mxu0
        %3551 = vdwg.mxu0
        %v3552 = vadd.f32 %v863, %v3534
        %v3553 = vadd.f32 %v864, %v3539
        %v3554 = vadd.f32 %v865, %v3544
        %v3555 = vadd.f32 %v866, %v3549
        %v3556 = vmul.u32 %v1043, 4
        %vm3557 = vcmp.eq.s32.totalorder %v1052, %v3556
        %v3558 = vsel %vm3557, 1.0, 0.0
        %v3560 = vsel %vm793, %v3558, 0
        %3562 = vmatprep.subr.mxu0 0.0
        %3563 = vmatpush1.msra.mxu0 %v3552
        %3564 = vmatprep.subr.mxu0 0.0
        %3565 = vmatpush1.msra.mxu0 %v3553
        %3566 = vmatprep.subr.mxu0 0.0
        %3567 = vmatpush1.msra.mxu0 %v3554
        %3568 = vmatprep.subr.mxu0 0.0
        %3569 = vmatpush1.msra.mxu0 %v3555
        %3570 = vmatprep.subr.mxu0 0.0
        %3571 = vmatpush1.msra.mxu0 0.0
        %3572 = vmatprep.subr.mxu0 0.0
        %3573 = vmatpush1.msra.mxu0 0.0
        %3574 = vmatprep.subr.mxu0 0.0
        %3575 = vmatpush1.msra.mxu0 0.0
        %3576 = vmatprep.subr.mxu0 0.0
        %3577 = vmatpush1.msra.mxu0 0.0
        %3578 = vmatprep.subr.mxu0 0.0
        %3579 = vmatpush1.msra.mxu0 0.0
        %3580 = vmatprep.subr.mxu0 0.0
        %3581 = vmatpush1.msra.mxu0 0.0
        %3582 = vmatprep.subr.mxu0 0.0
        %3583 = vmatpush1.msra.mxu0 0.0
        %3584 = vmatprep.subr.mxu0 0.0
        %3585 = vmatpush1.msra.mxu0 0.0
        %3586 = vmatprep.subr.mxu0 0.0
        %3587 = vmatpush1.msra.mxu0 0.0
        %3588 = vmatprep.subr.mxu0 0.0
        %3589 = vmatpush1.msra.mxu0 0.0
        %3590 = vmatprep.subr.mxu0 0.0
        %3591 = vmatpush1.msra.mxu0 0.0
        %3592 = vmatprep.subr.mxu0 0.0
        %3593 = vmatpush1.msra.mxu0 0.0
        %3594 = vmatprep.subr.mxu0 0.0
        %3595 = vmatpush1.msra.mxu0 0.0
        %3596 = vmatprep.subr.mxu0 0.0
        %3597 = vmatpush1.msra.mxu0 0.0
        %3598 = vmatprep.subr.mxu0 0.0
        %3599 = vmatpush1.msra.mxu0 0.0
        %3600 = vmatprep.subr.mxu0 0.0
        %3601 = vmatpush1.msra.mxu0 0.0
        %3602 = vmatprep.subr.mxu0 0.0
        %3603 = vmatpush1.msra.mxu0 0.0
        %3604 = vmatprep.subr.mxu0 0.0
        %3605 = vmatpush1.msra.mxu0 0.0
        %3606 = vmatprep.subr.mxu0 0.0
        %3607 = vmatpush1.msra.mxu0 0.0
        %3608 = vmatprep.subr.mxu0 0.0
        %3609 = vmatpush1.msra.mxu0 0.0
        %3610 = vmatprep.subr.mxu0 0.0
        %3611 = vmatpush1.msra.mxu0 0.0
        %3612 = vmatprep.subr.mxu0 0.0
        %3613 = vmatpush1.msra.mxu0 0.0
        %3614 = vmatprep.subr.mxu0 0.0
        %3615 = vmatpush1.msra.mxu0 0.0
        %3616 = vmatprep.subr.mxu0 0.0
        %3617 = vmatpush1.msra.mxu0 0.0
        %3618 = vmatprep.subr.mxu0 0.0
        %3619 = vmatpush1.msra.mxu0 0.0
        %3620 = vmatprep.subr.mxu0 0.0
        %3621 = vmatpush1.msra.mxu0 0.0
        %3622 = vmatprep.subr.mxu0 0.0
        %3623 = vmatpush1.msra.mxu0 0.0
        %3624 = vmatprep.subr.mxu0 0.0
        %3625 = vmatpush1.msra.mxu0 0.0
        %3626 = vmatprep.mubr.f32.mxu0 0.0
        %3627 = vmatmul.mubr.f32.gmra.mrb[0].mxu0 %v3560
        %v3628 = vpop.f32.mrb[0].mxu0
        %v3629 = vadd.f32 0.0, %v3628
        %v3630 = vpop.f32.mrb[0].mxu0
        %3631 = vdwg.mxu0
        %v3632 = vadd.s32 %v3556, 1
        %vm3633 = vcmp.eq.s32.totalorder %v1052, %v3632
        %v3634 = vsel %vm3633, 1.0, 0.0
        %v3636 = vsel %vm793, %v3634, 0
        %3638 = vmatprep.subr.mxu0 0.0
        %3639 = vmatpush1.msra.mxu0 %v3552
        %3640 = vmatprep.subr.mxu0 0.0
        %3641 = vmatpush1.msra.mxu0 %v3553
        %3642 = vmatprep.subr.mxu0 0.0
        %3643 = vmatpush1.msra.mxu0 %v3554
        %3644 = vmatprep.subr.mxu0 0.0
        %3645 = vmatpush1.msra.mxu0 %v3555
        %3646 = vmatprep.subr.mxu0 0.0
        %3647 = vmatpush1.msra.mxu0 0.0
        %3648 = vmatprep.subr.mxu0 0.0
        %3649 = vmatpush1.msra.mxu0 0.0
        %3650 = vmatprep.subr.mxu0 0.0
        %3651 = vmatpush1.msra.mxu0 0.0
        %3652 = vmatprep.subr.mxu0 0.0
        %3653 = vmatpush1.msra.mxu0 0.0
        %3654 = vmatprep.subr.mxu0 0.0
        %3655 = vmatpush1.msra.mxu0 0.0
        %3656 = vmatprep.subr.mxu0 0.0
        %3657 = vmatpush1.msra.mxu0 0.0
        %3658 = vmatprep.subr.mxu0 0.0
        %3659 = vmatpush1.msra.mxu0 0.0
        %3660 = vmatprep.subr.mxu0 0.0
        %3661 = vmatpush1.msra.mxu0 0.0
        %3662 = vmatprep.subr.mxu0 0.0
        %3663 = vmatpush1.msra.mxu0 0.0
        %3664 = vmatprep.subr.mxu0 0.0
        %3665 = vmatpush1.msra.mxu0 0.0
        %3666 = vmatprep.subr.mxu0 0.0
        %3667 = vmatpush1.msra.mxu0 0.0
        %3668 = vmatprep.subr.mxu0 0.0
        %3669 = vmatpush1.msra.mxu0 0.0
        %3670 = vmatprep.subr.mxu0 0.0
        %3671 = vmatpush1.msra.mxu0 0.0
        %3672 = vmatprep.subr.mxu0 0.0
        %3673 = vmatpush1.msra.mxu0 0.0
        %3674 = vmatprep.subr.mxu0 0.0
        %3675 = vmatpush1.msra.mxu0 0.0
        %3676 = vmatprep.subr.mxu0 0.0
        %3677 = vmatpush1.msra.mxu0 0.0
        %3678 = vmatprep.subr.mxu0 0.0
        %3679 = vmatpush1.msra.mxu0 0.0
        %3680 = vmatprep.subr.mxu0 0.0
        %3681 = vmatpush1.msra.mxu0 0.0
        %3682 = vmatprep.subr.mxu0 0.0
        %3683 = vmatpush1.msra.mxu0 0.0
        %3684 = vmatprep.subr.mxu0 0.0
        %3685 = vmatpush1.msra.mxu0 0.0
        %3686 = vmatprep.subr.mxu0 0.0
        %3687 = vmatpush1.msra.mxu0 0.0
        %3688 = vmatprep.subr.mxu0 0.0
        %3689 = vmatpush1.msra.mxu0 0.0
        %3690 = vmatprep.subr.mxu0 0.0
        %3691 = vmatpush1.msra.mxu0 0.0
        %3692 = vmatprep.subr.mxu0 0.0
        %3693 = vmatpush1.msra.mxu0 0.0
        %3694 = vmatprep.subr.mxu0 0.0
        %3695 = vmatpush1.msra.mxu0 0.0
        %3696 = vmatprep.subr.mxu0 0.0
        %3697 = vmatpush1.msra.mxu0 0.0
        %3698 = vmatprep.subr.mxu0 0.0
        %3699 = vmatpush1.msra.mxu0 0.0
        %3700 = vmatprep.subr.mxu0 0.0
        %3701 = vmatpush1.msra.mxu0 0.0
        %3702 = vmatprep.mubr.f32.mxu0 0.0
        %3703 = vmatmul.mubr.f32.gmra.mrb[0].mxu0 %v3636
        %v3704 = vpop.f32.mrb[0].mxu0
        %v3705 = vadd.f32 0.0, %v3704
        %v3706 = vpop.f32.mrb[0].mxu0
        %3707 = vdwg.mxu0
        %v3708 = vadd.s32 %v3556, 2
        %vm3709 = vcmp.eq.s32.totalorder %v1052, %v3708
        %v3710 = vsel %vm3709, 1.0, 0.0
        %v3712 = vsel %vm793, %v3710, 0
        %3714 = vmatprep.subr.mxu0 0.0
        %3715 = vmatpush1.msra.mxu0 %v3552
        %3716 = vmatprep.subr.mxu0 0.0
        %3717 = vmatpush1.msra.mxu0 %v3553
        %3718 = vmatprep.subr.mxu0 0.0
        %3719 = vmatpush1.msra.mxu0 %v3554
        %3720 = vmatprep.subr.mxu0 0.0
        %3721 = vmatpush1.msra.mxu0 %v3555
        %3722 = vmatprep.subr.mxu0 0.0
        %3723 = vmatpush1.msra.mxu0 0.0
        %3724 = vmatprep.subr.mxu0 0.0
        %3725 = vmatpush1.msra.mxu0 0.0
        %3726 = vmatprep.subr.mxu0 0.0
        %3727 = vmatpush1.msra.mxu0 0.0
        %3728 = vmatprep.subr.mxu0 0.0
        %3729 = vmatpush1.msra.mxu0 0.0
        %3730 = vmatprep.subr.mxu0 0.0
        %3731 = vmatpush1.msra.mxu0 0.0
        %3732 = vmatprep.subr.mxu0 0.0
        %3733 = vmatpush1.msra.mxu0 0.0
        %3734 = vmatprep.subr.mxu0 0.0
        %3735 = vmatpush1.msra.mxu0 0.0
        %3736 = vmatprep.subr.mxu0 0.0
        %3737 = vmatpush1.msra.mxu0 0.0
        %3738 = vmatprep.subr.mxu0 0.0
        %3739 = vmatpush1.msra.mxu0 0.0
        %3740 = vmatprep.subr.mxu0 0.0
        %3741 = vmatpush1.msra.mxu0 0.0
        %3742 = vmatprep.subr.mxu0 0.0
        %3743 = vmatpush1.msra.mxu0 0.0
        %3744 = vmatprep.subr.mxu0 0.0
        %3745 = vmatpush1.msra.mxu0 0.0
        %3746 = vmatprep.subr.mxu0 0.0
        %3747 = vmatpush1.msra.mxu0 0.0
        %3748 = vmatprep.subr.mxu0 0.0
        %3749 = vmatpush1.msra.mxu0 0.0
        %3750 = vmatprep.subr.mxu0 0.0
        %3751 = vmatpush1.msra.mxu0 0.0
        %3752 = vmatprep.subr.mxu0 0.0
        %3753 = vmatpush1.msra.mxu0 0.0
        %3754 = vmatprep.subr.mxu0 0.0
        %3755 = vmatpush1.msra.mxu0 0.0
        %3756 = vmatprep.subr.mxu0 0.0
        %3757 = vmatpush1.msra.mxu0 0.0
        %3758 = vmatprep.subr.mxu0 0.0
        %3759 = vmatpush1.msra.mxu0 0.0
        %3760 = vmatprep.subr.mxu0 0.0
        %3761 = vmatpush1.msra.mxu0 0.0
        %3762 = vmatprep.subr.mxu0 0.0
        %3763 = vmatpush1.msra.mxu0 0.0
        %3764 = vmatprep.subr.mxu0 0.0
        %3765 = vmatpush1.msra.mxu0 0.0
        %3766 = vmatprep.subr.mxu0 0.0
        %3767 = vmatpush1.msra.mxu0 0.0
        %3768 = vmatprep.subr.mxu0 0.0
        %3769 = vmatpush1.msra.mxu0 0.0
        %3770 = vmatprep.subr.mxu0 0.0
        %3771 = vmatpush1.msra.mxu0 0.0
        %3772 = vmatprep.subr.mxu0 0.0
        %3773 = vmatpush1.msra.mxu0 0.0
        %3774 = vmatprep.subr.mxu0 0.0
        %3775 = vmatpush1.msra.mxu0 0.0
        %3776 = vmatprep.subr.mxu0 0.0
        %3777 = vmatpush1.msra.mxu0 0.0
        %3778 = vmatprep.mubr.f32.mxu0 0.0
        %3779 = vmatmul.mubr.f32.gmra.mrb[0].mxu0 %v3712
        %v3780 = vpop.f32.mrb[0].mxu0
        %v3781 = vadd.f32 0.0, %v3780
        %v3782 = vpop.f32.mrb[0].mxu0
        %3783 = vdwg.mxu0
        %v3784 = vadd.s32 %v3556, 3
        %vm3785 = vcmp.eq.s32.totalorder %v1052, %v3784
        %v3786 = vsel %vm3785, 1.0, 0.0
        %v3788 = vsel %vm793, %v3786, 0
        %3790 = vmatprep.subr.mxu0 0.0
        %3791 = vmatpush1.msra.mxu0 %v3552
        %3792 = vmatprep.subr.mxu0 0.0
        %3793 = vmatpush1.msra.mxu0 %v3553
        %3794 = vmatprep.subr.mxu0 0.0
        %3795 = vmatpush1.msra.mxu0 %v3554
        %3796 = vmatprep.subr.mxu0 0.0
        %3797 = vmatpush1.msra.mxu0 %v3555
        %3798 = vmatprep.subr.mxu0 0.0
        %3799 = vmatpush1.msra.mxu0 0.0
        %3800 = vmatprep.subr.mxu0 0.0
        %3801 = vmatpush1.msra.mxu0 0.0
        %3802 = vmatprep.subr.mxu0 0.0
        %3803 = vmatpush1.msra.mxu0 0.0
        %3804 = vmatprep.subr.mxu0 0.0
        %3805 = vmatpush1.msra.mxu0 0.0
        %3806 = vmatprep.subr.mxu0 0.0
        %3807 = vmatpush1.msra.mxu0 0.0
        %3808 = vmatprep.subr.mxu0 0.0
        %3809 = vmatpush1.msra.mxu0 0.0
        %3810 = vmatprep.subr.mxu0 0.0
        %3811 = vmatpush1.msra.mxu0 0.0
        %3812 = vmatprep.subr.mxu0 0.0
        %3813 = vmatpush1.msra.mxu0 0.0
        %3814 = vmatprep.subr.mxu0 0.0
        %3815 = vmatpush1.msra.mxu0 0.0
        %3816 = vmatprep.subr.mxu0 0.0
        %3817 = vmatpush1.msra.mxu0 0.0
        %3818 = vmatprep.subr.mxu0 0.0
        %3819 = vmatpush1.msra.mxu0 0.0
        %3820 = vmatprep.subr.mxu0 0.0
        %3821 = vmatpush1.msra.mxu0 0.0
        %3822 = vmatprep.subr.mxu0 0.0
        %3823 = vmatpush1.msra.mxu0 0.0
        %3824 = vmatprep.subr.mxu0 0.0
        %3825 = vmatpush1.msra.mxu0 0.0
        %3826 = vmatprep.subr.mxu0 0.0
        %3827 = vmatpush1.msra.mxu0 0.0
        %3828 = vmatprep.subr.mxu0 0.0
        %3829 = vmatpush1.msra.mxu0 0.0
        %3830 = vmatprep.subr.mxu0 0.0
        %3831 = vmatpush1.msra.mxu0 0.0
        %3832 = vmatprep.subr.mxu0 0.0
        %3833 = vmatpush1.msra.mxu0 0.0
        %3834 = vmatprep.subr.mxu0 0.0
        %3835 = vmatpush1.msra.mxu0 0.0
        %3836 = vmatprep.subr.mxu0 0.0
        %3837 = vmatpush1.msra.mxu0 0.0
        %3838 = vmatprep.subr.mxu0 0.0
        %3839 = vmatpush1.msra.mxu0 0.0
        %3840 = vmatprep.subr.mxu0 0.0
        %3841 = vmatpush1.msra.mxu0 0.0
        %3842 = vmatprep.subr.mxu0 0.0
        %3843 = vmatpush1.msra.mxu0 0.0
        %3844 = vmatprep.subr.mxu0 0.0
        %3845 = vmatpush1.msra.mxu0 0.0
        %3846 = vmatprep.subr.mxu0 0.0
        %3847 = vmatpush1.msra.mxu0 0.0
        %3848 = vmatprep.subr.mxu0 0.0
        %3849 = vmatpush1.msra.mxu0 0.0
        %3850 = vmatprep.subr.mxu0 0.0
        %3851 = vmatpush1.msra.mxu0 0.0
        %3852 = vmatprep.subr.mxu0 0.0
        %3853 = vmatpush1.msra.mxu0 0.0
        %3854 = vmatprep.mubr.f32.mxu0 0.0
        %3855 = vmatmul.mubr.f32.gmra.mrb[0].mxu0 %v3788
        %v3856 = vpop.f32.mrb[0].mxu0
        %v3857 = vadd.f32 0.0, %v3856
        %v3858 = vpop.f32.mrb[0].mxu0
        %3859 = vdwg.mxu0
        %3861 = vrot.lane.b32.xlu0 %v3705, 32
        %v3862 = vpop.permute.xlu0 %3861
        %3865 = vrot.lane.b32.xlu0 %v3781, 64
        %v3866 = vpop.permute.xlu0 %3865
        %3869 = vrot.lane.b32.xlu0 %v3857, 96
        %v3870 = vpop.permute.xlu0 %3869
        %v3872 = vsel %vm793, %v3629, %v3862
        %vm3873 = vcmask 523264
        %v3874 = vsel %vm3873, %v3872, %v3866
        %vm3875 = vcmask 785408
        %v3876 = vsel %vm3875, %v3874, %v3870
        %v3877 = vld [vmem:[#allocation9] sm:$0xff]
        %v3878 = vadd.f32 %v3876, %v3877
        %v3879 = vld [vmem:[%s10] sm:$0x1]
        %v3880 = vld [vmem:[%s11] sm:$0x1]
        %3881 = vadd.xlane.f32.xlu0 %v3878
        %v3882 = vpop.xlane.xlu0 %3881
        %v3883 = vrcp.pop 128.0
        %v3884 = vmul.f32 %v3882, %v3883
        %v3885 = vsub.f32 %v3878, %v3884
        %v3886 = vmul.f32 %v3885, %v3885
        %3887 = vadd.xlane.f32.xlu0 %v3886
        %v3888 = vpop.xlane.xlu0 %3887
        %v3889 = vmul.f32 %v3888, %v3883
        %v3890 = vadd.f32 %v3889, 1e-05
        %v3891 = vrsqrt.pop %v3890
        %v3892 = vmul.f32 %v3885, %v3891
        %v3894 = vlaneseq
        %v3895 = vshrl.u32 %v3894, 7
        %v3896 = vsub.s32 0, %v3895
        %v3897 = vrot.slane %v3879, %v3896
        %v3899 = vmul.f32 %v3892, %v3897
        %v3901 = vlaneseq
        %v3902 = vshrl.u32 %v3901, 7
        %v3903 = vsub.s32 0, %v3902
        %v3904 = vrot.slane %v3880, %v3903
        %v3906 = vadd.f32 %v3899, %v3904
        %v3907 = vld [vmem:[#allocation13] sm:$0xff]
        %v3908 = vld [vmem:[#allocation13 + $0x8] sm:$0xff]
        %v3909 = vld [vmem:[#allocation13 + $0x10] sm:$0xff]
        %v3910 = vld [vmem:[#allocation13 + $0x18] sm:$0xff]
        %v3911 = vld [vmem:[#allocation13 + $0x20] sm:$0xff]
        %v3912 = vld [vmem:[#allocation13 + $0x28] sm:$0xff]
        %v3913 = vld [vmem:[#allocation13 + $0x30] sm:$0xff]
        %v3914 = vld [vmem:[#allocation13 + $0x38] sm:$0xff]
        %v3915 = vld [vmem:[#allocation13 + $0x40] sm:$0xff]
        %v3916 = vld [vmem:[#allocation13 + $0x48] sm:$0xff]
        %v3917 = vld [vmem:[#allocation13 + $0x50] sm:$0xff]
        %v3918 = vld [vmem:[#allocation13 + $0x58] sm:$0xff]
        %v3919 = vld [vmem:[#allocation13 + $0x60] sm:$0xff]
        %v3920 = vld [vmem:[#allocation13 + $0x68] sm:$0xff]
        %v3921 = vld [vmem:[#allocation13 + $0x70] sm:$0xff]
        %v3922 = vld [vmem:[#allocation13 + $0x78] sm:$0xff]
        %v3923 = vld [vmem:[#allocation13 + $0x80] sm:$0xff]
        %v3924 = vld [vmem:[#allocation13 + $0x88] sm:$0xff]
        %v3925 = vld [vmem:[#allocation13 + $0x90] sm:$0xff]
        %v3926 = vld [vmem:[#allocation13 + $0x98] sm:$0xff]
        %v3927 = vld [vmem:[#allocation13 + $0xa0] sm:$0xff]
        %v3928 = vld [vmem:[#allocation13 + $0xa8] sm:$0xff]
        %v3929 = vld [vmem:[#allocation13 + $0xb0] sm:$0xff]
        %v3930 = vld [vmem:[#allocation13 + $0xb8] sm:$0xff]
        %v3931 = vld [vmem:[#allocation13 + $0xc0] sm:$0xff]
        %v3932 = vld [vmem:[#allocation13 + $0xc8] sm:$0xff]
        %v3933 = vld [vmem:[#allocation13 + $0xd0] sm:$0xff]
        %v3934 = vld [vmem:[#allocation13 + $0xd8] sm:$0xff]
        %v3935 = vld [vmem:[#allocation13 + $0xe0] sm:$0xff]
        %v3936 = vld [vmem:[#allocation13 + $0xe8] sm:$0xff]
        %v3937 = vld [vmem:[#allocation13 + $0xf0] sm:$0xff]
        %v3938 = vld [vmem:[#allocation13 + $0xf8] sm:$0xff]
        %v3939 = vld [vmem:[#allocation13 + $0x100] sm:$0xff]
        %v3940 = vld [vmem:[#allocation13 + $0x108] sm:$0xff]
        %v3941 = vld [vmem:[#allocation13 + $0x110] sm:$0xff]
        %v3942 = vld [vmem:[#allocation13 + $0x118] sm:$0xff]
        %v3943 = vld [vmem:[#allocation13 + $0x120] sm:$0xff]
        %v3944 = vld [vmem:[#allocation13 + $0x128] sm:$0xff]
        %v3945 = vld [vmem:[#allocation13 + $0x130] sm:$0xff]
        %v3946 = vld [vmem:[#allocation13 + $0x138] sm:$0xff]
        %v3947 = vld [vmem:[#allocation13 + $0x140] sm:$0xff]
        %v3948 = vld [vmem:[#allocation13 + $0x148] sm:$0xff]
        %v3949 = vld [vmem:[#allocation13 + $0x150] sm:$0xff]
        %v3950 = vld [vmem:[#allocation13 + $0x158] sm:$0xff]
        %v3951 = vld [vmem:[#allocation13 + $0x160] sm:$0xff]
        %v3952 = vld [vmem:[#allocation13 + $0x168] sm:$0xff]
        %v3953 = vld [vmem:[#allocation13 + $0x170] sm:$0xff]
        %v3954 = vld [vmem:[#allocation13 + $0x178] sm:$0xff]
        %3955 = vmatprep.subr.mxu0 %v3908
        %3956 = vmatpush1.msra.mxu0 %v3907
        %3957 = vmatprep.subr.mxu0 %v3911
        %3958 = vmatpush1.msra.mxu0 %v3910
        %3959 = vmatprep.subr.mxu0 %v3914
        %3960 = vmatpush1.msra.mxu0 %v3913
        %3961 = vmatprep.subr.mxu0 %v3917
        %3962 = vmatpush1.msra.mxu0 %v3916
        %3963 = vmatprep.subr.mxu0 %v3920
        %3964 = vmatpush1.msra.mxu0 %v3919
        %3965 = vmatprep.subr.mxu0 %v3923
        %3966 = vmatpush1.msra.mxu0 %v3922
        %3967 = vmatprep.subr.mxu0 %v3926
        %3968 = vmatpush1.msra.mxu0 %v3925
        %3969 = vmatprep.subr.mxu0 %v3929
        %3970 = vmatpush1.msra.mxu0 %v3928
        %3971 = vmatprep.subr.mxu0 %v3932
        %3972 = vmatpush1.msra.mxu0 %v3931
        %3973 = vmatprep.subr.mxu0 %v3935
        %3974 = vmatpush1.msra.mxu0 %v3934
        %3975 = vmatprep.subr.mxu0 %v3938
        %3976 = vmatpush1.msra.mxu0 %v3937
        %3977 = vmatprep.subr.mxu0 %v3941
        %3978 = vmatpush1.msra.mxu0 %v3940
        %3979 = vmatprep.subr.mxu0 %v3944
        %3980 = vmatpush1.msra.mxu0 %v3943
        %3981 = vmatprep.subr.mxu0 %v3947
        %3982 = vmatpush1.msra.mxu0 %v3946
        %3983 = vmatprep.subr.mxu0 %v3950
        %3984 = vmatpush1.msra.mxu0 %v3949
        %3985 = vmatprep.subr.mxu0 %v3953
        %3986 = vmatpush1.msra.mxu0 %v3952
        %3987 = vmatprep.subr.mxu0 0.0
        %3988 = vmatpush1.msra.mxu0 0.0
        %3989 = vmatprep.subr.mxu0 0.0
        %3990 = vmatpush1.msra.mxu0 0.0
        %3991 = vmatprep.subr.mxu0 0.0
        %3992 = vmatpush1.msra.mxu0 0.0
        %3993 = vmatprep.subr.mxu0 0.0
        %3994 = vmatpush1.msra.mxu0 0.0
        %3995 = vmatprep.subr.mxu0 0.0
        %3996 = vmatpush1.msra.mxu0 0.0
        %3997 = vmatprep.subr.mxu0 0.0
        %3998 = vmatpush1.msra.mxu0 0.0
        %3999 = vmatprep.subr.mxu0 0.0
        %4000 = vmatpush1.msra.mxu0 0.0
        %4001 = vmatprep.subr.mxu0 0.0
        %4002 = vmatpush1.msra.mxu0 0.0
        %4003 = vmatprep.subr.mxu0 0.0
        %4004 = vmatpush1.msra.mxu0 0.0
        %4005 = vmatprep.subr.mxu0 0.0
        %4006 = vmatpush1.msra.mxu0 0.0
        %4007 = vmatprep.subr.mxu0 0.0
        %4008 = vmatpush1.msra.mxu0 0.0
        %4009 = vmatprep.subr.mxu0 0.0
        %4010 = vmatpush1.msra.mxu0 0.0
        %4011 = vmatprep.subr.mxu0 0.0
        %4012 = vmatpush1.msra.mxu0 0.0
        %4013 = vmatprep.subr.mxu0 0.0
        %4014 = vmatpush1.msra.mxu0 0.0
        %4015 = vmatprep.subr.mxu0 0.0
        %4016 = vmatpush1.msra.mxu0 0.0
        %4017 = vmatprep.subr.mxu0 0.0
        %4018 = vmatpush1.msra.mxu0 0.0
        %4019 = vmatprep.mubr.f32.mxu0 0.0
        %4020 = vmatmul.mubr.f32.gmra.mrb[0].mxu0 %v3906
        %v4021 = vpop.f32.mrb[0].mxu0
        %v4022 = vadd.f32 0.0, %v4021
        %v4023 = vpop.f32.mrb[0].mxu0
        %v4024 = vadd.f32 0.0, %v4023
        %4025 = vdwg.mxu0
        %4026 = vmatprep.subr.mxu0 0.0
        %4027 = vmatpush1.msra.mxu0 %v3909
        %4028 = vmatprep.subr.mxu0 0.0
        %4029 = vmatpush1.msra.mxu0 %v3912
        %4030 = vmatprep.subr.mxu0 0.0
        %4031 = vmatpush1.msra.mxu0 %v3915
        %4032 = vmatprep.subr.mxu0 0.0
        %4033 = vmatpush1.msra.mxu0 %v3918
        %4034 = vmatprep.subr.mxu0 0.0
        %4035 = vmatpush1.msra.mxu0 %v3921
        %4036 = vmatprep.subr.mxu0 0.0
        %4037 = vmatpush1.msra.mxu0 %v3924
        %4038 = vmatprep.subr.mxu0 0.0
        %4039 = vmatpush1.msra.mxu0 %v3927
        %4040 = vmatprep.subr.mxu0 0.0
        %4041 = vmatpush1.msra.mxu0 %v3930
        %4042 = vmatprep.subr.mxu0 0.0
        %4043 = vmatpush1.msra.mxu0 %v3933
        %4044 = vmatprep.subr.mxu0 0.0
        %4045 = vmatpush1.msra.mxu0 %v3936
        %4046 = vmatprep.subr.mxu0 0.0
        %4047 = vmatpush1.msra.mxu0 %v3939
        %4048 = vmatprep.subr.mxu0 0.0
        %4049 = vmatpush1.msra.mxu0 %v3942
        %4050 = vmatprep.subr.mxu0 0.0
        %4051 = vmatpush1.msra.mxu0 %v3945
        %4052 = vmatprep.subr.mxu0 0.0
        %4053 = vmatpush1.msra.mxu0 %v3948
        %4054 = vmatprep.subr.mxu0 0.0
        %4055 = vmatpush1.msra.mxu0 %v3951
        %4056 = vmatprep.subr.mxu0 0.0
        %4057 = vmatpush1.msra.mxu0 %v3954
        %4058 = vmatprep.subr.mxu0 0.0
        %4059 = vmatpush1.msra.mxu0 0.0
        %4060 = vmatprep.subr.mxu0 0.0
        %4061 = vmatpush1.msra.mxu0 0.0
        %4062 = vmatprep.subr.mxu0 0.0
        %4063 = vmatpush1.msra.mxu0 0.0
        %4064 = vmatprep.subr.mxu0 0.0
        %4065 = vmatpush1.msra.mxu0 0.0
        %4066 = vmatprep.subr.mxu0 0.0
        %4067 = vmatpush1.msra.mxu0 0.0
        %4068 = vmatprep.subr.mxu0 0.0
        %4069 = vmatpush1.msra.mxu0 0.0
        %4070 = vmatprep.subr.mxu0 0.0
        %4071 = vmatpush1.msra.mxu0 0.0
        %4072 = vmatprep.subr.mxu0 0.0
        %4073 = vmatpush1.msra.mxu0 0.0
        %4074 = vmatprep.subr.mxu0 0.0
        %4075 = vmatpush1.msra.mxu0 0.0
        %4076 = vmatprep.subr.mxu0 0.0
        %4077 = vmatpush1.msra.mxu0 0.0
        %4078 = vmatprep.subr.mxu0 0.0
        %4079 = vmatpush1.msra.mxu0 0.0
        %4080 = vmatprep.subr.mxu0 0.0
        %4081 = vmatpush1.msra.mxu0 0.0
        %4082 = vmatprep.subr.mxu0 0.0
        %4083 = vmatpush1.msra.mxu0 0.0
        %4084 = vmatprep.subr.mxu0 0.0
        %4085 = vmatpush1.msra.mxu0 0.0
        %4086 = vmatprep.subr.mxu0 0.0
        %4087 = vmatpush1.msra.mxu0 0.0
        %4088 = vmatprep.subr.mxu0 0.0
        %4089 = vmatpush1.msra.mxu0 0.0
        %4090 = vmatprep.mubr.f32.mxu0 0.0
        %4091 = vmatmul.mubr.f32.gmra.mrb[0].mxu0 %v3906
        %v4092 = vpop.f32.mrb[0].mxu0
        %v4093 = vadd.f32 0.0, %v4092
        %v4094 = vpop.f32.mrb[0].mxu0
        %4095 = vdwg.mxu0
        %vm4096 = vcmask 130048
        %v4098 = vsel %vm4096, %v4022, 0
        %v4101 = vsel %vm4096, %v4024, 0
        %4103 = vmatprep.subr.mxu0 0.0
        %4104 = vmatpush1.xpose.msra.mxu0 %v4101
        %4105 = vmatprep.subr.mxu0 0.0
        %4106 = vmatpush1.xpose.msra.mxu0 0.0
        %4107 = vmatprep.subr.mxu0 0.0
        %4108 = vmatpush1.xpose.msra.mxu0 0.0
        %4109 = vmatprep.subr.mxu0 0.0
        %4110 = vmatpush1.xpose.msra.mxu0 0.0
        %4111 = vmatprep.subr.mxu0 0.0
        %4112 = vmatpush1.xpose.msra.mxu0 0.0
        %4113 = vmatprep.subr.mxu0 0.0
        %4114 = vmatpush1.xpose.msra.mxu0 0.0
        %4115 = vmatprep.subr.mxu0 0.0
        %4116 = vmatpush1.xpose.msra.mxu0 0.0
        %4117 = vmatprep.subr.mxu0 0.0
        %4118 = vmatpush1.xpose.msra.mxu0 0.0
        %4119 = vmatprep.subr.mxu0 0.0
        %4120 = vmatpush1.xpose.msra.mxu0 0.0
        %4121 = vmatprep.subr.mxu0 0.0
        %4122 = vmatpush1.xpose.msra.mxu0 0.0
        %4123 = vmatprep.subr.mxu0 0.0
        %4124 = vmatpush1.xpose.msra.mxu0 0.0
        %4125 = vmatprep.subr.mxu0 0.0
        %4126 = vmatpush1.xpose.msra.mxu0 0.0
        %4127 = vmatprep.subr.mxu0 0.0
        %4128 = vmatpush1.xpose.msra.mxu0 0.0
        %4129 = vmatprep.subr.mxu0 0.0
        %4130 = vmatpush1.xpose.msra.mxu0 0.0
        %4131 = vmatprep.subr.mxu0 0.0
        %4132 = vmatpush1.xpose.msra.mxu0 0.0
        %4133 = vmatprep.subr.mxu0 0.0
        %4134 = vmatpush1.xpose.msra.mxu0 0.0
        %4135 = vmatprep.subr.mxu0 0.0
        %4136 = vmatpush1.xpose.msra.mxu0 0.0
        %4137 = vmatprep.subr.mxu0 0.0
        %4138 = vmatpush1.xpose.msra.mxu0 0.0
        %4139 = vmatprep.subr.mxu0 0.0
        %4140 = vmatpush1.xpose.msra.mxu0 0.0
        %4141 = vmatprep.subr.mxu0 0.0
        %4142 = vmatpush1.xpose.msra.mxu0 0.0
        %4143 = vmatprep.subr.mxu0 0.0
        %4144 = vmatpush1.xpose.msra.mxu0 0.0
        %4145 = vmatprep.subr.mxu0 0.0
        %4146 = vmatpush1.xpose.msra.mxu0 0.0
        %4147 = vmatprep.subr.mxu0 0.0
        %4148 = vmatpush1.xpose.msra.mxu0 0.0
        %4149 = vmatprep.subr.mxu0 0.0
        %4150 = vmatpush1.xpose.msra.mxu0 0.0
        %4151 = vmatprep.subr.mxu0 0.0
        %4152 = vmatpush1.xpose.msra.mxu0 0.0
        %4153 = vmatprep.subr.mxu0 0.0
        %4154 = vmatpush1.xpose.msra.mxu0 0.0
        %4155 = vmatprep.subr.mxu0 0.0
        %4156 = vmatpush1.xpose.msra.mxu0 0.0
        %4157 = vmatprep.subr.mxu0 0.0
        %4158 = vmatpush1.xpose.msra.mxu0 0.0
        %4159 = vmatprep.subr.mxu0 0.0
        %4160 = vmatpush1.xpose.msra.mxu0 0.0
        %4161 = vmatprep.subr.mxu0 0.0
        %4162 = vmatpush1.xpose.msra.mxu0 0.0
        %4163 = vmatprep.subr.mxu0 0.0
        %4164 = vmatpush1.xpose.msra.mxu0 0.0
        %4165 = vmatprep.subr.mxu0 0.0
        %4166 = vmatpush1.xpose.msra.mxu0 0.0
        %4167 = vmatprep.mubr.f32.mxu0 0.0
        %4168 = vmatmul.mubr.f32.gmra.mrb[0].mxu0 %v4098
        %v4169 = vpop.f32.mrb[0].mxu0
        %v4170 = vadd.f32 0.0, %v4169
        %v4171 = vpop.f32.mrb[0].mxu0
        %4172 = vdwg.mxu0
        %v4173 = vmul.f32 %v4170, 0.25
        %vm4174 = vcmask 64512
        %v4175 = vsel %vm4174, %v4173, -inf
        %4176 = vmax.xlane.f32.xlu0 %v4175
        %v4177 = vpop.xlane.xlu0 %4176
        %v4178 = vsub.f32 %v4173, %v4177
        %v4179 = vmul.f32 %v4178, 1.442695
        %v4180 = vpow.pop %v4179
        %v4181 = vsel %vm4174, %v4180, 0.0
        %4182 = vadd.xlane.f32.xlu0 %v4181
        %v4183 = vpop.xlane.xlu0 %4182
        %v4184 = vrcp.pop %v4183
        %v4185 = vmul.f32 %v4180, %v4184
        %v4187 = vsel %vm4174, %v4185, 0
        %4189 = vmatprep.subr.mxu0 0.0
        %4190 = vmatpush1.msra.mxu0 %v4093
        %4191 = vmatprep.subr.mxu0 0.0
        %4192 = vmatpush1.msra.mxu0 0.0
        %4193 = vmatprep.subr.mxu0 0.0
        %4194 = vmatpush1.msra.mxu0 0.0
        %4195 = vmatprep.subr.mxu0 0.0
        %4196 = vmatpush1.msra.mxu0 0.0
        %4197 = vmatprep.subr.mxu0 0.0
        %4198 = vmatpush1.msra.mxu0 0.0
        %4199 = vmatprep.subr.mxu0 0.0
        %4200 = vmatpush1.msra.mxu0 0.0
        %4201 = vmatprep.subr.mxu0 0.0
        %4202 = vmatpush1.msra.mxu0 0.0
        %4203 = vmatprep.subr.mxu0 0.0
        %4204 = vmatpush1.msra.mxu0 0.0
        %4205 = vmatprep.subr.mxu0 0.0
        %4206 = vmatpush1.msra.mxu0 0.0
        %4207 = vmatprep.subr.mxu0 0.0
        %4208 = vmatpush1.msra.mxu0 0.0
        %4209 = vmatprep.subr.mxu0 0.0
        %4210 = vmatpush1.msra.mxu0 0.0
        %4211 = vmatprep.subr.mxu0 0.0
        %4212 = vmatpush1.msra.mxu0 0.0
        %4213 = vmatprep.subr.mxu0 0.0
        %4214 = vmatpush1.msra.mxu0 0.0
        %4215 = vmatprep.subr.mxu0 0.0
        %4216 = vmatpush1.msra.mxu0 0.0
        %4217 = vmatprep.subr.mxu0 0.0
        %4218 = vmatpush1.msra.mxu0 0.0
        %4219 = vmatprep.subr.mxu0 0.0
        %4220 = vmatpush1.msra.mxu0 0.0
        %4221 = vmatprep.subr.mxu0 0.0
        %4222 = vmatpush1.msra.mxu0 0.0
        %4223 = vmatprep.subr.mxu0 0.0
        %4224 = vmatpush1.msra.mxu0 0.0
        %4225 = vmatprep.subr.mxu0 0.0
        %4226 = vmatpush1.msra.mxu0 0.0
        %4227 = vmatprep.subr.mxu0 0.0
        %4228 = vmatpush1.msra.mxu0 0.0
        %4229 = vmatprep.subr.mxu0 0.0
        %4230 = vmatpush1.msra.mxu0 0.0
        %4231 = vmatprep.subr.mxu0 0.0
        %4232 = vmatpush1.msra.mxu0 0.0
        %4233 = vmatprep.subr.mxu0 0.0
        %4234 = vmatpush1.msra.mxu0 0.0
        %4235 = vmatprep.subr.mxu0 0.0
        %4236 = vmatpush1.msra.mxu0 0.0
        %4237 = vmatprep.subr.mxu0 0.0
        %4238 = vmatpush1.msra.mxu0 0.0
        %4239 = vmatprep.subr.mxu0 0.0
        %4240 = vmatpush1.msra.mxu0 0.0
        %4241 = vmatprep.subr.mxu0 0.0
        %4242 = vmatpush1.msra.mxu0 0.0
        %4243 = vmatprep.subr.mxu0 0.0
        %4244 = vmatpush1.msra.mxu0 0.0
        %4245 = vmatprep.subr.mxu0 0.0
        %4246 = vmatpush1.msra.mxu0 0.0
        %4247 = vmatprep.subr.mxu0 0.0
        %4248 = vmatpush1.msra.mxu0 0.0
        %4249 = vmatprep.subr.mxu0 0.0
        %4250 = vmatpush1.msra.mxu0 0.0
        %4251 = vmatprep.subr.mxu0 0.0
        %4252 = vmatpush1.msra.mxu0 0.0
        %4253 = vmatprep.mubr.f32.mxu0 0.0
        %4254 = vmatmul.mubr.f32.gmra.mrb[0].mxu0 %v4187
        %v4255 = vpop.f32.mrb[0].mxu0
        %v4256 = vadd.f32 0.0, %v4255
        %v4257 = vpop.f32.mrb[0].mxu0
        %4258 = vdwg.mxu0
        %4259 = vst.msk [vmem:[#allocation3] sm:$0xff] %vm4096, %v4256
        %4260 = vrot.lane.b32.xlu0 %v4022, 112
        %v4261 = vpop.permute.xlu0 %4260
        %4262 = vrot.lane.b32.xlu0 %v4024, 112
        %v4263 = vpop.permute.xlu0 %4262
        %v4264 = vsel %vm4096, %v4261, 0
        %v4266 = vsel %vm4096, %v4263, 0
        %4268 = vmatprep.subr.mxu0 0.0
        %4269 = vmatpush1.xpose.msra.mxu0 %v4266
        %4270 = vmatprep.subr.mxu0 0.0
        %4271 = vmatpush1.xpose.msra.mxu0 0.0
        %4272 = vmatprep.subr.mxu0 0.0
        %4273 = vmatpush1.xpose.msra.mxu0 0.0
        %4274 = vmatprep.subr.mxu0 0.0
        %4275 = vmatpush1.xpose.msra.mxu0 0.0
        %4276 = vmatprep.subr.mxu0 0.0
        %4277 = vmatpush1.xpose.msra.mxu0 0.0
        %4278 = vmatprep.subr.mxu0 0.0
        %4279 = vmatpush1.xpose.msra.mxu0 0.0
        %4280 = vmatprep.subr.mxu0 0.0
        %4281 = vmatpush1.xpose.msra.mxu0 0.0
        %4282 = vmatprep.subr.mxu0 0.0
        %4283 = vmatpush1.xpose.msra.mxu0 0.0
        %4284 = vmatprep.subr.mxu0 0.0
        %4285 = vmatpush1.xpose.msra.mxu0 0.0
        %4286 = vmatprep.subr.mxu0 0.0
        %4287 = vmatpush1.xpose.msra.mxu0 0.0
        %4288 = vmatprep.subr.mxu0 0.0
        %4289 = vmatpush1.xpose.msra.mxu0 0.0
        %4290 = vmatprep.subr.mxu0 0.0
        %4291 = vmatpush1.xpose.msra.mxu0 0.0
        %4292 = vmatprep.subr.mxu0 0.0
        %4293 = vmatpush1.xpose.msra.mxu0 0.0
        %4294 = vmatprep.subr.mxu0 0.0
        %4295 = vmatpush1.xpose.msra.mxu0 0.0
        %4296 = vmatprep.subr.mxu0 0.0
        %4297 = vmatpush1.xpose.msra.mxu0 0.0
        %4298 = vmatprep.subr.mxu0 0.0
        %4299 = vmatpush1.xpose.msra.mxu0 0.0
        %4300 = vmatprep.subr.mxu0 0.0
        %4301 = vmatpush1.xpose.msra.mxu0 0.0
        %4302 = vmatprep.subr.mxu0 0.0
        %4303 = vmatpush1.xpose.msra.mxu0 0.0
        %4304 = vmatprep.subr.mxu0 0.0
        %4305 = vmatpush1.xpose.msra.mxu0 0.0
        %4306 = vmatprep.subr.mxu0 0.0
        %4307 = vmatpush1.xpose.msra.mxu0 0.0
        %4308 = vmatprep.subr.mxu0 0.0
        %4309 = vmatpush1.xpose.msra.mxu0 0.0
        %4310 = vmatprep.subr.mxu0 0.0
        %4311 = vmatpush1.xpose.msra.mxu0 0.0
        %4312 = vmatprep.subr.mxu0 0.0
        %4313 = vmatpush1.xpose.msra.mxu0 0.0
        %4314 = vmatprep.subr.mxu0 0.0
        %4315 = vmatpush1.xpose.msra.mxu0 0.0
        %4316 = vmatprep.subr.mxu0 0.0
        %4317 = vmatpush1.xpose.msra.mxu0 0.0
        %4318 = vmatprep.subr.mxu0 0.0
        %4319 = vmatpush1.xpose.msra.mxu0 0.0
        %4320 = vmatprep.subr.mxu0 0.0
        %4321 = vmatpush1.xpose.msra.mxu0 0.0
        %4322 = vmatprep.subr.mxu0 0.0
        %4323 = vmatpush1.xpose.msra.mxu0 0.0
        %4324 = vmatprep.subr.mxu0 0.0
        %4325 = vmatpush1.xpose.msra.mxu0 0.0
        %4326 = vmatprep.subr.mxu0 0.0
        %4327 = vmatpush1.xpose.msra.mxu0 0.0
        %4328 = vmatprep.subr.mxu0 0.0
        %4329 = vmatpush1.xpose.msra.mxu0 0.0
        %4330 = vmatprep.subr.mxu0 0.0
        %4331 = vmatpush1.xpose.msra.mxu0 0.0
        %4332 = vmatprep.mubr.f32.mxu0 0.0
        %4333 = vmatmul.mubr.f32.gmra.mrb[0].mxu0 %v4264
        %v4334 = vpop.f32.mrb[0].mxu0
        %v4335 = vadd.f32 0.0, %v4334
        %v4336 = vpop.f32.mrb[0].mxu0
        %4337 = vdwg.mxu0
        %v4338 = vmul.f32 %v4335, 0.25
        %v4339 = vsel %vm4174, %v4338, -inf
        %4340 = vmax.xlane.f32.xlu0 %v4339
        %v4341 = vpop.xlane.xlu0 %4340
        %v4342 = vsub.f32 %v4338, %v4341
        %v4343 = vmul.f32 %v4342, 1.442695
        %v4344 = vpow.pop %v4343
        %v4345 = vsel %vm4174, %v4344, 0.0
        %4346 = vadd.xlane.f32.xlu0 %v4345
        %v4347 = vpop.xlane.xlu0 %4346
        %v4348 = vrcp.pop %v4347
        %v4349 = vmul.f32 %v4344, %v4348
        %4351 = vrot.lane.b32.xlu0 %v4093, 112
        %v4352 = vpop.permute.xlu0 %4351
        %v4355 = vsel %vm4174, %v4349, 0
        %4357 = vmatprep.subr.mxu0 0.0
        %4358 = vmatpush1.msra.mxu0 %v4352
        %4359 = vmatprep.subr.mxu0 0.0
        %4360 = vmatpush1.msra.mxu0 0.0
        %4361 = vmatprep.subr.mxu0 0.0
        %4362 = vmatpush1.msra.mxu0 0.0
        %4363 = vmatprep.subr.mxu0 0.0
        %4364 = vmatpush1.msra.mxu0 0.0
        %4365 = vmatprep.subr.mxu0 0.0
        %4366 = vmatpush1.msra.mxu0 0.0
        %4367 = vmatprep.subr.mxu0 0.0
        %4368 = vmatpush1.msra.mxu0 0.0
        %4369 = vmatprep.subr.mxu0 0.0
        %4370 = vmatpush1.msra.mxu0 0.0
        %4371 = vmatprep.subr.mxu0 0.0
        %4372 = vmatpush1.msra.mxu0 0.0
        %4373 = vmatprep.subr.mxu0 0.0
        %4374 = vmatpush1.msra.mxu0 0.0
        %4375 = vmatprep.subr.mxu0 0.0
        %4376 = vmatpush1.msra.mxu0 0.0
        %4377 = vmatprep.subr.mxu0 0.0
        %4378 = vmatpush1.msra.mxu0 0.0
        %4379 = vmatprep.subr.mxu0 0.0
        %4380 = vmatpush1.msra.mxu0 0.0
        %4381 = vmatprep.subr.mxu0 0.0
        %4382 = vmatpush1.msra.mxu0 0.0
        %4383 = vmatprep.subr.mxu0 0.0
        %4384 = vmatpush1.msra.mxu0 0.0
        %4385 = vmatprep.subr.mxu0 0.0
        %4386 = vmatpush1.msra.mxu0 0.0
        %4387 = vmatprep.subr.mxu0 0.0
        %4388 = vmatpush1.msra.mxu0 0.0
        %4389 = vmatprep.subr.mxu0 0.0
        %4390 = vmatpush1.msra.mxu0 0.0
        %4391 = vmatprep.subr.mxu0 0.0
        %4392 = vmatpush1.msra.mxu0 0.0
        %4393 = vmatprep.subr.mxu0 0.0
        %4394 = vmatpush1.msra.mxu0 0.0
        %4395 = vmatprep.subr.mxu0 0.0
        %4396 = vmatpush1.msra.mxu0 0.0
        %4397 = vmatprep.subr.mxu0 0.0
        %4398 = vmatpush1.msra.mxu0 0.0
        %4399 = vmatprep.subr.mxu0 0.0
        %4400 = vmatpush1.msra.mxu0 0.0
        %4401 = vmatprep.subr.mxu0 0.0
        %4402 = vmatpush1.msra.mxu0 0.0
        %4403 = vmatprep.subr.mxu0 0.0
        %4404 = vmatpush1.msra.mxu0 0.0
        %4405 = vmatprep.subr.mxu0 0.0
        %4406 = vmatpush1.msra.mxu0 0.0
        %4407 = vmatprep.subr.mxu0 0.0
        %4408 = vmatpush1.msra.mxu0 0.0
        %4409 = vmatprep.subr.mxu0 0.0
        %4410 = vmatpush1.msra.mxu0 0.0
        %4411 = vmatprep.subr.mxu0 0.0
        %4412 = vmatpush1.msra.mxu0 0.0
        %4413 = vmatprep.subr.mxu0 0.0
        %4414 = vmatpush1.msra.mxu0 0.0
        %4415 = vmatprep.subr.mxu0 0.0
        %4416 = vmatpush1.msra.mxu0 0.0
        %4417 = vmatprep.subr.mxu0 0.0
        %4418 = vmatpush1.msra.mxu0 0.0
        %4419 = vmatprep.subr.mxu0 0.0
        %4420 = vmatpush1.msra.mxu0 0.0
        %4421 = vmatprep.mubr.f32.mxu0 0.0
        %4422 = vmatmul.mubr.f32.gmra.mrb[0].mxu0 %v4355
        %v4423 = vpop.f32.mrb[0].mxu0
        %v4424 = vadd.f32 0.0, %v4423
        %v4425 = vpop.f32.mrb[0].mxu0
        %4426 = vdwg.mxu0
        %4428 = vrot.lane.b32.xlu0 %v4424, 16
        %v4429 = vpop.permute.xlu0 %4428
        %vm4431 = vcmask 261248
        %4432 = vst.msk [vmem:[#allocation3] sm:$0xff] %vm4431, %v4429
        %4433 = vrot.lane.b32.xlu0 %v4022, 96
        %v4434 = vpop.permute.xlu0 %4433
        %4435 = vrot.lane.b32.xlu0 %v4024, 96
        %v4436 = vpop.permute.xlu0 %4435
        %v4437 = vsel %vm4096, %v4434, 0
        %v4439 = vsel %vm4096, %v4436, 0
        %4441 = vmatprep.subr.mxu0 0.0
        %4442 = vmatpush1.xpose.msra.mxu0 %v4439
        %4443 = vmatprep.subr.mxu0 0.0
        %4444 = vmatpush1.xpose.msra.mxu0 0.0
        %4445 = vmatprep.subr.mxu0 0.0
        %4446 = vmatpush1.xpose.msra.mxu0 0.0
        %4447 = vmatprep.subr.mxu0 0.0
        %4448 = vmatpush1.xpose.msra.mxu0 0.0
        %4449 = vmatprep.subr.mxu0 0.0
        %4450 = vmatpush1.xpose.msra.mxu0 0.0
        %4451 = vmatprep.subr.mxu0 0.0
        %4452 = vmatpush1.xpose.msra.mxu0 0.0
        %4453 = vmatprep.subr.mxu0 0.0
        %4454 = vmatpush1.xpose.msra.mxu0 0.0
        %4455 = vmatprep.subr.mxu0 0.0
        %4456 = vmatpush1.xpose.msra.mxu0 0.0
        %4457 = vmatprep.subr.mxu0 0.0
        %4458 = vmatpush1.xpose.msra.mxu0 0.0
        %4459 = vmatprep.subr.mxu0 0.0
        %4460 = vmatpush1.xpose.msra.mxu0 0.0
        %4461 = vmatprep.subr.mxu0 0.0
        %4462 = vmatpush1.xpose.msra.mxu0 0.0
        %4463 = vmatprep.subr.mxu0 0.0
        %4464 = vmatpush1.xpose.msra.mxu0 0.0
        %4465 = vmatprep.subr.mxu0 0.0
        %4466 = vmatpush1.xpose.msra.mxu0 0.0
        %4467 = vmatprep.subr.mxu0 0.0
        %4468 = vmatpush1.xpose.msra.mxu0 0.0
        %4469 = vmatprep.subr.mxu0 0.0
        %4470 = vmatpush1.xpose.msra.mxu0 0.0
        %4471 = vmatprep.subr.mxu0 0.0
        %4472 = vmatpush1.xpose.msra.mxu0 0.0
        %4473 = vmatprep.subr.mxu0 0.0
        %4474 = vmatpush1.xpose.msra.mxu0 0.0
        %4475 = vmatprep.subr.mxu0 0.0
        %4476 = vmatpush1.xpose.msra.mxu0 0.0
        %4477 = vmatprep.subr.mxu0 0.0
        %4478 = vmatpush1.xpose.msra.mxu0 0.0
        %4479 = vmatprep.subr.mxu0 0.0
        %4480 = vmatpush1.xpose.msra.mxu0 0.0
        %4481 = vmatprep.subr.mxu0 0.0
        %4482 = vmatpush1.xpose.msra.mxu0 0.0
        %4483 = vmatprep.subr.mxu0 0.0
        %4484 = vmatpush1.xpose.msra.mxu0 0.0
        %4485 = vmatprep.subr.mxu0 0.0
        %4486 = vmatpush1.xpose.msra.mxu0 0.0
        %4487 = vmatprep.subr.mxu0 0.0
        %4488 = vmatpush1.xpose.msra.mxu0 0.0
        %4489 = vmatprep.subr.mxu0 0.0
        %4490 = vmatpush1.xpose.msra.mxu0 0.0
        %4491 = vmatprep.subr.mxu0 0.0
        %4492 = vmatpush1.xpose.msra.mxu0 0.0
        %4493 = vmatprep.subr.mxu0 0.0
        %4494 = vmatpush1.xpose.msra.mxu0 0.0
        %4495 = vmatprep.subr.mxu0 0.0
        %4496 = vmatpush1.xpose.msra.mxu0 0.0
        %4497 = vmatprep.subr.mxu0 0.0
        %4498 = vmatpush1.xpose.msra.mxu0 0.0
        %4499 = vmatprep.subr.mxu0 0.0
        %4500 = vmatpush1.xpose.msra.mxu0 0.0
        %4501 = vmatprep.subr.mxu0 0.0
        %4502 = vmatpush1.xpose.msra.mxu0 0.0
        %4503 = vmatprep.subr.mxu0 0.0
        %4504 = vmatpush1.xpose.msra.mxu0 0.0
        %4505 = vmatprep.mubr.f32.mxu0 0.0
        %4506 = vmatmul.mubr.f32.gmra.mrb[0].mxu0 %v4437
        %v4507 = vpop.f32.mrb[0].mxu0
        %v4508 = vadd.f32 0.0, %v4507
        %v4509 = vpop.f32.mrb[0].mxu0
        %4510 = vdwg.mxu0
        %v4511 = vmul.f32 %v4508, 0.25
        %v4512 = vsel %vm4174, %v4511, -inf
        %4513 = vmax.xlane.f32.xlu0 %v4512
        %v4514 = vpop.xlane.xlu0 %4513
        %v4515 = vsub.f32 %v4511, %v4514
        %v4516 = vmul.f32 %v4515, 1.442695
        %v4517 = vpow.pop %v4516
        %v4518 = vsel %vm4174, %v4517, 0.0
        %4519 = vadd.xlane.f32.xlu0 %v4518
        %v4520 = vpop.xlane.xlu0 %4519
        %v4521 = vrcp.pop %v4520
        %v4522 = vmul.f32 %v4517, %v4521
        %4523 = vrot.lane.b32.xlu0 %v4093, 96
        %v4524 = vpop.permute.xlu0 %4523
        %v4527 = vsel %vm4174, %v4522, 0
        %4529 = vmatprep.subr.mxu0 0.0
        %4530 = vmatpush1.msra.mxu0 %v4524
        %4531 = vmatprep.subr.mxu0 0.0
        %4532 = vmatpush1.msra.mxu0 0.0
        %4533 = vmatprep.subr.mxu0 0.0
        %4534 = vmatpush1.msra.mxu0 0.0
        %4535 = vmatprep.subr.mxu0 0.0
        %4536 = vmatpush1.msra.mxu0 0.0
        %4537 = vmatprep.subr.mxu0 0.0
        %4538 = vmatpush1.msra.mxu0 0.0
        %4539 = vmatprep.subr.mxu0 0.0
        %4540 = vmatpush1.msra.mxu0 0.0
        %4541 = vmatprep.subr.mxu0 0.0
        %4542 = vmatpush1.msra.mxu0 0.0
        %4543 = vmatprep.subr.mxu0 0.0
        %4544 = vmatpush1.msra.mxu0 0.0
        %4545 = vmatprep.subr.mxu0 0.0
        %4546 = vmatpush1.msra.mxu0 0.0
        %4547 = vmatprep.subr.mxu0 0.0
        %4548 = vmatpush1.msra.mxu0 0.0
        %4549 = vmatprep.subr.mxu0 0.0
        %4550 = vmatpush1.msra.mxu0 0.0
        %4551 = vmatprep.subr.mxu0 0.0
        %4552 = vmatpush1.msra.mxu0 0.0
        %4553 = vmatprep.subr.mxu0 0.0
        %4554 = vmatpush1.msra.mxu0 0.0
        %4555 = vmatprep.subr.mxu0 0.0
        %4556 = vmatpush1.msra.mxu0 0.0
        %4557 = vmatprep.subr.mxu0 0.0
        %4558 = vmatpush1.msra.mxu0 0.0
        %4559 = vmatprep.subr.mxu0 0.0
        %4560 = vmatpush1.msra.mxu0 0.0
        %4561 = vmatprep.subr.mxu0 0.0
        %4562 = vmatpush1.msra.mxu0 0.0
        %4563 = vmatprep.subr.mxu0 0.0
        %4564 = vmatpush1.msra.mxu0 0.0
        %4565 = vmatprep.subr.mxu0 0.0
        %4566 = vmatpush1.msra.mxu0 0.0
        %4567 = vmatprep.subr.mxu0 0.0
        %4568 = vmatpush1.msra.mxu0 0.0
        %4569 = vmatprep.subr.mxu0 0.0
        %4570 = vmatpush1.msra.mxu0 0.0
        %4571 = vmatprep.subr.mxu0 0.0
        %4572 = vmatpush1.msra.mxu0 0.0
        %4573 = vmatprep.subr.mxu0 0.0
        %4574 = vmatpush1.msra.mxu0 0.0
        %4575 = vmatprep.subr.mxu0 0.0
        %4576 = vmatpush1.msra.mxu0 0.0
        %4577 = vmatprep.subr.mxu0 0.0
        %4578 = vmatpush1.msra.mxu0 0.0
        %4579 = vmatprep.subr.mxu0 0.0
        %4580 = vmatpush1.msra.mxu0 0.0
        %4581 = vmatprep.subr.mxu0 0.0
        %4582 = vmatpush1.msra.mxu0 0.0
        %4583 = vmatprep.subr.mxu0 0.0
        %4584 = vmatpush1.msra.mxu0 0.0
        %4585 = vmatprep.subr.mxu0 0.0
        %4586 = vmatpush1.msra.mxu0 0.0
        %4587 = vmatprep.subr.mxu0 0.0
        %4588 = vmatpush1.msra.mxu0 0.0
        %4589 = vmatprep.subr.mxu0 0.0
        %4590 = vmatpush1.msra.mxu0 0.0
        %4591 = vmatprep.subr.mxu0 0.0
        %4592 = vmatpush1.msra.mxu0 0.0
        %4593 = vmatprep.mubr.f32.mxu0 0.0
        %4594 = vmatmul.mubr.f32.gmra.mrb[0].mxu0 %v4527
        %v4595 = vpop.f32.mrb[0].mxu0
        %v4596 = vadd.f32 0.0, %v4595
        %v4597 = vpop.f32.mrb[0].mxu0
        %4598 = vdwg.mxu0
        %4600 = vrot.lane.b32.xlu0 %v4596, 32
        %v4601 = vpop.permute.xlu0 %4600
        %vm4603 = vcmask 392448
        %4604 = vst.msk [vmem:[#allocation3] sm:$0xff] %vm4603, %v4601
        %4605 = vrot.lane.b32.xlu0 %v4022, 80
        %v4606 = vpop.permute.xlu0 %4605
        %4607 = vrot.lane.b32.xlu0 %v4024, 80
        %v4608 = vpop.permute.xlu0 %4607
        %v4609 = vsel %vm4096, %v4606, 0
        %v4611 = vsel %vm4096, %v4608, 0
        %4613 = vmatprep.subr.mxu0 0.0
        %4614 = vmatpush1.xpose.msra.mxu0 %v4611
        %4615 = vmatprep.subr.mxu0 0.0
        %4616 = vmatpush1.xpose.msra.mxu0 0.0
        %4617 = vmatprep.subr.mxu0 0.0
        %4618 = vmatpush1.xpose.msra.mxu0 0.0
        %4619 = vmatprep.subr.mxu0 0.0
        %4620 = vmatpush1.xpose.msra.mxu0 0.0
        %4621 = vmatprep.subr.mxu0 0.0
        %4622 = vmatpush1.xpose.msra.mxu0 0.0
        %4623 = vmatprep.subr.mxu0 0.0
        %4624 = vmatpush1.xpose.msra.mxu0 0.0
        %4625 = vmatprep.subr.mxu0 0.0
        %4626 = vmatpush1.xpose.msra.mxu0 0.0
        %4627 = vmatprep.subr.mxu0 0.0
        %4628 = vmatpush1.xpose.msra.mxu0 0.0
        %4629 = vmatprep.subr.mxu0 0.0
        %4630 = vmatpush1.xpose.msra.mxu0 0.0
        %4631 = vmatprep.subr.mxu0 0.0
        %4632 = vmatpush1.xpose.msra.mxu0 0.0
        %4633 = vmatprep.subr.mxu0 0.0
        %4634 = vmatpush1.xpose.msra.mxu0 0.0
        %4635 = vmatprep.subr.mxu0 0.0
        %4636 = vmatpush1.xpose.msra.mxu0 0.0
        %4637 = vmatprep.subr.mxu0 0.0
        %4638 = vmatpush1.xpose.msra.mxu0 0.0
        %4639 = vmatprep.subr.mxu0 0.0
        %4640 = vmatpush1.xpose.msra.mxu0 0.0
        %4641 = vmatprep.subr.mxu0 0.0
        %4642 = vmatpush1.xpose.msra.mxu0 0.0
        %4643 = vmatprep.subr.mxu0 0.0
        %4644 = vmatpush1.xpose.msra.mxu0 0.0
        %4645 = vmatprep.subr.mxu0 0.0
        %4646 = vmatpush1.xpose.msra.mxu0 0.0
        %4647 = vmatprep.subr.mxu0 0.0
        %4648 = vmatpush1.xpose.msra.mxu0 0.0
        %4649 = vmatprep.subr.mxu0 0.0
        %4650 = vmatpush1.xpose.msra.mxu0 0.0
        %4651 = vmatprep.subr.mxu0 0.0
        %4652 = vmatpush1.xpose.msra.mxu0 0.0
        %4653 = vmatprep.subr.mxu0 0.0
        %4654 = vmatpush1.xpose.msra.mxu0 0.0
        %4655 = vmatprep.subr.mxu0 0.0
        %4656 = vmatpush1.xpose.msra.mxu0 0.0
        %4657 = vmatprep.subr.mxu0 0.0
        %4658 = vmatpush1.xpose.msra.mxu0 0.0
        %4659 = vmatprep.subr.mxu0 0.0
        %4660 = vmatpush1.xpose.msra.mxu0 0.0
        %4661 = vmatprep.subr.mxu0 0.0
        %4662 = vmatpush1.xpose.msra.mxu0 0.0
        %4663 = vmatprep.subr.mxu0 0.0
        %4664 = vmatpush1.xpose.msra.mxu0 0.0
        %4665 = vmatprep.subr.mxu0 0.0
        %4666 = vmatpush1.xpose.msra.mxu0 0.0
        %4667 = vmatprep.subr.mxu0 0.0
        %4668 = vmatpush1.xpose.msra.mxu0 0.0
        %4669 = vmatprep.subr.mxu0 0.0
        %4670 = vmatpush1.xpose.msra.mxu0 0.0
        %4671 = vmatprep.subr.mxu0 0.0
        %4672 = vmatpush1.xpose.msra.mxu0 0.0
        %4673 = vmatprep.subr.mxu0 0.0
        %4674 = vmatpush1.xpose.msra.mxu0 0.0
        %4675 = vmatprep.subr.mxu0 0.0
        %4676 = vmatpush1.xpose.msra.mxu0 0.0
        %4677 = vmatprep.mubr.f32.mxu0 0.0
        %4678 = vmatmul.mubr.f32.gmra.mrb[0].mxu0 %v4609
        %v4679 = vpop.f32.mrb[0].mxu0
        %v4680 = vadd.f32 0.0, %v4679
        %v4681 = vpop.f32.mrb[0].mxu0
        %4682 = vdwg.mxu0
        %v4683 = vmul.f32 %v4680, 0.25
        %v4684 = vsel %vm4174, %v4683, -inf
        %4685 = vmax.xlane.f32.xlu0 %v4684
        %v4686 = vpop.xlane.xlu0 %4685
        %v4687 = vsub.f32 %v4683, %v4686
        %v4688 = vmul.f32 %v4687, 1.442695
        %v4689 = vpow.pop %v4688
        %v4690 = vsel %vm4174, %v4689, 0.0
        %4691 = vadd.xlane.f32.xlu0 %v4690
        %v4692 = vpop.xlane.xlu0 %4691
        %v4693 = vrcp.pop %v4692
        %v4694 = vmul.f32 %v4689, %v4693
        %4695 = vrot.lane.b32.xlu0 %v4093, 80
        %v4696 = vpop.permute.xlu0 %4695
        %v4699 = vsel %vm4174, %v4694, 0
        %4701 = vmatprep.subr.mxu0 0.0
        %4702 = vmatpush1.msra.mxu0 %v4696
        %4703 = vmatprep.subr.mxu0 0.0
        %4704 = vmatpush1.msra.mxu0 0.0
        %4705 = vmatprep.subr.mxu0 0.0
        %4706 = vmatpush1.msra.mxu0 0.0
        %4707 = vmatprep.subr.mxu0 0.0
        %4708 = vmatpush1.msra.mxu0 0.0
        %4709 = vmatprep.subr.mxu0 0.0
        %4710 = vmatpush1.msra.mxu0 0.0
        %4711 = vmatprep.subr.mxu0 0.0
        %4712 = vmatpush1.msra.mxu0 0.0
        %4713 = vmatprep.subr.mxu0 0.0
        %4714 = vmatpush1.msra.mxu0 0.0
        %4715 = vmatprep.subr.mxu0 0.0
        %4716 = vmatpush1.msra.mxu0 0.0
        %4717 = vmatprep.subr.mxu0 0.0
        %4718 = vmatpush1.msra.mxu0 0.0
        %4719 = vmatprep.subr.mxu0 0.0
        %4720 = vmatpush1.msra.mxu0 0.0
        %4721 = vmatprep.subr.mxu0 0.0
        %4722 = vmatpush1.msra.mxu0 0.0
        %4723 = vmatprep.subr.mxu0 0.0
        %4724 = vmatpush1.msra.mxu0 0.0
        %4725 = vmatprep.subr.mxu0 0.0
        %4726 = vmatpush1.msra.mxu0 0.0
        %4727 = vmatprep.subr.mxu0 0.0
        %4728 = vmatpush1.msra.mxu0 0.0
        %4729 = vmatprep.subr.mxu0 0.0
        %4730 = vmatpush1.msra.mxu0 0.0
        %4731 = vmatprep.subr.mxu0 0.0
        %4732 = vmatpush1.msra.mxu0 0.0
        %4733 = vmatprep.subr.mxu0 0.0
        %4734 = vmatpush1.msra.mxu0 0.0
        %4735 = vmatprep.subr.mxu0 0.0
        %4736 = vmatpush1.msra.mxu0 0.0
        %4737 = vmatprep.subr.mxu0 0.0
        %4738 = vmatpush1.msra.mxu0 0.0
        %4739 = vmatprep.subr.mxu0 0.0
        %4740 = vmatpush1.msra.mxu0 0.0
        %4741 = vmatprep.subr.mxu0 0.0
        %4742 = vmatpush1.msra.mxu0 0.0
        %4743 = vmatprep.subr.mxu0 0.0
        %4744 = vmatpush1.msra.mxu0 0.0
        %4745 = vmatprep.subr.mxu0 0.0
        %4746 = vmatpush1.msra.mxu0 0.0
        %4747 = vmatprep.subr.mxu0 0.0
        %4748 = vmatpush1.msra.mxu0 0.0
        %4749 = vmatprep.subr.mxu0 0.0
        %4750 = vmatpush1.msra.mxu0 0.0
        %4751 = vmatprep.subr.mxu0 0.0
        %4752 = vmatpush1.msra.mxu0 0.0
        %4753 = vmatprep.subr.mxu0 0.0
        %4754 = vmatpush1.msra.mxu0 0.0
        %4755 = vmatprep.subr.mxu0 0.0
        %4756 = vmatpush1.msra.mxu0 0.0
        %4757 = vmatprep.subr.mxu0 0.0
        %4758 = vmatpush1.msra.mxu0 0.0
        %4759 = vmatprep.subr.mxu0 0.0
        %4760 = vmatpush1.msra.mxu0 0.0
        %4761 = vmatprep.subr.mxu0 0.0
        %4762 = vmatpush1.msra.mxu0 0.0
        %4763 = vmatprep.subr.mxu0 0.0
        %4764 = vmatpush1.msra.mxu0 0.0
        %4765 = vmatprep.mubr.f32.mxu0 0.0
        %4766 = vmatmul.mubr.f32.gmra.mrb[0].mxu0 %v4699
        %v4767 = vpop.f32.mrb[0].mxu0
        %v4768 = vadd.f32 0.0, %v4767
        %v4769 = vpop.f32.mrb[0].mxu0
        %4770 = vdwg.mxu0
        %4772 = vrot.lane.b32.xlu0 %v4768, 48
        %v4773 = vpop.permute.xlu0 %4772
        %vm4775 = vcmask 523648
        %4776 = vst.msk [vmem:[#allocation3] sm:$0xff] %vm4775, %v4773
        %4777 = vrot.lane.b32.xlu0 %v4022, 64
        %v4778 = vpop.permute.xlu0 %4777
        %4779 = vrot.lane.b32.xlu0 %v4024, 64
        %v4780 = vpop.permute.xlu0 %4779
        %v4781 = vsel %vm4096, %v4778, 0
        %v4783 = vsel %vm4096, %v4780, 0
        %4785 = vmatprep.subr.mxu0 0.0
        %4786 = vmatpush1.xpose.msra.mxu0 %v4783
        %4787 = vmatprep.subr.mxu0 0.0
        %4788 = vmatpush1.xpose.msra.mxu0 0.0
        %4789 = vmatprep.subr.mxu0 0.0
        %4790 = vmatpush1.xpose.msra.mxu0 0.0
        %4791 = vmatprep.subr.mxu0 0.0
        %4792 = vmatpush1.xpose.msra.mxu0 0.0
        %4793 = vmatprep.subr.mxu0 0.0
        %4794 = vmatpush1.xpose.msra.mxu0 0.0
        %4795 = vmatprep.subr.mxu0 0.0
        %4796 = vmatpush1.xpose.msra.mxu0 0.0
        %4797 = vmatprep.subr.mxu0 0.0
        %4798 = vmatpush1.xpose.msra.mxu0 0.0
        %4799 = vmatprep.subr.mxu0 0.0
        %4800 = vmatpush1.xpose.msra.mxu0 0.0
        %4801 = vmatprep.subr.mxu0 0.0
        %4802 = vmatpush1.xpose.msra.mxu0 0.0
        %4803 = vmatprep.subr.mxu0 0.0
        %4804 = vmatpush1.xpose.msra.mxu0 0.0
        %4805 = vmatprep.subr.mxu0 0.0
        %4806 = vmatpush1.xpose.msra.mxu0 0.0
        %4807 = vmatprep.subr.mxu0 0.0
        %4808 = vmatpush1.xpose.msra.mxu0 0.0
        %4809 = vmatprep.subr.mxu0 0.0
        %4810 = vmatpush1.xpose.msra.mxu0 0.0
        %4811 = vmatprep.subr.mxu0 0.0
        %4812 = vmatpush1.xpose.msra.mxu0 0.0
        %4813 = vmatprep.subr.mxu0 0.0
        %4814 = vmatpush1.xpose.msra.mxu0 0.0
        %4815 = vmatprep.subr.mxu0 0.0
        %4816 = vmatpush1.xpose.msra.mxu0 0.0
        %4817 = vmatprep.subr.mxu0 0.0
        %4818 = vmatpush1.xpose.msra.mxu0 0.0
        %4819 = vmatprep.subr.mxu0 0.0
        %4820 = vmatpush1.xpose.msra.mxu0 0.0
        %4821 = vmatprep.subr.mxu0 0.0
        %4822 = vmatpush1.xpose.msra.mxu0 0.0
        %4823 = vmatprep.subr.mxu0 0.0
        %4824 = vmatpush1.xpose.msra.mxu0 0.0
        %4825 = vmatprep.subr.mxu0 0.0
        %4826 = vmatpush1.xpose.msra.mxu0 0.0
        %4827 = vmatprep.subr.mxu0 0.0
        %4828 = vmatpush1.xpose.msra.mxu0 0.0
        %4829 = vmatprep.subr.mxu0 0.0
        %4830 = vmatpush1.xpose.msra.mxu0 0.0
        %4831 = vmatprep.subr.mxu0 0.0
        %4832 = vmatpush1.xpose.msra.mxu0 0.0
        %4833 = vmatprep.subr.mxu0 0.0
        %4834 = vmatpush1.xpose.msra.mxu0 0.0
        %4835 = vmatprep.subr.mxu0 0.0
        %4836 = vmatpush1.xpose.msra.mxu0 0.0
        %4837 = vmatprep.subr.mxu0 0.0
        %4838 = vmatpush1.xpose.msra.mxu0 0.0
        %4839 = vmatprep.subr.mxu0 0.0
        %4840 = vmatpush1.xpose.msra.mxu0 0.0
        %4841 = vmatprep.subr.mxu0 0.0
        %4842 = vmatpush1.xpose.msra.mxu0 0.0
        %4843 = vmatprep.subr.mxu0 0.0
        %4844 = vmatpush1.xpose.msra.mxu0 0.0
        %4845 = vmatprep.subr.mxu0 0.0
        %4846 = vmatpush1.xpose.msra.mxu0 0.0
        %4847 = vmatprep.subr.mxu0 0.0
        %4848 = vmatpush1.xpose.msra.mxu0 0.0
        %4849 = vmatprep.mubr.f32.mxu0 0.0
        %4850 = vmatmul.mubr.f32.gmra.mrb[0].mxu0 %v4781
        %v4851 = vpop.f32.mrb[0].mxu0
        %v4852 = vadd.f32 0.0, %v4851
        %v4853 = vpop.f32.mrb[0].mxu0
        %4854 = vdwg.mxu0
        %v4855 = vmul.f32 %v4852, 0.25
        %v4856 = vsel %vm4174, %v4855, -inf
        %4857 = vmax.xlane.f32.xlu0 %v4856
        %v4858 = vpop.xlane.xlu0 %4857
        %v4859 = vsub.f32 %v4855, %v4858
        %v4860 = vmul.f32 %v4859, 1.442695
        %v4861 = vpow.pop %v4860
        %v4862 = vsel %vm4174, %v4861, 0.0
        %4863 = vadd.xlane.f32.xlu0 %v4862
        %v4864 = vpop.xlane.xlu0 %4863
        %v4865 = vrcp.pop %v4864
        %v4866 = vmul.f32 %v4861, %v4865
        %4867 = vrot.lane.b32.xlu0 %v4093, 64
        %v4868 = vpop.permute.xlu0 %4867
        %v4871 = vsel %vm4174, %v4866, 0
        %4873 = vmatprep.subr.mxu0 0.0
        %4874 = vmatpush1.msra.mxu0 %v4868
        %4875 = vmatprep.subr.mxu0 0.0
        %4876 = vmatpush1.msra.mxu0 0.0
        %4877 = vmatprep.subr.mxu0 0.0
        %4878 = vmatpush1.msra.mxu0 0.0
        %4879 = vmatprep.subr.mxu0 0.0
        %4880 = vmatpush1.msra.mxu0 0.0
        %4881 = vmatprep.subr.mxu0 0.0
        %4882 = vmatpush1.msra.mxu0 0.0
        %4883 = vmatprep.subr.mxu0 0.0
        %4884 = vmatpush1.msra.mxu0 0.0
        %4885 = vmatprep.subr.mxu0 0.0
        %4886 = vmatpush1.msra.mxu0 0.0
        %4887 = vmatprep.subr.mxu0 0.0
        %4888 = vmatpush1.msra.mxu0 0.0
        %4889 = vmatprep.subr.mxu0 0.0
        %4890 = vmatpush1.msra.mxu0 0.0
        %4891 = vmatprep.subr.mxu0 0.0
        %4892 = vmatpush1.msra.mxu0 0.0
        %4893 = vmatprep.subr.mxu0 0.0
        %4894 = vmatpush1.msra.mxu0 0.0
        %4895 = vmatprep.subr.mxu0 0.0
        %4896 = vmatpush1.msra.mxu0 0.0
        %4897 = vmatprep.subr.mxu0 0.0
        %4898 = vmatpush1.msra.mxu0 0.0
        %4899 = vmatprep.subr.mxu0 0.0
        %4900 = vmatpush1.msra.mxu0 0.0
        %4901 = vmatprep.subr.mxu0 0.0
        %4902 = vmatpush1.msra.mxu0 0.0
        %4903 = vmatprep.subr.mxu0 0.0
        %4904 = vmatpush1.msra.mxu0 0.0
        %4905 = vmatprep.subr.mxu0 0.0
        %4906 = vmatpush1.msra.mxu0 0.0
        %4907 = vmatprep.subr.mxu0 0.0
        %4908 = vmatpush1.msra.mxu0 0.0
        %4909 = vmatprep.subr.mxu0 0.0
        %4910 = vmatpush1.msra.mxu0 0.0
        %4911 = vmatprep.subr.mxu0 0.0
        %4912 = vmatpush1.msra.mxu0 0.0
        %4913 = vmatprep.subr.mxu0 0.0
        %4914 = vmatpush1.msra.mxu0 0.0
        %4915 = vmatprep.subr.mxu0 0.0
        %4916 = vmatpush1.msra.mxu0 0.0
        %4917 = vmatprep.subr.mxu0 0.0
        %4918 = vmatpush1.msra.mxu0 0.0
        %4919 = vmatprep.subr.mxu0 0.0
        %4920 = vmatpush1.msra.mxu0 0.0
        %4921 = vmatprep.subr.mxu0 0.0
        %4922 = vmatpush1.msra.mxu0 0.0
        %4923 = vmatprep.subr.mxu0 0.0
        %4924 = vmatpush1.msra.mxu0 0.0
        %4925 = vmatprep.subr.mxu0 0.0
        %4926 = vmatpush1.msra.mxu0 0.0
        %4927 = vmatprep.subr.mxu0 0.0
        %4928 = vmatpush1.msra.mxu0 0.0
        %4929 = vmatprep.subr.mxu0 0.0
        %4930 = vmatpush1.msra.mxu0 0.0
        %4931 = vmatprep.subr.mxu0 0.0
        %4932 = vmatpush1.msra.mxu0 0.0
        %4933 = vmatprep.subr.mxu0 0.0
        %4934 = vmatpush1.msra.mxu0 0.0
        %4935 = vmatprep.subr.mxu0 0.0
        %4936 = vmatpush1.msra.mxu0 0.0
        %4937 = vmatprep.mubr.f32.mxu0 0.0
        %4938 = vmatmul.mubr.f32.gmra.mrb[0].mxu0 %v4871
        %v4939 = vpop.f32.mrb[0].mxu0
        %v4940 = vadd.f32 0.0, %v4939
        %v4941 = vpop.f32.mrb[0].mxu0
        %4942 = vdwg.mxu0
        %4944 = vrot.lane.b32.xlu0 %v4940, 64
        %v4945 = vpop.permute.xlu0 %4944
        %vm4947 = vcmask 654848
        %4948 = vst.msk [vmem:[#allocation3] sm:$0xff] %vm4947, %v4945
        %4949 = vrot.lane.b32.xlu0 %v4022, 48
        %v4950 = vpop.permute.xlu0 %4949
        %4951 = vrot.lane.b32.xlu0 %v4024, 48
        %v4952 = vpop.permute.xlu0 %4951
        %v4953 = vsel %vm4096, %v4950, 0
        %v4955 = vsel %vm4096, %v4952, 0
        %4957 = vmatprep.subr.mxu0 0.0
        %4958 = vmatpush1.xpose.msra.mxu0 %v4955
        %4959 = vmatprep.subr.mxu0 0.0
        %4960 = vmatpush1.xpose.msra.mxu0 0.0
        %4961 = vmatprep.subr.mxu0 0.0
        %4962 = vmatpush1.xpose.msra.mxu0 0.0
        %4963 = vmatprep.subr.mxu0 0.0
        %4964 = vmatpush1.xpose.msra.mxu0 0.0
        %4965 = vmatprep.subr.mxu0 0.0
        %4966 = vmatpush1.xpose.msra.mxu0 0.0
        %4967 = vmatprep.subr.mxu0 0.0
        %4968 = vmatpush1.xpose.msra.mxu0 0.0
        %4969 = vmatprep.subr.mxu0 0.0
        %4970 = vmatpush1.xpose.msra.mxu0 0.0
        %4971 = vmatprep.subr.mxu0 0.0
        %4972 = vmatpush1.xpose.msra.mxu0 0.0
        %4973 = vmatprep.subr.mxu0 0.0
        %4974 = vmatpush1.xpose.msra.mxu0 0.0
        %4975 = vmatprep.subr.mxu0 0.0
        %4976 = vmatpush1.xpose.msra.mxu0 0.0
        %4977 = vmatprep.subr.mxu0 0.0
        %4978 = vmatpush1.xpose.msra.mxu0 0.0
        %4979 = vmatprep.subr.mxu0 0.0
        %4980 = vmatpush1.xpose.msra.mxu0 0.0
        %4981 = vmatprep.subr.mxu0 0.0
        %4982 = vmatpush1.xpose.msra.mxu0 0.0
        %4983 = vmatprep.subr.mxu0 0.0
        %4984 = vmatpush1.xpose.msra.mxu0 0.0
        %4985 = vmatprep.subr.mxu0 0.0
        %4986 = vmatpush1.xpose.msra.mxu0 0.0
        %4987 = vmatprep.subr.mxu0 0.0
        %4988 = vmatpush1.xpose.msra.mxu0 0.0
        %4989 = vmatprep.subr.mxu0 0.0
        %4990 = vmatpush1.xpose.msra.mxu0 0.0
        %4991 = vmatprep.subr.mxu0 0.0
        %4992 = vmatpush1.xpose.msra.mxu0 0.0
        %4993 = vmatprep.subr.mxu0 0.0
        %4994 = vmatpush1.xpose.msra.mxu0 0.0
        %4995 = vmatprep.subr.mxu0 0.0
        %4996 = vmatpush1.xpose.msra.mxu0 0.0
        %4997 = vmatprep.subr.mxu0 0.0
        %4998 = vmatpush1.xpose.msra.mxu0 0.0
        %4999 = vmatprep.subr.mxu0 0.0
        %5000 = vmatpush1.xpose.msra.mxu0 0.0
        %5001 = vmatprep.subr.mxu0 0.0
        %5002 = vmatpush1.xpose.msra.mxu0 0.0
        %5003 = vmatprep.subr.mxu0 0.0
        %5004 = vmatpush1.xpose.msra.mxu0 0.0
        %5005 = vmatprep.subr.mxu0 0.0
        %5006 = vmatpush1.xpose.msra.mxu0 0.0
        %5007 = vmatprep.subr.mxu0 0.0
        %5008 = vmatpush1.xpose.msra.mxu0 0.0
        %5009 = vmatprep.subr.mxu0 0.0
        %5010 = vmatpush1.xpose.msra.mxu0 0.0
        %5011 = vmatprep.subr.mxu0 0.0
        %5012 = vmatpush1.xpose.msra.mxu0 0.0
        %5013 = vmatprep.subr.mxu0 0.0
        %5014 = vmatpush1.xpose.msra.mxu0 0.0
        %5015 = vmatprep.subr.mxu0 0.0
        %5016 = vmatpush1.xpose.msra.mxu0 0.0
        %5017 = vmatprep.subr.mxu0 0.0
        %5018 = vmatpush1.xpose.msra.mxu0 0.0
        %5019 = vmatprep.subr.mxu0 0.0
        %5020 = vmatpush1.xpose.msra.mxu0 0.0
        %5021 = vmatprep.mubr.f32.mxu0 0.0
        %5022 = vmatmul.mubr.f32.gmra.mrb[0].mxu0 %v4953
        %v5023 = vpop.f32.mrb[0].mxu0
        %v5024 = vadd.f32 0.0, %v5023
        %v5025 = vpop.f32.mrb[0].mxu0
        %5026 = vdwg.mxu0
        %v5027 = vmul.f32 %v5024, 0.25
        %v5028 = vsel %vm4174, %v5027, -inf
        %5029 = vmax.xlane.f32.xlu0 %v5028
        %v5030 = vpop.xlane.xlu0 %5029
        %v5031 = vsub.f32 %v5027, %v5030
        %v5032 = vmul.f32 %v5031, 1.442695
        %v5033 = vpow.pop %v5032
        %v5034 = vsel %vm4174, %v5033, 0.0
        %5035 = vadd.xlane.f32.xlu0 %v5034
        %v5036 = vpop.xlane.xlu0 %5035
        %v5037 = vrcp.pop %v5036
        %v5038 = vmul.f32 %v5033, %v5037
        %5039 = vrot.lane.b32.xlu0 %v4093, 48
        %v5040 = vpop.permute.xlu0 %5039
        %v5043 = vsel %vm4174, %v5038, 0
        %5045 = vmatprep.subr.mxu0 0.0
        %5046 = vmatpush1.msra.mxu0 %v5040
        %5047 = vmatprep.subr.mxu0 0.0
        %5048 = vmatpush1.msra.mxu0 0.0
        %5049 = vmatprep.subr.mxu0 0.0
        %5050 = vmatpush1.msra.mxu0 0.0
        %5051 = vmatprep.subr.mxu0 0.0
        %5052 = vmatpush1.msra.mxu0 0.0
        %5053 = vmatprep.subr.mxu0 0.0
        %5054 = vmatpush1.msra.mxu0 0.0
        %5055 = vmatprep.subr.mxu0 0.0
        %5056 = vmatpush1.msra.mxu0 0.0
        %5057 = vmatprep.subr.mxu0 0.0
        %5058 = vmatpush1.msra.mxu0 0.0
        %5059 = vmatprep.subr.mxu0 0.0
        %5060 = vmatpush1.msra.mxu0 0.0
        %5061 = vmatprep.subr.mxu0 0.0
        %5062 = vmatpush1.msra.mxu0 0.0
        %5063 = vmatprep.subr.mxu0 0.0
        %5064 = vmatpush1.msra.mxu0 0.0
        %5065 = vmatprep.subr.mxu0 0.0
        %5066 = vmatpush1.msra.mxu0 0.0
        %5067 = vmatprep.subr.mxu0 0.0
        %5068 = vmatpush1.msra.mxu0 0.0
        %5069 = vmatprep.subr.mxu0 0.0
        %5070 = vmatpush1.msra.mxu0 0.0
        %5071 = vmatprep.subr.mxu0 0.0
        %5072 = vmatpush1.msra.mxu0 0.0
        %5073 = vmatprep.subr.mxu0 0.0
        %5074 = vmatpush1.msra.mxu0 0.0
        %5075 = vmatprep.subr.mxu0 0.0
        %5076 = vmatpush1.msra.mxu0 0.0
        %5077 = vmatprep.subr.mxu0 0.0
        %5078 = vmatpush1.msra.mxu0 0.0
        %5079 = vmatprep.subr.mxu0 0.0
        %5080 = vmatpush1.msra.mxu0 0.0
        %5081 = vmatprep.subr.mxu0 0.0
        %5082 = vmatpush1.msra.mxu0 0.0
        %5083 = vmatprep.subr.mxu0 0.0
        %5084 = vmatpush1.msra.mxu0 0.0
        %5085 = vmatprep.subr.mxu0 0.0
        %5086 = vmatpush1.msra.mxu0 0.0
        %5087 = vmatprep.subr.mxu0 0.0
        %5088 = vmatpush1.msra.mxu0 0.0
        %5089 = vmatprep.subr.mxu0 0.0
        %5090 = vmatpush1.msra.mxu0 0.0
        %5091 = vmatprep.subr.mxu0 0.0
        %5092 = vmatpush1.msra.mxu0 0.0
        %5093 = vmatprep.subr.mxu0 0.0
        %5094 = vmatpush1.msra.mxu0 0.0
        %5095 = vmatprep.subr.mxu0 0.0
        %5096 = vmatpush1.msra.mxu0 0.0
        %5097 = vmatprep.subr.mxu0 0.0
        %5098 = vmatpush1.msra.mxu0 0.0
        %5099 = vmatprep.subr.mxu0 0.0
        %5100 = vmatpush1.msra.mxu0 0.0
        %5101 = vmatprep.subr.mxu0 0.0
        %5102 = vmatpush1.msra.mxu0 0.0
        %5103 = vmatprep.subr.mxu0 0.0
        %5104 = vmatpush1.msra.mxu0 0.0
        %5105 = vmatprep.subr.mxu0 0.0
        %5106 = vmatpush1.msra.mxu0 0.0
        %5107 = vmatprep.subr.mxu0 0.0
        %5108 = vmatpush1.msra.mxu0 0.0
        %5109 = vmatprep.mubr.f32.mxu0 0.0
        %5110 = vmatmul.mubr.f32.gmra.mrb[0].mxu0 %v5043
        %v5111 = vpop.f32.mrb[0].mxu0
        %v5112 = vadd.f32 0.0, %v5111
        %v5113 = vpop.f32.mrb[0].mxu0
        %5114 = vdwg.mxu0
        %5116 = vrot.lane.b32.xlu0 %v5112, 80
        %v5117 = vpop.permute.xlu0 %5116
        %vm5119 = vcmask 786048
        %5120 = vst.msk [vmem:[#allocation3] sm:$0xff] %vm5119, %v5117
        %5121 = vrot.lane.b32.xlu0 %v4022, 32
        %v5122 = vpop.permute.xlu0 %5121
        %5123 = vrot.lane.b32.xlu0 %v4024, 32
        %v5124 = vpop.permute.xlu0 %5123
        %v5125 = vsel %vm4096, %v5122, 0
        %v5127 = vsel %vm4096, %v5124, 0
        %5129 = vmatprep.subr.mxu0 0.0
        %5130 = vmatpush1.xpose.msra.mxu0 %v5127
        %5131 = vmatprep.subr.mxu0 0.0
        %5132 = vmatpush1.xpose.msra.mxu0 0.0
        %5133 = vmatprep.subr.mxu0 0.0
        %5134 = vmatpush1.xpose.msra.mxu0 0.0
        %5135 = vmatprep.subr.mxu0 0.0
        %5136 = vmatpush1.xpose.msra.mxu0 0.0
        %5137 = vmatprep.subr.mxu0 0.0
        %5138 = vmatpush1.xpose.msra.mxu0 0.0
        %5139 = vmatprep.subr.mxu0 0.0
        %5140 = vmatpush1.xpose.msra.mxu0 0.0
        %5141 = vmatprep.subr.mxu0 0.0
        %5142 = vmatpush1.xpose.msra.mxu0 0.0
        %5143 = vmatprep.subr.mxu0 0.0
        %5144 = vmatpush1.xpose.msra.mxu0 0.0
        %5145 = vmatprep.subr.mxu0 0.0
        %5146 = vmatpush1.xpose.msra.mxu0 0.0
        %5147 = vmatprep.subr.mxu0 0.0
        %5148 = vmatpush1.xpose.msra.mxu0 0.0
        %5149 = vmatprep.subr.mxu0 0.0
        %5150 = vmatpush1.xpose.msra.mxu0 0.0
        %5151 = vmatprep.subr.mxu0 0.0
        %5152 = vmatpush1.xpose.msra.mxu0 0.0
        %5153 = vmatprep.subr.mxu0 0.0
        %5154 = vmatpush1.xpose.msra.mxu0 0.0
        %5155 = vmatprep.subr.mxu0 0.0
        %5156 = vmatpush1.xpose.msra.mxu0 0.0
        %5157 = vmatprep.subr.mxu0 0.0
        %5158 = vmatpush1.xpose.msra.mxu0 0.0
        %5159 = vmatprep.subr.mxu0 0.0
        %5160 = vmatpush1.xpose.msra.mxu0 0.0
        %5161 = vmatprep.subr.mxu0 0.0
        %5162 = vmatpush1.xpose.msra.mxu0 0.0
        %5163 = vmatprep.subr.mxu0 0.0
        %5164 = vmatpush1.xpose.msra.mxu0 0.0
        %5165 = vmatprep.subr.mxu0 0.0
        %5166 = vmatpush1.xpose.msra.mxu0 0.0
        %5167 = vmatprep.subr.mxu0 0.0
        %5168 = vmatpush1.xpose.msra.mxu0 0.0
        %5169 = vmatprep.subr.mxu0 0.0
        %5170 = vmatpush1.xpose.msra.mxu0 0.0
        %5171 = vmatprep.subr.mxu0 0.0
        %5172 = vmatpush1.xpose.msra.mxu0 0.0
        %5173 = vmatprep.subr.mxu0 0.0
        %5174 = vmatpush1.xpose.msra.mxu0 0.0
        %5175 = vmatprep.subr.mxu0 0.0
        %5176 = vmatpush1.xpose.msra.mxu0 0.0
        %5177 = vmatprep.subr.mxu0 0.0
        %5178 = vmatpush1.xpose.msra.mxu0 0.0
        %5179 = vmatprep.subr.mxu0 0.0
        %5180 = vmatpush1.xpose.msra.mxu0 0.0
        %5181 = vmatprep.subr.mxu0 0.0
        %5182 = vmatpush1.xpose.msra.mxu0 0.0
        %5183 = vmatprep.subr.mxu0 0.0
        %5184 = vmatpush1.xpose.msra.mxu0 0.0
        %5185 = vmatprep.subr.mxu0 0.0
        %5186 = vmatpush1.xpose.msra.mxu0 0.0
        %5187 = vmatprep.subr.mxu0 0.0
        %5188 = vmatpush1.xpose.msra.mxu0 0.0
        %5189 = vmatprep.subr.mxu0 0.0
        %5190 = vmatpush1.xpose.msra.mxu0 0.0
        %5191 = vmatprep.subr.mxu0 0.0
        %5192 = vmatpush1.xpose.msra.mxu0 0.0
        %5193 = vmatprep.mubr.f32.mxu0 0.0
        %5194 = vmatmul.mubr.f32.gmra.mrb[0].mxu0 %v5125
        %v5195 = vpop.f32.mrb[0].mxu0
        %v5196 = vadd.f32 0.0, %v5195
        %v5197 = vpop.f32.mrb[0].mxu0
        %5198 = vdwg.mxu0
        %v5199 = vmul.f32 %v5196, 0.25
        %v5200 = vsel %vm4174, %v5199, -inf
        %5201 = vmax.xlane.f32.xlu0 %v5200
        %v5202 = vpop.xlane.xlu0 %5201
        %v5203 = vsub.f32 %v5199, %v5202
        %v5204 = vmul.f32 %v5203, 1.442695
        %v5205 = vpow.pop %v5204
        %v5206 = vsel %vm4174, %v5205, 0.0
        %5207 = vadd.xlane.f32.xlu0 %v5206
        %v5208 = vpop.xlane.xlu0 %5207
        %v5209 = vrcp.pop %v5208
        %v5210 = vmul.f32 %v5205, %v5209
        %5211 = vrot.lane.b32.xlu0 %v4093, 32
        %v5212 = vpop.permute.xlu0 %5211
        %v5215 = vsel %vm4174, %v5210, 0
        %5217 = vmatprep.subr.mxu0 0.0
        %5218 = vmatpush1.msra.mxu0 %v5212
        %5219 = vmatprep.subr.mxu0 0.0
        %5220 = vmatpush1.msra.mxu0 0.0
        %5221 = vmatprep.subr.mxu0 0.0
        %5222 = vmatpush1.msra.mxu0 0.0
        %5223 = vmatprep.subr.mxu0 0.0
        %5224 = vmatpush1.msra.mxu0 0.0
        %5225 = vmatprep.subr.mxu0 0.0
        %5226 = vmatpush1.msra.mxu0 0.0
        %5227 = vmatprep.subr.mxu0 0.0
        %5228 = vmatpush1.msra.mxu0 0.0
        %5229 = vmatprep.subr.mxu0 0.0
        %5230 = vmatpush1.msra.mxu0 0.0
        %5231 = vmatprep.subr.mxu0 0.0
        %5232 = vmatpush1.msra.mxu0 0.0
        %5233 = vmatprep.subr.mxu0 0.0
        %5234 = vmatpush1.msra.mxu0 0.0
        %5235 = vmatprep.subr.mxu0 0.0
        %5236 = vmatpush1.msra.mxu0 0.0
        %5237 = vmatprep.subr.mxu0 0.0
        %5238 = vmatpush1.msra.mxu0 0.0
        %5239 = vmatprep.subr.mxu0 0.0
        %5240 = vmatpush1.msra.mxu0 0.0
        %5241 = vmatprep.subr.mxu0 0.0
        %5242 = vmatpush1.msra.mxu0 0.0
        %5243 = vmatprep.subr.mxu0 0.0
        %5244 = vmatpush1.msra.mxu0 0.0
        %5245 = vmatprep.subr.mxu0 0.0
        %5246 = vmatpush1.msra.mxu0 0.0
        %5247 = vmatprep.subr.mxu0 0.0
        %5248 = vmatpush1.msra.mxu0 0.0
        %5249 = vmatprep.subr.mxu0 0.0
        %5250 = vmatpush1.msra.mxu0 0.0
        %5251 = vmatprep.subr.mxu0 0.0
        %5252 = vmatpush1.msra.mxu0 0.0
        %5253 = vmatprep.subr.mxu0 0.0
        %5254 = vmatpush1.msra.mxu0 0.0
        %5255 = vmatprep.subr.mxu0 0.0
        %5256 = vmatpush1.msra.mxu0 0.0
        %5257 = vmatprep.subr.mxu0 0.0
        %5258 = vmatpush1.msra.mxu0 0.0
        %5259 = vmatprep.subr.mxu0 0.0
        %5260 = vmatpush1.msra.mxu0 0.0
        %5261 = vmatprep.subr.mxu0 0.0
        %5262 = vmatpush1.msra.mxu0 0.0
        %5263 = vmatprep.subr.mxu0 0.0
        %5264 = vmatpush1.msra.mxu0 0.0
        %5265 = vmatprep.subr.mxu0 0.0
        %5266 = vmatpush1.msra.mxu0 0.0
        %5267 = vmatprep.subr.mxu0 0.0
        %5268 = vmatpush1.msra.mxu0 0.0
        %5269 = vmatprep.subr.mxu0 0.0
        %5270 = vmatpush1.msra.mxu0 0.0
        %5271 = vmatprep.subr.mxu0 0.0
        %5272 = vmatpush1.msra.mxu0 0.0
        %5273 = vmatprep.subr.mxu0 0.0
        %5274 = vmatpush1.msra.mxu0 0.0
        %5275 = vmatprep.subr.mxu0 0.0
        %5276 = vmatpush1.msra.mxu0 0.0
        %5277 = vmatprep.subr.mxu0 0.0
        %5278 = vmatpush1.msra.mxu0 0.0
        %5279 = vmatprep.subr.mxu0 0.0
        %5280 = vmatpush1.msra.mxu0 0.0
        %5281 = vmatprep.mubr.f32.mxu0 0.0
        %5282 = vmatmul.mubr.f32.gmra.mrb[0].mxu0 %v5215
        %v5283 = vpop.f32.mrb[0].mxu0
        %v5284 = vadd.f32 0.0, %v5283
        %v5285 = vpop.f32.mrb[0].mxu0
        %5286 = vdwg.mxu0
        %5288 = vrot.lane.b32.xlu0 %v5284, 96
        %v5289 = vpop.permute.xlu0 %5288
        %vm5291 = vcmask 917248
        %5292 = vst.msk [vmem:[#allocation3] sm:$0xff] %vm5291, %v5289
        %5293 = vrot.lane.b32.xlu0 %v4022, 16
        %v5294 = vpop.permute.xlu0 %5293
        %5295 = vrot.lane.b32.xlu0 %v4024, 16
        %v5296 = vpop.permute.xlu0 %5295
        %v5297 = vsel %vm4096, %v5294, 0
        %v5299 = vsel %vm4096, %v5296, 0
        %5301 = vmatprep.subr.mxu0 0.0
        %5302 = vmatpush1.xpose.msra.mxu0 %v5299
        %5303 = vmatprep.subr.mxu0 0.0
        %5304 = vmatpush1.xpose.msra.mxu0 0.0
        %5305 = vmatprep.subr.mxu0 0.0
        %5306 = vmatpush1.xpose.msra.mxu0 0.0
        %5307 = vmatprep.subr.mxu0 0.0
        %5308 = vmatpush1.xpose.msra.mxu0 0.0
        %5309 = vmatprep.subr.mxu0 0.0
        %5310 = vmatpush1.xpose.msra.mxu0 0.0
        %5311 = vmatprep.subr.mxu0 0.0
        %5312 = vmatpush1.xpose.msra.mxu0 0.0
        %5313 = vmatprep.subr.mxu0 0.0
        %5314 = vmatpush1.xpose.msra.mxu0 0.0
        %5315 = vmatprep.subr.mxu0 0.0
        %5316 = vmatpush1.xpose.msra.mxu0 0.0
        %5317 = vmatprep.subr.mxu0 0.0
        %5318 = vmatpush1.xpose.msra.mxu0 0.0
        %5319 = vmatprep.subr.mxu0 0.0
        %5320 = vmatpush1.xpose.msra.mxu0 0.0
        %5321 = vmatprep.subr.mxu0 0.0
        %5322 = vmatpush1.xpose.msra.mxu0 0.0
        %5323 = vmatprep.subr.mxu0 0.0
        %5324 = vmatpush1.xpose.msra.mxu0 0.0
        %5325 = vmatprep.subr.mxu0 0.0
        %5326 = vmatpush1.xpose.msra.mxu0 0.0
        %5327 = vmatprep.subr.mxu0 0.0
        %5328 = vmatpush1.xpose.msra.mxu0 0.0
        %5329 = vmatprep.subr.mxu0 0.0
        %5330 = vmatpush1.xpose.msra.mxu0 0.0
        %5331 = vmatprep.subr.mxu0 0.0
        %5332 = vmatpush1.xpose.msra.mxu0 0.0
        %5333 = vmatprep.subr.mxu0 0.0
        %5334 = vmatpush1.xpose.msra.mxu0 0.0
        %5335 = vmatprep.subr.mxu0 0.0
        %5336 = vmatpush1.xpose.msra.mxu0 0.0
        %5337 = vmatprep.subr.mxu0 0.0
        %5338 = vmatpush1.xpose.msra.mxu0 0.0
        %5339 = vmatprep.subr.mxu0 0.0
        %5340 = vmatpush1.xpose.msra.mxu0 0.0
        %5341 = vmatprep.subr.mxu0 0.0
        %5342 = vmatpush1.xpose.msra.mxu0 0.0
        %5343 = vmatprep.subr.mxu0 0.0
        %5344 = vmatpush1.xpose.msra.mxu0 0.0
        %5345 = vmatprep.subr.mxu0 0.0
        %5346 = vmatpush1.xpose.msra.mxu0 0.0
        %5347 = vmatprep.subr.mxu0 0.0
        %5348 = vmatpush1.xpose.msra.mxu0 0.0
        %5349 = vmatprep.subr.mxu0 0.0
        %5350 = vmatpush1.xpose.msra.mxu0 0.0
        %5351 = vmatprep.subr.mxu0 0.0
        %5352 = vmatpush1.xpose.msra.mxu0 0.0
        %5353 = vmatprep.subr.mxu0 0.0
        %5354 = vmatpush1.xpose.msra.mxu0 0.0
        %5355 = vmatprep.subr.mxu0 0.0
        %5356 = vmatpush1.xpose.msra.mxu0 0.0
        %5357 = vmatprep.subr.mxu0 0.0
        %5358 = vmatpush1.xpose.msra.mxu0 0.0
        %5359 = vmatprep.subr.mxu0 0.0
        %5360 = vmatpush1.xpose.msra.mxu0 0.0
        %5361 = vmatprep.subr.mxu0 0.0
        %5362 = vmatpush1.xpose.msra.mxu0 0.0
        %5363 = vmatprep.subr.mxu0 0.0
        %5364 = vmatpush1.xpose.msra.mxu0 0.0
        %5365 = vmatprep.mubr.f32.mxu0 0.0
        %5366 = vmatmul.mubr.f32.gmra.mrb[0].mxu0 %v5297
        %v5367 = vpop.f32.mrb[0].mxu0
        %v5368 = vadd.f32 0.0, %v5367
        %v5369 = vpop.f32.mrb[0].mxu0
        %5370 = vdwg.mxu0
        %v5371 = vmul.f32 %v5368, 0.25
        %v5372 = vsel %vm4174, %v5371, -inf
        %5373 = vmax.xlane.f32.xlu0 %v5372
        %v5374 = vpop.xlane.xlu0 %5373
        %v5375 = vsub.f32 %v5371, %v5374
        %v5376 = vmul.f32 %v5375, 1.442695
        %v5377 = vpow.pop %v5376
        %v5378 = vsel %vm4174, %v5377, 0.0
        %5379 = vadd.xlane.f32.xlu0 %v5378
        %v5380 = vpop.xlane.xlu0 %5379
        %v5381 = vrcp.pop %v5380
        %v5382 = vmul.f32 %v5377, %v5381
        %5383 = vrot.lane.b32.xlu0 %v4093, 16
        %v5384 = vpop.permute.xlu0 %5383
        %v5387 = vsel %vm4174, %v5382, 0
        %5389 = vmatprep.subr.mxu0 0.0
        %5390 = vmatpush1.msra.mxu0 %v5384
        %5391 = vmatprep.subr.mxu0 0.0
        %5392 = vmatpush1.msra.mxu0 0.0
        %5393 = vmatprep.subr.mxu0 0.0
        %5394 = vmatpush1.msra.mxu0 0.0
        %5395 = vmatprep.subr.mxu0 0.0
        %5396 = vmatpush1.msra.mxu0 0.0
        %5397 = vmatprep.subr.mxu0 0.0
        %5398 = vmatpush1.msra.mxu0 0.0
        %5399 = vmatprep.subr.mxu0 0.0
        %5400 = vmatpush1.msra.mxu0 0.0
        %5401 = vmatprep.subr.mxu0 0.0
        %5402 = vmatpush1.msra.mxu0 0.0
        %5403 = vmatprep.subr.mxu0 0.0
        %5404 = vmatpush1.msra.mxu0 0.0
        %5405 = vmatprep.subr.mxu0 0.0
        %5406 = vmatpush1.msra.mxu0 0.0
        %5407 = vmatprep.subr.mxu0 0.0
        %5408 = vmatpush1.msra.mxu0 0.0
        %5409 = vmatprep.subr.mxu0 0.0
        %5410 = vmatpush1.msra.mxu0 0.0
        %5411 = vmatprep.subr.mxu0 0.0
        %5412 = vmatpush1.msra.mxu0 0.0
        %5413 = vmatprep.subr.mxu0 0.0
        %5414 = vmatpush1.msra.mxu0 0.0
        %5415 = vmatprep.subr.mxu0 0.0
        %5416 = vmatpush1.msra.mxu0 0.0
        %5417 = vmatprep.subr.mxu0 0.0
        %5418 = vmatpush1.msra.mxu0 0.0
        %5419 = vmatprep.subr.mxu0 0.0
        %5420 = vmatpush1.msra.mxu0 0.0
        %5421 = vmatprep.subr.mxu0 0.0
        %5422 = vmatpush1.msra.mxu0 0.0
        %5423 = vmatprep.subr.mxu0 0.0
        %5424 = vmatpush1.msra.mxu0 0.0
        %5425 = vmatprep.subr.mxu0 0.0
        %5426 = vmatpush1.msra.mxu0 0.0
        %5427 = vmatprep.subr.mxu0 0.0
        %5428 = vmatpush1.msra.mxu0 0.0
        %5429 = vmatprep.subr.mxu0 0.0
        %5430 = vmatpush1.msra.mxu0 0.0
        %5431 = vmatprep.subr.mxu0 0.0
        %5432 = vmatpush1.msra.mxu0 0.0
        %5433 = vmatprep.subr.mxu0 0.0
        %5434 = vmatpush1.msra.mxu0 0.0
        %5435 = vmatprep.subr.mxu0 0.0
        %5436 = vmatpush1.msra.mxu0 0.0
        %5437 = vmatprep.subr.mxu0 0.0
        %5438 = vmatpush1.msra.mxu0 0.0
        %5439 = vmatprep.subr.mxu0 0.0
        %5440 = vmatpush1.msra.mxu0 0.0
        %5441 = vmatprep.subr.mxu0 0.0
        %5442 = vmatpush1.msra.mxu0 0.0
        %5443 = vmatprep.subr.mxu0 0.0
        %5444 = vmatpush1.msra.mxu0 0.0
        %5445 = vmatprep.subr.mxu0 0.0
        %5446 = vmatpush1.msra.mxu0 0.0
        %5447 = vmatprep.subr.mxu0 0.0
        %5448 = vmatpush1.msra.mxu0 0.0
        %5449 = vmatprep.subr.mxu0 0.0
        %5450 = vmatpush1.msra.mxu0 0.0
        %5451 = vmatprep.subr.mxu0 0.0
        %5452 = vmatpush1.msra.mxu0 0.0
        %5453 = vmatprep.mubr.f32.mxu0 0.0
        %5454 = vmatmul.mubr.f32.gmra.mrb[0].mxu0 %v5387
        %v5455 = vpop.f32.mrb[0].mxu0
        %v5456 = vadd.f32 0.0, %v5455
        %v5457 = vpop.f32.mrb[0].mxu0
        %5458 = vdwg.mxu0
        %5460 = vrot.lane.b32.xlu0 %v5456, 112
        %v5461 = vpop.permute.xlu0 %5460
        %vm5463 = vcmask 1048448
        %5464 = vst.msk [vmem:[#allocation3] sm:$0xff] %vm5463, %v5461
        %v5465 = vld [vmem:[#allocation3] sm:$0xff]
        %v5466 = vld [vmem:[#allocation15] sm:$0xff]
        %v5467 = vld [vmem:[#allocation15 + $0x8] sm:$0xff]
        %v5468 = vld [vmem:[#allocation15 + $0x10] sm:$0xff]
        %v5469 = vld [vmem:[#allocation15 + $0x18] sm:$0xff]
        %v5470 = vld [vmem:[#allocation15 + $0x20] sm:$0xff]
        %v5471 = vld [vmem:[#allocation15 + $0x28] sm:$0xff]
        %v5472 = vld [vmem:[#allocation15 + $0x30] sm:$0xff]
        %v5473 = vld [vmem:[#allocation15 + $0x38] sm:$0xff]
        %v5474 = vld [vmem:[#allocation15 + $0x40] sm:$0xff]
        %v5475 = vld [vmem:[#allocation15 + $0x48] sm:$0xff]
        %v5476 = vld [vmem:[#allocation15 + $0x50] sm:$0xff]
        %v5477 = vld [vmem:[#allocation15 + $0x58] sm:$0xff]
        %v5478 = vld [vmem:[#allocation15 + $0x60] sm:$0xff]
        %v5479 = vld [vmem:[#allocation15 + $0x68] sm:$0xff]
        %v5480 = vld [vmem:[#allocation15 + $0x70] sm:$0xff]
        %v5481 = vld [vmem:[#allocation15 + $0x78] sm:$0xff]
        %v5482 = vld [vmem:[%s14] sm:$0x1]
        %v5484 = vlaneseq
        %v5485 = vshrl.u32 %v5484, 7
        %v5486 = vsub.s32 0, %v5485
        %v5487 = vrot.slane %v5482, %v5486
        %5489 = vmatprep.subr.mxu0 0.0
        %5490 = vmatpush1.msra.mxu0 %v5466
        %5491 = vmatprep.subr.mxu0 0.0
        %5492 = vmatpush1.msra.mxu0 %v5467
        %5493 = vmatprep.subr.mxu0 0.0
        %5494 = vmatpush1.msra.mxu0 %v5468
        %5495 = vmatprep.subr.mxu0 0.0
        %5496 = vmatpush1.msra.mxu0 %v5469
        %5497 = vmatprep.subr.mxu0 0.0
        %5498 = vmatpush1.msra.mxu0 %v5470
        %5499 = vmatprep.subr.mxu0 0.0
        %5500 = vmatpush1.msra.mxu0 %v5471
        %5501 = vmatprep.subr.mxu0 0.0
        %5502 = vmatpush1.msra.mxu0 %v5472
        %5503 = vmatprep.subr.mxu0 0.0
        %5504 = vmatpush1.msra.mxu0 %v5473
        %5505 = vmatprep.subr.mxu0 0.0
        %5506 = vmatpush1.msra.mxu0 %v5474
        %5507 = vmatprep.subr.mxu0 0.0
        %5508 = vmatpush1.msra.mxu0 %v5475
        %5509 = vmatprep.subr.mxu0 0.0
        %5510 = vmatpush1.msra.mxu0 %v5476
        %5511 = vmatprep.subr.mxu0 0.0
        %5512 = vmatpush1.msra.mxu0 %v5477
        %5513 = vmatprep.subr.mxu0 0.0
        %5514 = vmatpush1.msra.mxu0 %v5478
        %5515 = vmatprep.subr.mxu0 0.0
        %5516 = vmatpush1.msra.mxu0 %v5479
        %5517 = vmatprep.subr.mxu0 0.0
        %5518 = vmatpush1.msra.mxu0 %v5480
        %5519 = vmatprep.subr.mxu0 0.0
        %5520 = vmatpush1.msra.mxu0 %v5481
        %5521 = vmatprep.subr.mxu0 0.0
        %5522 = vmatpush1.msra.mxu0 0.0
        %5523 = vmatprep.subr.mxu0 0.0
        %5524 = vmatpush1.msra.mxu0 0.0
        %5525 = vmatprep.subr.mxu0 0.0
        %5526 = vmatpush1.msra.mxu0 0.0
        %5527 = vmatprep.subr.mxu0 0.0
        %5528 = vmatpush1.msra.mxu0 0.0
        %5529 = vmatprep.subr.mxu0 0.0
        %5530 = vmatpush1.msra.mxu0 0.0
        %5531 = vmatprep.subr.mxu0 0.0
        %5532 = vmatpush1.msra.mxu0 0.0
        %5533 = vmatprep.subr.mxu0 0.0
        %5534 = vmatpush1.msra.mxu0 0.0
        %5535 = vmatprep.subr.mxu0 0.0
        %5536 = vmatpush1.msra.mxu0 0.0
        %5537 = vmatprep.subr.mxu0 0.0
        %5538 = vmatpush1.msra.mxu0 0.0
        %5539 = vmatprep.subr.mxu0 0.0
        %5540 = vmatpush1.msra.mxu0 0.0
        %5541 = vmatprep.subr.mxu0 0.0
        %5542 = vmatpush1.msra.mxu0 0.0
        %5543 = vmatprep.subr.mxu0 0.0
        %5544 = vmatpush1.msra.mxu0 0.0
        %5545 = vmatprep.subr.mxu0 0.0
        %5546 = vmatpush1.msra.mxu0 0.0
        %5547 = vmatprep.subr.mxu0 0.0
        %5548 = vmatpush1.msra.mxu0 0.0
        %5549 = vmatprep.subr.mxu0 0.0
        %5550 = vmatpush1.msra.mxu0 0.0
        %5551 = vmatprep.subr.mxu0 0.0
        %5552 = vmatpush1.msra.mxu0 0.0
        %5553 = vmatprep.mubr.f32.mxu0 0.0
        %5554 = vmatmul.mubr.f32.gmra.mrb[0].mxu0 %v5465
        %v5555 = vpop.f32.mrb[0].mxu0
        %v5556 = vadd.f32 %v5487, %v5555
        %v5557 = vpop.f32.mrb[0].mxu0
        %5558 = vdwg.mxu0
        %v5559 = vadd.f32 %v3878, %v5556
        %v5560 = vld [vmem:[%s15] sm:$0x1]
        %v5561 = vld [vmem:[%s16] sm:$0x1]
        %5562 = vadd.xlane.f32.xlu0 %v5559
        %v5563 = vpop.xlane.xlu0 %5562
        %v5564 = vmul.f32 %v5563, %v3883
        %v5565 = vsub.f32 %v5559, %v5564
        %v5566 = vmul.f32 %v5565, %v5565
        %5567 = vadd.xlane.f32.xlu0 %v5566
        %v5568 = vpop.xlane.xlu0 %5567
        %v5569 = vmul.f32 %v5568, %v3883
        %v5570 = vadd.f32 %v5569, 1e-05
        %v5571 = vrsqrt.pop %v5570
        %v5572 = vmul.f32 %v5565, %v5571
        %v5574 = vlaneseq
        %v5575 = vshrl.u32 %v5574, 7
        %v5576 = vsub.s32 0, %v5575
        %v5577 = vrot.slane %v5560, %v5576
        %v5579 = vmul.f32 %v5572, %v5577
        %v5581 = vlaneseq
        %v5582 = vshrl.u32 %v5581, 7
        %v5583 = vsub.s32 0, %v5582
        %v5584 = vrot.slane %v5561, %v5583
        %v5586 = vadd.f32 %v5579, %v5584
        %v5587 = vld [vmem:[#allocation16] sm:$0xff]
        %v5588 = vld [vmem:[#allocation16 + $0x8] sm:$0xff]
        %v5589 = vld [vmem:[#allocation16 + $0x10] sm:$0xff]
        %v5590 = vld [vmem:[#allocation16 + $0x18] sm:$0xff]
        %v5591 = vld [vmem:[#allocation16 + $0x20] sm:$0xff]
        %v5592 = vld [vmem:[#allocation16 + $0x28] sm:$0xff]
        %v5593 = vld [vmem:[#allocation16 + $0x30] sm:$0xff]
        %v5594 = vld [vmem:[#allocation16 + $0x38] sm:$0xff]
        %v5595 = vld [vmem:[#allocation16 + $0x40] sm:$0xff]
        %v5596 = vld [vmem:[#allocation16 + $0x48] sm:$0xff]
        %v5597 = vld [vmem:[#allocation16 + $0x50] sm:$0xff]
        %v5598 = vld [vmem:[#allocation16 + $0x58] sm:$0xff]
        %v5599 = vld [vmem:[#allocation16 + $0x60] sm:$0xff]
        %v5600 = vld [vmem:[#allocation16 + $0x68] sm:$0xff]
        %v5601 = vld [vmem:[#allocation16 + $0x70] sm:$0xff]
        %v5602 = vld [vmem:[#allocation16 + $0x78] sm:$0xff]
        %v5603 = vld [vmem:[%s18] sm:$0x1]
        %v5605 = vlaneseq
        %v5606 = vshrl.u32 %v5605, 7
        %v5607 = vsub.s32 0, %v5606
        %v5608 = vrot.slane %v5603, %v5607
        %5610 = vmatprep.subr.mxu0 0.0
        %5611 = vmatpush1.msra.mxu0 %v5587
        %5612 = vmatprep.subr.mxu0 0.0
        %5613 = vmatpush1.msra.mxu0 %v5588
        %5614 = vmatprep.subr.mxu0 0.0
        %5615 = vmatpush1.msra.mxu0 %v5589
        %5616 = vmatprep.subr.mxu0 0.0
        %5617 = vmatpush1.msra.mxu0 %v5590
        %5618 = vmatprep.subr.mxu0 0.0
        %5619 = vmatpush1.msra.mxu0 %v5591
        %5620 = vmatprep.subr.mxu0 0.0
        %5621 = vmatpush1.msra.mxu0 %v5592
        %5622 = vmatprep.subr.mxu0 0.0
        %5623 = vmatpush1.msra.mxu0 %v5593
        %5624 = vmatprep.subr.mxu0 0.0
        %5625 = vmatpush1.msra.mxu0 %v5594
        %5626 = vmatprep.subr.mxu0 0.0
        %5627 = vmatpush1.msra.mxu0 %v5595
        %5628 = vmatprep.subr.mxu0 0.0
        %5629 = vmatpush1.msra.mxu0 %v5596
        %5630 = vmatprep.subr.mxu0 0.0
        %5631 = vmatpush1.msra.mxu0 %v5597
        %5632 = vmatprep.subr.mxu0 0.0
        %5633 = vmatpush1.msra.mxu0 %v5598
        %5634 = vmatprep.subr.mxu0 0.0
        %5635 = vmatpush1.msra.mxu0 %v5599
        %5636 = vmatprep.subr.mxu0 0.0
        %5637 = vmatpush1.msra.mxu0 %v5600
        %5638 = vmatprep.subr.mxu0 0.0
        %5639 = vmatpush1.msra.mxu0 %v5601
        %5640 = vmatprep.subr.mxu0 0.0
        %5641 = vmatpush1.msra.mxu0 %v5602
        %5642 = vmatprep.subr.mxu0 0.0
        %5643 = vmatpush1.msra.mxu0 0.0
        %5644 = vmatprep.subr.mxu0 0.0
        %5645 = vmatpush1.msra.mxu0 0.0
        %5646 = vmatprep.subr.mxu0 0.0
        %5647 = vmatpush1.msra.mxu0 0.0
        %5648 = vmatprep.subr.mxu0 0.0
        %5649 = vmatpush1.msra.mxu0 0.0
        %5650 = vmatprep.subr.mxu0 0.0
        %5651 = vmatpush1.msra.mxu0 0.0
        %5652 = vmatprep.subr.mxu0 0.0
        %5653 = vmatpush1.msra.mxu0 0.0
        %5654 = vmatprep.subr.mxu0 0.0
        %5655 = vmatpush1.msra.mxu0 0.0
        %5656 = vmatprep.subr.mxu0 0.0
        %5657 = vmatpush1.msra.mxu0 0.0
        %5658 = vmatprep.subr.mxu0 0.0
        %5659 = vmatpush1.msra.mxu0 0.0
        %5660 = vmatprep.subr.mxu0 0.0
        %5661 = vmatpush1.msra.mxu0 0.0
        %5662 = vmatprep.subr.mxu0 0.0
        %5663 = vmatpush1.msra.mxu0 0.0
        %5664 = vmatprep.subr.mxu0 0.0
        %5665 = vmatpush1.msra.mxu0 0.0
        %5666 = vmatprep.subr.mxu0 0.0
        %5667 = vmatpush1.msra.mxu0 0.0
        %5668 = vmatprep.subr.mxu0 0.0
        %5669 = vmatpush1.msra.mxu0 0.0
        %5670 = vmatprep.subr.mxu0 0.0
        %5671 = vmatpush1.msra.mxu0 0.0
        %5672 = vmatprep.subr.mxu0 0.0
        %5673 = vmatpush1.msra.mxu0 0.0
        %5674 = vmatprep.mubr.f32.mxu0 0.0
        %5675 = vmatmul.mubr.f32.gmra.mrb[0].mxu0 %v5586
        %v5676 = vpop.f32.mrb[0].mxu0
        %v5677 = vadd.f32 %v5608, %v5676
        %v5678 = vpop.f32.mrb[0].mxu0
        %5679 = vdwg.mxu0
        %v5680 = vmul.f32 %v5677, 0.5
        %v5681 = vmul.f32 %v5677, 0.70710677
        %v5682 = verf.f32.pop %v5681
        %v5683 = vadd.f32 %v5682, 1.0
        %v5684 = vmul.f32 %v5680, %v5683
        %v5685 = vld [vmem:[#allocation18] sm:$0xff]
        %v5686 = vld [vmem:[#allocation18 + $0x8] sm:$0xff]
        %v5687 = vld [vmem:[#allocation18 + $0x10] sm:$0xff]
        %v5688 = vld [vmem:[#allocation18 + $0x18] sm:$0xff]
        %v5689 = vld [vmem:[#allocation18 + $0x20] sm:$0xff]
        %v5690 = vld [vmem:[#allocation18 + $0x28] sm:$0xff]
        %v5691 = vld [vmem:[#allocation18 + $0x30] sm:$0xff]
        %v5692 = vld [vmem:[#allocation18 + $0x38] sm:$0xff]
        %v5693 = vld [vmem:[#allocation18 + $0x40] sm:$0xff]
        %v5694 = vld [vmem:[#allocation18 + $0x48] sm:$0xff]
        %v5695 = vld [vmem:[#allocation18 + $0x50] sm:$0xff]
        %v5696 = vld [vmem:[#allocation18 + $0x58] sm:$0xff]
        %v5697 = vld [vmem:[#allocation18 + $0x60] sm:$0xff]
        %v5698 = vld [vmem:[#allocation18 + $0x68] sm:$0xff]
        %v5699 = vld [vmem:[#allocation18 + $0x70] sm:$0xff]
        %v5700 = vld [vmem:[#allocation18 + $0x78] sm:$0xff]
        %v5701 = vld [vmem:[%s20] sm:$0x1]
        %v5703 = vlaneseq
        %v5704 = vshrl.u32 %v5703, 7
        %v5705 = vsub.s32 0, %v5704
        %v5706 = vrot.slane %v5701, %v5705
        %5708 = vmatprep.subr.mxu0 0.0
        %5709 = vmatpush1.msra.mxu0 %v5685
        %5710 = vmatprep.subr.mxu0 0.0
        %5711 = vmatpush1.msra.mxu0 %v5686
        %5712 = vmatprep.subr.mxu0 0.0
        %5713 = vmatpush1.msra.mxu0 %v5687
        %5714 = vmatprep.subr.mxu0 0.0
        %5715 = vmatpush1.msra.mxu0 %v5688
        %5716 = vmatprep.subr.mxu0 0.0
        %5717 = vmatpush1.msra.mxu0 %v5689
        %5718 = vmatprep.subr.mxu0 0.0
        %5719 = vmatpush1.msra.mxu0 %v5690
        %5720 = vmatprep.subr.mxu0 0.0
        %5721 = vmatpush1.msra.mxu0 %v5691
        %5722 = vmatprep.subr.mxu0 0.0
        %5723 = vmatpush1.msra.mxu0 %v5692
        %5724 = vmatprep.subr.mxu0 0.0
        %5725 = vmatpush1.msra.mxu0 %v5693
        %5726 = vmatprep.subr.mxu0 0.0
        %5727 = vmatpush1.msra.mxu0 %v5694
        %5728 = vmatprep.subr.mxu0 0.0
        %5729 = vmatpush1.msra.mxu0 %v5695
        %5730 = vmatprep.subr.mxu0 0.0
        %5731 = vmatpush1.msra.mxu0 %v5696
        %5732 = vmatprep.subr.mxu0 0.0
        %5733 = vmatpush1.msra.mxu0 %v5697
        %5734 = vmatprep.subr.mxu0 0.0
        %5735 = vmatpush1.msra.mxu0 %v5698
        %5736 = vmatprep.subr.mxu0 0.0
        %5737 = vmatpush1.msra.mxu0 %v5699
        %5738 = vmatprep.subr.mxu0 0.0
        %5739 = vmatpush1.msra.mxu0 %v5700
        %5740 = vmatprep.subr.mxu0 0.0
        %5741 = vmatpush1.msra.mxu0 0.0
        %5742 = vmatprep.subr.mxu0 0.0
        %5743 = vmatpush1.msra.mxu0 0.0
        %5744 = vmatprep.subr.mxu0 0.0
        %5745 = vmatpush1.msra.mxu0 0.0
        %5746 = vmatprep.subr.mxu0 0.0
        %5747 = vmatpush1.msra.mxu0 0.0
        %5748 = vmatprep.subr.mxu0 0.0
        %5749 = vmatpush1.msra.mxu0 0.0
        %5750 = vmatprep.subr.mxu0 0.0
        %5751 = vmatpush1.msra.mxu0 0.0
        %5752 = vmatprep.subr.mxu0 0.0
        %5753 = vmatpush1.msra.mxu0 0.0
        %5754 = vmatprep.subr.mxu0 0.0
        %5755 = vmatpush1.msra.mxu0 0.0
        %5756 = vmatprep.subr.mxu0 0.0
        %5757 = vmatpush1.msra.mxu0 0.0
        %5758 = vmatprep.subr.mxu0 0.0
        %5759 = vmatpush1.msra.mxu0 0.0
        %5760 = vmatprep.subr.mxu0 0.0
        %5761 = vmatpush1.msra.mxu0 0.0
        %5762 = vmatprep.subr.mxu0 0.0
        %5763 = vmatpush1.msra.mxu0 0.0
        %5764 = vmatprep.subr.mxu0 0.0
        %5765 = vmatpush1.msra.mxu0 0.0
        %5766 = vmatprep.subr.mxu0 0.0
        %5767 = vmatpush1.msra.mxu0 0.0
        %5768 = vmatprep.subr.mxu0 0.0
        %5769 = vmatpush1.msra.mxu0 0.0
        %5770 = vmatprep.subr.mxu0 0.0
        %5771 = vmatpush1.msra.mxu0 0.0
        %5772 = vmatprep.mubr.f32.mxu0 0.0
        %5773 = vmatmul.mubr.f32.gmra.mrb[0].mxu0 %v5684
        %v5774 = vpop.f32.mrb[0].mxu0
        %v5775 = vadd.f32 %v5706, %v5774
        %v5776 = vpop.f32.mrb[0].mxu0
        %5777 = vdwg.mxu0
        %v5778 = vadd.f32 %v5559, %v5775
        %5779 = vst [vmem:[%s788] sm:$0xff] %v5778
        %s5780 = sand.u32 %s496, 1
        %s5781 = scalar_lea.sflag [#allocation6], %s5780
        %s5782 = sand.u32 %s496, 1
        %s5783 = smul.addr %s5782, 8
        %s5784 = scalar_lea.vmem [#allocation19], %s5783
        // Predicated region
        $region141: #{tpu_custom_call.1} parent=103 // pred_check
          %p5785 = pneg %p506
        $region142: #{tpu_custom_call.1} parent=103 // pred_check_branch
          %5787 = sbr.rel (%p5785) target = $region144
        $region143: #{tpu_custom_call.1} parent=103 // pred_region
          %s5789 = ssub.s32 128, 128
          %5790 = vsyncadd %s5781, %s5789
          %s5791 = smul.addr %s42, 128
          %s5792 = scalar_lea.hbm %s21, %s5791
          %s5794 = sshll.u32 %s5784, 4
          %s5795 = int_to_ptr.vmem [resolvable:$true] %s5794
          %5797 = dma.vmem_to_hbm [thread:$0]  %s5795, 128, %s5792, %s5781
        $region144: #{tpu_custom_call.1} parent=103 // pred_fallthru
          _
      $region104: #{tpu_custom_call.1} parent=5 // pred_fallthru
        _
      %p5798 = scmp.le.s32.totalorder 2, %s37
      // Predicated region
      $region145: #{tpu_custom_call.1} parent=5 // pred_check
        %p5799 = pneg %p5798
      $region146: #{tpu_custom_call.1} parent=5 // pred_check_branch
        %5801 = sbr.rel (%p5799) target = $region148
      $region147: #{tpu_custom_call.1} parent=5 // pred_region
        %s5802 = ssub.s32 %s37, 2
        // Predicated region
        $region149: #{tpu_custom_call.1} parent=147 // pred_check
          %p5803 = pneg %p512
        $region150: #{tpu_custom_call.1} parent=147 // pred_check_branch
          %5805 = sbr.rel (%p5803) target = $region152
        $region151: #{tpu_custom_call.1} parent=147 // pred_region
          %s5806 = sand.u32 %s497, 1
          %s5807 = scalar_lea.sflag [#allocation6], %s5806
          %s5808 = sand.u32 %s497, 1
          %s5809 = smul.addr %s5808, 8
          %s5810 = scalar_lea.vmem [#allocation19], %s5809
          %5811 = dma.done %s5807, 128
        $region152: #{tpu_custom_call.1} parent=147 // pred_fallthru
          _
      $region148: #{tpu_custom_call.1} parent=5 // pred_fallthru
        _
    $region6: #{tpu_custom_call.1} parent=1 // loop_footer
      %s41 = sadd.s32 1, %s37
    $region7: #{tpu_custom_call.1} parent=1 // loop_footer_branch
      %36 = sbr.rel target = $region3
    $region8: #{tpu_custom_call.1} parent=1 // loop_exit
      _
    %5812 = vsyncpa [#allocation5], 1
    %s5813 = scalar_lea.sflag [#allocation5], 1
    %5814 = vsyncpa %s5813, 1
    %5815 = vsyncpa [#allocation8], 1
    %5816 = vsyncpa [#allocation11], 1
    %5817 = vsyncpa [#allocation14], 1
    %5818 = vsyncpa [#allocation17], 1
    %5819 = vsyncpa [#allocation6], 1
    %s5820 = scalar_lea.sflag [#allocation6], 1
    %5821 = vsyncpa %s5820, 1

</llo_original>
